<compile_context>
chip_gen: v7x
topology: tpu7x:2x2x1
jax: 0.10.0
libtpu: 0.0.40
codegen_flags: <defaults>
</compile_context>

<pallas_src>
import functools
import math

import jax
import jax.numpy as jnp
from jax.experimental import pallas as pl
from jax.experimental.pallas import tpu as pltpu


def _round_up(a, b):
    return (a + b - 1) // b * b


# --------------------------------------------------------------------------------------
# Fused non-local kernel.
#   grid = (batch, query_tile); per batch (qi == 0) compute phi^T / g / theta for the
#   whole sequence into VMEM scratch, then per query tile:
#     s = phi^T @ theta_q  ->  softmax over keys (sublane axis)  ->  y = g @ p
#     out = Ww_scaled @ (y / denom) + shift + x_q      (all lane-dense over positions)
# --------------------------------------------------------------------------------------

def _nonlocal_kernel(x_ref, wall_ref, ball_ref, ww_ref, sh_ref, o_ref,
                     phiT_sc, g_sc, th_sc, *, n_inter, n_keys, tile_q):
    I = n_inter
    qi = pl.program_id(1)

    # ---- per-batch setup: one projection matmul over the full sequence ----
    @pl.when(qi == 0)
    def _setup():
        x_full = x_ref[0]                                            # (C, Mp)
        proj = (jnp.dot(wall_ref[...], x_full,
                        preferred_element_type=jnp.float32)
                + ball_ref[...])                                     # (3I, Mp)
        phiT_sc[...] = jnp.transpose(proj[0:I])                      # (Mp, I): once/batch
        g_sc[...] = proj[I:2 * I]                                    # (I, Mp)
        th_sc[...] = proj[2 * I:3 * I]                               # (I, Mp)

    # ---- per query tile ----
    q0 = pl.multiple_of(qi * tile_q, 128)
    x_q = x_ref[0, :, pl.ds(q0, tile_q)]                             # (C, tq) residual
    theta_q = th_sc[:, pl.ds(q0, tile_q)]                            # (I, tq)

    s = jnp.dot(phiT_sc[...], theta_q,
                preferred_element_type=jnp.float32)                  # (Mp, tq) scores

    n_keys_padded = phiT_sc.shape[0]
    if n_keys_padded != n_keys:      # static: mask padded key rows out of the softmax
        k_idx = jax.lax.broadcasted_iota(jnp.int32, s.shape, 0)
        s = jnp.where(k_idx < n_keys, s, -1e30)

    m = jnp.max(s, axis=0, keepdims=True)                            # (1, tq)
    p = jnp.exp(s - m)                                               # EUP
    denom = jnp.sum(p, axis=0, keepdims=True)                        # (1, tq)

    y = jnp.dot(g_sc[...], p, preferred_element_type=jnp.float32)    # (I, tq)
    # deferred softmax normalization: scale the small (I, tq) result, not the (Mp, tq)
    # probability matrix; approx reciprocal runs on the EUP slot (tolerance note below).
    y = y * pl.reciprocal(denom, approx=True)

    out = (jnp.dot(ww_ref[...], y, preferred_element_type=jnp.float32)
           + sh_ref[...] + x_q)                                      # (C, tq)
    o_ref[0] = out


@functools.lru_cache(maxsize=None)
def _build_call(B, C, I, M, Mp, tq):
    kernel = functools.partial(_nonlocal_kernel, n_inter=I, n_keys=M, tile_q=tq)

    # Rough VMEM budget (bytes) with headroom; kept within v7x's 64 MiB physical VMEM.
    need = 4 * (2 * C * Mp          # x block (double-buffered)
                + 2 * C * tq        # output block (double-buffered)
                + Mp * 128          # phi^T scratch (minor dim padded to a lane)
                + 2 * I * Mp        # g / theta scratch
                + Mp * tq           # live score tile
                + 4 * I * C + C)    # weights
    vmem_limit = int(min(64 * 2 ** 20, max(32 * 2 ** 20, 3 * need)))

    return pl.pallas_call(
        kernel,
        out_shape=jax.ShapeDtypeStruct((B, C, Mp), jnp.float32),
        grid_spec=pltpu.PrefetchScalarGridSpec(
            num_scalar_prefetch=0,
            grid=(B, Mp // tq),
            in_specs=[
                pl.BlockSpec((1, C, Mp), lambda b, q: (b, 0, 0)),   # x[b], full sequence
                pl.BlockSpec((3 * I, C), lambda b, q: (0, 0)),      # [wp; wg; wt]
                pl.BlockSpec((3 * I, 1), lambda b, q: (0, 0)),      # [bp; bg; bt]
                pl.BlockSpec((C, I), lambda b, q: (0, 0)),          # BN-scaled W weight
                pl.BlockSpec((C, 1), lambda b, q: (0, 0)),          # folded BN shift
            ],
            out_specs=pl.BlockSpec((1, C, tq), lambda b, q: (b, 0, q)),
            scratch_shapes=[
                pltpu.VMEM((Mp, I), jnp.float32),    # phi^T  (keys-major)
                pltpu.VMEM((I, Mp), jnp.float32),    # g
                pltpu.VMEM((I, Mp), jnp.float32),    # theta
            ]),
        compiler_params=pltpu.CompilerParams(
            dimension_semantics=("parallel", "arbitrary"),
            vmem_limit_bytes=vmem_limit),
    )


# --------------------------------------------------------------------------------------
# Forward
# --------------------------------------------------------------------------------------

@jax.jit
def temporal_nonlocal_forward(x_ncthw, params):
    """x_ncthw: (B, C, T, H, W) float32. Returns z = W(y) + x with the same shape."""
    B, C, T, H, W = x_ncthw.shape
    I = params["wt"].shape[0]
    M = T * H * W

    # NCTHW -> (B, C, M): a pure reshape; positions stay on the lane (last) axis.
    x = x_ncthw.reshape(B, C, M).astype(jnp.float32)

    Mp = _round_up(M, 128)
    if Mp != M:
        x = jnp.pad(x, ((0, 0), (0, 0), (0, Mp - M)))

    # Query tile: lane-dense multiple of 128; keep the (Mp, tq) f32 score tile <= 8 MiB.
    tq = 128
    for cand in (512, 256):
        if Mp % cand == 0 and Mp * cand * 4 <= 8 * 2 ** 20:
            tq = cand
            break

    # Fold W-conv bias + BatchNorm3d (eval mode, running stats) into a scale/shift.
    eps = 1e-5
    scale = params["bn_gamma"] * jax.lax.rsqrt(params["bn_var"] + eps)          # (C,)
    ww_scaled = params["ww"] * scale[:, None]                                   # (C, I)
    shift = params["bn_beta"] + scale * (params["bw"] - params["bn_mean"])      # (C,)

    # Stack phi / g / theta projections so the per-batch setup is one matmul.
    w_all = jnp.concatenate([params["wp"], params["wg"], params["wt"]], axis=0)   # (3I, C)
    b_all = jnp.concatenate([params["bp"], params["bg"], params["bt"]])[:, None]  # (3I, 1)

    z = _build_call(B, C, I, M, Mp, tq)(x, w_all, b_all, ww_scaled, shift[:, None])
    if Mp != M:
        z = z[:, :, :M]
    return z.reshape(B, C, T, H, W)


# --------------------------------------------------------------------------------------
# Pure-JAX reference (exact softmax) for a tolerance check.
# --------------------------------------------------------------------------------------

def _reference_forward(x, params):
    B, C, T, H, W = x.shape
    M = T * H * W
    xm = x.reshape(B, C, M).astype(jnp.float32)
    theta = jnp.einsum('ic,bcm->bim', params["wt"], xm) + params["bt"][None, :, None]
    phi = jnp.einsum('ic,bcm->bim', params["wp"], xm) + params["bp"][None, :, None]
    g = jnp.einsum('ic,bcm->bim', params["wg"], xm) + params["bg"][None, :, None]
    f = jnp.einsum('biq,bik->bqk', theta, phi)
    attn = jax.nn.softmax(f, axis=-1)
    y = jnp.einsum('bqk,bik->biq', attn, g)
    wy = jnp.einsum('ci,biq->bcq', params["ww"], y) + params["bw"][None, :, None]
    eps = 1e-5
    scale = params["bn_gamma"] / jnp.sqrt(params["bn_var"] + eps)
    wy = wy * scale[None, :, None] + (params["bn_beta"]
                                      - params["bn_mean"] * scale)[None, :, None]
    return (wy + xm).reshape(B, C, T, H, W)


# --------------------------------------------------------------------------------------
# Deterministic parameter init mirroring NONLocalBlock3D_tem(C, sub_sample=False,
# bn_layer=True): g/theta/phi are 1x1x1 convs C->C//2, W is 1x1x1 conv C//2->C + BN3d.
# (The canonical block zero-inits W's BN gamma; fresh BN stats are used here so the
#  W-path is actually exercised.)
# --------------------------------------------------------------------------------------

def init_params(key, in_channels):
    inter = max(in_channels // 2, 1)
    ks = jax.random.split(key, 8)

    def conv_w(k, cout, cin):
        return jax.random.normal(k, (cout, cin), jnp.float32) / math.sqrt(cin)

    return dict(
        wt=conv_w(ks[0], inter, in_channels),                      # theta: (I, C)
        bt=0.1 * jax.random.normal(ks[1], (inter,), jnp.float32),
        wp=conv_w(ks[2], inter, in_channels),                      # phi
        bp=0.1 * jax.random.normal(ks[3], (inter,), jnp.float32),
        wg=conv_w(ks[4], inter, in_channels),                      # g
        bg=0.1 * jax.random.normal(ks[5], (inter,), jnp.float32),
        ww=conv_w(ks[6], in_channels, inter),                      # W: (C, I)
        bw=0.1 * jax.random.normal(ks[7], (in_channels,), jnp.float32),
        bn_gamma=jnp.ones((in_channels,), jnp.float32),
        bn_beta=jnp.zeros((in_channels,), jnp.float32),
        bn_mean=jnp.zeros((in_channels,), jnp.float32),
        bn_var=jnp.ones((in_channels,), jnp.float32),
    )


# --------------------------------------------------------------------------------------

if __name__ == "__main__":
    # TemporalNonLocalModule(nonlocal_in=32); small 5-D video input (B, C, T, H, W).
    C_IN = 32
    B, T, H, W = 2, 8, 8, 16        # M = T*H*W = 1024 -> two query tiles per batch

    key = jax.random.PRNGKey(0)
    kx, kp = jax.random.split(key)
    x = jax.random.normal(kx, (B, C_IN, T, H, W), jnp.float32)
    params = init_params(kp, C_IN)

    out = jax.block_until_ready(temporal_nonlocal_forward(x, params))

    assert out.shape == (B, C_IN, T, H, W), out.shape
    assert bool(jnp.all(jnp.isfinite(out)))

    # Tolerance note: pl.reciprocal(approx=True) gives a slightly approximate softmax
    # denominator, hence the loose-but-bug-catching tolerance.
    ref = _reference_forward(x, params)
    max_err = float(jnp.max(jnp.abs(out - ref)))
    assert max_err < 3e-2, f"max abs error vs reference: {max_err}"

    print("KERNEL_OK")
</pallas_src>

<mosaic_0001>
module attributes {stable_mosaic.version = 11 : i64} {
  func.func @_nonlocal_kernel(%arg0: i32, %arg1: i32, %arg2: memref<1x32x1024xf32, #tpu.memory_space<vmem>>, %arg3: memref<48x32xf32, #tpu.memory_space<vmem>>, %arg4: memref<48x1xf32, #tpu.memory_space<vmem>>, %arg5: memref<32x16xf32, #tpu.memory_space<vmem>>, %arg6: memref<32x1xf32, #tpu.memory_space<vmem>>, %arg7: memref<1x32x512xf32, #tpu.memory_space<vmem>>, %arg8: memref<1024x16xf32, #tpu.memory_space<vmem>>, %arg9: memref<16x1024xf32, #tpu.memory_space<vmem>>, %arg10: memref<16x1024xf32, #tpu.memory_space<vmem>>) attributes {dimension_semantics = [#tpu.dimension_semantics<parallel>, #tpu.dimension_semantics<arbitrary>], iteration_bounds = array<i64: 2, 2>, scalar_prefetch = 0 : i64, scratch_operands = 3 : i64, tpu.core_type = #tpu.core_type<tc>, window_params = [{transform_indices = @transform_0, window_bounds = array<i64: 1, 32, 1024>}, {pipeline_mode = #tpu.pipeline_mode<synchronous>, transform_indices = @transform_1, window_bounds = array<i64: 48, 32>}, {pipeline_mode = #tpu.pipeline_mode<synchronous>, transform_indices = @transform_2, window_bounds = array<i64: 48, 1>}, {pipeline_mode = #tpu.pipeline_mode<synchronous>, transform_indices = @transform_3, window_bounds = array<i64: 32, 16>}, {pipeline_mode = #tpu.pipeline_mode<synchronous>, transform_indices = @transform_4, window_bounds = array<i64: 32, 1>}, {transform_indices = @transform_5, window_bounds = array<i64: 1, 32, 512>}]} {
    %c0_i32 = arith.constant 0 : i32
    %0 = arith.cmpi eq, %arg1, %c0_i32 : i32
    %1 = arith.extui %0 : i1 to i32
    %c0_i32_0 = arith.constant 0 : i32
    %2 = arith.cmpi ne, %1, %c0_i32_0 : i32
    scf.if %2 {
      %c0_18 = arith.constant 0 : index
      %c0_19 = arith.constant 0 : index
      %c0_20 = arith.constant 0 : index
      %33 = vector.load %arg2[%c0_18, %c0_19, %c0_20] : memref<1x32x1024xf32, #tpu.memory_space<vmem>>, vector<1x32x1024xf32>
      %34 = vector.shape_cast %33 : vector<1x32x1024xf32> to vector<32x1024xf32>
      %c0_21 = arith.constant 0 : index
      %c0_22 = arith.constant 0 : index
      %35 = vector.load %arg3[%c0_21, %c0_22] : memref<48x32xf32, #tpu.memory_space<vmem>>, vector<48x32xf32>
      %cst_23 = arith.constant dense<0.000000e+00> : vector<48x1024xf32>
      %36 = tpu.matmul %35, %34, %cst_23 {dimension_numbers = #tpu.dot_dimension_numbers<[1], [0], [0], [1], [0, 0, 1, 1], [], []>} : vector<48x32xf32>, vector<32x1024xf32>, vector<48x1024xf32> -> vector<48x1024xf32>
      %c0_24 = arith.constant 0 : index
      %c0_25 = arith.constant 0 : index
      %37 = vector.load %arg4[%c0_24, %c0_25] : memref<48x1xf32, #tpu.memory_space<vmem>>, vector<48x1xf32>
      %38 = vector.broadcast %37 : vector<48x1xf32> to vector<48x1024xf32>
      %39 = arith.addf %36, %38 : vector<48x1024xf32>
      %40 = vector.extract_strided_slice %39 {offsets = [0, 0], sizes = [16, 1024], strides = [1, 1]} : vector<48x1024xf32> to vector<16x1024xf32>
      %41 = tpu.transpose %40, [1, 0] : vector<16x1024xf32> -> vector<1024x16xf32>
      %c0_26 = arith.constant 0 : index
      %c0_27 = arith.constant 0 : index
      %42 = vector.load %arg8[%c0_26, %c0_27] : memref<1024x16xf32, #tpu.memory_space<vmem>>, vector<1024x16xf32>
      tpu.vector_store %arg8[%c0_26, %c0_27], %41 {strides = array<i32>} : memref<1024x16xf32, #tpu.memory_space<vmem>>, vector<1024x16xf32>,
      %43 = vector.extract_strided_slice %39 {offsets = [16, 0], sizes = [16, 1024], strides = [1, 1]} : vector<48x1024xf32> to vector<16x1024xf32>
      %c0_28 = arith.constant 0 : index
      %c0_29 = arith.constant 0 : index
      %44 = vector.load %arg9[%c0_28, %c0_29] : memref<16x1024xf32, #tpu.memory_space<vmem>>, vector<16x1024xf32>
      tpu.vector_store %arg9[%c0_28, %c0_29], %43 {strides = array<i32>} : memref<16x1024xf32, #tpu.memory_space<vmem>>, vector<16x1024xf32>,
      %45 = vector.extract_strided_slice %39 {offsets = [32, 0], sizes = [16, 1024], strides = [1, 1]} : vector<48x1024xf32> to vector<16x1024xf32>
      %c0_30 = arith.constant 0 : index
      %c0_31 = arith.constant 0 : index
      %46 = vector.load %arg10[%c0_30, %c0_31] : memref<16x1024xf32, #tpu.memory_space<vmem>>, vector<16x1024xf32>
      tpu.vector_store %arg10[%c0_30, %c0_31], %45 {strides = array<i32>} : memref<16x1024xf32, #tpu.memory_space<vmem>>, vector<16x1024xf32>,
    } else {
    }
    %c512_i32 = arith.constant 512 : i32
    %3 = arith.muli %arg1, %c512_i32 : i32
    %4 = tpu.assume_multiple %3, 128 : i32
    %c0 = arith.constant 0 : index
    %c0_1 = arith.constant 0 : index
    %5 = arith.index_cast %4 : i32 to index
    %6 = vector.load %arg2[%c0, %c0_1, %5] : memref<1x32x1024xf32, #tpu.memory_space<vmem>>, vector<1x32x512xf32>
    %7 = vector.shape_cast %6 : vector<1x32x512xf32> to vector<32x512xf32>
    %c0_2 = arith.constant 0 : index
    %8 = arith.index_cast %4 : i32 to index
    %9 = vector.load %arg10[%c0_2, %8] : memref<16x1024xf32, #tpu.memory_space<vmem>>, vector<16x512xf32>
    %c0_3 = arith.constant 0 : index
    %c0_4 = arith.constant 0 : index
    %10 = vector.load %arg8[%c0_3, %c0_4] : memref<1024x16xf32, #tpu.memory_space<vmem>>, vector<1024x16xf32>
    %cst = arith.constant dense<0.000000e+00> : vector<1024x512xf32>
    %11 = tpu.matmul %10, %9, %cst {dimension_numbers = #tpu.dot_dimension_numbers<[1], [0], [0], [1], [0, 0, 1, 1], [], []>} : vector<1024x16xf32>, vector<16x512xf32>, vector<1024x512xf32> -> vector<1024x512xf32>
    %cst_5 = arith.constant dense<0xFF800000> : vector<512xf32>
    %12 = vector.multi_reduction <maximumf>, %11, %cst_5 [0] : vector<1024x512xf32> to vector<512xf32>
    %13 = vector.shape_cast %12 : vector<512xf32> to vector<1x512xf32>
    %14 = vector.broadcast %13 : vector<1x512xf32> to vector<1024x512xf32>
    %15 = arith.subf %11, %14 : vector<1024x512xf32>
    %16 = math.exp %15 : vector<1024x512xf32>
    %cst_6 = arith.constant dense<0.000000e+00> : vector<512xf32>
    %17 = vector.multi_reduction <add>, %16, %cst_6 [0] : vector<1024x512xf32> to vector<512xf32>
    %18 = vector.shape_cast %17 : vector<512xf32> to vector<1x512xf32>
    %c0_7 = arith.constant 0 : index
    %c0_8 = arith.constant 0 : index
    %19 = vector.load %arg9[%c0_7, %c0_8] : memref<16x1024xf32, #tpu.memory_space<vmem>>, vector<16x1024xf32>
    %cst_9 = arith.constant dense<0.000000e+00> : vector<16x512xf32>
    %20 = tpu.matmul %19, %16, %cst_9 {dimension_numbers = #tpu.dot_dimension_numbers<[1], [0], [0], [1], [0, 0, 1, 1], [], []>} : vector<16x1024xf32>, vector<1024x512xf32>, vector<16x512xf32> -> vector<16x512xf32>
    %21 = tpu.reciprocal %18 {approx = true} : vector<1x512xf32> -> vector<1x512xf32>
    %22 = vector.broadcast %21 : vector<1x512xf32> to vector<16x512xf32>
    %23 = arith.mulf %20, %22 : vector<16x512xf32>
    %c0_10 = arith.constant 0 : index
    %c0_11 = arith.constant 0 : index
    %24 = vector.load %arg5[%c0_10, %c0_11] : memref<32x16xf32, #tpu.memory_space<vmem>>, vector<32x16xf32>
    %cst_12 = arith.constant dense<0.000000e+00> : vector<32x512xf32>
    %25 = tpu.matmul %24, %23, %cst_12 {dimension_numbers = #tpu.dot_dimension_numbers<[1], [0], [0], [1], [0, 0, 1, 1], [], []>} : vector<32x16xf32>, vector<16x512xf32>, vector<32x512xf32> -> vector<32x512xf32>
    %c0_13 = arith.constant 0 : index
    %c0_14 = arith.constant 0 : index
    %26 = vector.load %arg6[%c0_13, %c0_14] : memref<32x1xf32, #tpu.memory_space<vmem>>, vector<32x1xf32>
    %27 = vector.broadcast %26 : vector<32x1xf32> to vector<32x512xf32>
    %28 = arith.addf %25, %27 : vector<32x512xf32>
    %29 = arith.addf %28, %7 : vector<32x512xf32>
    %c0_15 = arith.constant 0 : index
    %c0_16 = arith.constant 0 : index
    %c0_17 = arith.constant 0 : index
    %30 = vector.load %arg7[%c0_15, %c0_16, %c0_17] : memref<1x32x512xf32, #tpu.memory_space<vmem>>, vector<1x32x512xf32>
    %31 = vector.shape_cast %30 : vector<1x32x512xf32> to vector<32x512xf32>
    %32 = vector.shape_cast %29 : vector<32x512xf32> to vector<1x32x512xf32>
    tpu.vector_store %arg7[%c0_15, %c0_16, %c0_17], %32 {strides = array<i32>} : memref<1x32x512xf32, #tpu.memory_space<vmem>>, vector<1x32x512xf32>,
    return
  }
  func.func @transform_0(%arg0: i32, %arg1: i32) -> (i32, i32, i32) {
    %c0_i32 = arith.constant 0 : i32
    %c0_i32_0 = arith.constant 0 : i32
    %c0_i32_1 = arith.constant 0 : i32
    return %arg0, %c0_i32, %c0_i32_0 : i32, i32, i32
  }
  func.func @transform_1(%arg0: i32, %arg1: i32) -> (i32, i32) {
    %c0_i32 = arith.constant 0 : i32
    %c0_i32_0 = arith.constant 0 : i32
    %c0_i32_1 = arith.constant 0 : i32
    return %c0_i32, %c0_i32_0 : i32, i32
  }
  func.func @transform_2(%arg0: i32, %arg1: i32) -> (i32, i32) {
    %c0_i32 = arith.constant 0 : i32
    %c0_i32_0 = arith.constant 0 : i32
    %c0_i32_1 = arith.constant 0 : i32
    return %c0_i32, %c0_i32_0 : i32, i32
  }
  func.func @transform_3(%arg0: i32, %arg1: i32) -> (i32, i32) {
    %c0_i32 = arith.constant 0 : i32
    %c0_i32_0 = arith.constant 0 : i32
    %c0_i32_1 = arith.constant 0 : i32
    return %c0_i32, %c0_i32_0 : i32, i32
  }
  func.func @transform_4(%arg0: i32, %arg1: i32) -> (i32, i32) {
    %c0_i32 = arith.constant 0 : i32
    %c0_i32_0 = arith.constant 0 : i32
    %c0_i32_1 = arith.constant 0 : i32
    return %c0_i32, %c0_i32_0 : i32, i32
  }
  func.func @transform_5(%arg0: i32, %arg1: i32) -> (i32, i32, i32) {
    %c0_i32 = arith.constant 0 : i32
    %c0_i32_0 = arith.constant 0 : i32
    return %arg0, %c0_i32, %arg1 : i32, i32, i32
  }
}

</mosaic_0001>

<llo_original>
// kernel: temporal_nonlocal_forward.1
$region0: #{temporal_nonlocal_forward.1}
  #allocation0 [shape = 'u32[]', space=smem, size = 0x4, offset = 0x4, fixed_abs, tag = 'smem constant byte address 0x4 - core index']
  #allocation1 [shape = 'u32[144,128]{1,0:T(1,128)}', space=vmem, size = 0x12000, scoped, tag = 'internal scratch']
  #allocation2 [shape = 'f32[1024,16]{1,0:T(8,128)}', space=vmem, size = 0x80000, scoped, tag = 'scratch operand']
  #allocation3 [shape = 'f32[16,1024]{1,0:T(8,128)}', space=vmem, size = 0x10000, scoped, tag = 'scratch operand']
  #allocation4 [shape = 'f32[16,1024]{1,0:T(8,128)}', space=vmem, size = 0x10000, scoped, tag = 'scratch operand']
  %s0 = inlined_call_operand.vmem [shape: f32[2,32,1024], index: 0, kind: input, shape index: {}]
  %s1 = inlined_call_operand.vmem [shape: f32[48,32], index: 1, kind: input, shape index: {}]
  %s2 = inlined_call_operand.vmem [shape: f32[48,1], index: 2, kind: input, shape index: {}]
  %s3 = inlined_call_operand.vmem [shape: f32[32,16], index: 3, kind: input, shape index: {}]
  %s4 = inlined_call_operand.vmem [shape: f32[32,1], index: 4, kind: input, shape index: {}]
  %s5 = inlined_call_operand.vmem [shape: f32[2,32,1024], index: 5, kind: output, shape index: {}]
  %s6 = sld [smem:[#allocation0]]
  $region76: #{temporal_nonlocal_forward.1} parent=0
    _
  %s8 = ssub.s32 1, %s6
  %s9 = scalar_select 0, %s8, %s6
  $region1: #{temporal_nonlocal_forward.1} parent=0
    #allocation5 [shape = 'u8[131072]{0}', space=vmem, size = 0x20000, scoped, tag = 'output window, operand 0']
    loop: start=0, step=1, limit=6
    $region2: #{temporal_nonlocal_forward.1} parent=1 // loop_pre_header
      _
    $region3: #{temporal_nonlocal_forward.1} parent=1 // loop_header
      %s11 = sphi 0, %s15
      %p12 = scmp.ge.s32.totalorder %s11, 6
      %s18 = sphi 0, %s30
      %s19 = sphi 0, %s26
      %s20 = sphi 0, %s18
      %s21 = sphi 0, %s19
      %s22 = sphi 0, %s20
      %s23 = sphi 0, %s21
      %s33 = sphi 0, %s35
      %s36 = sphi 0, %s33
      %s37 = sphi 0, %s36
      %s53 = sphi 0, %s37
      %s57 = sphi 0, %s57
      %s59 = sphi 0, %s57
      %s60 = sphi 0, %s59
      %s74 = sphi 0, %s60
      %s78 = sphi 0, %s78
      %s80 = sphi 0, %s78
      %s81 = sphi 0, %s80
      %s95 = sphi 0, %s81
      %s99 = sphi 0, %s99
      %s101 = sphi 0, %s99
      %s102 = sphi 0, %s101
      %s116 = sphi 0, %s102
      %s120 = sphi 0, %s120
      %s122 = sphi 0, %s120
      %s123 = sphi 0, %s122
      %s137 = sphi 0, %s123
      %s145 = sphi 0, %s147
      %s148 = sphi 0, %s145
      %s149 = sphi 0, %s148
      %s165 = sphi 0, %s149
    $region4: #{temporal_nonlocal_forward.1} parent=1 // loop_header_branch
      %14 = sbr.rel (%p12) target = $region8
    $region5: #{temporal_nonlocal_forward.1} parent=1 // loop_body
      %s16 = ssub.s32 %s11, 1
      %s17 = ssub.s32 %s11, 2
      %s24 = sadd.s32 1, %s19
      %p25 = scmp.ge.s32.totalorder %s24, 2
      %s26 = scalar_select %p25, 0, %s24
      %s27 = sadd.s32 1, %s18
      %s28 = scalar_select %p25, %s27, %s18
      %p29 = scmp.ge.s32.totalorder %s28, 2
      %s30 = scalar_select %p29, 0, %s28
      %s31 = ssub.s32 %s18, %s30
      %p32 = scmp.eq.s32.totalorder %s31, 0
      %s34 = sadd.s32 %s33, 1
      %s35 = scalar_select %p32, %s33, %s34
      %p38 = pneg %p32
      %p39 = scmp.eq.s32.totalorder %s11, 3
      %p40 = por %p38, %p39
      %p41 = scmp.ne.s32.totalorder %s33, %s36
      %p42 = scmp.eq.s32.totalorder %s11, 0
      %p43 = por %p41, %p42
      %p44 = scmp.ne.s32.totalorder %s33, %s36
      %p45 = scmp.eq.s32.totalorder %s16, 3
      %p46 = por %p44, %p45
      %p47 = scmp.ne.s32.totalorder %s36, %s37
      %p48 = scmp.eq.s32.totalorder %s16, 0
      %p49 = por %p47, %p48
      %p50 = scmp.ne.s32.totalorder %s36, %s37
      %p51 = scmp.eq.s32.totalorder %s17, 3
      %p52 = por %p50, %p51
      %p54 = scmp.ne.s32.totalorder %s37, %s53
      %p55 = scmp.eq.s32.totalorder %s17, 0
      %p56 = por %p54, %p55
      %s58 = sadd.s32 %s57, 1
      %p61 = scmp.eq.s32.totalorder %s11, 3
      %p62 = scmp.ne.s32.totalorder %s57, %s59
      %p63 = scmp.eq.s32.totalorder %s11, 0
      %p64 = por %p62, %p63
      %p65 = scmp.ne.s32.totalorder %s57, %s59
      %p66 = scmp.eq.s32.totalorder %s16, 3
      %p67 = por %p65, %p66
      %p68 = scmp.ne.s32.totalorder %s59, %s60
      %p69 = scmp.eq.s32.totalorder %s16, 0
      %p70 = por %p68, %p69
      %p71 = scmp.ne.s32.totalorder %s59, %s60
      %p72 = scmp.eq.s32.totalorder %s17, 3
      %p73 = por %p71, %p72
      %p75 = scmp.ne.s32.totalorder %s60, %s74
      %p76 = scmp.eq.s32.totalorder %s17, 0
      %p77 = por %p75, %p76
      %s79 = sadd.s32 %s78, 1
      %p82 = scmp.eq.s32.totalorder %s11, 3
      %p83 = scmp.ne.s32.totalorder %s78, %s80
      %p84 = scmp.eq.s32.totalorder %s11, 0
      %p85 = por %p83, %p84
      %p86 = scmp.ne.s32.totalorder %s78, %s80
      %p87 = scmp.eq.s32.totalorder %s16, 3
      %p88 = por %p86, %p87
      %p89 = scmp.ne.s32.totalorder %s80, %s81
      %p90 = scmp.eq.s32.totalorder %s16, 0
      %p91 = por %p89, %p90
      %p92 = scmp.ne.s32.totalorder %s80, %s81
      %p93 = scmp.eq.s32.totalorder %s17, 3
      %p94 = por %p92, %p93
      %p96 = scmp.ne.s32.totalorder %s81, %s95
      %p97 = scmp.eq.s32.totalorder %s17, 0
      %p98 = por %p96, %p97
      %s100 = sadd.s32 %s99, 1
      %p103 = scmp.eq.s32.totalorder %s11, 3
      %p104 = scmp.ne.s32.totalorder %s99, %s101
      %p105 = scmp.eq.s32.totalorder %s11, 0
      %p106 = por %p104, %p105
      %p107 = scmp.ne.s32.totalorder %s99, %s101
      %p108 = scmp.eq.s32.totalorder %s16, 3
      %p109 = por %p107, %p108
      %p110 = scmp.ne.s32.totalorder %s101, %s102
      %p111 = scmp.eq.s32.totalorder %s16, 0
      %p112 = por %p110, %p111
      %p113 = scmp.ne.s32.totalorder %s101, %s102
      %p114 = scmp.eq.s32.totalorder %s17, 3
      %p115 = por %p113, %p114
      %p117 = scmp.ne.s32.totalorder %s102, %s116
      %p118 = scmp.eq.s32.totalorder %s17, 0
      %p119 = por %p117, %p118
      %s121 = sadd.s32 %s120, 1
      %p124 = scmp.eq.s32.totalorder %s11, 3
      %p125 = scmp.ne.s32.totalorder %s120, %s122
      %p126 = scmp.eq.s32.totalorder %s11, 0
      %p127 = por %p125, %p126
      %p128 = scmp.ne.s32.totalorder %s120, %s122
      %p129 = scmp.eq.s32.totalorder %s16, 3
      %p130 = por %p128, %p129
      %p131 = scmp.ne.s32.totalorder %s122, %s123
      %p132 = scmp.eq.s32.totalorder %s16, 0
      %p133 = por %p131, %p132
      %p134 = scmp.ne.s32.totalorder %s122, %s123
      %p135 = scmp.eq.s32.totalorder %s17, 3
      %p136 = por %p134, %p135
      %p138 = scmp.ne.s32.totalorder %s123, %s137
      %p139 = scmp.eq.s32.totalorder %s17, 0
      %p140 = por %p138, %p139
      %s141 = ssub.s32 %s18, %s30
      %s142 = ssub.s32 %s19, %s26
      %s143 = sor.u32 %s141, %s142
      %p144 = scmp.eq.s32.totalorder %s143, 0
      %s146 = sadd.s32 %s145, 1
      %s147 = scalar_select %p144, %s145, %s146
      %p150 = pneg %p144
      %p151 = scmp.eq.s32.totalorder %s11, 3
      %p152 = por %p150, %p151
      %p153 = scmp.ne.s32.totalorder %s145, %s148
      %p154 = scmp.eq.s32.totalorder %s11, 0
      %p155 = por %p153, %p154
      %p156 = scmp.ne.s32.totalorder %s145, %s148
      %p157 = scmp.eq.s32.totalorder %s16, 3
      %p158 = por %p156, %p157
      %p159 = scmp.ne.s32.totalorder %s148, %s149
      %p160 = scmp.eq.s32.totalorder %s16, 0
      %p161 = por %p159, %p160
      %p162 = scmp.ne.s32.totalorder %s148, %s149
      %p163 = scmp.eq.s32.totalorder %s17, 3
      %p164 = por %p162, %p163
      %p166 = scmp.ne.s32.totalorder %s149, %s165
      %p167 = scmp.eq.s32.totalorder %s17, 0
      %p168 = por %p166, %p167
      %p169 = scmp.le.s32.totalorder 1, %s11
      %p170 = scmp.lt.s32.totalorder %s11, 5
      %p171 = pnand %p169, %p170
      %p172 = pneg %p171
      // Predicated region
      $region9: #{temporal_nonlocal_forward.1} parent=5 // pred_check
        _
      $region10: #{temporal_nonlocal_forward.1} parent=5 // pred_check_branch
        %174 = sbr.rel (%p171) target = $region12
      $region11: #{temporal_nonlocal_forward.1} parent=5 // pred_region
        %s175 = ssub.s32 %s11, 1
        // Predicated region
        $region13: #{temporal_nonlocal_forward.1} parent=11 // pred_check
          %p176 = pneg %p70
        $region14: #{temporal_nonlocal_forward.1} parent=11 // pred_check_branch
          %178 = sbr.rel (%p176) target = $region16
        $region15: #{temporal_nonlocal_forward.1} parent=11 // pred_region
          _
        $region16: #{temporal_nonlocal_forward.1} parent=11 // pred_fallthru
          _
        // Predicated region
        $region17: #{temporal_nonlocal_forward.1} parent=11 // pred_check
          %p179 = pneg %p91
        $region18: #{temporal_nonlocal_forward.1} parent=11 // pred_check_branch
          %181 = sbr.rel (%p179) target = $region20
        $region19: #{temporal_nonlocal_forward.1} parent=11 // pred_region
          _
        $region20: #{temporal_nonlocal_forward.1} parent=11 // pred_fallthru
          _
        // Predicated region
        $region21: #{temporal_nonlocal_forward.1} parent=11 // pred_check
          %p182 = pneg %p112
        $region22: #{temporal_nonlocal_forward.1} parent=11 // pred_check_branch
          %184 = sbr.rel (%p182) target = $region24
        $region23: #{temporal_nonlocal_forward.1} parent=11 // pred_region
          _
        $region24: #{temporal_nonlocal_forward.1} parent=11 // pred_fallthru
          _
        // Predicated region
        $region25: #{temporal_nonlocal_forward.1} parent=11 // pred_check
          %p185 = pneg %p133
        $region26: #{temporal_nonlocal_forward.1} parent=11 // pred_check_branch
          %187 = sbr.rel (%p185) target = $region28
        $region27: #{temporal_nonlocal_forward.1} parent=11 // pred_region
          _
        $region28: #{temporal_nonlocal_forward.1} parent=11 // pred_fallthru
          _
      $region12: #{temporal_nonlocal_forward.1} parent=5 // pred_fallthru
        _
      %p188 = scmp.lt.s32.totalorder %s11, 4
      // Predicated region
      $region29: #{temporal_nonlocal_forward.1} parent=5 // pred_check
        %p189 = pneg %p188
      $region30: #{temporal_nonlocal_forward.1} parent=5 // pred_check_branch
        %191 = sbr.rel (%p189) target = $region32
      $region31: #{temporal_nonlocal_forward.1} parent=5 // pred_region
        // Predicated region
        $region33: #{temporal_nonlocal_forward.1} parent=31 // pred_check
          %p192 = pneg %p43
        $region34: #{temporal_nonlocal_forward.1} parent=31 // pred_check_branch
          %194 = sbr.rel (%p192) target = $region36
        $region35: #{temporal_nonlocal_forward.1} parent=31 // pred_region
          %p195 = scmp.lt.s32.totalorder %s18, 1
          %s196 = scalar_select %p195, %s18, 1
          %s197 = smul.addr %s196, 32
          %s198 = smul.addr %s197, 8
          %s199 = scalar_lea.vmem %s0, %s198
        $region36: #{temporal_nonlocal_forward.1} parent=31 // pred_fallthru
          _
      $region32: #{temporal_nonlocal_forward.1} parent=5 // pred_fallthru
        _
      %p200 = scmp.le.s32.totalorder 1, %s11
      %p201 = scmp.lt.s32.totalorder %s11, 5
      %p202 = pnand %p200, %p201
      %p203 = pneg %p202
      // Predicated region
      $region37: #{temporal_nonlocal_forward.1} parent=5 // pred_check
        _
      $region38: #{temporal_nonlocal_forward.1} parent=5 // pred_check_branch
        %205 = sbr.rel (%p202) target = $region40
      $region39: #{temporal_nonlocal_forward.1} parent=5 // pred_region
        %s206 = ssub.s32 %s11, 1
        %p207 = scmp.lt.s32.totalorder %s20, 1
        %s208 = scalar_select %p207, %s20, 1
        %s209 = smul.addr %s208, 32
        %s210 = smul.addr %s209, 8
        %s211 = scalar_lea.vmem %s0, %s210
        %p212 = pneg %p49
        %p213 = pneg %p46
        %p214 = pneg %p70
        %p215 = pneg %p67
        %p216 = pneg %p91
        %p217 = pneg %p88
        %p218 = pneg %p112
        %p219 = pneg %p109
        %p220 = pneg %p133
        %p221 = pneg %p130
        %p222 = pneg %p161
        %p223 = pneg %p158
        %s224 = sand.u32 %s148, 1
        %s225 = sand.u32 %s148, 1
        %s226 = smul.addr %s225, 128
        %s227 = scalar_lea.vmem [#allocation5], %s226
        %p228 = scmp.lt.s32.totalorder %s20, 1
        %s229 = scalar_select %p228, %s20, 1
        %s230 = smul.addr %s229, 32
        %s231 = smul.addr %s230, 8
        %s232 = scalar_lea.vmem %s0, %s231
        %s233 = smul.u32 4, %s21
        %p234 = scmp.eq.s32.totalorder %s21, 0
        // Predicated region
        $region41: #{temporal_nonlocal_forward.1} parent=39 // pred_check
          %p235 = pneg %p234
        $region42: #{temporal_nonlocal_forward.1} parent=39 // pred_check_branch
          %237 = sbr.rel (%p235) target = $region44
        $region43: #{temporal_nonlocal_forward.1} parent=39 // pred_region
          %v238 = vld [vmem:[%s232] sm:$0xff]
          %v239 = vld [vmem:[%s232 + $0x8] sm:$0xff]
          %v240 = vld [vmem:[%s232 + $0x10] sm:$0xff]
          %v241 = vld [vmem:[%s232 + $0x18] sm:$0xff]
          %v242 = vld [vmem:[%s232 + $0x20] sm:$0xff]
          %v243 = vld [vmem:[%s232 + $0x28] sm:$0xff]
          %v244 = vld [vmem:[%s232 + $0x30] sm:$0xff]
          %v245 = vld [vmem:[%s232 + $0x38] sm:$0xff]
          %v246 = vld [vmem:[%s232 + $0x40] sm:$0xff]
          %v247 = vld [vmem:[%s232 + $0x48] sm:$0xff]
          %v248 = vld [vmem:[%s232 + $0x50] sm:$0xff]
          %v249 = vld [vmem:[%s232 + $0x58] sm:$0xff]
          %v250 = vld [vmem:[%s232 + $0x60] sm:$0xff]
          %v251 = vld [vmem:[%s232 + $0x68] sm:$0xff]
          %v252 = vld [vmem:[%s232 + $0x70] sm:$0xff]
          %v253 = vld [vmem:[%s232 + $0x78] sm:$0xff]
          %v254 = vld [vmem:[%s232 + $0x80] sm:$0xff]
          %v255 = vld [vmem:[%s232 + $0x88] sm:$0xff]
          %v256 = vld [vmem:[%s232 + $0x90] sm:$0xff]
          %v257 = vld [vmem:[%s232 + $0x98] sm:$0xff]
          %v258 = vld [vmem:[%s232 + $0xa0] sm:$0xff]
          %v259 = vld [vmem:[%s232 + $0xa8] sm:$0xff]
          %v260 = vld [vmem:[%s232 + $0xb0] sm:$0xff]
          %v261 = vld [vmem:[%s232 + $0xb8] sm:$0xff]
          %v262 = vld [vmem:[%s232 + $0xc0] sm:$0xff]
          %v263 = vld [vmem:[%s232 + $0xc8] sm:$0xff]
          %v264 = vld [vmem:[%s232 + $0xd0] sm:$0xff]
          %v265 = vld [vmem:[%s232 + $0xd8] sm:$0xff]
          %v266 = vld [vmem:[%s232 + $0xe0] sm:$0xff]
          %v267 = vld [vmem:[%s232 + $0xe8] sm:$0xff]
          %v268 = vld [vmem:[%s232 + $0xf0] sm:$0xff]
          %v269 = vld [vmem:[%s232 + $0xf8] sm:$0xff]
          %v270 = vld [vmem:[%s1] sm:$0xff]
          %v271 = vld [vmem:[%s1 + $0x8] sm:$0xff]
          %v272 = vld [vmem:[%s1 + $0x10] sm:$0xff]
          %v273 = vld [vmem:[%s1 + $0x18] sm:$0xff]
          %v274 = vld [vmem:[%s1 + $0x20] sm:$0xff]
          %v275 = vld [vmem:[%s1 + $0x28] sm:$0xff]
          %v276 = vld [vmem:[%s2] sm:$0xff]
          %v277 = vld [vmem:[%s2 + $0x8] sm:$0xff]
          %v278 = vld [vmem:[%s2 + $0x10] sm:$0xff]
          %v279 = vld [vmem:[%s2 + $0x18] sm:$0xff]
          %v280 = vld [vmem:[%s2 + $0x20] sm:$0xff]
          %v281 = vld [vmem:[%s2 + $0x28] sm:$0xff]
          %283 = vset.pattern.permute.xlu0 0
          %284 = vperm.xlu0 %283, %v276
          %v285 = vpop.permute.xlu0 %284
          %288 = vset.pattern.permute.xlu0 0
          %289 = vperm.xlu0 %288, %v277
          %v290 = vpop.permute.xlu0 %289
          %293 = vset.pattern.permute.xlu0 0
          %294 = vperm.xlu0 %293, %v278
          %v295 = vpop.permute.xlu0 %294
          %298 = vset.pattern.permute.xlu0 0
          %299 = vperm.xlu0 %298, %v279
          %v300 = vpop.permute.xlu0 %299
          %303 = vset.pattern.permute.xlu0 0
          %304 = vperm.xlu0 %303, %v280
          %v305 = vpop.permute.xlu0 %304
          %308 = vset.pattern.permute.xlu0 0
          %309 = vperm.xlu0 %308, %v281
          %v310 = vpop.permute.xlu0 %309
          %vm312 = vcmask 261120
          %v314 = vsel %vm312, %v270, 0
          %v317 = vsel %vm312, %v271, 0
          %v320 = vsel %vm312, %v272, 0
          %v323 = vsel %vm312, %v273, 0
          %v326 = vsel %vm312, %v274, 0
          %v329 = vsel %vm312, %v275, 0
          %331 = vmatprep.subr.mxu0 %v239
          %332 = vmatpush1.msra.mxu0 %v238
          %333 = vmatprep.subr.mxu0 %v247
          %334 = vmatpush1.msra.mxu0 %v246
          %335 = vmatprep.subr.mxu0 %v255
          %336 = vmatpush1.msra.mxu0 %v254
          %337 = vmatprep.subr.mxu0 %v263
          %338 = vmatpush1.msra.mxu0 %v262
          %339 = vmatprep.subr.mxu0 0.0
          %340 = vmatpush1.msra.mxu0 0.0
          %341 = vmatprep.subr.mxu0 0.0
          %342 = vmatpush1.msra.mxu0 0.0
          %343 = vmatprep.subr.mxu0 0.0
          %344 = vmatpush1.msra.mxu0 0.0
          %345 = vmatprep.subr.mxu0 0.0
          %346 = vmatpush1.msra.mxu0 0.0
          %347 = vmatprep.subr.mxu0 0.0
          %348 = vmatpush1.msra.mxu0 0.0
          %349 = vmatprep.subr.mxu0 0.0
          %350 = vmatpush1.msra.mxu0 0.0
          %351 = vmatprep.subr.mxu0 0.0
          %352 = vmatpush1.msra.mxu0 0.0
          %353 = vmatprep.subr.mxu0 0.0
          %354 = vmatpush1.msra.mxu0 0.0
          %355 = vmatprep.subr.mxu0 0.0
          %356 = vmatpush1.msra.mxu0 0.0
          %357 = vmatprep.subr.mxu0 0.0
          %358 = vmatpush1.msra.mxu0 0.0
          %359 = vmatprep.subr.mxu0 0.0
          %360 = vmatpush1.msra.mxu0 0.0
          %361 = vmatprep.subr.mxu0 0.0
          %362 = vmatpush1.msra.mxu0 0.0
          %363 = vmatprep.subr.mxu0 0.0
          %364 = vmatpush1.msra.mxu0 0.0
          %365 = vmatprep.subr.mxu0 0.0
          %366 = vmatpush1.msra.mxu0 0.0
          %367 = vmatprep.subr.mxu0 0.0
          %368 = vmatpush1.msra.mxu0 0.0
          %369 = vmatprep.subr.mxu0 0.0
          %370 = vmatpush1.msra.mxu0 0.0
          %371 = vmatprep.subr.mxu0 0.0
          %372 = vmatpush1.msra.mxu0 0.0
          %373 = vmatprep.subr.mxu0 0.0
          %374 = vmatpush1.msra.mxu0 0.0
          %375 = vmatprep.subr.mxu0 0.0
          %376 = vmatpush1.msra.mxu0 0.0
          %377 = vmatprep.subr.mxu0 0.0
          %378 = vmatpush1.msra.mxu0 0.0
          %379 = vmatprep.subr.mxu0 0.0
          %380 = vmatpush1.msra.mxu0 0.0
          %381 = vmatprep.subr.mxu0 0.0
          %382 = vmatpush1.msra.mxu0 0.0
          %383 = vmatprep.subr.mxu0 0.0
          %384 = vmatpush1.msra.mxu0 0.0
          %385 = vmatprep.subr.mxu0 0.0
          %386 = vmatpush1.msra.mxu0 0.0
          %387 = vmatprep.subr.mxu0 0.0
          %388 = vmatpush1.msra.mxu0 0.0
          %389 = vmatprep.subr.mxu0 0.0
          %390 = vmatpush1.msra.mxu0 0.0
          %391 = vmatprep.subr.mxu0 0.0
          %392 = vmatpush1.msra.mxu0 0.0
          %393 = vmatprep.subr.mxu0 0.0
          %394 = vmatpush1.msra.mxu0 0.0
          %395 = vmatprep.mubr.f32.mxu0 0.0
          %396 = vmatmul.mubr.f32.gmra.mrb[0].mxu0 %v314
          %v397 = vpop.f32.mrb[0].mxu0
          %v398 = vadd.f32 %v285, %v397
          %v399 = vpop.f32.mrb[0].mxu0
          %v400 = vadd.f32 %v285, %v399
          %401 = vmatprep.mubr.f32.mxu0 0.0
          %402 = vmatmul.mubr.f32.gmra.mrb[0].mxu0 %v317
          %v403 = vpop.f32.mrb[0].mxu0
          %v404 = vadd.f32 %v290, %v403
          %v405 = vpop.f32.mrb[0].mxu0
          %v406 = vadd.f32 %v290, %v405
          %407 = vmatprep.mubr.f32.mxu0 0.0
          %408 = vmatmul.mubr.f32.gmra.mrb[0].mxu0 %v320
          %v409 = vpop.f32.mrb[0].mxu0
          %v410 = vadd.f32 %v295, %v409
          %v411 = vpop.f32.mrb[0].mxu0
          %v412 = vadd.f32 %v295, %v411
          %413 = vmatprep.mubr.f32.mxu0 0.0
          %414 = vmatmul.mubr.f32.gmra.mrb[0].mxu0 %v323
          %v415 = vpop.f32.mrb[0].mxu0
          %v416 = vadd.f32 %v300, %v415
          %v417 = vpop.f32.mrb[0].mxu0
          %v418 = vadd.f32 %v300, %v417
          %419 = vmatprep.mubr.f32.mxu0 0.0
          %420 = vmatmul.mubr.f32.gmra.mrb[0].mxu0 %v326
          %v421 = vpop.f32.mrb[0].mxu0
          %v422 = vadd.f32 %v305, %v421
          %v423 = vpop.f32.mrb[0].mxu0
          %v424 = vadd.f32 %v305, %v423
          %425 = vmatprep.mubr.f32.mxu0 0.0
          %426 = vmatmul.mubr.f32.gmra.mrb[0].mxu0 %v329
          %v427 = vpop.f32.mrb[0].mxu0
          %v428 = vadd.f32 %v310, %v427
          %v429 = vpop.f32.mrb[0].mxu0
          %v430 = vadd.f32 %v310, %v429
          %431 = vdwg.mxu0
          %432 = vmatprep.subr.mxu0 %v241
          %433 = vmatpush1.msra.mxu0 %v240
          %434 = vmatprep.subr.mxu0 %v249
          %435 = vmatpush1.msra.mxu0 %v248
          %436 = vmatprep.subr.mxu0 %v257
          %437 = vmatpush1.msra.mxu0 %v256
          %438 = vmatprep.subr.mxu0 %v265
          %439 = vmatpush1.msra.mxu0 %v264
          %440 = vmatprep.subr.mxu0 0.0
          %441 = vmatpush1.msra.mxu0 0.0
          %442 = vmatprep.subr.mxu0 0.0
          %443 = vmatpush1.msra.mxu0 0.0
          %444 = vmatprep.subr.mxu0 0.0
          %445 = vmatpush1.msra.mxu0 0.0
          %446 = vmatprep.subr.mxu0 0.0
          %447 = vmatpush1.msra.mxu0 0.0
          %448 = vmatprep.subr.mxu0 0.0
          %449 = vmatpush1.msra.mxu0 0.0
          %450 = vmatprep.subr.mxu0 0.0
          %451 = vmatpush1.msra.mxu0 0.0
          %452 = vmatprep.subr.mxu0 0.0
          %453 = vmatpush1.msra.mxu0 0.0
          %454 = vmatprep.subr.mxu0 0.0
          %455 = vmatpush1.msra.mxu0 0.0
          %456 = vmatprep.subr.mxu0 0.0
          %457 = vmatpush1.msra.mxu0 0.0
          %458 = vmatprep.subr.mxu0 0.0
          %459 = vmatpush1.msra.mxu0 0.0
          %460 = vmatprep.subr.mxu0 0.0
          %461 = vmatpush1.msra.mxu0 0.0
          %462 = vmatprep.subr.mxu0 0.0
          %463 = vmatpush1.msra.mxu0 0.0
          %464 = vmatprep.subr.mxu0 0.0
          %465 = vmatpush1.msra.mxu0 0.0
          %466 = vmatprep.subr.mxu0 0.0
          %467 = vmatpush1.msra.mxu0 0.0
          %468 = vmatprep.subr.mxu0 0.0
          %469 = vmatpush1.msra.mxu0 0.0
          %470 = vmatprep.subr.mxu0 0.0
          %471 = vmatpush1.msra.mxu0 0.0
          %472 = vmatprep.subr.mxu0 0.0
          %473 = vmatpush1.msra.mxu0 0.0
          %474 = vmatprep.subr.mxu0 0.0
          %475 = vmatpush1.msra.mxu0 0.0
          %476 = vmatprep.subr.mxu0 0.0
          %477 = vmatpush1.msra.mxu0 0.0
          %478 = vmatprep.subr.mxu0 0.0
          %479 = vmatpush1.msra.mxu0 0.0
          %480 = vmatprep.subr.mxu0 0.0
          %481 = vmatpush1.msra.mxu0 0.0
          %482 = vmatprep.subr.mxu0 0.0
          %483 = vmatpush1.msra.mxu0 0.0
          %484 = vmatprep.subr.mxu0 0.0
          %485 = vmatpush1.msra.mxu0 0.0
          %486 = vmatprep.subr.mxu0 0.0
          %487 = vmatpush1.msra.mxu0 0.0
          %488 = vmatprep.subr.mxu0 0.0
          %489 = vmatpush1.msra.mxu0 0.0
          %490 = vmatprep.subr.mxu0 0.0
          %491 = vmatpush1.msra.mxu0 0.0
          %492 = vmatprep.subr.mxu0 0.0
          %493 = vmatpush1.msra.mxu0 0.0
          %494 = vmatprep.subr.mxu0 0.0
          %495 = vmatpush1.msra.mxu0 0.0
          %496 = vmatprep.mubr.f32.mxu0 0.0
          %497 = vmatmul.mubr.f32.gmra.mrb[0].mxu0 %v314
          %v498 = vpop.f32.mrb[0].mxu0
          %v499 = vadd.f32 %v285, %v498
          %v500 = vpop.f32.mrb[0].mxu0
          %v501 = vadd.f32 %v285, %v500
          %502 = vmatprep.mubr.f32.mxu0 0.0
          %503 = vmatmul.mubr.f32.gmra.mrb[0].mxu0 %v317
          %v504 = vpop.f32.mrb[0].mxu0
          %v505 = vadd.f32 %v290, %v504
          %v506 = vpop.f32.mrb[0].mxu0
          %v507 = vadd.f32 %v290, %v506
          %508 = vmatprep.mubr.f32.mxu0 0.0
          %509 = vmatmul.mubr.f32.gmra.mrb[0].mxu0 %v320
          %v510 = vpop.f32.mrb[0].mxu0
          %v511 = vadd.f32 %v295, %v510
          %v512 = vpop.f32.mrb[0].mxu0
          %v513 = vadd.f32 %v295, %v512
          %514 = vmatprep.mubr.f32.mxu0 0.0
          %515 = vmatmul.mubr.f32.gmra.mrb[0].mxu0 %v323
          %v516 = vpop.f32.mrb[0].mxu0
          %v517 = vadd.f32 %v300, %v516
          %v518 = vpop.f32.mrb[0].mxu0
          %v519 = vadd.f32 %v300, %v518
          %520 = vmatprep.mubr.f32.mxu0 0.0
          %521 = vmatmul.mubr.f32.gmra.mrb[0].mxu0 %v326
          %v522 = vpop.f32.mrb[0].mxu0
          %v523 = vadd.f32 %v305, %v522
          %v524 = vpop.f32.mrb[0].mxu0
          %v525 = vadd.f32 %v305, %v524
          %526 = vmatprep.mubr.f32.mxu0 0.0
          %527 = vmatmul.mubr.f32.gmra.mrb[0].mxu0 %v329
          %v528 = vpop.f32.mrb[0].mxu0
          %v529 = vadd.f32 %v310, %v528
          %v530 = vpop.f32.mrb[0].mxu0
          %v531 = vadd.f32 %v310, %v530
          %532 = vdwg.mxu0
          %533 = vmatprep.subr.mxu0 %v243
          %534 = vmatpush1.msra.mxu0 %v242
          %535 = vmatprep.subr.mxu0 %v251
          %536 = vmatpush1.msra.mxu0 %v250
          %537 = vmatprep.subr.mxu0 %v259
          %538 = vmatpush1.msra.mxu0 %v258
          %539 = vmatprep.subr.mxu0 %v267
          %540 = vmatpush1.msra.mxu0 %v266
          %541 = vmatprep.subr.mxu0 0.0
          %542 = vmatpush1.msra.mxu0 0.0
          %543 = vmatprep.subr.mxu0 0.0
          %544 = vmatpush1.msra.mxu0 0.0
          %545 = vmatprep.subr.mxu0 0.0
          %546 = vmatpush1.msra.mxu0 0.0
          %547 = vmatprep.subr.mxu0 0.0
          %548 = vmatpush1.msra.mxu0 0.0
          %549 = vmatprep.subr.mxu0 0.0
          %550 = vmatpush1.msra.mxu0 0.0
          %551 = vmatprep.subr.mxu0 0.0
          %552 = vmatpush1.msra.mxu0 0.0
          %553 = vmatprep.subr.mxu0 0.0
          %554 = vmatpush1.msra.mxu0 0.0
          %555 = vmatprep.subr.mxu0 0.0
          %556 = vmatpush1.msra.mxu0 0.0
          %557 = vmatprep.subr.mxu0 0.0
          %558 = vmatpush1.msra.mxu0 0.0
          %559 = vmatprep.subr.mxu0 0.0
          %560 = vmatpush1.msra.mxu0 0.0
          %561 = vmatprep.subr.mxu0 0.0
          %562 = vmatpush1.msra.mxu0 0.0
          %563 = vmatprep.subr.mxu0 0.0
          %564 = vmatpush1.msra.mxu0 0.0
          %565 = vmatprep.subr.mxu0 0.0
          %566 = vmatpush1.msra.mxu0 0.0
          %567 = vmatprep.subr.mxu0 0.0
          %568 = vmatpush1.msra.mxu0 0.0
          %569 = vmatprep.subr.mxu0 0.0
          %570 = vmatpush1.msra.mxu0 0.0
          %571 = vmatprep.subr.mxu0 0.0
          %572 = vmatpush1.msra.mxu0 0.0
          %573 = vmatprep.subr.mxu0 0.0
          %574 = vmatpush1.msra.mxu0 0.0
          %575 = vmatprep.subr.mxu0 0.0
          %576 = vmatpush1.msra.mxu0 0.0
          %577 = vmatprep.subr.mxu0 0.0
          %578 = vmatpush1.msra.mxu0 0.0
          %579 = vmatprep.subr.mxu0 0.0
          %580 = vmatpush1.msra.mxu0 0.0
          %581 = vmatprep.subr.mxu0 0.0
          %582 = vmatpush1.msra.mxu0 0.0
          %583 = vmatprep.subr.mxu0 0.0
          %584 = vmatpush1.msra.mxu0 0.0
          %585 = vmatprep.subr.mxu0 0.0
          %586 = vmatpush1.msra.mxu0 0.0
          %587 = vmatprep.subr.mxu0 0.0
          %588 = vmatpush1.msra.mxu0 0.0
          %589 = vmatprep.subr.mxu0 0.0
          %590 = vmatpush1.msra.mxu0 0.0
          %591 = vmatprep.subr.mxu0 0.0
          %592 = vmatpush1.msra.mxu0 0.0
          %593 = vmatprep.subr.mxu0 0.0
          %594 = vmatpush1.msra.mxu0 0.0
          %595 = vmatprep.subr.mxu0 0.0
          %596 = vmatpush1.msra.mxu0 0.0
          %597 = vmatprep.mubr.f32.mxu0 0.0
          %598 = vmatmul.mubr.f32.gmra.mrb[0].mxu0 %v314
          %v599 = vpop.f32.mrb[0].mxu0
          %v600 = vadd.f32 %v285, %v599
          %v601 = vpop.f32.mrb[0].mxu0
          %v602 = vadd.f32 %v285, %v601
          %603 = vmatprep.mubr.f32.mxu0 0.0
          %604 = vmatmul.mubr.f32.gmra.mrb[0].mxu0 %v317
          %v605 = vpop.f32.mrb[0].mxu0
          %v606 = vadd.f32 %v290, %v605
          %v607 = vpop.f32.mrb[0].mxu0
          %v608 = vadd.f32 %v290, %v607
          %609 = vmatprep.mubr.f32.mxu0 0.0
          %610 = vmatmul.mubr.f32.gmra.mrb[0].mxu0 %v320
          %v611 = vpop.f32.mrb[0].mxu0
          %v612 = vadd.f32 %v295, %v611
          %v613 = vpop.f32.mrb[0].mxu0
          %v614 = vadd.f32 %v295, %v613
          %615 = vmatprep.mubr.f32.mxu0 0.0
          %616 = vmatmul.mubr.f32.gmra.mrb[0].mxu0 %v323
          %v617 = vpop.f32.mrb[0].mxu0
          %v618 = vadd.f32 %v300, %v617
          %v619 = vpop.f32.mrb[0].mxu0
          %v620 = vadd.f32 %v300, %v619
          %621 = vmatprep.mubr.f32.mxu0 0.0
          %622 = vmatmul.mubr.f32.gmra.mrb[0].mxu0 %v326
          %v623 = vpop.f32.mrb[0].mxu0
          %v624 = vadd.f32 %v305, %v623
          %v625 = vpop.f32.mrb[0].mxu0
          %v626 = vadd.f32 %v305, %v625
          %627 = vmatprep.mubr.f32.mxu0 0.0
          %628 = vmatmul.mubr.f32.gmra.mrb[0].mxu0 %v329
          %v629 = vpop.f32.mrb[0].mxu0
          %v630 = vadd.f32 %v310, %v629
          %v631 = vpop.f32.mrb[0].mxu0
          %v632 = vadd.f32 %v310, %v631
          %633 = vdwg.mxu0
          %634 = vmatprep.subr.mxu0 %v245
          %635 = vmatpush1.msra.mxu0 %v244
          %636 = vmatprep.subr.mxu0 %v253
          %637 = vmatpush1.msra.mxu0 %v252
          %638 = vmatprep.subr.mxu0 %v261
          %639 = vmatpush1.msra.mxu0 %v260
          %640 = vmatprep.subr.mxu0 %v269
          %641 = vmatpush1.msra.mxu0 %v268
          %642 = vmatprep.subr.mxu0 0.0
          %643 = vmatpush1.msra.mxu0 0.0
          %644 = vmatprep.subr.mxu0 0.0
          %645 = vmatpush1.msra.mxu0 0.0
          %646 = vmatprep.subr.mxu0 0.0
          %647 = vmatpush1.msra.mxu0 0.0
          %648 = vmatprep.subr.mxu0 0.0
          %649 = vmatpush1.msra.mxu0 0.0
          %650 = vmatprep.subr.mxu0 0.0
          %651 = vmatpush1.msra.mxu0 0.0
          %652 = vmatprep.subr.mxu0 0.0
          %653 = vmatpush1.msra.mxu0 0.0
          %654 = vmatprep.subr.mxu0 0.0
          %655 = vmatpush1.msra.mxu0 0.0
          %656 = vmatprep.subr.mxu0 0.0
          %657 = vmatpush1.msra.mxu0 0.0
          %658 = vmatprep.subr.mxu0 0.0
          %659 = vmatpush1.msra.mxu0 0.0
          %660 = vmatprep.subr.mxu0 0.0
          %661 = vmatpush1.msra.mxu0 0.0
          %662 = vmatprep.subr.mxu0 0.0
          %663 = vmatpush1.msra.mxu0 0.0
          %664 = vmatprep.subr.mxu0 0.0
          %665 = vmatpush1.msra.mxu0 0.0
          %666 = vmatprep.subr.mxu0 0.0
          %667 = vmatpush1.msra.mxu0 0.0
          %668 = vmatprep.subr.mxu0 0.0
          %669 = vmatpush1.msra.mxu0 0.0
          %670 = vmatprep.subr.mxu0 0.0
          %671 = vmatpush1.msra.mxu0 0.0
          %672 = vmatprep.subr.mxu0 0.0
          %673 = vmatpush1.msra.mxu0 0.0
          %674 = vmatprep.subr.mxu0 0.0
          %675 = vmatpush1.msra.mxu0 0.0
          %676 = vmatprep.subr.mxu0 0.0
          %677 = vmatpush1.msra.mxu0 0.0
          %678 = vmatprep.subr.mxu0 0.0
          %679 = vmatpush1.msra.mxu0 0.0
          %680 = vmatprep.subr.mxu0 0.0
          %681 = vmatpush1.msra.mxu0 0.0
          %682 = vmatprep.subr.mxu0 0.0
          %683 = vmatpush1.msra.mxu0 0.0
          %684 = vmatprep.subr.mxu0 0.0
          %685 = vmatpush1.msra.mxu0 0.0
          %686 = vmatprep.subr.mxu0 0.0
          %687 = vmatpush1.msra.mxu0 0.0
          %688 = vmatprep.subr.mxu0 0.0
          %689 = vmatpush1.msra.mxu0 0.0
          %690 = vmatprep.subr.mxu0 0.0
          %691 = vmatpush1.msra.mxu0 0.0
          %692 = vmatprep.subr.mxu0 0.0
          %693 = vmatpush1.msra.mxu0 0.0
          %694 = vmatprep.subr.mxu0 0.0
          %695 = vmatpush1.msra.mxu0 0.0
          %696 = vmatprep.subr.mxu0 0.0
          %697 = vmatpush1.msra.mxu0 0.0
          %698 = vmatprep.mubr.f32.mxu0 0.0
          %699 = vmatmul.mubr.f32.gmra.mrb[0].mxu0 %v314
          %v700 = vpop.f32.mrb[0].mxu0
          %v701 = vadd.f32 %v285, %v700
          %v702 = vpop.f32.mrb[0].mxu0
          %v703 = vadd.f32 %v285, %v702
          %704 = vmatprep.mubr.f32.mxu0 0.0
          %705 = vmatmul.mubr.f32.gmra.mrb[0].mxu0 %v317
          %v706 = vpop.f32.mrb[0].mxu0
          %v707 = vadd.f32 %v290, %v706
          %v708 = vpop.f32.mrb[0].mxu0
          %v709 = vadd.f32 %v290, %v708
          %710 = vmatprep.mubr.f32.mxu0 0.0
          %711 = vmatmul.mubr.f32.gmra.mrb[0].mxu0 %v320
          %v712 = vpop.f32.mrb[0].mxu0
          %v713 = vadd.f32 %v295, %v712
          %v714 = vpop.f32.mrb[0].mxu0
          %v715 = vadd.f32 %v295, %v714
          %716 = vmatprep.mubr.f32.mxu0 0.0
          %717 = vmatmul.mubr.f32.gmra.mrb[0].mxu0 %v323
          %v718 = vpop.f32.mrb[0].mxu0
          %v719 = vadd.f32 %v300, %v718
          %v720 = vpop.f32.mrb[0].mxu0
          %v721 = vadd.f32 %v300, %v720
          %722 = vmatprep.mubr.f32.mxu0 0.0
          %723 = vmatmul.mubr.f32.gmra.mrb[0].mxu0 %v326
          %v724 = vpop.f32.mrb[0].mxu0
          %v725 = vadd.f32 %v305, %v724
          %v726 = vpop.f32.mrb[0].mxu0
          %v727 = vadd.f32 %v305, %v726
          %728 = vmatprep.mubr.f32.mxu0 0.0
          %729 = vmatmul.mubr.f32.gmra.mrb[0].mxu0 %v329
          %v730 = vpop.f32.mrb[0].mxu0
          %v731 = vadd.f32 %v310, %v730
          %v732 = vpop.f32.mrb[0].mxu0
          %v733 = vadd.f32 %v310, %v732
          %734 = vdwg.mxu0
          %735 = vxpose.xlu0.b32.start [1/16] %v398, 128
          %736 = vxpose.xlu0.b32.cont [2/16] %v404, 128
          %737 = vxpose.xlu0.b32.cont [3/16] 0.0, 128
          %738 = vxpose.xlu0.b32.cont [4/16] 0.0, 128
          %739 = vxpose.xlu0.b32.cont [5/16] 0.0, 128
          %740 = vxpose.xlu0.b32.cont [6/16] 0.0, 128
          %741 = vxpose.xlu0.b32.cont [7/16] 0.0, 128
          %742 = vxpose.xlu0.b32.cont [8/16] 0.0, 128
          %743 = vxpose.xlu0.b32.cont [9/16] 0.0, 128
          %744 = vxpose.xlu0.b32.cont [10/16] 0.0, 128
          %745 = vxpose.xlu0.b32.cont [11/16] 0.0, 128
          %746 = vxpose.xlu0.b32.cont [12/16] 0.0, 128
          %747 = vxpose.xlu0.b32.cont [13/16] 0.0, 128
          %748 = vxpose.xlu0.b32.cont [14/16] 0.0, 128
          %749 = vxpose.xlu0.b32.cont [15/16] 0.0, 128
          %750 = vxpose.xlu0.b32.end [16/16] 0.0, 128
          %v751 = vpop.trf.xlu0
          %v752 = vpop.trf.xlu0
          %v753 = vpop.trf.xlu0
          %v754 = vpop.trf.xlu0
          %v755 = vpop.trf.xlu0
          %v756 = vpop.trf.xlu0
          %v757 = vpop.trf.xlu0
          %v758 = vpop.trf.xlu0
          %v759 = vpop.trf.xlu0
          %v760 = vpop.trf.xlu0
          %v761 = vpop.trf.xlu0
          %v762 = vpop.trf.xlu0
          %v763 = vpop.trf.xlu0
          %v764 = vpop.trf.xlu0
          %v765 = vpop.trf.xlu0
          %v766 = vpop.trf.xlu0
          %767 = vxpose.xlu0.b32.start [1/16] %v400, 128
          %768 = vxpose.xlu0.b32.cont [2/16] %v406, 128
          %769 = vxpose.xlu0.b32.cont [3/16] 0.0, 128
          %770 = vxpose.xlu0.b32.cont [4/16] 0.0, 128
          %771 = vxpose.xlu0.b32.cont [5/16] 0.0, 128
          %772 = vxpose.xlu0.b32.cont [6/16] 0.0, 128
          %773 = vxpose.xlu0.b32.cont [7/16] 0.0, 128
          %774 = vxpose.xlu0.b32.cont [8/16] 0.0, 128
          %775 = vxpose.xlu0.b32.cont [9/16] 0.0, 128
          %776 = vxpose.xlu0.b32.cont [10/16] 0.0, 128
          %777 = vxpose.xlu0.b32.cont [11/16] 0.0, 128
          %778 = vxpose.xlu0.b32.cont [12/16] 0.0, 128
          %779 = vxpose.xlu0.b32.cont [13/16] 0.0, 128
          %780 = vxpose.xlu0.b32.cont [14/16] 0.0, 128
          %781 = vxpose.xlu0.b32.cont [15/16] 0.0, 128
          %782 = vxpose.xlu0.b32.end [16/16] 0.0, 128
          %v783 = vpop.trf.xlu0
          %v784 = vpop.trf.xlu0
          %v785 = vpop.trf.xlu0
          %v786 = vpop.trf.xlu0
          %v787 = vpop.trf.xlu0
          %v788 = vpop.trf.xlu0
          %v789 = vpop.trf.xlu0
          %v790 = vpop.trf.xlu0
          %v791 = vpop.trf.xlu0
          %v792 = vpop.trf.xlu0
          %v793 = vpop.trf.xlu0
          %v794 = vpop.trf.xlu0
          %v795 = vpop.trf.xlu0
          %v796 = vpop.trf.xlu0
          %v797 = vpop.trf.xlu0
          %v798 = vpop.trf.xlu0
          %799 = vxpose.xlu0.b32.start [1/16] %v499, 128
          %800 = vxpose.xlu0.b32.cont [2/16] %v505, 128
          %801 = vxpose.xlu0.b32.cont [3/16] 0.0, 128
          %802 = vxpose.xlu0.b32.cont [4/16] 0.0, 128
          %803 = vxpose.xlu0.b32.cont [5/16] 0.0, 128
          %804 = vxpose.xlu0.b32.cont [6/16] 0.0, 128
          %805 = vxpose.xlu0.b32.cont [7/16] 0.0, 128
          %806 = vxpose.xlu0.b32.cont [8/16] 0.0, 128
          %807 = vxpose.xlu0.b32.cont [9/16] 0.0, 128
          %808 = vxpose.xlu0.b32.cont [10/16] 0.0, 128
          %809 = vxpose.xlu0.b32.cont [11/16] 0.0, 128
          %810 = vxpose.xlu0.b32.cont [12/16] 0.0, 128
          %811 = vxpose.xlu0.b32.cont [13/16] 0.0, 128
          %812 = vxpose.xlu0.b32.cont [14/16] 0.0, 128
          %813 = vxpose.xlu0.b32.cont [15/16] 0.0, 128
          %814 = vxpose.xlu0.b32.end [16/16] 0.0, 128
          %v815 = vpop.trf.xlu0
          %v816 = vpop.trf.xlu0
          %v817 = vpop.trf.xlu0
          %v818 = vpop.trf.xlu0
          %v819 = vpop.trf.xlu0
          %v820 = vpop.trf.xlu0
          %v821 = vpop.trf.xlu0
          %v822 = vpop.trf.xlu0
          %v823 = vpop.trf.xlu0
          %v824 = vpop.trf.xlu0
          %v825 = vpop.trf.xlu0
          %v826 = vpop.trf.xlu0
          %v827 = vpop.trf.xlu0
          %v828 = vpop.trf.xlu0
          %v829 = vpop.trf.xlu0
          %v830 = vpop.trf.xlu0
          %831 = vxpose.xlu0.b32.start [1/16] %v501, 128
          %832 = vxpose.xlu0.b32.cont [2/16] %v507, 128
          %833 = vxpose.xlu0.b32.cont [3/16] 0.0, 128
          %834 = vxpose.xlu0.b32.cont [4/16] 0.0, 128
          %835 = vxpose.xlu0.b32.cont [5/16] 0.0, 128
          %836 = vxpose.xlu0.b32.cont [6/16] 0.0, 128
          %837 = vxpose.xlu0.b32.cont [7/16] 0.0, 128
          %838 = vxpose.xlu0.b32.cont [8/16] 0.0, 128
          %839 = vxpose.xlu0.b32.cont [9/16] 0.0, 128
          %840 = vxpose.xlu0.b32.cont [10/16] 0.0, 128
          %841 = vxpose.xlu0.b32.cont [11/16] 0.0, 128
          %842 = vxpose.xlu0.b32.cont [12/16] 0.0, 128
          %843 = vxpose.xlu0.b32.cont [13/16] 0.0, 128
          %844 = vxpose.xlu0.b32.cont [14/16] 0.0, 128
          %845 = vxpose.xlu0.b32.cont [15/16] 0.0, 128
          %846 = vxpose.xlu0.b32.end [16/16] 0.0, 128
          %v847 = vpop.trf.xlu0
          %v848 = vpop.trf.xlu0
          %v849 = vpop.trf.xlu0
          %v850 = vpop.trf.xlu0
          %v851 = vpop.trf.xlu0
          %v852 = vpop.trf.xlu0
          %v853 = vpop.trf.xlu0
          %v854 = vpop.trf.xlu0
          %v855 = vpop.trf.xlu0
          %v856 = vpop.trf.xlu0
          %v857 = vpop.trf.xlu0
          %v858 = vpop.trf.xlu0
          %v859 = vpop.trf.xlu0
          %v860 = vpop.trf.xlu0
          %v861 = vpop.trf.xlu0
          %v862 = vpop.trf.xlu0
          %863 = vxpose.xlu0.b32.start [1/16] %v600, 128
          %864 = vxpose.xlu0.b32.cont [2/16] %v606, 128
          %865 = vxpose.xlu0.b32.cont [3/16] 0.0, 128
          %866 = vxpose.xlu0.b32.cont [4/16] 0.0, 128
          %867 = vxpose.xlu0.b32.cont [5/16] 0.0, 128
          %868 = vxpose.xlu0.b32.cont [6/16] 0.0, 128
          %869 = vxpose.xlu0.b32.cont [7/16] 0.0, 128
          %870 = vxpose.xlu0.b32.cont [8/16] 0.0, 128
          %871 = vxpose.xlu0.b32.cont [9/16] 0.0, 128
          %872 = vxpose.xlu0.b32.cont [10/16] 0.0, 128
          %873 = vxpose.xlu0.b32.cont [11/16] 0.0, 128
          %874 = vxpose.xlu0.b32.cont [12/16] 0.0, 128
          %875 = vxpose.xlu0.b32.cont [13/16] 0.0, 128
          %876 = vxpose.xlu0.b32.cont [14/16] 0.0, 128
          %877 = vxpose.xlu0.b32.cont [15/16] 0.0, 128
          %878 = vxpose.xlu0.b32.end [16/16] 0.0, 128
          %v879 = vpop.trf.xlu0
          %v880 = vpop.trf.xlu0
          %v881 = vpop.trf.xlu0
          %v882 = vpop.trf.xlu0
          %v883 = vpop.trf.xlu0
          %v884 = vpop.trf.xlu0
          %v885 = vpop.trf.xlu0
          %v886 = vpop.trf.xlu0
          %v887 = vpop.trf.xlu0
          %v888 = vpop.trf.xlu0
          %v889 = vpop.trf.xlu0
          %v890 = vpop.trf.xlu0
          %v891 = vpop.trf.xlu0
          %v892 = vpop.trf.xlu0
          %v893 = vpop.trf.xlu0
          %v894 = vpop.trf.xlu0
          %895 = vxpose.xlu0.b32.start [1/16] %v602, 128
          %896 = vxpose.xlu0.b32.cont [2/16] %v608, 128
          %897 = vxpose.xlu0.b32.cont [3/16] 0.0, 128
          %898 = vxpose.xlu0.b32.cont [4/16] 0.0, 128
          %899 = vxpose.xlu0.b32.cont [5/16] 0.0, 128
          %900 = vxpose.xlu0.b32.cont [6/16] 0.0, 128
          %901 = vxpose.xlu0.b32.cont [7/16] 0.0, 128
          %902 = vxpose.xlu0.b32.cont [8/16] 0.0, 128
          %903 = vxpose.xlu0.b32.cont [9/16] 0.0, 128
          %904 = vxpose.xlu0.b32.cont [10/16] 0.0, 128
          %905 = vxpose.xlu0.b32.cont [11/16] 0.0, 128
          %906 = vxpose.xlu0.b32.cont [12/16] 0.0, 128
          %907 = vxpose.xlu0.b32.cont [13/16] 0.0, 128
          %908 = vxpose.xlu0.b32.cont [14/16] 0.0, 128
          %909 = vxpose.xlu0.b32.cont [15/16] 0.0, 128
          %910 = vxpose.xlu0.b32.end [16/16] 0.0, 128
          %v911 = vpop.trf.xlu0
          %v912 = vpop.trf.xlu0
          %v913 = vpop.trf.xlu0
          %v914 = vpop.trf.xlu0
          %v915 = vpop.trf.xlu0
          %v916 = vpop.trf.xlu0
          %v917 = vpop.trf.xlu0
          %v918 = vpop.trf.xlu0
          %v919 = vpop.trf.xlu0
          %v920 = vpop.trf.xlu0
          %v921 = vpop.trf.xlu0
          %v922 = vpop.trf.xlu0
          %v923 = vpop.trf.xlu0
          %v924 = vpop.trf.xlu0
          %v925 = vpop.trf.xlu0
          %v926 = vpop.trf.xlu0
          %927 = vxpose.xlu0.b32.start [1/16] %v701, 128
          %928 = vxpose.xlu0.b32.cont [2/16] %v707, 128
          %929 = vxpose.xlu0.b32.cont [3/16] 0.0, 128
          %930 = vxpose.xlu0.b32.cont [4/16] 0.0, 128
          %931 = vxpose.xlu0.b32.cont [5/16] 0.0, 128
          %932 = vxpose.xlu0.b32.cont [6/16] 0.0, 128
          %933 = vxpose.xlu0.b32.cont [7/16] 0.0, 128
          %934 = vxpose.xlu0.b32.cont [8/16] 0.0, 128
          %935 = vxpose.xlu0.b32.cont [9/16] 0.0, 128
          %936 = vxpose.xlu0.b32.cont [10/16] 0.0, 128
          %937 = vxpose.xlu0.b32.cont [11/16] 0.0, 128
          %938 = vxpose.xlu0.b32.cont [12/16] 0.0, 128
          %939 = vxpose.xlu0.b32.cont [13/16] 0.0, 128
          %940 = vxpose.xlu0.b32.cont [14/16] 0.0, 128
          %941 = vxpose.xlu0.b32.cont [15/16] 0.0, 128
          %942 = vxpose.xlu0.b32.end [16/16] 0.0, 128
          %v943 = vpop.trf.xlu0
          %v944 = vpop.trf.xlu0
          %v945 = vpop.trf.xlu0
          %v946 = vpop.trf.xlu0
          %v947 = vpop.trf.xlu0
          %v948 = vpop.trf.xlu0
          %v949 = vpop.trf.xlu0
          %v950 = vpop.trf.xlu0
          %v951 = vpop.trf.xlu0
          %v952 = vpop.trf.xlu0
          %v953 = vpop.trf.xlu0
          %v954 = vpop.trf.xlu0
          %v955 = vpop.trf.xlu0
          %v956 = vpop.trf.xlu0
          %v957 = vpop.trf.xlu0
          %v958 = vpop.trf.xlu0
          %959 = vxpose.xlu0.b32.start [1/16] %v703, 128
          %960 = vxpose.xlu0.b32.cont [2/16] %v709, 128
          %961 = vxpose.xlu0.b32.cont [3/16] 0.0, 128
          %962 = vxpose.xlu0.b32.cont [4/16] 0.0, 128
          %963 = vxpose.xlu0.b32.cont [5/16] 0.0, 128
          %964 = vxpose.xlu0.b32.cont [6/16] 0.0, 128
          %965 = vxpose.xlu0.b32.cont [7/16] 0.0, 128
          %966 = vxpose.xlu0.b32.cont [8/16] 0.0, 128
          %967 = vxpose.xlu0.b32.cont [9/16] 0.0, 128
          %968 = vxpose.xlu0.b32.cont [10/16] 0.0, 128
          %969 = vxpose.xlu0.b32.cont [11/16] 0.0, 128
          %970 = vxpose.xlu0.b32.cont [12/16] 0.0, 128
          %971 = vxpose.xlu0.b32.cont [13/16] 0.0, 128
          %972 = vxpose.xlu0.b32.cont [14/16] 0.0, 128
          %973 = vxpose.xlu0.b32.cont [15/16] 0.0, 128
          %974 = vxpose.xlu0.b32.end [16/16] 0.0, 128
          %v975 = vpop.trf.xlu0
          %v976 = vpop.trf.xlu0
          %v977 = vpop.trf.xlu0
          %v978 = vpop.trf.xlu0
          %v979 = vpop.trf.xlu0
          %v980 = vpop.trf.xlu0
          %v981 = vpop.trf.xlu0
          %v982 = vpop.trf.xlu0
          %v983 = vpop.trf.xlu0
          %v984 = vpop.trf.xlu0
          %v985 = vpop.trf.xlu0
          %v986 = vpop.trf.xlu0
          %v987 = vpop.trf.xlu0
          %v988 = vpop.trf.xlu0
          %v989 = vpop.trf.xlu0
          %v990 = vpop.trf.xlu0
          %vm991 = vcmask 130048
          %992 = vst.msk [vmem:[#allocation2] sm:$0xff] %vm991, %v751
          %993 = vst.msk [vmem:[#allocation2 + $0x8] sm:$0xff] %vm991, %v752
          %994 = vst.msk [vmem:[#allocation2 + $0x10] sm:$0xff] %vm991, %v753
          %995 = vst.msk [vmem:[#allocation2 + $0x18] sm:$0xff] %vm991, %v754
          %996 = vst.msk [vmem:[#allocation2 + $0x20] sm:$0xff] %vm991, %v755
          %997 = vst.msk [vmem:[#allocation2 + $0x28] sm:$0xff] %vm991, %v756
          %998 = vst.msk [vmem:[#allocation2 + $0x30] sm:$0xff] %vm991, %v757
          %999 = vst.msk [vmem:[#allocation2 + $0x38] sm:$0xff] %vm991, %v758
          %1000 = vst.msk [vmem:[#allocation2 + $0x40] sm:$0xff] %vm991, %v759
          %1001 = vst.msk [vmem:[#allocation2 + $0x48] sm:$0xff] %vm991, %v760
          %1002 = vst.msk [vmem:[#allocation2 + $0x50] sm:$0xff] %vm991, %v761
          %1003 = vst.msk [vmem:[#allocation2 + $0x58] sm:$0xff] %vm991, %v762
          %1004 = vst.msk [vmem:[#allocation2 + $0x60] sm:$0xff] %vm991, %v763
          %1005 = vst.msk [vmem:[#allocation2 + $0x68] sm:$0xff] %vm991, %v764
          %1006 = vst.msk [vmem:[#allocation2 + $0x70] sm:$0xff] %vm991, %v765
          %1007 = vst.msk [vmem:[#allocation2 + $0x78] sm:$0xff] %vm991, %v766
          %1008 = vst.msk [vmem:[#allocation2 + $0x80] sm:$0xff] %vm991, %v783
          %1009 = vst.msk [vmem:[#allocation2 + $0x88] sm:$0xff] %vm991, %v784
          %1010 = vst.msk [vmem:[#allocation2 + $0x90] sm:$0xff] %vm991, %v785
          %1011 = vst.msk [vmem:[#allocation2 + $0x98] sm:$0xff] %vm991, %v786
          %1012 = vst.msk [vmem:[#allocation2 + $0xa0] sm:$0xff] %vm991, %v787
          %1013 = vst.msk [vmem:[#allocation2 + $0xa8] sm:$0xff] %vm991, %v788
          %1014 = vst.msk [vmem:[#allocation2 + $0xb0] sm:$0xff] %vm991, %v789
          %1015 = vst.msk [vmem:[#allocation2 + $0xb8] sm:$0xff] %vm991, %v790
          %1016 = vst.msk [vmem:[#allocation2 + $0xc0] sm:$0xff] %vm991, %v791
          %1017 = vst.msk [vmem:[#allocation2 + $0xc8] sm:$0xff] %vm991, %v792
          %1018 = vst.msk [vmem:[#allocation2 + $0xd0] sm:$0xff] %vm991, %v793
          %1019 = vst.msk [vmem:[#allocation2 + $0xd8] sm:$0xff] %vm991, %v794
          %1020 = vst.msk [vmem:[#allocation2 + $0xe0] sm:$0xff] %vm991, %v795
          %1021 = vst.msk [vmem:[#allocation2 + $0xe8] sm:$0xff] %vm991, %v796
          %1022 = vst.msk [vmem:[#allocation2 + $0xf0] sm:$0xff] %vm991, %v797
          %1023 = vst.msk [vmem:[#allocation2 + $0xf8] sm:$0xff] %vm991, %v798
          %1024 = vst.msk [vmem:[#allocation2 + $0x100] sm:$0xff] %vm991, %v815
          %1025 = vst.msk [vmem:[#allocation2 + $0x108] sm:$0xff] %vm991, %v816
          %1026 = vst.msk [vmem:[#allocation2 + $0x110] sm:$0xff] %vm991, %v817
          %1027 = vst.msk [vmem:[#allocation2 + $0x118] sm:$0xff] %vm991, %v818
          %1028 = vst.msk [vmem:[#allocation2 + $0x120] sm:$0xff] %vm991, %v819
          %1029 = vst.msk [vmem:[#allocation2 + $0x128] sm:$0xff] %vm991, %v820
          %1030 = vst.msk [vmem:[#allocation2 + $0x130] sm:$0xff] %vm991, %v821
          %1031 = vst.msk [vmem:[#allocation2 + $0x138] sm:$0xff] %vm991, %v822
          %1032 = vst.msk [vmem:[#allocation2 + $0x140] sm:$0xff] %vm991, %v823
          %1033 = vst.msk [vmem:[#allocation2 + $0x148] sm:$0xff] %vm991, %v824
          %1034 = vst.msk [vmem:[#allocation2 + $0x150] sm:$0xff] %vm991, %v825
          %1035 = vst.msk [vmem:[#allocation2 + $0x158] sm:$0xff] %vm991, %v826
          %1036 = vst.msk [vmem:[#allocation2 + $0x160] sm:$0xff] %vm991, %v827
          %1037 = vst.msk [vmem:[#allocation2 + $0x168] sm:$0xff] %vm991, %v828
          %1038 = vst.msk [vmem:[#allocation2 + $0x170] sm:$0xff] %vm991, %v829
          %1039 = vst.msk [vmem:[#allocation2 + $0x178] sm:$0xff] %vm991, %v830
          %1040 = vst.msk [vmem:[#allocation2 + $0x180] sm:$0xff] %vm991, %v847
          %1041 = vst.msk [vmem:[#allocation2 + $0x188] sm:$0xff] %vm991, %v848
          %1042 = vst.msk [vmem:[#allocation2 + $0x190] sm:$0xff] %vm991, %v849
          %1043 = vst.msk [vmem:[#allocation2 + $0x198] sm:$0xff] %vm991, %v850
          %1044 = vst.msk [vmem:[#allocation2 + $0x1a0] sm:$0xff] %vm991, %v851
          %1045 = vst.msk [vmem:[#allocation2 + $0x1a8] sm:$0xff] %vm991, %v852
          %1046 = vst.msk [vmem:[#allocation2 + $0x1b0] sm:$0xff] %vm991, %v853
          %1047 = vst.msk [vmem:[#allocation2 + $0x1b8] sm:$0xff] %vm991, %v854
          %1048 = vst.msk [vmem:[#allocation2 + $0x1c0] sm:$0xff] %vm991, %v855
          %1049 = vst.msk [vmem:[#allocation2 + $0x1c8] sm:$0xff] %vm991, %v856
          %1050 = vst.msk [vmem:[#allocation2 + $0x1d0] sm:$0xff] %vm991, %v857
          %1051 = vst.msk [vmem:[#allocation2 + $0x1d8] sm:$0xff] %vm991, %v858
          %1052 = vst.msk [vmem:[#allocation2 + $0x1e0] sm:$0xff] %vm991, %v859
          %1053 = vst.msk [vmem:[#allocation2 + $0x1e8] sm:$0xff] %vm991, %v860
          %1054 = vst.msk [vmem:[#allocation2 + $0x1f0] sm:$0xff] %vm991, %v861
          %1055 = vst.msk [vmem:[#allocation2 + $0x1f8] sm:$0xff] %vm991, %v862
          %1056 = vst.msk [vmem:[#allocation2 + $0x200] sm:$0xff] %vm991, %v879
          %1057 = vst.msk [vmem:[#allocation2 + $0x208] sm:$0xff] %vm991, %v880
          %1058 = vst.msk [vmem:[#allocation2 + $0x210] sm:$0xff] %vm991, %v881
          %1059 = vst.msk [vmem:[#allocation2 + $0x218] sm:$0xff] %vm991, %v882
          %1060 = vst.msk [vmem:[#allocation2 + $0x220] sm:$0xff] %vm991, %v883
          %1061 = vst.msk [vmem:[#allocation2 + $0x228] sm:$0xff] %vm991, %v884
          %1062 = vst.msk [vmem:[#allocation2 + $0x230] sm:$0xff] %vm991, %v885
          %1063 = vst.msk [vmem:[#allocation2 + $0x238] sm:$0xff] %vm991, %v886
          %1064 = vst.msk [vmem:[#allocation2 + $0x240] sm:$0xff] %vm991, %v887
          %1065 = vst.msk [vmem:[#allocation2 + $0x248] sm:$0xff] %vm991, %v888
          %1066 = vst.msk [vmem:[#allocation2 + $0x250] sm:$0xff] %vm991, %v889
          %1067 = vst.msk [vmem:[#allocation2 + $0x258] sm:$0xff] %vm991, %v890
          %1068 = vst.msk [vmem:[#allocation2 + $0x260] sm:$0xff] %vm991, %v891
          %1069 = vst.msk [vmem:[#allocation2 + $0x268] sm:$0xff] %vm991, %v892
          %1070 = vst.msk [vmem:[#allocation2 + $0x270] sm:$0xff] %vm991, %v893
          %1071 = vst.msk [vmem:[#allocation2 + $0x278] sm:$0xff] %vm991, %v894
          %1072 = vst.msk [vmem:[#allocation2 + $0x280] sm:$0xff] %vm991, %v911
          %1073 = vst.msk [vmem:[#allocation2 + $0x288] sm:$0xff] %vm991, %v912
          %1074 = vst.msk [vmem:[#allocation2 + $0x290] sm:$0xff] %vm991, %v913
          %1075 = vst.msk [vmem:[#allocation2 + $0x298] sm:$0xff] %vm991, %v914
          %1076 = vst.msk [vmem:[#allocation2 + $0x2a0] sm:$0xff] %vm991, %v915
          %1077 = vst.msk [vmem:[#allocation2 + $0x2a8] sm:$0xff] %vm991, %v916
          %1078 = vst.msk [vmem:[#allocation2 + $0x2b0] sm:$0xff] %vm991, %v917
          %1079 = vst.msk [vmem:[#allocation2 + $0x2b8] sm:$0xff] %vm991, %v918
          %1080 = vst.msk [vmem:[#allocation2 + $0x2c0] sm:$0xff] %vm991, %v919
          %1081 = vst.msk [vmem:[#allocation2 + $0x2c8] sm:$0xff] %vm991, %v920
          %1082 = vst.msk [vmem:[#allocation2 + $0x2d0] sm:$0xff] %vm991, %v921
          %1083 = vst.msk [vmem:[#allocation2 + $0x2d8] sm:$0xff] %vm991, %v922
          %1084 = vst.msk [vmem:[#allocation2 + $0x2e0] sm:$0xff] %vm991, %v923
          %1085 = vst.msk [vmem:[#allocation2 + $0x2e8] sm:$0xff] %vm991, %v924
          %1086 = vst.msk [vmem:[#allocation2 + $0x2f0] sm:$0xff] %vm991, %v925
          %1087 = vst.msk [vmem:[#allocation2 + $0x2f8] sm:$0xff] %vm991, %v926
          %1088 = vst.msk [vmem:[#allocation2 + $0x300] sm:$0xff] %vm991, %v943
          %1089 = vst.msk [vmem:[#allocation2 + $0x308] sm:$0xff] %vm991, %v944
          %1090 = vst.msk [vmem:[#allocation2 + $0x310] sm:$0xff] %vm991, %v945
          %1091 = vst.msk [vmem:[#allocation2 + $0x318] sm:$0xff] %vm991, %v946
          %1092 = vst.msk [vmem:[#allocation2 + $0x320] sm:$0xff] %vm991, %v947
          %1093 = vst.msk [vmem:[#allocation2 + $0x328] sm:$0xff] %vm991, %v948
          %1094 = vst.msk [vmem:[#allocation2 + $0x330] sm:$0xff] %vm991, %v949
          %1095 = vst.msk [vmem:[#allocation2 + $0x338] sm:$0xff] %vm991, %v950
          %1096 = vst.msk [vmem:[#allocation2 + $0x340] sm:$0xff] %vm991, %v951
          %1097 = vst.msk [vmem:[#allocation2 + $0x348] sm:$0xff] %vm991, %v952
          %1098 = vst.msk [vmem:[#allocation2 + $0x350] sm:$0xff] %vm991, %v953
          %1099 = vst.msk [vmem:[#allocation2 + $0x358] sm:$0xff] %vm991, %v954
          %1100 = vst.msk [vmem:[#allocation2 + $0x360] sm:$0xff] %vm991, %v955
          %1101 = vst.msk [vmem:[#allocation2 + $0x368] sm:$0xff] %vm991, %v956
          %1102 = vst.msk [vmem:[#allocation2 + $0x370] sm:$0xff] %vm991, %v957
          %1103 = vst.msk [vmem:[#allocation2 + $0x378] sm:$0xff] %vm991, %v958
          %1104 = vst.msk [vmem:[#allocation2 + $0x380] sm:$0xff] %vm991, %v975
          %1105 = vst.msk [vmem:[#allocation2 + $0x388] sm:$0xff] %vm991, %v976
          %1106 = vst.msk [vmem:[#allocation2 + $0x390] sm:$0xff] %vm991, %v977
          %1107 = vst.msk [vmem:[#allocation2 + $0x398] sm:$0xff] %vm991, %v978
          %1108 = vst.msk [vmem:[#allocation2 + $0x3a0] sm:$0xff] %vm991, %v979
          %1109 = vst.msk [vmem:[#allocation2 + $0x3a8] sm:$0xff] %vm991, %v980
          %1110 = vst.msk [vmem:[#allocation2 + $0x3b0] sm:$0xff] %vm991, %v981
          %1111 = vst.msk [vmem:[#allocation2 + $0x3b8] sm:$0xff] %vm991, %v982
          %1112 = vst.msk [vmem:[#allocation2 + $0x3c0] sm:$0xff] %vm991, %v983
          %1113 = vst.msk [vmem:[#allocation2 + $0x3c8] sm:$0xff] %vm991, %v984
          %1114 = vst.msk [vmem:[#allocation2 + $0x3d0] sm:$0xff] %vm991, %v985
          %1115 = vst.msk [vmem:[#allocation2 + $0x3d8] sm:$0xff] %vm991, %v986
          %1116 = vst.msk [vmem:[#allocation2 + $0x3e0] sm:$0xff] %vm991, %v987
          %1117 = vst.msk [vmem:[#allocation2 + $0x3e8] sm:$0xff] %vm991, %v988
          %1118 = vst.msk [vmem:[#allocation2 + $0x3f0] sm:$0xff] %vm991, %v989
          %1119 = vst.msk [vmem:[#allocation2 + $0x3f8] sm:$0xff] %vm991, %v990
          %1120 = vst [vmem:[#allocation3] sm:$0xff] %v410
          %1121 = vst [vmem:[#allocation3 + $0x8] sm:$0xff] %v412
          %1122 = vst [vmem:[#allocation3 + $0x10] sm:$0xff] %v511
          %1123 = vst [vmem:[#allocation3 + $0x18] sm:$0xff] %v513
          %1124 = vst [vmem:[#allocation3 + $0x20] sm:$0xff] %v612
          %1125 = vst [vmem:[#allocation3 + $0x28] sm:$0xff] %v614
          %1126 = vst [vmem:[#allocation3 + $0x30] sm:$0xff] %v713
          %1127 = vst [vmem:[#allocation3 + $0x38] sm:$0xff] %v715
          %1128 = vst [vmem:[#allocation3 + $0x40] sm:$0xff] %v416
          %1129 = vst [vmem:[#allocation3 + $0x48] sm:$0xff] %v418
          %1130 = vst [vmem:[#allocation3 + $0x50] sm:$0xff] %v517
          %1131 = vst [vmem:[#allocation3 + $0x58] sm:$0xff] %v519
          %1132 = vst [vmem:[#allocation3 + $0x60] sm:$0xff] %v618
          %1133 = vst [vmem:[#allocation3 + $0x68] sm:$0xff] %v620
          %1134 = vst [vmem:[#allocation3 + $0x70] sm:$0xff] %v719
          %1135 = vst [vmem:[#allocation3 + $0x78] sm:$0xff] %v721
          %1136 = vst [vmem:[#allocation4] sm:$0xff] %v422
          %1137 = vst [vmem:[#allocation4 + $0x8] sm:$0xff] %v424
          %1138 = vst [vmem:[#allocation4 + $0x10] sm:$0xff] %v523
          %1139 = vst [vmem:[#allocation4 + $0x18] sm:$0xff] %v525
          %1140 = vst [vmem:[#allocation4 + $0x20] sm:$0xff] %v624
          %1141 = vst [vmem:[#allocation4 + $0x28] sm:$0xff] %v626
          %1142 = vst [vmem:[#allocation4 + $0x30] sm:$0xff] %v725
          %1143 = vst [vmem:[#allocation4 + $0x38] sm:$0xff] %v727
          %1144 = vst [vmem:[#allocation4 + $0x40] sm:$0xff] %v428
          %1145 = vst [vmem:[#allocation4 + $0x48] sm:$0xff] %v430
          %1146 = vst [vmem:[#allocation4 + $0x50] sm:$0xff] %v529
          %1147 = vst [vmem:[#allocation4 + $0x58] sm:$0xff] %v531
          %1148 = vst [vmem:[#allocation4 + $0x60] sm:$0xff] %v630
          %1149 = vst [vmem:[#allocation4 + $0x68] sm:$0xff] %v632
          %1150 = vst [vmem:[#allocation4 + $0x70] sm:$0xff] %v731
          %1151 = vst [vmem:[#allocation4 + $0x78] sm:$0xff] %v733
        $region44: #{temporal_nonlocal_forward.1} parent=39 // pred_fallthru
          _
        %s1152 = smul.u32 %s21, 512
        %s1153 = sshra.s32 %s1152, 7
        %s1154 = sand.u32 %s1152, 127
        %s1155 = smul.addr %s1153, 8
        %s1156 = scalar_lea.vmem %s232, %s1155
        %v1157 = vld [vmem:[%s1156] sm:$0xff]
        %v1158 = vld [vmem:[%s1156 + $0x8] sm:$0xff]
        %v1159 = vld [vmem:[%s1156 + $0x10] sm:$0xff]
        %v1160 = vld [vmem:[%s1156 + $0x18] sm:$0xff]
        %v1161 = vld [vmem:[%s1156 + $0x40] sm:$0xff]
        %v1162 = vld [vmem:[%s1156 + $0x48] sm:$0xff]
        %v1163 = vld [vmem:[%s1156 + $0x50] sm:$0xff]
        %v1164 = vld [vmem:[%s1156 + $0x58] sm:$0xff]
        %v1165 = vld [vmem:[%s1156 + $0x80] sm:$0xff]
        %v1166 = vld [vmem:[%s1156 + $0x88] sm:$0xff]
        %v1167 = vld [vmem:[%s1156 + $0x90] sm:$0xff]
        %v1168 = vld [vmem:[%s1156 + $0x98] sm:$0xff]
        %v1169 = vld [vmem:[%s1156 + $0xc0] sm:$0xff]
        %v1170 = vld [vmem:[%s1156 + $0xc8] sm:$0xff]
        %v1171 = vld [vmem:[%s1156 + $0xd0] sm:$0xff]
        %v1172 = vld [vmem:[%s1156 + $0xd8] sm:$0xff]
        %s1173 = smul.addr %s1153, 8
        %s1174 = scalar_lea.vmem [#allocation4], %s1173
        %v1175 = vld [vmem:[%s1174] sm:$0xff]
        %v1176 = vld [vmem:[%s1174 + $0x8] sm:$0xff]
        %v1177 = vld [vmem:[%s1174 + $0x10] sm:$0xff]
        %v1178 = vld [vmem:[%s1174 + $0x18] sm:$0xff]
        %v1179 = vld [vmem:[%s1174 + $0x40] sm:$0xff]
        %v1180 = vld [vmem:[%s1174 + $0x48] sm:$0xff]
        %v1181 = vld [vmem:[%s1174 + $0x50] sm:$0xff]
        %v1182 = vld [vmem:[%s1174 + $0x58] sm:$0xff]
        %v1183 = vld [vmem:[#allocation2] sm:$0xff]
        %v1184 = vld [vmem:[#allocation2 + $0x8] sm:$0xff]
        %v1185 = vld [vmem:[#allocation2 + $0x10] sm:$0xff]
        %v1186 = vld [vmem:[#allocation2 + $0x18] sm:$0xff]
        %v1187 = vld [vmem:[#allocation2 + $0x20] sm:$0xff]
        %v1188 = vld [vmem:[#allocation2 + $0x28] sm:$0xff]
        %v1189 = vld [vmem:[#allocation2 + $0x30] sm:$0xff]
        %v1190 = vld [vmem:[#allocation2 + $0x38] sm:$0xff]
        %v1191 = vld [vmem:[#allocation2 + $0x40] sm:$0xff]
        %v1192 = vld [vmem:[#allocation2 + $0x48] sm:$0xff]
        %v1193 = vld [vmem:[#allocation2 + $0x50] sm:$0xff]
        %v1194 = vld [vmem:[#allocation2 + $0x58] sm:$0xff]
        %v1195 = vld [vmem:[#allocation2 + $0x60] sm:$0xff]
        %v1196 = vld [vmem:[#allocation2 + $0x68] sm:$0xff]
        %v1197 = vld [vmem:[#allocation2 + $0x70] sm:$0xff]
        %v1198 = vld [vmem:[#allocation2 + $0x78] sm:$0xff]
        %v1199 = vld [vmem:[#allocation2 + $0x80] sm:$0xff]
        %v1200 = vld [vmem:[#allocation2 + $0x88] sm:$0xff]
        %v1201 = vld [vmem:[#allocation2 + $0x90] sm:$0xff]
        %v1202 = vld [vmem:[#allocation2 + $0x98] sm:$0xff]
        %v1203 = vld [vmem:[#allocation2 + $0xa0] sm:$0xff]
        %v1204 = vld [vmem:[#allocation2 + $0xa8] sm:$0xff]
        %v1205 = vld [vmem:[#allocation2 + $0xb0] sm:$0xff]
        %v1206 = vld [vmem:[#allocation2 + $0xb8] sm:$0xff]
        %v1207 = vld [vmem:[#allocation2 + $0xc0] sm:$0xff]
        %v1208 = vld [vmem:[#allocation2 + $0xc8] sm:$0xff]
        %v1209 = vld [vmem:[#allocation2 + $0xd0] sm:$0xff]
        %v1210 = vld [vmem:[#allocation2 + $0xd8] sm:$0xff]
        %v1211 = vld [vmem:[#allocation2 + $0xe0] sm:$0xff]
        %v1212 = vld [vmem:[#allocation2 + $0xe8] sm:$0xff]
        %v1213 = vld [vmem:[#allocation2 + $0xf0] sm:$0xff]
        %v1214 = vld [vmem:[#allocation2 + $0xf8] sm:$0xff]
        %v1215 = vld [vmem:[#allocation2 + $0x100] sm:$0xff]
        %v1216 = vld [vmem:[#allocation2 + $0x108] sm:$0xff]
        %v1217 = vld [vmem:[#allocation2 + $0x110] sm:$0xff]
        %v1218 = vld [vmem:[#allocation2 + $0x118] sm:$0xff]
        %v1219 = vld [vmem:[#allocation2 + $0x120] sm:$0xff]
        %v1220 = vld [vmem:[#allocation2 + $0x128] sm:$0xff]
        %v1221 = vld [vmem:[#allocation2 + $0x130] sm:$0xff]
        %v1222 = vld [vmem:[#allocation2 + $0x138] sm:$0xff]
        %v1223 = vld [vmem:[#allocation2 + $0x140] sm:$0xff]
        %v1224 = vld [vmem:[#allocation2 + $0x148] sm:$0xff]
        %v1225 = vld [vmem:[#allocation2 + $0x150] sm:$0xff]
        %v1226 = vld [vmem:[#allocation2 + $0x158] sm:$0xff]
        %v1227 = vld [vmem:[#allocation2 + $0x160] sm:$0xff]
        %v1228 = vld [vmem:[#allocation2 + $0x168] sm:$0xff]
        %v1229 = vld [vmem:[#allocation2 + $0x170] sm:$0xff]
        %v1230 = vld [vmem:[#allocation2 + $0x178] sm:$0xff]
        %v1231 = vld [vmem:[#allocation2 + $0x180] sm:$0xff]
        %v1232 = vld [vmem:[#allocation2 + $0x188] sm:$0xff]
        %v1233 = vld [vmem:[#allocation2 + $0x190] sm:$0xff]
        %v1234 = vld [vmem:[#allocation2 + $0x198] sm:$0xff]
        %v1235 = vld [vmem:[#allocation2 + $0x1a0] sm:$0xff]
        %v1236 = vld [vmem:[#allocation2 + $0x1a8] sm:$0xff]
        %v1237 = vld [vmem:[#allocation2 + $0x1b0] sm:$0xff]
        %v1238 = vld [vmem:[#allocation2 + $0x1b8] sm:$0xff]
        %v1239 = vld [vmem:[#allocation2 + $0x1c0] sm:$0xff]
        %v1240 = vld [vmem:[#allocation2 + $0x1c8] sm:$0xff]
        %v1241 = vld [vmem:[#allocation2 + $0x1d0] sm:$0xff]
        %v1242 = vld [vmem:[#allocation2 + $0x1d8] sm:$0xff]
        %v1243 = vld [vmem:[#allocation2 + $0x1e0] sm:$0xff]
        %v1244 = vld [vmem:[#allocation2 + $0x1e8] sm:$0xff]
        %v1245 = vld [vmem:[#allocation2 + $0x1f0] sm:$0xff]
        %v1246 = vld [vmem:[#allocation2 + $0x1f8] sm:$0xff]
        %v1247 = vld [vmem:[#allocation2 + $0x200] sm:$0xff]
        %v1248 = vld [vmem:[#allocation2 + $0x208] sm:$0xff]
        %v1249 = vld [vmem:[#allocation2 + $0x210] sm:$0xff]
        %v1250 = vld [vmem:[#allocation2 + $0x218] sm:$0xff]
        %v1251 = vld [vmem:[#allocation2 + $0x220] sm:$0xff]
        %v1252 = vld [vmem:[#allocation2 + $0x228] sm:$0xff]
        %v1253 = vld [vmem:[#allocation2 + $0x230] sm:$0xff]
        %v1254 = vld [vmem:[#allocation2 + $0x238] sm:$0xff]
        %v1255 = vld [vmem:[#allocation2 + $0x240] sm:$0xff]
        %v1256 = vld [vmem:[#allocation2 + $0x248] sm:$0xff]
        %v1257 = vld [vmem:[#allocation2 + $0x250] sm:$0xff]
        %v1258 = vld [vmem:[#allocation2 + $0x258] sm:$0xff]
        %v1259 = vld [vmem:[#allocation2 + $0x260] sm:$0xff]
        %v1260 = vld [vmem:[#allocation2 + $0x268] sm:$0xff]
        %v1261 = vld [vmem:[#allocation2 + $0x270] sm:$0xff]
        %v1262 = vld [vmem:[#allocation2 + $0x278] sm:$0xff]
        %v1263 = vld [vmem:[#allocation2 + $0x280] sm:$0xff]
        %v1264 = vld [vmem:[#allocation2 + $0x288] sm:$0xff]
        %v1265 = vld [vmem:[#allocation2 + $0x290] sm:$0xff]
        %v1266 = vld [vmem:[#allocation2 + $0x298] sm:$0xff]
        %v1267 = vld [vmem:[#allocation2 + $0x2a0] sm:$0xff]
        %v1268 = vld [vmem:[#allocation2 + $0x2a8] sm:$0xff]
        %v1269 = vld [vmem:[#allocation2 + $0x2b0] sm:$0xff]
        %v1270 = vld [vmem:[#allocation2 + $0x2b8] sm:$0xff]
        %v1271 = vld [vmem:[#allocation2 + $0x2c0] sm:$0xff]
        %v1272 = vld [vmem:[#allocation2 + $0x2c8] sm:$0xff]
        %v1273 = vld [vmem:[#allocation2 + $0x2d0] sm:$0xff]
        %v1274 = vld [vmem:[#allocation2 + $0x2d8] sm:$0xff]
        %v1275 = vld [vmem:[#allocation2 + $0x2e0] sm:$0xff]
        %v1276 = vld [vmem:[#allocation2 + $0x2e8] sm:$0xff]
        %v1277 = vld [vmem:[#allocation2 + $0x2f0] sm:$0xff]
        %v1278 = vld [vmem:[#allocation2 + $0x2f8] sm:$0xff]
        %v1279 = vld [vmem:[#allocation2 + $0x300] sm:$0xff]
        %v1280 = vld [vmem:[#allocation2 + $0x308] sm:$0xff]
        %v1281 = vld [vmem:[#allocation2 + $0x310] sm:$0xff]
        %v1282 = vld [vmem:[#allocation2 + $0x318] sm:$0xff]
        %v1283 = vld [vmem:[#allocation2 + $0x320] sm:$0xff]
        %v1284 = vld [vmem:[#allocation2 + $0x328] sm:$0xff]
        %v1285 = vld [vmem:[#allocation2 + $0x330] sm:$0xff]
        %v1286 = vld [vmem:[#allocation2 + $0x338] sm:$0xff]
        %v1287 = vld [vmem:[#allocation2 + $0x340] sm:$0xff]
        %v1288 = vld [vmem:[#allocation2 + $0x348] sm:$0xff]
        %v1289 = vld [vmem:[#allocation2 + $0x350] sm:$0xff]
        %v1290 = vld [vmem:[#allocation2 + $0x358] sm:$0xff]
        %v1291 = vld [vmem:[#allocation2 + $0x360] sm:$0xff]
        %v1292 = vld [vmem:[#allocation2 + $0x368] sm:$0xff]
        %v1293 = vld [vmem:[#allocation2 + $0x370] sm:$0xff]
        %v1294 = vld [vmem:[#allocation2 + $0x378] sm:$0xff]
        %v1295 = vld [vmem:[#allocation2 + $0x380] sm:$0xff]
        %v1296 = vld [vmem:[#allocation2 + $0x388] sm:$0xff]
        %v1297 = vld [vmem:[#allocation2 + $0x390] sm:$0xff]
        %v1298 = vld [vmem:[#allocation2 + $0x398] sm:$0xff]
        %v1299 = vld [vmem:[#allocation2 + $0x3a0] sm:$0xff]
        %v1300 = vld [vmem:[#allocation2 + $0x3a8] sm:$0xff]
        %v1301 = vld [vmem:[#allocation2 + $0x3b0] sm:$0xff]
        %v1302 = vld [vmem:[#allocation2 + $0x3b8] sm:$0xff]
        %v1303 = vld [vmem:[#allocation2 + $0x3c0] sm:$0xff]
        %v1304 = vld [vmem:[#allocation2 + $0x3c8] sm:$0xff]
        %v1305 = vld [vmem:[#allocation2 + $0x3d0] sm:$0xff]
        %v1306 = vld [vmem:[#allocation2 + $0x3d8] sm:$0xff]
        %v1307 = vld [vmem:[#allocation2 + $0x3e0] sm:$0xff]
        %v1308 = vld [vmem:[#allocation2 + $0x3e8] sm:$0xff]
        %v1309 = vld [vmem:[#allocation2 + $0x3f0] sm:$0xff]
        %v1310 = vld [vmem:[#allocation2 + $0x3f8] sm:$0xff]
        %vm1311 = vcmask 130048
        %v1313 = vsel %vm1311, %v1183, 0
        %v1316 = vsel %vm1311, %v1184, 0
        %v1319 = vsel %vm1311, %v1185, 0
        %v1322 = vsel %vm1311, %v1186, 0
        %v1325 = vsel %vm1311, %v1187, 0
        %v1328 = vsel %vm1311, %v1188, 0
        %v1331 = vsel %vm1311, %v1189, 0
        %v1334 = vsel %vm1311, %v1190, 0
        %v1337 = vsel %vm1311, %v1191, 0
        %v1340 = vsel %vm1311, %v1192, 0
        %v1343 = vsel %vm1311, %v1193, 0
        %v1346 = vsel %vm1311, %v1194, 0
        %v1349 = vsel %vm1311, %v1195, 0
        %v1352 = vsel %vm1311, %v1196, 0
        %v1355 = vsel %vm1311, %v1197, 0
        %v1358 = vsel %vm1311, %v1198, 0
        %v1361 = vsel %vm1311, %v1199, 0
        %v1364 = vsel %vm1311, %v1200, 0
        %v1367 = vsel %vm1311, %v1201, 0
        %v1370 = vsel %vm1311, %v1202, 0
        %v1373 = vsel %vm1311, %v1203, 0
        %v1376 = vsel %vm1311, %v1204, 0
        %v1379 = vsel %vm1311, %v1205, 0
        %v1382 = vsel %vm1311, %v1206, 0
        %v1385 = vsel %vm1311, %v1207, 0
        %v1388 = vsel %vm1311, %v1208, 0
        %v1391 = vsel %vm1311, %v1209, 0
        %v1394 = vsel %vm1311, %v1210, 0
        %v1397 = vsel %vm1311, %v1211, 0
        %v1400 = vsel %vm1311, %v1212, 0
        %v1403 = vsel %vm1311, %v1213, 0
        %v1406 = vsel %vm1311, %v1214, 0
        %v1409 = vsel %vm1311, %v1215, 0
        %v1412 = vsel %vm1311, %v1216, 0
        %v1415 = vsel %vm1311, %v1217, 0
        %v1418 = vsel %vm1311, %v1218, 0
        %v1421 = vsel %vm1311, %v1219, 0
        %v1424 = vsel %vm1311, %v1220, 0
        %v1427 = vsel %vm1311, %v1221, 0
        %v1430 = vsel %vm1311, %v1222, 0
        %v1433 = vsel %vm1311, %v1223, 0
        %v1436 = vsel %vm1311, %v1224, 0
        %v1439 = vsel %vm1311, %v1225, 0
        %v1442 = vsel %vm1311, %v1226, 0
        %v1445 = vsel %vm1311, %v1227, 0
        %v1448 = vsel %vm1311, %v1228, 0
        %v1451 = vsel %vm1311, %v1229, 0
        %v1454 = vsel %vm1311, %v1230, 0
        %v1457 = vsel %vm1311, %v1231, 0
        %v1460 = vsel %vm1311, %v1232, 0
        %v1463 = vsel %vm1311, %v1233, 0
        %v1466 = vsel %vm1311, %v1234, 0
        %v1469 = vsel %vm1311, %v1235, 0
        %v1472 = vsel %vm1311, %v1236, 0
        %v1475 = vsel %vm1311, %v1237, 0
        %v1478 = vsel %vm1311, %v1238, 0
        %v1481 = vsel %vm1311, %v1239, 0
        %v1484 = vsel %vm1311, %v1240, 0
        %v1487 = vsel %vm1311, %v1241, 0
        %v1490 = vsel %vm1311, %v1242, 0
        %v1493 = vsel %vm1311, %v1243, 0
        %v1496 = vsel %vm1311, %v1244, 0
        %v1499 = vsel %vm1311, %v1245, 0
        %v1502 = vsel %vm1311, %v1246, 0
        %v1505 = vsel %vm1311, %v1247, 0
        %v1508 = vsel %vm1311, %v1248, 0
        %v1511 = vsel %vm1311, %v1249, 0
        %v1514 = vsel %vm1311, %v1250, 0
        %v1517 = vsel %vm1311, %v1251, 0
        %v1520 = vsel %vm1311, %v1252, 0
        %v1523 = vsel %vm1311, %v1253, 0
        %v1526 = vsel %vm1311, %v1254, 0
        %v1529 = vsel %vm1311, %v1255, 0
        %v1532 = vsel %vm1311, %v1256, 0
        %v1535 = vsel %vm1311, %v1257, 0
        %v1538 = vsel %vm1311, %v1258, 0
        %v1541 = vsel %vm1311, %v1259, 0
        %v1544 = vsel %vm1311, %v1260, 0
        %v1547 = vsel %vm1311, %v1261, 0
        %v1550 = vsel %vm1311, %v1262, 0
        %v1553 = vsel %vm1311, %v1263, 0
        %v1556 = vsel %vm1311, %v1264, 0
        %v1559 = vsel %vm1311, %v1265, 0
        %v1562 = vsel %vm1311, %v1266, 0
        %v1565 = vsel %vm1311, %v1267, 0
        %v1568 = vsel %vm1311, %v1268, 0
        %v1571 = vsel %vm1311, %v1269, 0
        %v1574 = vsel %vm1311, %v1270, 0
        %v1577 = vsel %vm1311, %v1271, 0
        %v1580 = vsel %vm1311, %v1272, 0
        %v1583 = vsel %vm1311, %v1273, 0
        %v1586 = vsel %vm1311, %v1274, 0
        %v1589 = vsel %vm1311, %v1275, 0
        %v1592 = vsel %vm1311, %v1276, 0
        %v1595 = vsel %vm1311, %v1277, 0
        %v1598 = vsel %vm1311, %v1278, 0
        %v1601 = vsel %vm1311, %v1279, 0
        %v1604 = vsel %vm1311, %v1280, 0
        %v1607 = vsel %vm1311, %v1281, 0
        %v1610 = vsel %vm1311, %v1282, 0
        %v1613 = vsel %vm1311, %v1283, 0
        %v1616 = vsel %vm1311, %v1284, 0
        %v1619 = vsel %vm1311, %v1285, 0
        %v1622 = vsel %vm1311, %v1286, 0
        %v1625 = vsel %vm1311, %v1287, 0
        %v1628 = vsel %vm1311, %v1288, 0
        %v1631 = vsel %vm1311, %v1289, 0
        %v1634 = vsel %vm1311, %v1290, 0
        %v1637 = vsel %vm1311, %v1291, 0
        %v1640 = vsel %vm1311, %v1292, 0
        %v1643 = vsel %vm1311, %v1293, 0
        %v1646 = vsel %vm1311, %v1294, 0
        %v1649 = vsel %vm1311, %v1295, 0
        %v1652 = vsel %vm1311, %v1296, 0
        %v1655 = vsel %vm1311, %v1297, 0
        %v1658 = vsel %vm1311, %v1298, 0
        %v1661 = vsel %vm1311, %v1299, 0
        %v1664 = vsel %vm1311, %v1300, 0
        %v1667 = vsel %vm1311, %v1301, 0
        %v1670 = vsel %vm1311, %v1302, 0
        %v1673 = vsel %vm1311, %v1303, 0
        %v1676 = vsel %vm1311, %v1304, 0
        %v1679 = vsel %vm1311, %v1305, 0
        %v1682 = vsel %vm1311, %v1306, 0
        %v1685 = vsel %vm1311, %v1307, 0
        %v1688 = vsel %vm1311, %v1308, 0
        %v1691 = vsel %vm1311, %v1309, 0
        %v1694 = vsel %vm1311, %v1310, 0
        %1696 = vmatprep.subr.mxu0 %v1176
        %1697 = vmatpush1.msra.mxu0 %v1175
        %1698 = vmatprep.subr.mxu0 %v1180
        %1699 = vmatpush1.msra.mxu0 %v1179
        %1700 = vmatprep.subr.mxu0 0.0
        %1701 = vmatpush1.msra.mxu0 0.0
        %1702 = vmatprep.subr.mxu0 0.0
        %1703 = vmatpush1.msra.mxu0 0.0
        %1704 = vmatprep.subr.mxu0 0.0
        %1705 = vmatpush1.msra.mxu0 0.0
        %1706 = vmatprep.subr.mxu0 0.0
        %1707 = vmatpush1.msra.mxu0 0.0
        %1708 = vmatprep.subr.mxu0 0.0
        %1709 = vmatpush1.msra.mxu0 0.0
        %1710 = vmatprep.subr.mxu0 0.0
        %1711 = vmatpush1.msra.mxu0 0.0
        %1712 = vmatprep.subr.mxu0 0.0
        %1713 = vmatpush1.msra.mxu0 0.0
        %1714 = vmatprep.subr.mxu0 0.0
        %1715 = vmatpush1.msra.mxu0 0.0
        %1716 = vmatprep.subr.mxu0 0.0
        %1717 = vmatpush1.msra.mxu0 0.0
        %1718 = vmatprep.subr.mxu0 0.0
        %1719 = vmatpush1.msra.mxu0 0.0
        %1720 = vmatprep.subr.mxu0 0.0
        %1721 = vmatpush1.msra.mxu0 0.0
        %1722 = vmatprep.subr.mxu0 0.0
        %1723 = vmatpush1.msra.mxu0 0.0
        %1724 = vmatprep.subr.mxu0 0.0
        %1725 = vmatpush1.msra.mxu0 0.0
        %1726 = vmatprep.subr.mxu0 0.0
        %1727 = vmatpush1.msra.mxu0 0.0
        %1728 = vmatprep.subr.mxu0 0.0
        %1729 = vmatpush1.msra.mxu0 0.0
        %1730 = vmatprep.subr.mxu0 0.0
        %1731 = vmatpush1.msra.mxu0 0.0
        %1732 = vmatprep.subr.mxu0 0.0
        %1733 = vmatpush1.msra.mxu0 0.0
        %1734 = vmatprep.subr.mxu0 0.0
        %1735 = vmatpush1.msra.mxu0 0.0
        %1736 = vmatprep.subr.mxu0 0.0
        %1737 = vmatpush1.msra.mxu0 0.0
        %1738 = vmatprep.subr.mxu0 0.0
        %1739 = vmatpush1.msra.mxu0 0.0
        %1740 = vmatprep.subr.mxu0 0.0
        %1741 = vmatpush1.msra.mxu0 0.0
        %1742 = vmatprep.subr.mxu0 0.0
        %1743 = vmatpush1.msra.mxu0 0.0
        %1744 = vmatprep.subr.mxu0 0.0
        %1745 = vmatpush1.msra.mxu0 0.0
        %1746 = vmatprep.subr.mxu0 0.0
        %1747 = vmatpush1.msra.mxu0 0.0
        %1748 = vmatprep.subr.mxu0 0.0
        %1749 = vmatpush1.msra.mxu0 0.0
        %1750 = vmatprep.subr.mxu0 0.0
        %1751 = vmatpush1.msra.mxu0 0.0
        %1752 = vmatprep.subr.mxu0 0.0
        %1753 = vmatpush1.msra.mxu0 0.0
        %1754 = vmatprep.subr.mxu0 0.0
        %1755 = vmatpush1.msra.mxu0 0.0
        %1756 = vmatprep.subr.mxu0 0.0
        %1757 = vmatpush1.msra.mxu0 0.0
        %1758 = vmatprep.subr.mxu0 0.0
        %1759 = vmatpush1.msra.mxu0 0.0
        %1760 = vmatprep.mubr.f32.mxu0 0.0
        %1761 = vmatmul.mubr.f32.gmra.mrb[0].mxu0 %v1313
        %v1762 = vpop.f32.mrb[0].mxu0
        %v1763 = vadd.f32 0.0, %v1762
        %v1764 = vpop.f32.mrb[0].mxu0
        %v1765 = vadd.f32 0.0, %v1764
        %1766 = vmatprep.mubr.f32.mxu0 0.0
        %1767 = vmatmul.mubr.f32.gmra.mrb[0].mxu0 %v1316
        %v1768 = vpop.f32.mrb[0].mxu0
        %v1769 = vadd.f32 0.0, %v1768
        %v1770 = vpop.f32.mrb[0].mxu0
        %v1771 = vadd.f32 0.0, %v1770
        %1772 = vmatprep.mubr.f32.mxu0 0.0
        %1773 = vmatmul.mubr.f32.gmra.mrb[0].mxu0 %v1319
        %v1774 = vpop.f32.mrb[0].mxu0
        %v1775 = vadd.f32 0.0, %v1774
        %v1776 = vpop.f32.mrb[0].mxu0
        %v1777 = vadd.f32 0.0, %v1776
        %1778 = vmatprep.mubr.f32.mxu0 0.0
        %1779 = vmatmul.mubr.f32.gmra.mrb[0].mxu0 %v1322
        %v1780 = vpop.f32.mrb[0].mxu0
        %v1781 = vadd.f32 0.0, %v1780
        %v1782 = vpop.f32.mrb[0].mxu0
        %v1783 = vadd.f32 0.0, %v1782
        %1784 = vmatprep.mubr.f32.mxu0 0.0
        %1785 = vmatmul.mubr.f32.gmra.mrb[0].mxu0 %v1325
        %v1786 = vpop.f32.mrb[0].mxu0
        %v1787 = vadd.f32 0.0, %v1786
        %v1788 = vpop.f32.mrb[0].mxu0
        %v1789 = vadd.f32 0.0, %v1788
        %1790 = vmatprep.mubr.f32.mxu0 0.0
        %1791 = vmatmul.mubr.f32.gmra.mrb[0].mxu0 %v1328
        %v1792 = vpop.f32.mrb[0].mxu0
        %v1793 = vadd.f32 0.0, %v1792
        %v1794 = vpop.f32.mrb[0].mxu0
        %v1795 = vadd.f32 0.0, %v1794
        %1796 = vmatprep.mubr.f32.mxu0 0.0
        %1797 = vmatmul.mubr.f32.gmra.mrb[0].mxu0 %v1331
        %v1798 = vpop.f32.mrb[0].mxu0
        %v1799 = vadd.f32 0.0, %v1798
        %v1800 = vpop.f32.mrb[0].mxu0
        %v1801 = vadd.f32 0.0, %v1800
        %1802 = vmatprep.mubr.f32.mxu0 0.0
        %1803 = vmatmul.mubr.f32.gmra.mrb[0].mxu0 %v1334
        %v1804 = vpop.f32.mrb[0].mxu0
        %v1805 = vadd.f32 0.0, %v1804
        %v1806 = vpop.f32.mrb[0].mxu0
        %v1807 = vadd.f32 0.0, %v1806
        %1808 = vmatprep.mubr.f32.mxu0 0.0
        %1809 = vmatmul.mubr.f32.gmra.mrb[0].mxu0 %v1337
        %v1810 = vpop.f32.mrb[0].mxu0
        %v1811 = vadd.f32 0.0, %v1810
        %v1812 = vpop.f32.mrb[0].mxu0
        %v1813 = vadd.f32 0.0, %v1812
        %1814 = vmatprep.mubr.f32.mxu0 0.0
        %1815 = vmatmul.mubr.f32.gmra.mrb[0].mxu0 %v1340
        %v1816 = vpop.f32.mrb[0].mxu0
        %v1817 = vadd.f32 0.0, %v1816
        %v1818 = vpop.f32.mrb[0].mxu0
        %v1819 = vadd.f32 0.0, %v1818
        %1820 = vmatprep.mubr.f32.mxu0 0.0
        %1821 = vmatmul.mubr.f32.gmra.mrb[0].mxu0 %v1343
        %v1822 = vpop.f32.mrb[0].mxu0
        %v1823 = vadd.f32 0.0, %v1822
        %v1824 = vpop.f32.mrb[0].mxu0
        %v1825 = vadd.f32 0.0, %v1824
        %1826 = vmatprep.mubr.f32.mxu0 0.0
        %1827 = vmatmul.mubr.f32.gmra.mrb[0].mxu0 %v1346
        %v1828 = vpop.f32.mrb[0].mxu0
        %v1829 = vadd.f32 0.0, %v1828
        %v1830 = vpop.f32.mrb[0].mxu0
        %v1831 = vadd.f32 0.0, %v1830
        %1832 = vmatprep.mubr.f32.mxu0 0.0
        %1833 = vmatmul.mubr.f32.gmra.mrb[0].mxu0 %v1349
        %v1834 = vpop.f32.mrb[0].mxu0
        %v1835 = vadd.f32 0.0, %v1834
        %v1836 = vpop.f32.mrb[0].mxu0
        %v1837 = vadd.f32 0.0, %v1836
        %1838 = vmatprep.mubr.f32.mxu0 0.0
        %1839 = vmatmul.mubr.f32.gmra.mrb[0].mxu0 %v1352
        %v1840 = vpop.f32.mrb[0].mxu0
        %v1841 = vadd.f32 0.0, %v1840
        %v1842 = vpop.f32.mrb[0].mxu0
        %v1843 = vadd.f32 0.0, %v1842
        %1844 = vmatprep.mubr.f32.mxu0 0.0
        %1845 = vmatmul.mubr.f32.gmra.mrb[0].mxu0 %v1355
        %v1846 = vpop.f32.mrb[0].mxu0
        %v1847 = vadd.f32 0.0, %v1846
        %v1848 = vpop.f32.mrb[0].mxu0
        %v1849 = vadd.f32 0.0, %v1848
        %1850 = vmatprep.mubr.f32.mxu0 0.0
        %1851 = vmatmul.mubr.f32.gmra.mrb[0].mxu0 %v1358
        %v1852 = vpop.f32.mrb[0].mxu0
        %v1853 = vadd.f32 0.0, %v1852
        %v1854 = vpop.f32.mrb[0].mxu0
        %v1855 = vadd.f32 0.0, %v1854
        %1856 = vmatprep.mubr.f32.mxu0 0.0
        %1857 = vmatmul.mubr.f32.gmra.mrb[0].mxu0 %v1361
        %v1858 = vpop.f32.mrb[0].mxu0
        %v1859 = vadd.f32 0.0, %v1858
        %v1860 = vpop.f32.mrb[0].mxu0
        %v1861 = vadd.f32 0.0, %v1860
        %1862 = vmatprep.mubr.f32.mxu0 0.0
        %1863 = vmatmul.mubr.f32.gmra.mrb[0].mxu0 %v1364
        %v1864 = vpop.f32.mrb[0].mxu0
        %v1865 = vadd.f32 0.0, %v1864
        %v1866 = vpop.f32.mrb[0].mxu0
        %v1867 = vadd.f32 0.0, %v1866
        %1868 = vmatprep.mubr.f32.mxu0 0.0
        %1869 = vmatmul.mubr.f32.gmra.mrb[0].mxu0 %v1367
        %v1870 = vpop.f32.mrb[0].mxu0
        %v1871 = vadd.f32 0.0, %v1870
        %v1872 = vpop.f32.mrb[0].mxu0
        %v1873 = vadd.f32 0.0, %v1872
        %1874 = vmatprep.mubr.f32.mxu0 0.0
        %1875 = vmatmul.mubr.f32.gmra.mrb[0].mxu0 %v1370
        %v1876 = vpop.f32.mrb[0].mxu0
        %v1877 = vadd.f32 0.0, %v1876
        %v1878 = vpop.f32.mrb[0].mxu0
        %v1879 = vadd.f32 0.0, %v1878
        %1880 = vmatprep.mubr.f32.mxu0 0.0
        %1881 = vmatmul.mubr.f32.gmra.mrb[0].mxu0 %v1373
        %v1882 = vpop.f32.mrb[0].mxu0
        %v1883 = vadd.f32 0.0, %v1882
        %v1884 = vpop.f32.mrb[0].mxu0
        %v1885 = vadd.f32 0.0, %v1884
        %1886 = vmatprep.mubr.f32.mxu0 0.0
        %1887 = vmatmul.mubr.f32.gmra.mrb[0].mxu0 %v1376
        %v1888 = vpop.f32.mrb[0].mxu0
        %v1889 = vadd.f32 0.0, %v1888
        %v1890 = vpop.f32.mrb[0].mxu0
        %v1891 = vadd.f32 0.0, %v1890
        %1892 = vmatprep.mubr.f32.mxu0 0.0
        %1893 = vmatmul.mubr.f32.gmra.mrb[0].mxu0 %v1379
        %v1894 = vpop.f32.mrb[0].mxu0
        %v1895 = vadd.f32 0.0, %v1894
        %v1896 = vpop.f32.mrb[0].mxu0
        %v1897 = vadd.f32 0.0, %v1896
        %1898 = vmatprep.mubr.f32.mxu0 0.0
        %1899 = vmatmul.mubr.f32.gmra.mrb[0].mxu0 %v1382
        %v1900 = vpop.f32.mrb[0].mxu0
        %v1901 = vadd.f32 0.0, %v1900
        %v1902 = vpop.f32.mrb[0].mxu0
        %v1903 = vadd.f32 0.0, %v1902
        %1904 = vmatprep.mubr.f32.mxu0 0.0
        %1905 = vmatmul.mubr.f32.gmra.mrb[0].mxu0 %v1385
        %v1906 = vpop.f32.mrb[0].mxu0
        %v1907 = vadd.f32 0.0, %v1906
        %v1908 = vpop.f32.mrb[0].mxu0
        %v1909 = vadd.f32 0.0, %v1908
        %1910 = vmatprep.mubr.f32.mxu0 0.0
        %1911 = vmatmul.mubr.f32.gmra.mrb[0].mxu0 %v1388
        %v1912 = vpop.f32.mrb[0].mxu0
        %v1913 = vadd.f32 0.0, %v1912
        %v1914 = vpop.f32.mrb[0].mxu0
        %v1915 = vadd.f32 0.0, %v1914
        %1916 = vmatprep.mubr.f32.mxu0 0.0
        %1917 = vmatmul.mubr.f32.gmra.mrb[0].mxu0 %v1391
        %v1918 = vpop.f32.mrb[0].mxu0
        %v1919 = vadd.f32 0.0, %v1918
        %v1920 = vpop.f32.mrb[0].mxu0
        %v1921 = vadd.f32 0.0, %v1920
        %1922 = vmatprep.mubr.f32.mxu0 0.0
        %1923 = vmatmul.mubr.f32.gmra.mrb[0].mxu0 %v1394
        %v1924 = vpop.f32.mrb[0].mxu0
        %v1925 = vadd.f32 0.0, %v1924
        %v1926 = vpop.f32.mrb[0].mxu0
        %v1927 = vadd.f32 0.0, %v1926
        %1928 = vmatprep.mubr.f32.mxu0 0.0
        %1929 = vmatmul.mubr.f32.gmra.mrb[0].mxu0 %v1397
        %v1930 = vpop.f32.mrb[0].mxu0
        %v1931 = vadd.f32 0.0, %v1930
        %v1932 = vpop.f32.mrb[0].mxu0
        %v1933 = vadd.f32 0.0, %v1932
        %1934 = vmatprep.mubr.f32.mxu0 0.0
        %1935 = vmatmul.mubr.f32.gmra.mrb[0].mxu0 %v1400
        %v1936 = vpop.f32.mrb[0].mxu0
        %v1937 = vadd.f32 0.0, %v1936
        %v1938 = vpop.f32.mrb[0].mxu0
        %v1939 = vadd.f32 0.0, %v1938
        %1940 = vmatprep.mubr.f32.mxu0 0.0
        %1941 = vmatmul.mubr.f32.gmra.mrb[0].mxu0 %v1403
        %v1942 = vpop.f32.mrb[0].mxu0
        %v1943 = vadd.f32 0.0, %v1942
        %v1944 = vpop.f32.mrb[0].mxu0
        %v1945 = vadd.f32 0.0, %v1944
        %1946 = vmatprep.mubr.f32.mxu0 0.0
        %1947 = vmatmul.mubr.f32.gmra.mrb[0].mxu0 %v1406
        %v1948 = vpop.f32.mrb[0].mxu0
        %v1949 = vadd.f32 0.0, %v1948
        %v1950 = vpop.f32.mrb[0].mxu0
        %v1951 = vadd.f32 0.0, %v1950
        %1952 = vmatprep.mubr.f32.mxu0 0.0
        %1953 = vmatmul.mubr.f32.gmra.mrb[0].mxu0 %v1409
        %v1954 = vpop.f32.mrb[0].mxu0
        %v1955 = vadd.f32 0.0, %v1954
        %v1956 = vpop.f32.mrb[0].mxu0
        %v1957 = vadd.f32 0.0, %v1956
        %1958 = vmatprep.mubr.f32.mxu0 0.0
        %1959 = vmatmul.mubr.f32.gmra.mrb[0].mxu0 %v1412
        %v1960 = vpop.f32.mrb[0].mxu0
        %v1961 = vadd.f32 0.0, %v1960
        %v1962 = vpop.f32.mrb[0].mxu0
        %v1963 = vadd.f32 0.0, %v1962
        %1964 = vmatprep.mubr.f32.mxu0 0.0
        %1965 = vmatmul.mubr.f32.gmra.mrb[0].mxu0 %v1415
        %v1966 = vpop.f32.mrb[0].mxu0
        %v1967 = vadd.f32 0.0, %v1966
        %v1968 = vpop.f32.mrb[0].mxu0
        %v1969 = vadd.f32 0.0, %v1968
        %1970 = vmatprep.mubr.f32.mxu0 0.0
        %1971 = vmatmul.mubr.f32.gmra.mrb[0].mxu0 %v1418
        %v1972 = vpop.f32.mrb[0].mxu0
        %v1973 = vadd.f32 0.0, %v1972
        %v1974 = vpop.f32.mrb[0].mxu0
        %v1975 = vadd.f32 0.0, %v1974
        %1976 = vmatprep.mubr.f32.mxu0 0.0
        %1977 = vmatmul.mubr.f32.gmra.mrb[0].mxu0 %v1421
        %v1978 = vpop.f32.mrb[0].mxu0
        %v1979 = vadd.f32 0.0, %v1978
        %v1980 = vpop.f32.mrb[0].mxu0
        %v1981 = vadd.f32 0.0, %v1980
        %1982 = vmatprep.mubr.f32.mxu0 0.0
        %1983 = vmatmul.mubr.f32.gmra.mrb[0].mxu0 %v1424
        %v1984 = vpop.f32.mrb[0].mxu0
        %v1985 = vadd.f32 0.0, %v1984
        %v1986 = vpop.f32.mrb[0].mxu0
        %v1987 = vadd.f32 0.0, %v1986
        %1988 = vmatprep.mubr.f32.mxu0 0.0
        %1989 = vmatmul.mubr.f32.gmra.mrb[0].mxu0 %v1427
        %v1990 = vpop.f32.mrb[0].mxu0
        %v1991 = vadd.f32 0.0, %v1990
        %v1992 = vpop.f32.mrb[0].mxu0
        %v1993 = vadd.f32 0.0, %v1992
        %1994 = vmatprep.mubr.f32.mxu0 0.0
        %1995 = vmatmul.mubr.f32.gmra.mrb[0].mxu0 %v1430
        %v1996 = vpop.f32.mrb[0].mxu0
        %v1997 = vadd.f32 0.0, %v1996
        %v1998 = vpop.f32.mrb[0].mxu0
        %v1999 = vadd.f32 0.0, %v1998
        %2000 = vmatprep.mubr.f32.mxu0 0.0
        %2001 = vmatmul.mubr.f32.gmra.mrb[0].mxu0 %v1433
        %v2002 = vpop.f32.mrb[0].mxu0
        %v2003 = vadd.f32 0.0, %v2002
        %v2004 = vpop.f32.mrb[0].mxu0
        %v2005 = vadd.f32 0.0, %v2004
        %2006 = vmatprep.mubr.f32.mxu0 0.0
        %2007 = vmatmul.mubr.f32.gmra.mrb[0].mxu0 %v1436
        %v2008 = vpop.f32.mrb[0].mxu0
        %v2009 = vadd.f32 0.0, %v2008
        %v2010 = vpop.f32.mrb[0].mxu0
        %v2011 = vadd.f32 0.0, %v2010
        %2012 = vmatprep.mubr.f32.mxu0 0.0
        %2013 = vmatmul.mubr.f32.gmra.mrb[0].mxu0 %v1439
        %v2014 = vpop.f32.mrb[0].mxu0
        %v2015 = vadd.f32 0.0, %v2014
        %v2016 = vpop.f32.mrb[0].mxu0
        %v2017 = vadd.f32 0.0, %v2016
        %2018 = vmatprep.mubr.f32.mxu0 0.0
        %2019 = vmatmul.mubr.f32.gmra.mrb[0].mxu0 %v1442
        %v2020 = vpop.f32.mrb[0].mxu0
        %v2021 = vadd.f32 0.0, %v2020
        %v2022 = vpop.f32.mrb[0].mxu0
        %v2023 = vadd.f32 0.0, %v2022
        %2024 = vmatprep.mubr.f32.mxu0 0.0
        %2025 = vmatmul.mubr.f32.gmra.mrb[0].mxu0 %v1445
        %v2026 = vpop.f32.mrb[0].mxu0
        %v2027 = vadd.f32 0.0, %v2026
        %v2028 = vpop.f32.mrb[0].mxu0
        %v2029 = vadd.f32 0.0, %v2028
        %2030 = vmatprep.mubr.f32.mxu0 0.0
        %2031 = vmatmul.mubr.f32.gmra.mrb[0].mxu0 %v1448
        %v2032 = vpop.f32.mrb[0].mxu0
        %v2033 = vadd.f32 0.0, %v2032
        %v2034 = vpop.f32.mrb[0].mxu0
        %v2035 = vadd.f32 0.0, %v2034
        %2036 = vmatprep.mubr.f32.mxu0 0.0
        %2037 = vmatmul.mubr.f32.gmra.mrb[0].mxu0 %v1451
        %v2038 = vpop.f32.mrb[0].mxu0
        %v2039 = vadd.f32 0.0, %v2038
        %v2040 = vpop.f32.mrb[0].mxu0
        %v2041 = vadd.f32 0.0, %v2040
        %2042 = vmatprep.mubr.f32.mxu0 0.0
        %2043 = vmatmul.mubr.f32.gmra.mrb[0].mxu0 %v1454
        %v2044 = vpop.f32.mrb[0].mxu0
        %v2045 = vadd.f32 0.0, %v2044
        %v2046 = vpop.f32.mrb[0].mxu0
        %v2047 = vadd.f32 0.0, %v2046
        %2048 = vmatprep.mubr.f32.mxu0 0.0
        %2049 = vmatmul.mubr.f32.gmra.mrb[0].mxu0 %v1457
        %v2050 = vpop.f32.mrb[0].mxu0
        %v2051 = vadd.f32 0.0, %v2050
        %v2052 = vpop.f32.mrb[0].mxu0
        %v2053 = vadd.f32 0.0, %v2052
        %2054 = vmatprep.mubr.f32.mxu0 0.0
        %2055 = vmatmul.mubr.f32.gmra.mrb[0].mxu0 %v1460
        %v2056 = vpop.f32.mrb[0].mxu0
        %v2057 = vadd.f32 0.0, %v2056
        %v2058 = vpop.f32.mrb[0].mxu0
        %v2059 = vadd.f32 0.0, %v2058
        %2060 = vmatprep.mubr.f32.mxu0 0.0
        %2061 = vmatmul.mubr.f32.gmra.mrb[0].mxu0 %v1463
        %v2062 = vpop.f32.mrb[0].mxu0
        %v2063 = vadd.f32 0.0, %v2062
        %v2064 = vpop.f32.mrb[0].mxu0
        %v2065 = vadd.f32 0.0, %v2064
        %2066 = vmatprep.mubr.f32.mxu0 0.0
        %2067 = vmatmul.mubr.f32.gmra.mrb[0].mxu0 %v1466
        %v2068 = vpop.f32.mrb[0].mxu0
        %v2069 = vadd.f32 0.0, %v2068
        %v2070 = vpop.f32.mrb[0].mxu0
        %v2071 = vadd.f32 0.0, %v2070
        %2072 = vmatprep.mubr.f32.mxu0 0.0
        %2073 = vmatmul.mubr.f32.gmra.mrb[0].mxu0 %v1469
        %v2074 = vpop.f32.mrb[0].mxu0
        %v2075 = vadd.f32 0.0, %v2074
        %v2076 = vpop.f32.mrb[0].mxu0
        %v2077 = vadd.f32 0.0, %v2076
        %2078 = vmatprep.mubr.f32.mxu0 0.0
        %2079 = vmatmul.mubr.f32.gmra.mrb[0].mxu0 %v1472
        %v2080 = vpop.f32.mrb[0].mxu0
        %v2081 = vadd.f32 0.0, %v2080
        %v2082 = vpop.f32.mrb[0].mxu0
        %v2083 = vadd.f32 0.0, %v2082
        %2084 = vmatprep.mubr.f32.mxu0 0.0
        %2085 = vmatmul.mubr.f32.gmra.mrb[0].mxu0 %v1475
        %v2086 = vpop.f32.mrb[0].mxu0
        %v2087 = vadd.f32 0.0, %v2086
        %v2088 = vpop.f32.mrb[0].mxu0
        %v2089 = vadd.f32 0.0, %v2088
        %2090 = vmatprep.mubr.f32.mxu0 0.0
        %2091 = vmatmul.mubr.f32.gmra.mrb[0].mxu0 %v1478
        %v2092 = vpop.f32.mrb[0].mxu0
        %v2093 = vadd.f32 0.0, %v2092
        %v2094 = vpop.f32.mrb[0].mxu0
        %v2095 = vadd.f32 0.0, %v2094
        %2096 = vmatprep.mubr.f32.mxu0 0.0
        %2097 = vmatmul.mubr.f32.gmra.mrb[0].mxu0 %v1481
        %v2098 = vpop.f32.mrb[0].mxu0
        %v2099 = vadd.f32 0.0, %v2098
        %v2100 = vpop.f32.mrb[0].mxu0
        %v2101 = vadd.f32 0.0, %v2100
        %2102 = vmatprep.mubr.f32.mxu0 0.0
        %2103 = vmatmul.mubr.f32.gmra.mrb[0].mxu0 %v1484
        %v2104 = vpop.f32.mrb[0].mxu0
        %v2105 = vadd.f32 0.0, %v2104
        %v2106 = vpop.f32.mrb[0].mxu0
        %v2107 = vadd.f32 0.0, %v2106
        %2108 = vmatprep.mubr.f32.mxu0 0.0
        %2109 = vmatmul.mubr.f32.gmra.mrb[0].mxu0 %v1487
        %v2110 = vpop.f32.mrb[0].mxu0
        %v2111 = vadd.f32 0.0, %v2110
        %v2112 = vpop.f32.mrb[0].mxu0
        %v2113 = vadd.f32 0.0, %v2112
        %2114 = vmatprep.mubr.f32.mxu0 0.0
        %2115 = vmatmul.mubr.f32.gmra.mrb[0].mxu0 %v1490
        %v2116 = vpop.f32.mrb[0].mxu0
        %v2117 = vadd.f32 0.0, %v2116
        %v2118 = vpop.f32.mrb[0].mxu0
        %v2119 = vadd.f32 0.0, %v2118
        %2120 = vmatprep.mubr.f32.mxu0 0.0
        %2121 = vmatmul.mubr.f32.gmra.mrb[0].mxu0 %v1493
        %v2122 = vpop.f32.mrb[0].mxu0
        %v2123 = vadd.f32 0.0, %v2122
        %v2124 = vpop.f32.mrb[0].mxu0
        %v2125 = vadd.f32 0.0, %v2124
        %2126 = vmatprep.mubr.f32.mxu0 0.0
        %2127 = vmatmul.mubr.f32.gmra.mrb[0].mxu0 %v1496
        %v2128 = vpop.f32.mrb[0].mxu0
        %v2129 = vadd.f32 0.0, %v2128
        %v2130 = vpop.f32.mrb[0].mxu0
        %v2131 = vadd.f32 0.0, %v2130
        %2132 = vmatprep.mubr.f32.mxu0 0.0
        %2133 = vmatmul.mubr.f32.gmra.mrb[0].mxu0 %v1499
        %v2134 = vpop.f32.mrb[0].mxu0
        %v2135 = vadd.f32 0.0, %v2134
        %v2136 = vpop.f32.mrb[0].mxu0
        %v2137 = vadd.f32 0.0, %v2136
        %2138 = vmatprep.mubr.f32.mxu0 0.0
        %2139 = vmatmul.mubr.f32.gmra.mrb[0].mxu0 %v1502
        %v2140 = vpop.f32.mrb[0].mxu0
        %v2141 = vadd.f32 0.0, %v2140
        %v2142 = vpop.f32.mrb[0].mxu0
        %v2143 = vadd.f32 0.0, %v2142
        %2144 = vmatprep.mubr.f32.mxu0 0.0
        %2145 = vmatmul.mubr.f32.gmra.mrb[0].mxu0 %v1505
        %v2146 = vpop.f32.mrb[0].mxu0
        %v2147 = vadd.f32 0.0, %v2146
        %v2148 = vpop.f32.mrb[0].mxu0
        %v2149 = vadd.f32 0.0, %v2148
        %2150 = vmatprep.mubr.f32.mxu0 0.0
        %2151 = vmatmul.mubr.f32.gmra.mrb[0].mxu0 %v1508
        %v2152 = vpop.f32.mrb[0].mxu0
        %v2153 = vadd.f32 0.0, %v2152
        %v2154 = vpop.f32.mrb[0].mxu0
        %v2155 = vadd.f32 0.0, %v2154
        %2156 = vmatprep.mubr.f32.mxu0 0.0
        %2157 = vmatmul.mubr.f32.gmra.mrb[0].mxu0 %v1511
        %v2158 = vpop.f32.mrb[0].mxu0
        %v2159 = vadd.f32 0.0, %v2158
        %v2160 = vpop.f32.mrb[0].mxu0
        %v2161 = vadd.f32 0.0, %v2160
        %2162 = vmatprep.mubr.f32.mxu0 0.0
        %2163 = vmatmul.mubr.f32.gmra.mrb[0].mxu0 %v1514
        %v2164 = vpop.f32.mrb[0].mxu0
        %v2165 = vadd.f32 0.0, %v2164
        %v2166 = vpop.f32.mrb[0].mxu0
        %v2167 = vadd.f32 0.0, %v2166
        %2168 = vmatprep.mubr.f32.mxu0 0.0
        %2169 = vmatmul.mubr.f32.gmra.mrb[0].mxu0 %v1517
        %v2170 = vpop.f32.mrb[0].mxu0
        %v2171 = vadd.f32 0.0, %v2170
        %v2172 = vpop.f32.mrb[0].mxu0
        %v2173 = vadd.f32 0.0, %v2172
        %2174 = vmatprep.mubr.f32.mxu0 0.0
        %2175 = vmatmul.mubr.f32.gmra.mrb[0].mxu0 %v1520
        %v2176 = vpop.f32.mrb[0].mxu0
        %v2177 = vadd.f32 0.0, %v2176
        %v2178 = vpop.f32.mrb[0].mxu0
        %v2179 = vadd.f32 0.0, %v2178
        %2180 = vmatprep.mubr.f32.mxu0 0.0
        %2181 = vmatmul.mubr.f32.gmra.mrb[0].mxu0 %v1523
        %v2182 = vpop.f32.mrb[0].mxu0
        %v2183 = vadd.f32 0.0, %v2182
        %v2184 = vpop.f32.mrb[0].mxu0
        %v2185 = vadd.f32 0.0, %v2184
        %2186 = vmatprep.mubr.f32.mxu0 0.0
        %2187 = vmatmul.mubr.f32.gmra.mrb[0].mxu0 %v1526
        %v2188 = vpop.f32.mrb[0].mxu0
        %v2189 = vadd.f32 0.0, %v2188
        %v2190 = vpop.f32.mrb[0].mxu0
        %v2191 = vadd.f32 0.0, %v2190
        %2192 = vmatprep.mubr.f32.mxu0 0.0
        %2193 = vmatmul.mubr.f32.gmra.mrb[0].mxu0 %v1529
        %v2194 = vpop.f32.mrb[0].mxu0
        %v2195 = vadd.f32 0.0, %v2194
        %v2196 = vpop.f32.mrb[0].mxu0
        %v2197 = vadd.f32 0.0, %v2196
        %2198 = vmatprep.mubr.f32.mxu0 0.0
        %2199 = vmatmul.mubr.f32.gmra.mrb[0].mxu0 %v1532
        %v2200 = vpop.f32.mrb[0].mxu0
        %v2201 = vadd.f32 0.0, %v2200
        %v2202 = vpop.f32.mrb[0].mxu0
        %v2203 = vadd.f32 0.0, %v2202
        %2204 = vmatprep.mubr.f32.mxu0 0.0
        %2205 = vmatmul.mubr.f32.gmra.mrb[0].mxu0 %v1535
        %v2206 = vpop.f32.mrb[0].mxu0
        %v2207 = vadd.f32 0.0, %v2206
        %v2208 = vpop.f32.mrb[0].mxu0
        %v2209 = vadd.f32 0.0, %v2208
        %2210 = vmatprep.mubr.f32.mxu0 0.0
        %2211 = vmatmul.mubr.f32.gmra.mrb[0].mxu0 %v1538
        %v2212 = vpop.f32.mrb[0].mxu0
        %v2213 = vadd.f32 0.0, %v2212
        %v2214 = vpop.f32.mrb[0].mxu0
        %v2215 = vadd.f32 0.0, %v2214
        %2216 = vmatprep.mubr.f32.mxu0 0.0
        %2217 = vmatmul.mubr.f32.gmra.mrb[0].mxu0 %v1541
        %v2218 = vpop.f32.mrb[0].mxu0
        %v2219 = vadd.f32 0.0, %v2218
        %v2220 = vpop.f32.mrb[0].mxu0
        %v2221 = vadd.f32 0.0, %v2220
        %2222 = vmatprep.mubr.f32.mxu0 0.0
        %2223 = vmatmul.mubr.f32.gmra.mrb[0].mxu0 %v1544
        %v2224 = vpop.f32.mrb[0].mxu0
        %v2225 = vadd.f32 0.0, %v2224
        %v2226 = vpop.f32.mrb[0].mxu0
        %v2227 = vadd.f32 0.0, %v2226
        %2228 = vmatprep.mubr.f32.mxu0 0.0
        %2229 = vmatmul.mubr.f32.gmra.mrb[0].mxu0 %v1547
        %v2230 = vpop.f32.mrb[0].mxu0
        %v2231 = vadd.f32 0.0, %v2230
        %v2232 = vpop.f32.mrb[0].mxu0
        %v2233 = vadd.f32 0.0, %v2232
        %2234 = vmatprep.mubr.f32.mxu0 0.0
        %2235 = vmatmul.mubr.f32.gmra.mrb[0].mxu0 %v1550
        %v2236 = vpop.f32.mrb[0].mxu0
        %v2237 = vadd.f32 0.0, %v2236
        %v2238 = vpop.f32.mrb[0].mxu0
        %v2239 = vadd.f32 0.0, %v2238
        %2240 = vmatprep.mubr.f32.mxu0 0.0
        %2241 = vmatmul.mubr.f32.gmra.mrb[0].mxu0 %v1553
        %v2242 = vpop.f32.mrb[0].mxu0
        %v2243 = vadd.f32 0.0, %v2242
        %v2244 = vpop.f32.mrb[0].mxu0
        %v2245 = vadd.f32 0.0, %v2244
        %2246 = vmatprep.mubr.f32.mxu0 0.0
        %2247 = vmatmul.mubr.f32.gmra.mrb[0].mxu0 %v1556
        %v2248 = vpop.f32.mrb[0].mxu0
        %v2249 = vadd.f32 0.0, %v2248
        %v2250 = vpop.f32.mrb[0].mxu0
        %v2251 = vadd.f32 0.0, %v2250
        %2252 = vmatprep.mubr.f32.mxu0 0.0
        %2253 = vmatmul.mubr.f32.gmra.mrb[0].mxu0 %v1559
        %v2254 = vpop.f32.mrb[0].mxu0
        %v2255 = vadd.f32 0.0, %v2254
        %v2256 = vpop.f32.mrb[0].mxu0
        %v2257 = vadd.f32 0.0, %v2256
        %2258 = vmatprep.mubr.f32.mxu0 0.0
        %2259 = vmatmul.mubr.f32.gmra.mrb[0].mxu0 %v1562
        %v2260 = vpop.f32.mrb[0].mxu0
        %v2261 = vadd.f32 0.0, %v2260
        %v2262 = vpop.f32.mrb[0].mxu0
        %v2263 = vadd.f32 0.0, %v2262
        %2264 = vmatprep.mubr.f32.mxu0 0.0
        %2265 = vmatmul.mubr.f32.gmra.mrb[0].mxu0 %v1565
        %v2266 = vpop.f32.mrb[0].mxu0
        %v2267 = vadd.f32 0.0, %v2266
        %v2268 = vpop.f32.mrb[0].mxu0
        %v2269 = vadd.f32 0.0, %v2268
        %2270 = vmatprep.mubr.f32.mxu0 0.0
        %2271 = vmatmul.mubr.f32.gmra.mrb[0].mxu0 %v1568
        %v2272 = vpop.f32.mrb[0].mxu0
        %v2273 = vadd.f32 0.0, %v2272
        %v2274 = vpop.f32.mrb[0].mxu0
        %v2275 = vadd.f32 0.0, %v2274
        %2276 = vmatprep.mubr.f32.mxu0 0.0
        %2277 = vmatmul.mubr.f32.gmra.mrb[0].mxu0 %v1571
        %v2278 = vpop.f32.mrb[0].mxu0
        %v2279 = vadd.f32 0.0, %v2278
        %v2280 = vpop.f32.mrb[0].mxu0
        %v2281 = vadd.f32 0.0, %v2280
        %2282 = vmatprep.mubr.f32.mxu0 0.0
        %2283 = vmatmul.mubr.f32.gmra.mrb[0].mxu0 %v1574
        %v2284 = vpop.f32.mrb[0].mxu0
        %v2285 = vadd.f32 0.0, %v2284
        %v2286 = vpop.f32.mrb[0].mxu0
        %v2287 = vadd.f32 0.0, %v2286
        %2288 = vmatprep.mubr.f32.mxu0 0.0
        %2289 = vmatmul.mubr.f32.gmra.mrb[0].mxu0 %v1577
        %v2290 = vpop.f32.mrb[0].mxu0
        %v2291 = vadd.f32 0.0, %v2290
        %v2292 = vpop.f32.mrb[0].mxu0
        %v2293 = vadd.f32 0.0, %v2292
        %2294 = vmatprep.mubr.f32.mxu0 0.0
        %2295 = vmatmul.mubr.f32.gmra.mrb[0].mxu0 %v1580
        %v2296 = vpop.f32.mrb[0].mxu0
        %v2297 = vadd.f32 0.0, %v2296
        %v2298 = vpop.f32.mrb[0].mxu0
        %v2299 = vadd.f32 0.0, %v2298
        %2300 = vmatprep.mubr.f32.mxu0 0.0
        %2301 = vmatmul.mubr.f32.gmra.mrb[0].mxu0 %v1583
        %v2302 = vpop.f32.mrb[0].mxu0
        %v2303 = vadd.f32 0.0, %v2302
        %v2304 = vpop.f32.mrb[0].mxu0
        %v2305 = vadd.f32 0.0, %v2304
        %2306 = vmatprep.mubr.f32.mxu0 0.0
        %2307 = vmatmul.mubr.f32.gmra.mrb[0].mxu0 %v1586
        %v2308 = vpop.f32.mrb[0].mxu0
        %v2309 = vadd.f32 0.0, %v2308
        %v2310 = vpop.f32.mrb[0].mxu0
        %v2311 = vadd.f32 0.0, %v2310
        %2312 = vmatprep.mubr.f32.mxu0 0.0
        %2313 = vmatmul.mubr.f32.gmra.mrb[0].mxu0 %v1589
        %v2314 = vpop.f32.mrb[0].mxu0
        %v2315 = vadd.f32 0.0, %v2314
        %v2316 = vpop.f32.mrb[0].mxu0
        %v2317 = vadd.f32 0.0, %v2316
        %2318 = vmatprep.mubr.f32.mxu0 0.0
        %2319 = vmatmul.mubr.f32.gmra.mrb[0].mxu0 %v1592
        %v2320 = vpop.f32.mrb[0].mxu0
        %v2321 = vadd.f32 0.0, %v2320
        %v2322 = vpop.f32.mrb[0].mxu0
        %v2323 = vadd.f32 0.0, %v2322
        %2324 = vmatprep.mubr.f32.mxu0 0.0
        %2325 = vmatmul.mubr.f32.gmra.mrb[0].mxu0 %v1595
        %v2326 = vpop.f32.mrb[0].mxu0
        %v2327 = vadd.f32 0.0, %v2326
        %v2328 = vpop.f32.mrb[0].mxu0
        %v2329 = vadd.f32 0.0, %v2328
        %2330 = vmatprep.mubr.f32.mxu0 0.0
        %2331 = vmatmul.mubr.f32.gmra.mrb[0].mxu0 %v1598
        %v2332 = vpop.f32.mrb[0].mxu0
        %v2333 = vadd.f32 0.0, %v2332
        %v2334 = vpop.f32.mrb[0].mxu0
        %v2335 = vadd.f32 0.0, %v2334
        %2336 = vmatprep.mubr.f32.mxu0 0.0
        %2337 = vmatmul.mubr.f32.gmra.mrb[0].mxu0 %v1601
        %v2338 = vpop.f32.mrb[0].mxu0
        %v2339 = vadd.f32 0.0, %v2338
        %v2340 = vpop.f32.mrb[0].mxu0
        %v2341 = vadd.f32 0.0, %v2340
        %2342 = vmatprep.mubr.f32.mxu0 0.0
        %2343 = vmatmul.mubr.f32.gmra.mrb[0].mxu0 %v1604
        %v2344 = vpop.f32.mrb[0].mxu0
        %v2345 = vadd.f32 0.0, %v2344
        %v2346 = vpop.f32.mrb[0].mxu0
        %v2347 = vadd.f32 0.0, %v2346
        %2348 = vmatprep.mubr.f32.mxu0 0.0
        %2349 = vmatmul.mubr.f32.gmra.mrb[0].mxu0 %v1607
        %v2350 = vpop.f32.mrb[0].mxu0
        %v2351 = vadd.f32 0.0, %v2350
        %v2352 = vpop.f32.mrb[0].mxu0
        %v2353 = vadd.f32 0.0, %v2352
        %2354 = vmatprep.mubr.f32.mxu0 0.0
        %2355 = vmatmul.mubr.f32.gmra.mrb[0].mxu0 %v1610
        %v2356 = vpop.f32.mrb[0].mxu0
        %v2357 = vadd.f32 0.0, %v2356
        %v2358 = vpop.f32.mrb[0].mxu0
        %v2359 = vadd.f32 0.0, %v2358
        %2360 = vmatprep.mubr.f32.mxu0 0.0
        %2361 = vmatmul.mubr.f32.gmra.mrb[0].mxu0 %v1613
        %v2362 = vpop.f32.mrb[0].mxu0
        %v2363 = vadd.f32 0.0, %v2362
        %v2364 = vpop.f32.mrb[0].mxu0
        %v2365 = vadd.f32 0.0, %v2364
        %2366 = vmatprep.mubr.f32.mxu0 0.0
        %2367 = vmatmul.mubr.f32.gmra.mrb[0].mxu0 %v1616
        %v2368 = vpop.f32.mrb[0].mxu0
        %v2369 = vadd.f32 0.0, %v2368
        %v2370 = vpop.f32.mrb[0].mxu0
        %v2371 = vadd.f32 0.0, %v2370
        %2372 = vmatprep.mubr.f32.mxu0 0.0
        %2373 = vmatmul.mubr.f32.gmra.mrb[0].mxu0 %v1619
        %v2374 = vpop.f32.mrb[0].mxu0
        %v2375 = vadd.f32 0.0, %v2374
        %v2376 = vpop.f32.mrb[0].mxu0
        %v2377 = vadd.f32 0.0, %v2376
        %2378 = vmatprep.mubr.f32.mxu0 0.0
        %2379 = vmatmul.mubr.f32.gmra.mrb[0].mxu0 %v1622
        %v2380 = vpop.f32.mrb[0].mxu0
        %v2381 = vadd.f32 0.0, %v2380
        %v2382 = vpop.f32.mrb[0].mxu0
        %v2383 = vadd.f32 0.0, %v2382
        %2384 = vmatprep.mubr.f32.mxu0 0.0
        %2385 = vmatmul.mubr.f32.gmra.mrb[0].mxu0 %v1625
        %v2386 = vpop.f32.mrb[0].mxu0
        %v2387 = vadd.f32 0.0, %v2386
        %v2388 = vpop.f32.mrb[0].mxu0
        %v2389 = vadd.f32 0.0, %v2388
        %2390 = vmatprep.mubr.f32.mxu0 0.0
        %2391 = vmatmul.mubr.f32.gmra.mrb[0].mxu0 %v1628
        %v2392 = vpop.f32.mrb[0].mxu0
        %v2393 = vadd.f32 0.0, %v2392
        %v2394 = vpop.f32.mrb[0].mxu0
        %v2395 = vadd.f32 0.0, %v2394
        %2396 = vmatprep.mubr.f32.mxu0 0.0
        %2397 = vmatmul.mubr.f32.gmra.mrb[0].mxu0 %v1631
        %v2398 = vpop.f32.mrb[0].mxu0
        %v2399 = vadd.f32 0.0, %v2398
        %v2400 = vpop.f32.mrb[0].mxu0
        %v2401 = vadd.f32 0.0, %v2400
        %2402 = vmatprep.mubr.f32.mxu0 0.0
        %2403 = vmatmul.mubr.f32.gmra.mrb[0].mxu0 %v1634
        %v2404 = vpop.f32.mrb[0].mxu0
        %v2405 = vadd.f32 0.0, %v2404
        %v2406 = vpop.f32.mrb[0].mxu0
        %v2407 = vadd.f32 0.0, %v2406
        %2408 = vmatprep.mubr.f32.mxu0 0.0
        %2409 = vmatmul.mubr.f32.gmra.mrb[0].mxu0 %v1637
        %v2410 = vpop.f32.mrb[0].mxu0
        %v2411 = vadd.f32 0.0, %v2410
        %v2412 = vpop.f32.mrb[0].mxu0
        %v2413 = vadd.f32 0.0, %v2412
        %2414 = vmatprep.mubr.f32.mxu0 0.0
        %2415 = vmatmul.mubr.f32.gmra.mrb[0].mxu0 %v1640
        %v2416 = vpop.f32.mrb[0].mxu0
        %v2417 = vadd.f32 0.0, %v2416
        %v2418 = vpop.f32.mrb[0].mxu0
        %v2419 = vadd.f32 0.0, %v2418
        %2420 = vmatprep.mubr.f32.mxu0 0.0
        %2421 = vmatmul.mubr.f32.gmra.mrb[0].mxu0 %v1643
        %v2422 = vpop.f32.mrb[0].mxu0
        %v2423 = vadd.f32 0.0, %v2422
        %v2424 = vpop.f32.mrb[0].mxu0
        %v2425 = vadd.f32 0.0, %v2424
        %2426 = vmatprep.mubr.f32.mxu0 0.0
        %2427 = vmatmul.mubr.f32.gmra.mrb[0].mxu0 %v1646
        %v2428 = vpop.f32.mrb[0].mxu0
        %v2429 = vadd.f32 0.0, %v2428
        %v2430 = vpop.f32.mrb[0].mxu0
        %v2431 = vadd.f32 0.0, %v2430
        %2432 = vmatprep.mubr.f32.mxu0 0.0
        %2433 = vmatmul.mubr.f32.gmra.mrb[0].mxu0 %v1649
        %v2434 = vpop.f32.mrb[0].mxu0
        %v2435 = vadd.f32 0.0, %v2434
        %v2436 = vpop.f32.mrb[0].mxu0
        %v2437 = vadd.f32 0.0, %v2436
        %2438 = vmatprep.mubr.f32.mxu0 0.0
        %2439 = vmatmul.mubr.f32.gmra.mrb[0].mxu0 %v1652
        %v2440 = vpop.f32.mrb[0].mxu0
        %v2441 = vadd.f32 0.0, %v2440
        %v2442 = vpop.f32.mrb[0].mxu0
        %v2443 = vadd.f32 0.0, %v2442
        %2444 = vmatprep.mubr.f32.mxu0 0.0
        %2445 = vmatmul.mubr.f32.gmra.mrb[0].mxu0 %v1655
        %v2446 = vpop.f32.mrb[0].mxu0
        %v2447 = vadd.f32 0.0, %v2446
        %v2448 = vpop.f32.mrb[0].mxu0
        %v2449 = vadd.f32 0.0, %v2448
        %2450 = vmatprep.mubr.f32.mxu0 0.0
        %2451 = vmatmul.mubr.f32.gmra.mrb[0].mxu0 %v1658
        %v2452 = vpop.f32.mrb[0].mxu0
        %v2453 = vadd.f32 0.0, %v2452
        %v2454 = vpop.f32.mrb[0].mxu0
        %v2455 = vadd.f32 0.0, %v2454
        %2456 = vmatprep.mubr.f32.mxu0 0.0
        %2457 = vmatmul.mubr.f32.gmra.mrb[0].mxu0 %v1661
        %v2458 = vpop.f32.mrb[0].mxu0
        %v2459 = vadd.f32 0.0, %v2458
        %v2460 = vpop.f32.mrb[0].mxu0
        %v2461 = vadd.f32 0.0, %v2460
        %2462 = vmatprep.mubr.f32.mxu0 0.0
        %2463 = vmatmul.mubr.f32.gmra.mrb[0].mxu0 %v1664
        %v2464 = vpop.f32.mrb[0].mxu0
        %v2465 = vadd.f32 0.0, %v2464
        %v2466 = vpop.f32.mrb[0].mxu0
        %v2467 = vadd.f32 0.0, %v2466
        %2468 = vmatprep.mubr.f32.mxu0 0.0
        %2469 = vmatmul.mubr.f32.gmra.mrb[0].mxu0 %v1667
        %v2470 = vpop.f32.mrb[0].mxu0
        %v2471 = vadd.f32 0.0, %v2470
        %v2472 = vpop.f32.mrb[0].mxu0
        %v2473 = vadd.f32 0.0, %v2472
        %2474 = vmatprep.mubr.f32.mxu0 0.0
        %2475 = vmatmul.mubr.f32.gmra.mrb[0].mxu0 %v1670
        %v2476 = vpop.f32.mrb[0].mxu0
        %v2477 = vadd.f32 0.0, %v2476
        %v2478 = vpop.f32.mrb[0].mxu0
        %v2479 = vadd.f32 0.0, %v2478
        %2480 = vmatprep.mubr.f32.mxu0 0.0
        %2481 = vmatmul.mubr.f32.gmra.mrb[0].mxu0 %v1673
        %v2482 = vpop.f32.mrb[0].mxu0
        %v2483 = vadd.f32 0.0, %v2482
        %v2484 = vpop.f32.mrb[0].mxu0
        %v2485 = vadd.f32 0.0, %v2484
        %2486 = vmatprep.mubr.f32.mxu0 0.0
        %2487 = vmatmul.mubr.f32.gmra.mrb[0].mxu0 %v1676
        %v2488 = vpop.f32.mrb[0].mxu0
        %v2489 = vadd.f32 0.0, %v2488
        %v2490 = vpop.f32.mrb[0].mxu0
        %v2491 = vadd.f32 0.0, %v2490
        %2492 = vmatprep.mubr.f32.mxu0 0.0
        %2493 = vmatmul.mubr.f32.gmra.mrb[0].mxu0 %v1679
        %v2494 = vpop.f32.mrb[0].mxu0
        %v2495 = vadd.f32 0.0, %v2494
        %v2496 = vpop.f32.mrb[0].mxu0
        %v2497 = vadd.f32 0.0, %v2496
        %2498 = vmatprep.mubr.f32.mxu0 0.0
        %2499 = vmatmul.mubr.f32.gmra.mrb[0].mxu0 %v1682
        %v2500 = vpop.f32.mrb[0].mxu0
        %v2501 = vadd.f32 0.0, %v2500
        %v2502 = vpop.f32.mrb[0].mxu0
        %v2503 = vadd.f32 0.0, %v2502
        %2504 = vmatprep.mubr.f32.mxu0 0.0
        %2505 = vmatmul.mubr.f32.gmra.mrb[0].mxu0 %v1685
        %v2506 = vpop.f32.mrb[0].mxu0
        %v2507 = vadd.f32 0.0, %v2506
        %v2508 = vpop.f32.mrb[0].mxu0
        %v2509 = vadd.f32 0.0, %v2508
        %2510 = vmatprep.mubr.f32.mxu0 0.0
        %2511 = vmatmul.mubr.f32.gmra.mrb[0].mxu0 %v1688
        %v2512 = vpop.f32.mrb[0].mxu0
        %v2513 = vadd.f32 0.0, %v2512
        %v2514 = vpop.f32.mrb[0].mxu0
        %v2515 = vadd.f32 0.0, %v2514
        %2516 = vmatprep.mubr.f32.mxu0 0.0
        %2517 = vmatmul.mubr.f32.gmra.mrb[0].mxu0 %v1691
        %v2518 = vpop.f32.mrb[0].mxu0
        %v2519 = vadd.f32 0.0, %v2518
        %v2520 = vpop.f32.mrb[0].mxu0
        %v2521 = vadd.f32 0.0, %v2520
        %2522 = vmatprep.mubr.f32.mxu0 0.0
        %2523 = vmatmul.mubr.f32.gmra.mrb[0].mxu0 %v1694
        %v2524 = vpop.f32.mrb[0].mxu0
        %v2525 = vadd.f32 0.0, %v2524
        %v2526 = vpop.f32.mrb[0].mxu0
        %v2527 = vadd.f32 0.0, %v2526
        %2528 = vdwg.mxu0
        %2529 = vmatprep.subr.mxu0 %v1178
        %2530 = vmatpush1.msra.mxu0 %v1177
        %2531 = vmatprep.subr.mxu0 %v1182
        %2532 = vmatpush1.msra.mxu0 %v1181
        %2533 = vmatprep.subr.mxu0 0.0
        %2534 = vmatpush1.msra.mxu0 0.0
        %2535 = vmatprep.subr.mxu0 0.0
        %2536 = vmatpush1.msra.mxu0 0.0
        %2537 = vmatprep.subr.mxu0 0.0
        %2538 = vmatpush1.msra.mxu0 0.0
        %2539 = vmatprep.subr.mxu0 0.0
        %2540 = vmatpush1.msra.mxu0 0.0
        %2541 = vmatprep.subr.mxu0 0.0
        %2542 = vmatpush1.msra.mxu0 0.0
        %2543 = vmatprep.subr.mxu0 0.0
        %2544 = vmatpush1.msra.mxu0 0.0
        %2545 = vmatprep.subr.mxu0 0.0
        %2546 = vmatpush1.msra.mxu0 0.0
        %2547 = vmatprep.subr.mxu0 0.0
        %2548 = vmatpush1.msra.mxu0 0.0
        %2549 = vmatprep.subr.mxu0 0.0
        %2550 = vmatpush1.msra.mxu0 0.0
        %2551 = vmatprep.subr.mxu0 0.0
        %2552 = vmatpush1.msra.mxu0 0.0
        %2553 = vmatprep.subr.mxu0 0.0
        %2554 = vmatpush1.msra.mxu0 0.0
        %2555 = vmatprep.subr.mxu0 0.0
        %2556 = vmatpush1.msra.mxu0 0.0
        %2557 = vmatprep.subr.mxu0 0.0
        %2558 = vmatpush1.msra.mxu0 0.0
        %2559 = vmatprep.subr.mxu0 0.0
        %2560 = vmatpush1.msra.mxu0 0.0
        %2561 = vmatprep.subr.mxu0 0.0
        %2562 = vmatpush1.msra.mxu0 0.0
        %2563 = vmatprep.subr.mxu0 0.0
        %2564 = vmatpush1.msra.mxu0 0.0
        %2565 = vmatprep.subr.mxu0 0.0
        %2566 = vmatpush1.msra.mxu0 0.0
        %2567 = vmatprep.subr.mxu0 0.0
        %2568 = vmatpush1.msra.mxu0 0.0
        %2569 = vmatprep.subr.mxu0 0.0
        %2570 = vmatpush1.msra.mxu0 0.0
        %2571 = vmatprep.subr.mxu0 0.0
        %2572 = vmatpush1.msra.mxu0 0.0
        %2573 = vmatprep.subr.mxu0 0.0
        %2574 = vmatpush1.msra.mxu0 0.0
        %2575 = vmatprep.subr.mxu0 0.0
        %2576 = vmatpush1.msra.mxu0 0.0
        %2577 = vmatprep.subr.mxu0 0.0
        %2578 = vmatpush1.msra.mxu0 0.0
        %2579 = vmatprep.subr.mxu0 0.0
        %2580 = vmatpush1.msra.mxu0 0.0
        %2581 = vmatprep.subr.mxu0 0.0
        %2582 = vmatpush1.msra.mxu0 0.0
        %2583 = vmatprep.subr.mxu0 0.0
        %2584 = vmatpush1.msra.mxu0 0.0
        %2585 = vmatprep.subr.mxu0 0.0
        %2586 = vmatpush1.msra.mxu0 0.0
        %2587 = vmatprep.subr.mxu0 0.0
        %2588 = vmatpush1.msra.mxu0 0.0
        %2589 = vmatprep.subr.mxu0 0.0
        %2590 = vmatpush1.msra.mxu0 0.0
        %2591 = vmatprep.subr.mxu0 0.0
        %2592 = vmatpush1.msra.mxu0 0.0
        %2593 = vmatprep.mubr.f32.mxu0 0.0
        %2594 = vmatmul.mubr.f32.gmra.mrb[0].mxu0 %v1313
        %v2595 = vpop.f32.mrb[0].mxu0
        %v2596 = vadd.f32 0.0, %v2595
        %v2597 = vpop.f32.mrb[0].mxu0
        %v2598 = vadd.f32 0.0, %v2597
        %2599 = vmatprep.mubr.f32.mxu0 0.0
        %2600 = vmatmul.mubr.f32.gmra.mrb[0].mxu0 %v1316
        %v2601 = vpop.f32.mrb[0].mxu0
        %v2602 = vadd.f32 0.0, %v2601
        %v2603 = vpop.f32.mrb[0].mxu0
        %v2604 = vadd.f32 0.0, %v2603
        %2605 = vmatprep.mubr.f32.mxu0 0.0
        %2606 = vmatmul.mubr.f32.gmra.mrb[0].mxu0 %v1319
        %v2607 = vpop.f32.mrb[0].mxu0
        %v2608 = vadd.f32 0.0, %v2607
        %v2609 = vpop.f32.mrb[0].mxu0
        %v2610 = vadd.f32 0.0, %v2609
        %2611 = vmatprep.mubr.f32.mxu0 0.0
        %2612 = vmatmul.mubr.f32.gmra.mrb[0].mxu0 %v1322
        %v2613 = vpop.f32.mrb[0].mxu0
        %v2614 = vadd.f32 0.0, %v2613
        %v2615 = vpop.f32.mrb[0].mxu0
        %v2616 = vadd.f32 0.0, %v2615
        %2617 = vmatprep.mubr.f32.mxu0 0.0
        %2618 = vmatmul.mubr.f32.gmra.mrb[0].mxu0 %v1325
        %v2619 = vpop.f32.mrb[0].mxu0
        %v2620 = vadd.f32 0.0, %v2619
        %v2621 = vpop.f32.mrb[0].mxu0
        %v2622 = vadd.f32 0.0, %v2621
        %2623 = vmatprep.mubr.f32.mxu0 0.0
        %2624 = vmatmul.mubr.f32.gmra.mrb[0].mxu0 %v1328
        %v2625 = vpop.f32.mrb[0].mxu0
        %v2626 = vadd.f32 0.0, %v2625
        %v2627 = vpop.f32.mrb[0].mxu0
        %v2628 = vadd.f32 0.0, %v2627
        %2629 = vmatprep.mubr.f32.mxu0 0.0
        %2630 = vmatmul.mubr.f32.gmra.mrb[0].mxu0 %v1331
        %v2631 = vpop.f32.mrb[0].mxu0
        %v2632 = vadd.f32 0.0, %v2631
        %v2633 = vpop.f32.mrb[0].mxu0
        %v2634 = vadd.f32 0.0, %v2633
        %2635 = vmatprep.mubr.f32.mxu0 0.0
        %2636 = vmatmul.mubr.f32.gmra.mrb[0].mxu0 %v1334
        %v2637 = vpop.f32.mrb[0].mxu0
        %v2638 = vadd.f32 0.0, %v2637
        %v2639 = vpop.f32.mrb[0].mxu0
        %v2640 = vadd.f32 0.0, %v2639
        %2641 = vmatprep.mubr.f32.mxu0 0.0
        %2642 = vmatmul.mubr.f32.gmra.mrb[0].mxu0 %v1337
        %v2643 = vpop.f32.mrb[0].mxu0
        %v2644 = vadd.f32 0.0, %v2643
        %v2645 = vpop.f32.mrb[0].mxu0
        %v2646 = vadd.f32 0.0, %v2645
        %2647 = vmatprep.mubr.f32.mxu0 0.0
        %2648 = vmatmul.mubr.f32.gmra.mrb[0].mxu0 %v1340
        %v2649 = vpop.f32.mrb[0].mxu0
        %v2650 = vadd.f32 0.0, %v2649
        %v2651 = vpop.f32.mrb[0].mxu0
        %v2652 = vadd.f32 0.0, %v2651
        %2653 = vmatprep.mubr.f32.mxu0 0.0
        %2654 = vmatmul.mubr.f32.gmra.mrb[0].mxu0 %v1343
        %v2655 = vpop.f32.mrb[0].mxu0
        %v2656 = vadd.f32 0.0, %v2655
        %v2657 = vpop.f32.mrb[0].mxu0
        %v2658 = vadd.f32 0.0, %v2657
        %2659 = vmatprep.mubr.f32.mxu0 0.0
        %2660 = vmatmul.mubr.f32.gmra.mrb[0].mxu0 %v1346
        %v2661 = vpop.f32.mrb[0].mxu0
        %v2662 = vadd.f32 0.0, %v2661
        %v2663 = vpop.f32.mrb[0].mxu0
        %v2664 = vadd.f32 0.0, %v2663
        %2665 = vmatprep.mubr.f32.mxu0 0.0
        %2666 = vmatmul.mubr.f32.gmra.mrb[0].mxu0 %v1349
        %v2667 = vpop.f32.mrb[0].mxu0
        %v2668 = vadd.f32 0.0, %v2667
        %v2669 = vpop.f32.mrb[0].mxu0
        %v2670 = vadd.f32 0.0, %v2669
        %2671 = vmatprep.mubr.f32.mxu0 0.0
        %2672 = vmatmul.mubr.f32.gmra.mrb[0].mxu0 %v1352
        %v2673 = vpop.f32.mrb[0].mxu0
        %v2674 = vadd.f32 0.0, %v2673
        %v2675 = vpop.f32.mrb[0].mxu0
        %v2676 = vadd.f32 0.0, %v2675
        %2677 = vmatprep.mubr.f32.mxu0 0.0
        %2678 = vmatmul.mubr.f32.gmra.mrb[0].mxu0 %v1355
        %v2679 = vpop.f32.mrb[0].mxu0
        %v2680 = vadd.f32 0.0, %v2679
        %v2681 = vpop.f32.mrb[0].mxu0
        %v2682 = vadd.f32 0.0, %v2681
        %2683 = vmatprep.mubr.f32.mxu0 0.0
        %2684 = vmatmul.mubr.f32.gmra.mrb[0].mxu0 %v1358
        %v2685 = vpop.f32.mrb[0].mxu0
        %v2686 = vadd.f32 0.0, %v2685
        %v2687 = vpop.f32.mrb[0].mxu0
        %v2688 = vadd.f32 0.0, %v2687
        %2689 = vmatprep.mubr.f32.mxu0 0.0
        %2690 = vmatmul.mubr.f32.gmra.mrb[0].mxu0 %v1361
        %v2691 = vpop.f32.mrb[0].mxu0
        %v2692 = vadd.f32 0.0, %v2691
        %v2693 = vpop.f32.mrb[0].mxu0
        %v2694 = vadd.f32 0.0, %v2693
        %2695 = vmatprep.mubr.f32.mxu0 0.0
        %2696 = vmatmul.mubr.f32.gmra.mrb[0].mxu0 %v1364
        %v2697 = vpop.f32.mrb[0].mxu0
        %v2698 = vadd.f32 0.0, %v2697
        %v2699 = vpop.f32.mrb[0].mxu0
        %v2700 = vadd.f32 0.0, %v2699
        %2701 = vmatprep.mubr.f32.mxu0 0.0
        %2702 = vmatmul.mubr.f32.gmra.mrb[0].mxu0 %v1367
        %v2703 = vpop.f32.mrb[0].mxu0
        %v2704 = vadd.f32 0.0, %v2703
        %v2705 = vpop.f32.mrb[0].mxu0
        %v2706 = vadd.f32 0.0, %v2705
        %2707 = vmatprep.mubr.f32.mxu0 0.0
        %2708 = vmatmul.mubr.f32.gmra.mrb[0].mxu0 %v1370
        %v2709 = vpop.f32.mrb[0].mxu0
        %v2710 = vadd.f32 0.0, %v2709
        %v2711 = vpop.f32.mrb[0].mxu0
        %v2712 = vadd.f32 0.0, %v2711
        %2713 = vmatprep.mubr.f32.mxu0 0.0
        %2714 = vmatmul.mubr.f32.gmra.mrb[0].mxu0 %v1373
        %v2715 = vpop.f32.mrb[0].mxu0
        %v2716 = vadd.f32 0.0, %v2715
        %v2717 = vpop.f32.mrb[0].mxu0
        %v2718 = vadd.f32 0.0, %v2717
        %2719 = vmatprep.mubr.f32.mxu0 0.0
        %2720 = vmatmul.mubr.f32.gmra.mrb[0].mxu0 %v1376
        %v2721 = vpop.f32.mrb[0].mxu0
        %v2722 = vadd.f32 0.0, %v2721
        %v2723 = vpop.f32.mrb[0].mxu0
        %v2724 = vadd.f32 0.0, %v2723
        %2725 = vmatprep.mubr.f32.mxu0 0.0
        %2726 = vmatmul.mubr.f32.gmra.mrb[0].mxu0 %v1379
        %v2727 = vpop.f32.mrb[0].mxu0
        %v2728 = vadd.f32 0.0, %v2727
        %v2729 = vpop.f32.mrb[0].mxu0
        %v2730 = vadd.f32 0.0, %v2729
        %2731 = vmatprep.mubr.f32.mxu0 0.0
        %2732 = vmatmul.mubr.f32.gmra.mrb[0].mxu0 %v1382
        %v2733 = vpop.f32.mrb[0].mxu0
        %v2734 = vadd.f32 0.0, %v2733
        %v2735 = vpop.f32.mrb[0].mxu0
        %v2736 = vadd.f32 0.0, %v2735
        %2737 = vmatprep.mubr.f32.mxu0 0.0
        %2738 = vmatmul.mubr.f32.gmra.mrb[0].mxu0 %v1385
        %v2739 = vpop.f32.mrb[0].mxu0
        %v2740 = vadd.f32 0.0, %v2739
        %v2741 = vpop.f32.mrb[0].mxu0
        %v2742 = vadd.f32 0.0, %v2741
        %2743 = vmatprep.mubr.f32.mxu0 0.0
        %2744 = vmatmul.mubr.f32.gmra.mrb[0].mxu0 %v1388
        %v2745 = vpop.f32.mrb[0].mxu0
        %v2746 = vadd.f32 0.0, %v2745
        %v2747 = vpop.f32.mrb[0].mxu0
        %v2748 = vadd.f32 0.0, %v2747
        %2749 = vmatprep.mubr.f32.mxu0 0.0
        %2750 = vmatmul.mubr.f32.gmra.mrb[0].mxu0 %v1391
        %v2751 = vpop.f32.mrb[0].mxu0
        %v2752 = vadd.f32 0.0, %v2751
        %v2753 = vpop.f32.mrb[0].mxu0
        %v2754 = vadd.f32 0.0, %v2753
        %2755 = vmatprep.mubr.f32.mxu0 0.0
        %2756 = vmatmul.mubr.f32.gmra.mrb[0].mxu0 %v1394
        %v2757 = vpop.f32.mrb[0].mxu0
        %v2758 = vadd.f32 0.0, %v2757
        %v2759 = vpop.f32.mrb[0].mxu0
        %v2760 = vadd.f32 0.0, %v2759
        %2761 = vmatprep.mubr.f32.mxu0 0.0
        %2762 = vmatmul.mubr.f32.gmra.mrb[0].mxu0 %v1397
        %v2763 = vpop.f32.mrb[0].mxu0
        %v2764 = vadd.f32 0.0, %v2763
        %v2765 = vpop.f32.mrb[0].mxu0
        %v2766 = vadd.f32 0.0, %v2765
        %2767 = vmatprep.mubr.f32.mxu0 0.0
        %2768 = vmatmul.mubr.f32.gmra.mrb[0].mxu0 %v1400
        %v2769 = vpop.f32.mrb[0].mxu0
        %v2770 = vadd.f32 0.0, %v2769
        %v2771 = vpop.f32.mrb[0].mxu0
        %v2772 = vadd.f32 0.0, %v2771
        %2773 = vmatprep.mubr.f32.mxu0 0.0
        %2774 = vmatmul.mubr.f32.gmra.mrb[0].mxu0 %v1403
        %v2775 = vpop.f32.mrb[0].mxu0
        %v2776 = vadd.f32 0.0, %v2775
        %v2777 = vpop.f32.mrb[0].mxu0
        %v2778 = vadd.f32 0.0, %v2777
        %2779 = vmatprep.mubr.f32.mxu0 0.0
        %2780 = vmatmul.mubr.f32.gmra.mrb[0].mxu0 %v1406
        %v2781 = vpop.f32.mrb[0].mxu0
        %v2782 = vadd.f32 0.0, %v2781
        %v2783 = vpop.f32.mrb[0].mxu0
        %v2784 = vadd.f32 0.0, %v2783
        %2785 = vmatprep.mubr.f32.mxu0 0.0
        %2786 = vmatmul.mubr.f32.gmra.mrb[0].mxu0 %v1409
        %v2787 = vpop.f32.mrb[0].mxu0
        %v2788 = vadd.f32 0.0, %v2787
        %v2789 = vpop.f32.mrb[0].mxu0
        %v2790 = vadd.f32 0.0, %v2789
        %2791 = vmatprep.mubr.f32.mxu0 0.0
        %2792 = vmatmul.mubr.f32.gmra.mrb[0].mxu0 %v1412
        %v2793 = vpop.f32.mrb[0].mxu0
        %v2794 = vadd.f32 0.0, %v2793
        %v2795 = vpop.f32.mrb[0].mxu0
        %v2796 = vadd.f32 0.0, %v2795
        %2797 = vmatprep.mubr.f32.mxu0 0.0
        %2798 = vmatmul.mubr.f32.gmra.mrb[0].mxu0 %v1415
        %v2799 = vpop.f32.mrb[0].mxu0
        %v2800 = vadd.f32 0.0, %v2799
        %v2801 = vpop.f32.mrb[0].mxu0
        %v2802 = vadd.f32 0.0, %v2801
        %2803 = vmatprep.mubr.f32.mxu0 0.0
        %2804 = vmatmul.mubr.f32.gmra.mrb[0].mxu0 %v1418
        %v2805 = vpop.f32.mrb[0].mxu0
        %v2806 = vadd.f32 0.0, %v2805
        %v2807 = vpop.f32.mrb[0].mxu0
        %v2808 = vadd.f32 0.0, %v2807
        %2809 = vmatprep.mubr.f32.mxu0 0.0
        %2810 = vmatmul.mubr.f32.gmra.mrb[0].mxu0 %v1421
        %v2811 = vpop.f32.mrb[0].mxu0
        %v2812 = vadd.f32 0.0, %v2811
        %v2813 = vpop.f32.mrb[0].mxu0
        %v2814 = vadd.f32 0.0, %v2813
        %2815 = vmatprep.mubr.f32.mxu0 0.0
        %2816 = vmatmul.mubr.f32.gmra.mrb[0].mxu0 %v1424
        %v2817 = vpop.f32.mrb[0].mxu0
        %v2818 = vadd.f32 0.0, %v2817
        %v2819 = vpop.f32.mrb[0].mxu0
        %v2820 = vadd.f32 0.0, %v2819
        %2821 = vmatprep.mubr.f32.mxu0 0.0
        %2822 = vmatmul.mubr.f32.gmra.mrb[0].mxu0 %v1427
        %v2823 = vpop.f32.mrb[0].mxu0
        %v2824 = vadd.f32 0.0, %v2823
        %v2825 = vpop.f32.mrb[0].mxu0
        %v2826 = vadd.f32 0.0, %v2825
        %2827 = vmatprep.mubr.f32.mxu0 0.0
        %2828 = vmatmul.mubr.f32.gmra.mrb[0].mxu0 %v1430
        %v2829 = vpop.f32.mrb[0].mxu0
        %v2830 = vadd.f32 0.0, %v2829
        %v2831 = vpop.f32.mrb[0].mxu0
        %v2832 = vadd.f32 0.0, %v2831
        %2833 = vmatprep.mubr.f32.mxu0 0.0
        %2834 = vmatmul.mubr.f32.gmra.mrb[0].mxu0 %v1433
        %v2835 = vpop.f32.mrb[0].mxu0
        %v2836 = vadd.f32 0.0, %v2835
        %v2837 = vpop.f32.mrb[0].mxu0
        %v2838 = vadd.f32 0.0, %v2837
        %2839 = vmatprep.mubr.f32.mxu0 0.0
        %2840 = vmatmul.mubr.f32.gmra.mrb[0].mxu0 %v1436
        %v2841 = vpop.f32.mrb[0].mxu0
        %v2842 = vadd.f32 0.0, %v2841
        %v2843 = vpop.f32.mrb[0].mxu0
        %v2844 = vadd.f32 0.0, %v2843
        %2845 = vmatprep.mubr.f32.mxu0 0.0
        %2846 = vmatmul.mubr.f32.gmra.mrb[0].mxu0 %v1439
        %v2847 = vpop.f32.mrb[0].mxu0
        %v2848 = vadd.f32 0.0, %v2847
        %v2849 = vpop.f32.mrb[0].mxu0
        %v2850 = vadd.f32 0.0, %v2849
        %2851 = vmatprep.mubr.f32.mxu0 0.0
        %2852 = vmatmul.mubr.f32.gmra.mrb[0].mxu0 %v1442
        %v2853 = vpop.f32.mrb[0].mxu0
        %v2854 = vadd.f32 0.0, %v2853
        %v2855 = vpop.f32.mrb[0].mxu0
        %v2856 = vadd.f32 0.0, %v2855
        %2857 = vmatprep.mubr.f32.mxu0 0.0
        %2858 = vmatmul.mubr.f32.gmra.mrb[0].mxu0 %v1445
        %v2859 = vpop.f32.mrb[0].mxu0
        %v2860 = vadd.f32 0.0, %v2859
        %v2861 = vpop.f32.mrb[0].mxu0
        %v2862 = vadd.f32 0.0, %v2861
        %2863 = vmatprep.mubr.f32.mxu0 0.0
        %2864 = vmatmul.mubr.f32.gmra.mrb[0].mxu0 %v1448
        %v2865 = vpop.f32.mrb[0].mxu0
        %v2866 = vadd.f32 0.0, %v2865
        %v2867 = vpop.f32.mrb[0].mxu0
        %v2868 = vadd.f32 0.0, %v2867
        %2869 = vmatprep.mubr.f32.mxu0 0.0
        %2870 = vmatmul.mubr.f32.gmra.mrb[0].mxu0 %v1451
        %v2871 = vpop.f32.mrb[0].mxu0
        %v2872 = vadd.f32 0.0, %v2871
        %v2873 = vpop.f32.mrb[0].mxu0
        %v2874 = vadd.f32 0.0, %v2873
        %2875 = vmatprep.mubr.f32.mxu0 0.0
        %2876 = vmatmul.mubr.f32.gmra.mrb[0].mxu0 %v1454
        %v2877 = vpop.f32.mrb[0].mxu0
        %v2878 = vadd.f32 0.0, %v2877
        %v2879 = vpop.f32.mrb[0].mxu0
        %v2880 = vadd.f32 0.0, %v2879
        %2881 = vmatprep.mubr.f32.mxu0 0.0
        %2882 = vmatmul.mubr.f32.gmra.mrb[0].mxu0 %v1457
        %v2883 = vpop.f32.mrb[0].mxu0
        %v2884 = vadd.f32 0.0, %v2883
        %v2885 = vpop.f32.mrb[0].mxu0
        %v2886 = vadd.f32 0.0, %v2885
        %2887 = vmatprep.mubr.f32.mxu0 0.0
        %2888 = vmatmul.mubr.f32.gmra.mrb[0].mxu0 %v1460
        %v2889 = vpop.f32.mrb[0].mxu0
        %v2890 = vadd.f32 0.0, %v2889
        %v2891 = vpop.f32.mrb[0].mxu0
        %v2892 = vadd.f32 0.0, %v2891
        %2893 = vmatprep.mubr.f32.mxu0 0.0
        %2894 = vmatmul.mubr.f32.gmra.mrb[0].mxu0 %v1463
        %v2895 = vpop.f32.mrb[0].mxu0
        %v2896 = vadd.f32 0.0, %v2895
        %v2897 = vpop.f32.mrb[0].mxu0
        %v2898 = vadd.f32 0.0, %v2897
        %2899 = vmatprep.mubr.f32.mxu0 0.0
        %2900 = vmatmul.mubr.f32.gmra.mrb[0].mxu0 %v1466
        %v2901 = vpop.f32.mrb[0].mxu0
        %v2902 = vadd.f32 0.0, %v2901
        %v2903 = vpop.f32.mrb[0].mxu0
        %v2904 = vadd.f32 0.0, %v2903
        %2905 = vmatprep.mubr.f32.mxu0 0.0
        %2906 = vmatmul.mubr.f32.gmra.mrb[0].mxu0 %v1469
        %v2907 = vpop.f32.mrb[0].mxu0
        %v2908 = vadd.f32 0.0, %v2907
        %v2909 = vpop.f32.mrb[0].mxu0
        %v2910 = vadd.f32 0.0, %v2909
        %2911 = vmatprep.mubr.f32.mxu0 0.0
        %2912 = vmatmul.mubr.f32.gmra.mrb[0].mxu0 %v1472
        %v2913 = vpop.f32.mrb[0].mxu0
        %v2914 = vadd.f32 0.0, %v2913
        %v2915 = vpop.f32.mrb[0].mxu0
        %v2916 = vadd.f32 0.0, %v2915
        %2917 = vmatprep.mubr.f32.mxu0 0.0
        %2918 = vmatmul.mubr.f32.gmra.mrb[0].mxu0 %v1475
        %v2919 = vpop.f32.mrb[0].mxu0
        %v2920 = vadd.f32 0.0, %v2919
        %v2921 = vpop.f32.mrb[0].mxu0
        %v2922 = vadd.f32 0.0, %v2921
        %2923 = vmatprep.mubr.f32.mxu0 0.0
        %2924 = vmatmul.mubr.f32.gmra.mrb[0].mxu0 %v1478
        %v2925 = vpop.f32.mrb[0].mxu0
        %v2926 = vadd.f32 0.0, %v2925
        %v2927 = vpop.f32.mrb[0].mxu0
        %v2928 = vadd.f32 0.0, %v2927
        %2929 = vmatprep.mubr.f32.mxu0 0.0
        %2930 = vmatmul.mubr.f32.gmra.mrb[0].mxu0 %v1481
        %v2931 = vpop.f32.mrb[0].mxu0
        %v2932 = vadd.f32 0.0, %v2931
        %v2933 = vpop.f32.mrb[0].mxu0
        %v2934 = vadd.f32 0.0, %v2933
        %2935 = vmatprep.mubr.f32.mxu0 0.0
        %2936 = vmatmul.mubr.f32.gmra.mrb[0].mxu0 %v1484
        %v2937 = vpop.f32.mrb[0].mxu0
        %v2938 = vadd.f32 0.0, %v2937
        %v2939 = vpop.f32.mrb[0].mxu0
        %v2940 = vadd.f32 0.0, %v2939
        %2941 = vmatprep.mubr.f32.mxu0 0.0
        %2942 = vmatmul.mubr.f32.gmra.mrb[0].mxu0 %v1487
        %v2943 = vpop.f32.mrb[0].mxu0
        %v2944 = vadd.f32 0.0, %v2943
        %v2945 = vpop.f32.mrb[0].mxu0
        %v2946 = vadd.f32 0.0, %v2945
        %2947 = vmatprep.mubr.f32.mxu0 0.0
        %2948 = vmatmul.mubr.f32.gmra.mrb[0].mxu0 %v1490
        %v2949 = vpop.f32.mrb[0].mxu0
        %v2950 = vadd.f32 0.0, %v2949
        %v2951 = vpop.f32.mrb[0].mxu0
        %v2952 = vadd.f32 0.0, %v2951
        %2953 = vmatprep.mubr.f32.mxu0 0.0
        %2954 = vmatmul.mubr.f32.gmra.mrb[0].mxu0 %v1493
        %v2955 = vpop.f32.mrb[0].mxu0
        %v2956 = vadd.f32 0.0, %v2955
        %v2957 = vpop.f32.mrb[0].mxu0
        %v2958 = vadd.f32 0.0, %v2957
        %2959 = vmatprep.mubr.f32.mxu0 0.0
        %2960 = vmatmul.mubr.f32.gmra.mrb[0].mxu0 %v1496
        %v2961 = vpop.f32.mrb[0].mxu0
        %v2962 = vadd.f32 0.0, %v2961
        %v2963 = vpop.f32.mrb[0].mxu0
        %v2964 = vadd.f32 0.0, %v2963
        %2965 = vmatprep.mubr.f32.mxu0 0.0
        %2966 = vmatmul.mubr.f32.gmra.mrb[0].mxu0 %v1499
        %v2967 = vpop.f32.mrb[0].mxu0
        %v2968 = vadd.f32 0.0, %v2967
        %v2969 = vpop.f32.mrb[0].mxu0
        %v2970 = vadd.f32 0.0, %v2969
        %2971 = vmatprep.mubr.f32.mxu0 0.0
        %2972 = vmatmul.mubr.f32.gmra.mrb[0].mxu0 %v1502
        %v2973 = vpop.f32.mrb[0].mxu0
        %v2974 = vadd.f32 0.0, %v2973
        %v2975 = vpop.f32.mrb[0].mxu0
        %v2976 = vadd.f32 0.0, %v2975
        %2977 = vmatprep.mubr.f32.mxu0 0.0
        %2978 = vmatmul.mubr.f32.gmra.mrb[0].mxu0 %v1505
        %v2979 = vpop.f32.mrb[0].mxu0
        %v2980 = vadd.f32 0.0, %v2979
        %v2981 = vpop.f32.mrb[0].mxu0
        %v2982 = vadd.f32 0.0, %v2981
        %2983 = vmatprep.mubr.f32.mxu0 0.0
        %2984 = vmatmul.mubr.f32.gmra.mrb[0].mxu0 %v1508
        %v2985 = vpop.f32.mrb[0].mxu0
        %v2986 = vadd.f32 0.0, %v2985
        %v2987 = vpop.f32.mrb[0].mxu0
        %v2988 = vadd.f32 0.0, %v2987
        %2989 = vmatprep.mubr.f32.mxu0 0.0
        %2990 = vmatmul.mubr.f32.gmra.mrb[0].mxu0 %v1511
        %v2991 = vpop.f32.mrb[0].mxu0
        %v2992 = vadd.f32 0.0, %v2991
        %v2993 = vpop.f32.mrb[0].mxu0
        %v2994 = vadd.f32 0.0, %v2993
        %2995 = vmatprep.mubr.f32.mxu0 0.0
        %2996 = vmatmul.mubr.f32.gmra.mrb[0].mxu0 %v1514
        %v2997 = vpop.f32.mrb[0].mxu0
        %v2998 = vadd.f32 0.0, %v2997
        %v2999 = vpop.f32.mrb[0].mxu0
        %v3000 = vadd.f32 0.0, %v2999
        %3001 = vmatprep.mubr.f32.mxu0 0.0
        %3002 = vmatmul.mubr.f32.gmra.mrb[0].mxu0 %v1517
        %v3003 = vpop.f32.mrb[0].mxu0
        %v3004 = vadd.f32 0.0, %v3003
        %v3005 = vpop.f32.mrb[0].mxu0
        %v3006 = vadd.f32 0.0, %v3005
        %3007 = vmatprep.mubr.f32.mxu0 0.0
        %3008 = vmatmul.mubr.f32.gmra.mrb[0].mxu0 %v1520
        %v3009 = vpop.f32.mrb[0].mxu0
        %v3010 = vadd.f32 0.0, %v3009
        %v3011 = vpop.f32.mrb[0].mxu0
        %v3012 = vadd.f32 0.0, %v3011
        %3013 = vmatprep.mubr.f32.mxu0 0.0
        %3014 = vmatmul.mubr.f32.gmra.mrb[0].mxu0 %v1523
        %v3015 = vpop.f32.mrb[0].mxu0
        %v3016 = vadd.f32 0.0, %v3015
        %v3017 = vpop.f32.mrb[0].mxu0
        %v3018 = vadd.f32 0.0, %v3017
        %3019 = vmatprep.mubr.f32.mxu0 0.0
        %3020 = vmatmul.mubr.f32.gmra.mrb[0].mxu0 %v1526
        %v3021 = vpop.f32.mrb[0].mxu0
        %v3022 = vadd.f32 0.0, %v3021
        %v3023 = vpop.f32.mrb[0].mxu0
        %v3024 = vadd.f32 0.0, %v3023
        %3025 = vmatprep.mubr.f32.mxu0 0.0
        %3026 = vmatmul.mubr.f32.gmra.mrb[0].mxu0 %v1529
        %v3027 = vpop.f32.mrb[0].mxu0
        %v3028 = vadd.f32 0.0, %v3027
        %v3029 = vpop.f32.mrb[0].mxu0
        %v3030 = vadd.f32 0.0, %v3029
        %3031 = vmatprep.mubr.f32.mxu0 0.0
        %3032 = vmatmul.mubr.f32.gmra.mrb[0].mxu0 %v1532
        %v3033 = vpop.f32.mrb[0].mxu0
        %v3034 = vadd.f32 0.0, %v3033
        %v3035 = vpop.f32.mrb[0].mxu0
        %v3036 = vadd.f32 0.0, %v3035
        %3037 = vmatprep.mubr.f32.mxu0 0.0
        %3038 = vmatmul.mubr.f32.gmra.mrb[0].mxu0 %v1535
        %v3039 = vpop.f32.mrb[0].mxu0
        %v3040 = vadd.f32 0.0, %v3039
        %v3041 = vpop.f32.mrb[0].mxu0
        %v3042 = vadd.f32 0.0, %v3041
        %3043 = vmatprep.mubr.f32.mxu0 0.0
        %3044 = vmatmul.mubr.f32.gmra.mrb[0].mxu0 %v1538
        %v3045 = vpop.f32.mrb[0].mxu0
        %v3046 = vadd.f32 0.0, %v3045
        %v3047 = vpop.f32.mrb[0].mxu0
        %v3048 = vadd.f32 0.0, %v3047
        %3049 = vmatprep.mubr.f32.mxu0 0.0
        %3050 = vmatmul.mubr.f32.gmra.mrb[0].mxu0 %v1541
        %v3051 = vpop.f32.mrb[0].mxu0
        %v3052 = vadd.f32 0.0, %v3051
        %v3053 = vpop.f32.mrb[0].mxu0
        %v3054 = vadd.f32 0.0, %v3053
        %3055 = vmatprep.mubr.f32.mxu0 0.0
        %3056 = vmatmul.mubr.f32.gmra.mrb[0].mxu0 %v1544
        %v3057 = vpop.f32.mrb[0].mxu0
        %v3058 = vadd.f32 0.0, %v3057
        %v3059 = vpop.f32.mrb[0].mxu0
        %v3060 = vadd.f32 0.0, %v3059
        %3061 = vmatprep.mubr.f32.mxu0 0.0
        %3062 = vmatmul.mubr.f32.gmra.mrb[0].mxu0 %v1547
        %v3063 = vpop.f32.mrb[0].mxu0
        %v3064 = vadd.f32 0.0, %v3063
        %v3065 = vpop.f32.mrb[0].mxu0
        %v3066 = vadd.f32 0.0, %v3065
        %3067 = vmatprep.mubr.f32.mxu0 0.0
        %3068 = vmatmul.mubr.f32.gmra.mrb[0].mxu0 %v1550
        %v3069 = vpop.f32.mrb[0].mxu0
        %v3070 = vadd.f32 0.0, %v3069
        %v3071 = vpop.f32.mrb[0].mxu0
        %v3072 = vadd.f32 0.0, %v3071
        %3073 = vmatprep.mubr.f32.mxu0 0.0
        %3074 = vmatmul.mubr.f32.gmra.mrb[0].mxu0 %v1553
        %v3075 = vpop.f32.mrb[0].mxu0
        %v3076 = vadd.f32 0.0, %v3075
        %v3077 = vpop.f32.mrb[0].mxu0
        %v3078 = vadd.f32 0.0, %v3077
        %3079 = vmatprep.mubr.f32.mxu0 0.0
        %3080 = vmatmul.mubr.f32.gmra.mrb[0].mxu0 %v1556
        %v3081 = vpop.f32.mrb[0].mxu0
        %v3082 = vadd.f32 0.0, %v3081
        %v3083 = vpop.f32.mrb[0].mxu0
        %v3084 = vadd.f32 0.0, %v3083
        %3085 = vmatprep.mubr.f32.mxu0 0.0
        %3086 = vmatmul.mubr.f32.gmra.mrb[0].mxu0 %v1559
        %v3087 = vpop.f32.mrb[0].mxu0
        %v3088 = vadd.f32 0.0, %v3087
        %v3089 = vpop.f32.mrb[0].mxu0
        %v3090 = vadd.f32 0.0, %v3089
        %3091 = vmatprep.mubr.f32.mxu0 0.0
        %3092 = vmatmul.mubr.f32.gmra.mrb[0].mxu0 %v1562
        %v3093 = vpop.f32.mrb[0].mxu0
        %v3094 = vadd.f32 0.0, %v3093
        %v3095 = vpop.f32.mrb[0].mxu0
        %v3096 = vadd.f32 0.0, %v3095
        %3097 = vmatprep.mubr.f32.mxu0 0.0
        %3098 = vmatmul.mubr.f32.gmra.mrb[0].mxu0 %v1565
        %v3099 = vpop.f32.mrb[0].mxu0
        %v3100 = vadd.f32 0.0, %v3099
        %v3101 = vpop.f32.mrb[0].mxu0
        %v3102 = vadd.f32 0.0, %v3101
        %3103 = vmatprep.mubr.f32.mxu0 0.0
        %3104 = vmatmul.mubr.f32.gmra.mrb[0].mxu0 %v1568
        %v3105 = vpop.f32.mrb[0].mxu0
        %v3106 = vadd.f32 0.0, %v3105
        %v3107 = vpop.f32.mrb[0].mxu0
        %v3108 = vadd.f32 0.0, %v3107
        %3109 = vmatprep.mubr.f32.mxu0 0.0
        %3110 = vmatmul.mubr.f32.gmra.mrb[0].mxu0 %v1571
        %v3111 = vpop.f32.mrb[0].mxu0
        %v3112 = vadd.f32 0.0, %v3111
        %v3113 = vpop.f32.mrb[0].mxu0
        %v3114 = vadd.f32 0.0, %v3113
        %3115 = vmatprep.mubr.f32.mxu0 0.0
        %3116 = vmatmul.mubr.f32.gmra.mrb[0].mxu0 %v1574
        %v3117 = vpop.f32.mrb[0].mxu0
        %v3118 = vadd.f32 0.0, %v3117
        %v3119 = vpop.f32.mrb[0].mxu0
        %v3120 = vadd.f32 0.0, %v3119
        %3121 = vmatprep.mubr.f32.mxu0 0.0
        %3122 = vmatmul.mubr.f32.gmra.mrb[0].mxu0 %v1577
        %v3123 = vpop.f32.mrb[0].mxu0
        %v3124 = vadd.f32 0.0, %v3123
        %v3125 = vpop.f32.mrb[0].mxu0
        %v3126 = vadd.f32 0.0, %v3125
        %3127 = vmatprep.mubr.f32.mxu0 0.0
        %3128 = vmatmul.mubr.f32.gmra.mrb[0].mxu0 %v1580
        %v3129 = vpop.f32.mrb[0].mxu0
        %v3130 = vadd.f32 0.0, %v3129
        %v3131 = vpop.f32.mrb[0].mxu0
        %v3132 = vadd.f32 0.0, %v3131
        %3133 = vmatprep.mubr.f32.mxu0 0.0
        %3134 = vmatmul.mubr.f32.gmra.mrb[0].mxu0 %v1583
        %v3135 = vpop.f32.mrb[0].mxu0
        %v3136 = vadd.f32 0.0, %v3135
        %v3137 = vpop.f32.mrb[0].mxu0
        %v3138 = vadd.f32 0.0, %v3137
        %3139 = vmatprep.mubr.f32.mxu0 0.0
        %3140 = vmatmul.mubr.f32.gmra.mrb[0].mxu0 %v1586
        %v3141 = vpop.f32.mrb[0].mxu0
        %v3142 = vadd.f32 0.0, %v3141
        %v3143 = vpop.f32.mrb[0].mxu0
        %v3144 = vadd.f32 0.0, %v3143
        %3145 = vmatprep.mubr.f32.mxu0 0.0
        %3146 = vmatmul.mubr.f32.gmra.mrb[0].mxu0 %v1589
        %v3147 = vpop.f32.mrb[0].mxu0
        %v3148 = vadd.f32 0.0, %v3147
        %v3149 = vpop.f32.mrb[0].mxu0
        %v3150 = vadd.f32 0.0, %v3149
        %3151 = vmatprep.mubr.f32.mxu0 0.0
        %3152 = vmatmul.mubr.f32.gmra.mrb[0].mxu0 %v1592
        %v3153 = vpop.f32.mrb[0].mxu0
        %v3154 = vadd.f32 0.0, %v3153
        %v3155 = vpop.f32.mrb[0].mxu0
        %v3156 = vadd.f32 0.0, %v3155
        %3157 = vmatprep.mubr.f32.mxu0 0.0
        %3158 = vmatmul.mubr.f32.gmra.mrb[0].mxu0 %v1595
        %v3159 = vpop.f32.mrb[0].mxu0
        %v3160 = vadd.f32 0.0, %v3159
        %v3161 = vpop.f32.mrb[0].mxu0
        %v3162 = vadd.f32 0.0, %v3161
        %3163 = vmatprep.mubr.f32.mxu0 0.0
        %3164 = vmatmul.mubr.f32.gmra.mrb[0].mxu0 %v1598
        %v3165 = vpop.f32.mrb[0].mxu0
        %v3166 = vadd.f32 0.0, %v3165
        %v3167 = vpop.f32.mrb[0].mxu0
        %v3168 = vadd.f32 0.0, %v3167
        %3169 = vmatprep.mubr.f32.mxu0 0.0
        %3170 = vmatmul.mubr.f32.gmra.mrb[0].mxu0 %v1601
        %v3171 = vpop.f32.mrb[0].mxu0
        %v3172 = vadd.f32 0.0, %v3171
        %v3173 = vpop.f32.mrb[0].mxu0
        %v3174 = vadd.f32 0.0, %v3173
        %3175 = vmatprep.mubr.f32.mxu0 0.0
        %3176 = vmatmul.mubr.f32.gmra.mrb[0].mxu0 %v1604
        %v3177 = vpop.f32.mrb[0].mxu0
        %v3178 = vadd.f32 0.0, %v3177
        %v3179 = vpop.f32.mrb[0].mxu0
        %v3180 = vadd.f32 0.0, %v3179
        %3181 = vmatprep.mubr.f32.mxu0 0.0
        %3182 = vmatmul.mubr.f32.gmra.mrb[0].mxu0 %v1607
        %v3183 = vpop.f32.mrb[0].mxu0
        %v3184 = vadd.f32 0.0, %v3183
        %v3185 = vpop.f32.mrb[0].mxu0
        %v3186 = vadd.f32 0.0, %v3185
        %3187 = vmatprep.mubr.f32.mxu0 0.0
        %3188 = vmatmul.mubr.f32.gmra.mrb[0].mxu0 %v1610
        %v3189 = vpop.f32.mrb[0].mxu0
        %v3190 = vadd.f32 0.0, %v3189
        %v3191 = vpop.f32.mrb[0].mxu0
        %v3192 = vadd.f32 0.0, %v3191
        %3193 = vmatprep.mubr.f32.mxu0 0.0
        %3194 = vmatmul.mubr.f32.gmra.mrb[0].mxu0 %v1613
        %v3195 = vpop.f32.mrb[0].mxu0
        %v3196 = vadd.f32 0.0, %v3195
        %v3197 = vpop.f32.mrb[0].mxu0
        %v3198 = vadd.f32 0.0, %v3197
        %3199 = vmatprep.mubr.f32.mxu0 0.0
        %3200 = vmatmul.mubr.f32.gmra.mrb[0].mxu0 %v1616
        %v3201 = vpop.f32.mrb[0].mxu0
        %v3202 = vadd.f32 0.0, %v3201
        %v3203 = vpop.f32.mrb[0].mxu0
        %v3204 = vadd.f32 0.0, %v3203
        %3205 = vmatprep.mubr.f32.mxu0 0.0
        %3206 = vmatmul.mubr.f32.gmra.mrb[0].mxu0 %v1619
        %v3207 = vpop.f32.mrb[0].mxu0
        %v3208 = vadd.f32 0.0, %v3207
        %v3209 = vpop.f32.mrb[0].mxu0
        %v3210 = vadd.f32 0.0, %v3209
        %3211 = vmatprep.mubr.f32.mxu0 0.0
        %3212 = vmatmul.mubr.f32.gmra.mrb[0].mxu0 %v1622
        %v3213 = vpop.f32.mrb[0].mxu0
        %v3214 = vadd.f32 0.0, %v3213
        %v3215 = vpop.f32.mrb[0].mxu0
        %v3216 = vadd.f32 0.0, %v3215
        %3217 = vmatprep.mubr.f32.mxu0 0.0
        %3218 = vmatmul.mubr.f32.gmra.mrb[0].mxu0 %v1625
        %v3219 = vpop.f32.mrb[0].mxu0
        %v3220 = vadd.f32 0.0, %v3219
        %v3221 = vpop.f32.mrb[0].mxu0
        %v3222 = vadd.f32 0.0, %v3221
        %3223 = vmatprep.mubr.f32.mxu0 0.0
        %3224 = vmatmul.mubr.f32.gmra.mrb[0].mxu0 %v1628
        %v3225 = vpop.f32.mrb[0].mxu0
        %v3226 = vadd.f32 0.0, %v3225
        %v3227 = vpop.f32.mrb[0].mxu0
        %v3228 = vadd.f32 0.0, %v3227
        %3229 = vmatprep.mubr.f32.mxu0 0.0
        %3230 = vmatmul.mubr.f32.gmra.mrb[0].mxu0 %v1631
        %v3231 = vpop.f32.mrb[0].mxu0
        %v3232 = vadd.f32 0.0, %v3231
        %v3233 = vpop.f32.mrb[0].mxu0
        %v3234 = vadd.f32 0.0, %v3233
        %3235 = vmatprep.mubr.f32.mxu0 0.0
        %3236 = vmatmul.mubr.f32.gmra.mrb[0].mxu0 %v1634
        %v3237 = vpop.f32.mrb[0].mxu0
        %v3238 = vadd.f32 0.0, %v3237
        %v3239 = vpop.f32.mrb[0].mxu0
        %v3240 = vadd.f32 0.0, %v3239
        %3241 = vmatprep.mubr.f32.mxu0 0.0
        %3242 = vmatmul.mubr.f32.gmra.mrb[0].mxu0 %v1637
        %v3243 = vpop.f32.mrb[0].mxu0
        %v3244 = vadd.f32 0.0, %v3243
        %v3245 = vpop.f32.mrb[0].mxu0
        %v3246 = vadd.f32 0.0, %v3245
        %3247 = vmatprep.mubr.f32.mxu0 0.0
        %3248 = vmatmul.mubr.f32.gmra.mrb[0].mxu0 %v1640
        %v3249 = vpop.f32.mrb[0].mxu0
        %v3250 = vadd.f32 0.0, %v3249
        %v3251 = vpop.f32.mrb[0].mxu0
        %v3252 = vadd.f32 0.0, %v3251
        %3253 = vmatprep.mubr.f32.mxu0 0.0
        %3254 = vmatmul.mubr.f32.gmra.mrb[0].mxu0 %v1643
        %v3255 = vpop.f32.mrb[0].mxu0
        %v3256 = vadd.f32 0.0, %v3255
        %v3257 = vpop.f32.mrb[0].mxu0
        %v3258 = vadd.f32 0.0, %v3257
        %3259 = vmatprep.mubr.f32.mxu0 0.0
        %3260 = vmatmul.mubr.f32.gmra.mrb[0].mxu0 %v1646
        %v3261 = vpop.f32.mrb[0].mxu0
        %v3262 = vadd.f32 0.0, %v3261
        %v3263 = vpop.f32.mrb[0].mxu0
        %v3264 = vadd.f32 0.0, %v3263
        %3265 = vmatprep.mubr.f32.mxu0 0.0
        %3266 = vmatmul.mubr.f32.gmra.mrb[0].mxu0 %v1649
        %v3267 = vpop.f32.mrb[0].mxu0
        %v3268 = vadd.f32 0.0, %v3267
        %v3269 = vpop.f32.mrb[0].mxu0
        %v3270 = vadd.f32 0.0, %v3269
        %3271 = vmatprep.mubr.f32.mxu0 0.0
        %3272 = vmatmul.mubr.f32.gmra.mrb[0].mxu0 %v1652
        %v3273 = vpop.f32.mrb[0].mxu0
        %v3274 = vadd.f32 0.0, %v3273
        %v3275 = vpop.f32.mrb[0].mxu0
        %v3276 = vadd.f32 0.0, %v3275
        %3277 = vmatprep.mubr.f32.mxu0 0.0
        %3278 = vmatmul.mubr.f32.gmra.mrb[0].mxu0 %v1655
        %v3279 = vpop.f32.mrb[0].mxu0
        %v3280 = vadd.f32 0.0, %v3279
        %v3281 = vpop.f32.mrb[0].mxu0
        %v3282 = vadd.f32 0.0, %v3281
        %3283 = vmatprep.mubr.f32.mxu0 0.0
        %3284 = vmatmul.mubr.f32.gmra.mrb[0].mxu0 %v1658
        %v3285 = vpop.f32.mrb[0].mxu0
        %v3286 = vadd.f32 0.0, %v3285
        %v3287 = vpop.f32.mrb[0].mxu0
        %v3288 = vadd.f32 0.0, %v3287
        %3289 = vmatprep.mubr.f32.mxu0 0.0
        %3290 = vmatmul.mubr.f32.gmra.mrb[0].mxu0 %v1661
        %v3291 = vpop.f32.mrb[0].mxu0
        %v3292 = vadd.f32 0.0, %v3291
        %v3293 = vpop.f32.mrb[0].mxu0
        %v3294 = vadd.f32 0.0, %v3293
        %3295 = vmatprep.mubr.f32.mxu0 0.0
        %3296 = vmatmul.mubr.f32.gmra.mrb[0].mxu0 %v1664
        %v3297 = vpop.f32.mrb[0].mxu0
        %v3298 = vadd.f32 0.0, %v3297
        %v3299 = vpop.f32.mrb[0].mxu0
        %v3300 = vadd.f32 0.0, %v3299
        %3301 = vmatprep.mubr.f32.mxu0 0.0
        %3302 = vmatmul.mubr.f32.gmra.mrb[0].mxu0 %v1667
        %v3303 = vpop.f32.mrb[0].mxu0
        %v3304 = vadd.f32 0.0, %v3303
        %v3305 = vpop.f32.mrb[0].mxu0
        %v3306 = vadd.f32 0.0, %v3305
        %3307 = vmatprep.mubr.f32.mxu0 0.0
        %3308 = vmatmul.mubr.f32.gmra.mrb[0].mxu0 %v1670
        %v3309 = vpop.f32.mrb[0].mxu0
        %v3310 = vadd.f32 0.0, %v3309
        %v3311 = vpop.f32.mrb[0].mxu0
        %v3312 = vadd.f32 0.0, %v3311
        %3313 = vmatprep.mubr.f32.mxu0 0.0
        %3314 = vmatmul.mubr.f32.gmra.mrb[0].mxu0 %v1673
        %v3315 = vpop.f32.mrb[0].mxu0
        %v3316 = vadd.f32 0.0, %v3315
        %v3317 = vpop.f32.mrb[0].mxu0
        %v3318 = vadd.f32 0.0, %v3317
        %3319 = vmatprep.mubr.f32.mxu0 0.0
        %3320 = vmatmul.mubr.f32.gmra.mrb[0].mxu0 %v1676
        %v3321 = vpop.f32.mrb[0].mxu0
        %v3322 = vadd.f32 0.0, %v3321
        %v3323 = vpop.f32.mrb[0].mxu0
        %v3324 = vadd.f32 0.0, %v3323
        %3325 = vmatprep.mubr.f32.mxu0 0.0
        %3326 = vmatmul.mubr.f32.gmra.mrb[0].mxu0 %v1679
        %v3327 = vpop.f32.mrb[0].mxu0
        %v3328 = vadd.f32 0.0, %v3327
        %v3329 = vpop.f32.mrb[0].mxu0
        %v3330 = vadd.f32 0.0, %v3329
        %3331 = vmatprep.mubr.f32.mxu0 0.0
        %3332 = vmatmul.mubr.f32.gmra.mrb[0].mxu0 %v1682
        %v3333 = vpop.f32.mrb[0].mxu0
        %v3334 = vadd.f32 0.0, %v3333
        %v3335 = vpop.f32.mrb[0].mxu0
        %v3336 = vadd.f32 0.0, %v3335
        %3337 = vmatprep.mubr.f32.mxu0 0.0
        %3338 = vmatmul.mubr.f32.gmra.mrb[0].mxu0 %v1685
        %v3339 = vpop.f32.mrb[0].mxu0
        %v3340 = vadd.f32 0.0, %v3339
        %v3341 = vpop.f32.mrb[0].mxu0
        %v3342 = vadd.f32 0.0, %v3341
        %3343 = vmatprep.mubr.f32.mxu0 0.0
        %3344 = vmatmul.mubr.f32.gmra.mrb[0].mxu0 %v1688
        %v3345 = vpop.f32.mrb[0].mxu0
        %v3346 = vadd.f32 0.0, %v3345
        %v3347 = vpop.f32.mrb[0].mxu0
        %v3348 = vadd.f32 0.0, %v3347
        %3349 = vmatprep.mubr.f32.mxu0 0.0
        %3350 = vmatmul.mubr.f32.gmra.mrb[0].mxu0 %v1691
        %v3351 = vpop.f32.mrb[0].mxu0
        %v3352 = vadd.f32 0.0, %v3351
        %v3353 = vpop.f32.mrb[0].mxu0
        %v3354 = vadd.f32 0.0, %v3353
        %3355 = vmatprep.mubr.f32.mxu0 0.0
        %3356 = vmatmul.mubr.f32.gmra.mrb[0].mxu0 %v1694
        %v3357 = vpop.f32.mrb[0].mxu0
        %v3358 = vadd.f32 0.0, %v3357
        %v3359 = vpop.f32.mrb[0].mxu0
        %v3360 = vadd.f32 0.0, %v3359
        %3361 = vdwg.mxu0
        %v3362 = vmax.f32 %v1763, %v1769
        %v3363 = vmax.f32 %v3362, %v1775
        %v3364 = vmax.f32 %v3363, %v1781
        %v3365 = vmax.f32 %v3364, %v1787
        %v3366 = vmax.f32 %v3365, %v1793
        %v3367 = vmax.f32 %v3366, %v1799
        %v3368 = vmax.f32 %v3367, %v1805
        %v3369 = vmax.f32 %v3368, %v1811
        %v3370 = vmax.f32 %v3369, %v1817
        %v3371 = vmax.f32 %v3370, %v1823
        %v3372 = vmax.f32 %v3371, %v1829
        %v3373 = vmax.f32 %v3372, %v1835
        %v3374 = vmax.f32 %v3373, %v1841
        %v3375 = vmax.f32 %v3374, %v1847
        %v3376 = vmax.f32 %v3375, %v1853
        %v3377 = vmax.f32 %v3376, %v1859
        %v3378 = vmax.f32 %v3377, %v1865
        %v3379 = vmax.f32 %v3378, %v1871
        %v3380 = vmax.f32 %v3379, %v1877
        %v3381 = vmax.f32 %v3380, %v1883
        %v3382 = vmax.f32 %v3381, %v1889
        %v3383 = vmax.f32 %v3382, %v1895
        %v3384 = vmax.f32 %v3383, %v1901
        %v3385 = vmax.f32 %v3384, %v1907
        %v3386 = vmax.f32 %v3385, %v1913
        %v3387 = vmax.f32 %v3386, %v1919
        %v3388 = vmax.f32 %v3387, %v1925
        %v3389 = vmax.f32 %v3388, %v1931
        %v3390 = vmax.f32 %v3389, %v1937
        %v3391 = vmax.f32 %v3390, %v1943
        %v3392 = vmax.f32 %v3391, %v1949
        %v3393 = vmax.f32 %v3392, %v1955
        %v3394 = vmax.f32 %v3393, %v1961
        %v3395 = vmax.f32 %v3394, %v1967
        %v3396 = vmax.f32 %v3395, %v1973
        %v3397 = vmax.f32 %v3396, %v1979
        %v3398 = vmax.f32 %v3397, %v1985
        %v3399 = vmax.f32 %v3398, %v1991
        %v3400 = vmax.f32 %v3399, %v1997
        %v3401 = vmax.f32 %v3400, %v2003
        %v3402 = vmax.f32 %v3401, %v2009
        %v3403 = vmax.f32 %v3402, %v2015
        %v3404 = vmax.f32 %v3403, %v2021
        %v3405 = vmax.f32 %v3404, %v2027
        %v3406 = vmax.f32 %v3405, %v2033
        %v3407 = vmax.f32 %v3406, %v2039
        %v3408 = vmax.f32 %v3407, %v2045
        %v3409 = vmax.f32 %v3408, %v2051
        %v3410 = vmax.f32 %v3409, %v2057
        %v3411 = vmax.f32 %v3410, %v2063
        %v3412 = vmax.f32 %v3411, %v2069
        %v3413 = vmax.f32 %v3412, %v2075
        %v3414 = vmax.f32 %v3413, %v2081
        %v3415 = vmax.f32 %v3414, %v2087
        %v3416 = vmax.f32 %v3415, %v2093
        %v3417 = vmax.f32 %v3416, %v2099
        %v3418 = vmax.f32 %v3417, %v2105
        %v3419 = vmax.f32 %v3418, %v2111
        %v3420 = vmax.f32 %v3419, %v2117
        %v3421 = vmax.f32 %v3420, %v2123
        %v3422 = vmax.f32 %v3421, %v2129
        %v3423 = vmax.f32 %v3422, %v2135
        %v3424 = vmax.f32 %v3423, %v2141
        %v3425 = vmax.f32 %v3424, %v2147
        %v3426 = vmax.f32 %v3425, %v2153
        %v3427 = vmax.f32 %v3426, %v2159
        %v3428 = vmax.f32 %v3427, %v2165
        %v3429 = vmax.f32 %v3428, %v2171
        %v3430 = vmax.f32 %v3429, %v2177
        %v3431 = vmax.f32 %v3430, %v2183
        %v3432 = vmax.f32 %v3431, %v2189
        %v3433 = vmax.f32 %v3432, %v2195
        %v3434 = vmax.f32 %v3433, %v2201
        %v3435 = vmax.f32 %v3434, %v2207
        %v3436 = vmax.f32 %v3435, %v2213
        %v3437 = vmax.f32 %v3436, %v2219
        %v3438 = vmax.f32 %v3437, %v2225
        %v3439 = vmax.f32 %v3438, %v2231
        %v3440 = vmax.f32 %v3439, %v2237
        %v3441 = vmax.f32 %v3440, %v2243
        %v3442 = vmax.f32 %v3441, %v2249
        %v3443 = vmax.f32 %v3442, %v2255
        %v3444 = vmax.f32 %v3443, %v2261
        %v3445 = vmax.f32 %v3444, %v2267
        %v3446 = vmax.f32 %v3445, %v2273
        %v3447 = vmax.f32 %v3446, %v2279
        %v3448 = vmax.f32 %v3447, %v2285
        %v3449 = vmax.f32 %v3448, %v2291
        %v3450 = vmax.f32 %v3449, %v2297
        %v3451 = vmax.f32 %v3450, %v2303
        %v3452 = vmax.f32 %v3451, %v2309
        %v3453 = vmax.f32 %v3452, %v2315
        %v3454 = vmax.f32 %v3453, %v2321
        %v3455 = vmax.f32 %v3454, %v2327
        %v3456 = vmax.f32 %v3455, %v2333
        %v3457 = vmax.f32 %v3456, %v2339
        %v3458 = vmax.f32 %v3457, %v2345
        %v3459 = vmax.f32 %v3458, %v2351
        %v3460 = vmax.f32 %v3459, %v2357
        %v3461 = vmax.f32 %v3460, %v2363
        %v3462 = vmax.f32 %v3461, %v2369
        %v3463 = vmax.f32 %v3462, %v2375
        %v3464 = vmax.f32 %v3463, %v2381
        %v3465 = vmax.f32 %v3464, %v2387
        %v3466 = vmax.f32 %v3465, %v2393
        %v3467 = vmax.f32 %v3466, %v2399
        %v3468 = vmax.f32 %v3467, %v2405
        %v3469 = vmax.f32 %v3468, %v2411
        %v3470 = vmax.f32 %v3469, %v2417
        %v3471 = vmax.f32 %v3470, %v2423
        %v3472 = vmax.f32 %v3471, %v2429
        %v3473 = vmax.f32 %v3472, %v2435
        %v3474 = vmax.f32 %v3473, %v2441
        %v3475 = vmax.f32 %v3474, %v2447
        %v3476 = vmax.f32 %v3475, %v2453
        %v3477 = vmax.f32 %v3476, %v2459
        %v3478 = vmax.f32 %v3477, %v2465
        %v3479 = vmax.f32 %v3478, %v2471
        %v3480 = vmax.f32 %v3479, %v2477
        %v3481 = vmax.f32 %v3480, %v2483
        %v3482 = vmax.f32 %v3481, %v2489
        %v3483 = vmax.f32 %v3482, %v2495
        %v3484 = vmax.f32 %v3483, %v2501
        %v3485 = vmax.f32 %v3484, %v2507
        %v3486 = vmax.f32 %v3485, %v2513
        %v3487 = vmax.f32 %v3486, %v2519
        %v3488 = vmax.f32 %v3487, %v2525
        %v3489 = vrot.slane %v3488, 4
        %v3490 = vmax.f32 %v3488, %v3489
        %v3491 = vrot.slane %v3490, 2
        %v3492 = vmax.f32 %v3490, %v3491
        %v3493 = vrot.slane %v3492, 1
        %v3494 = vmax.f32 %v3492, %v3493
        %v3495 = vmax.f32 %v1765, %v1771
        %v3496 = vmax.f32 %v3495, %v1777
        %v3497 = vmax.f32 %v3496, %v1783
        %v3498 = vmax.f32 %v3497, %v1789
        %v3499 = vmax.f32 %v3498, %v1795
        %v3500 = vmax.f32 %v3499, %v1801
        %v3501 = vmax.f32 %v3500, %v1807
        %v3502 = vmax.f32 %v3501, %v1813
        %v3503 = vmax.f32 %v3502, %v1819
        %v3504 = vmax.f32 %v3503, %v1825
        %v3505 = vmax.f32 %v3504, %v1831
        %v3506 = vmax.f32 %v3505, %v1837
        %v3507 = vmax.f32 %v3506, %v1843
        %v3508 = vmax.f32 %v3507, %v1849
        %v3509 = vmax.f32 %v3508, %v1855
        %v3510 = vmax.f32 %v3509, %v1861
        %v3511 = vmax.f32 %v3510, %v1867
        %v3512 = vmax.f32 %v3511, %v1873
        %v3513 = vmax.f32 %v3512, %v1879
        %v3514 = vmax.f32 %v3513, %v1885
        %v3515 = vmax.f32 %v3514, %v1891
        %v3516 = vmax.f32 %v3515, %v1897
        %v3517 = vmax.f32 %v3516, %v1903
        %v3518 = vmax.f32 %v3517, %v1909
        %v3519 = vmax.f32 %v3518, %v1915
        %v3520 = vmax.f32 %v3519, %v1921
        %v3521 = vmax.f32 %v3520, %v1927
        %v3522 = vmax.f32 %v3521, %v1933
        %v3523 = vmax.f32 %v3522, %v1939
        %v3524 = vmax.f32 %v3523, %v1945
        %v3525 = vmax.f32 %v3524, %v1951
        %v3526 = vmax.f32 %v3525, %v1957
        %v3527 = vmax.f32 %v3526, %v1963
        %v3528 = vmax.f32 %v3527, %v1969
        %v3529 = vmax.f32 %v3528, %v1975
        %v3530 = vmax.f32 %v3529, %v1981
        %v3531 = vmax.f32 %v3530, %v1987
        %v3532 = vmax.f32 %v3531, %v1993
        %v3533 = vmax.f32 %v3532, %v1999
        %v3534 = vmax.f32 %v3533, %v2005
        %v3535 = vmax.f32 %v3534, %v2011
        %v3536 = vmax.f32 %v3535, %v2017
        %v3537 = vmax.f32 %v3536, %v2023
        %v3538 = vmax.f32 %v3537, %v2029
        %v3539 = vmax.f32 %v3538, %v2035
        %v3540 = vmax.f32 %v3539, %v2041
        %v3541 = vmax.f32 %v3540, %v2047
        %v3542 = vmax.f32 %v3541, %v2053
        %v3543 = vmax.f32 %v3542, %v2059
        %v3544 = vmax.f32 %v3543, %v2065
        %v3545 = vmax.f32 %v3544, %v2071
        %v3546 = vmax.f32 %v3545, %v2077
        %v3547 = vmax.f32 %v3546, %v2083
        %v3548 = vmax.f32 %v3547, %v2089
        %v3549 = vmax.f32 %v3548, %v2095
        %v3550 = vmax.f32 %v3549, %v2101
        %v3551 = vmax.f32 %v3550, %v2107
        %v3552 = vmax.f32 %v3551, %v2113
        %v3553 = vmax.f32 %v3552, %v2119
        %v3554 = vmax.f32 %v3553, %v2125
        %v3555 = vmax.f32 %v3554, %v2131
        %v3556 = vmax.f32 %v3555, %v2137
        %v3557 = vmax.f32 %v3556, %v2143
        %v3558 = vmax.f32 %v3557, %v2149
        %v3559 = vmax.f32 %v3558, %v2155
        %v3560 = vmax.f32 %v3559, %v2161
        %v3561 = vmax.f32 %v3560, %v2167
        %v3562 = vmax.f32 %v3561, %v2173
        %v3563 = vmax.f32 %v3562, %v2179
        %v3564 = vmax.f32 %v3563, %v2185
        %v3565 = vmax.f32 %v3564, %v2191
        %v3566 = vmax.f32 %v3565, %v2197
        %v3567 = vmax.f32 %v3566, %v2203
        %v3568 = vmax.f32 %v3567, %v2209
        %v3569 = vmax.f32 %v3568, %v2215
        %v3570 = vmax.f32 %v3569, %v2221
        %v3571 = vmax.f32 %v3570, %v2227
        %v3572 = vmax.f32 %v3571, %v2233
        %v3573 = vmax.f32 %v3572, %v2239
        %v3574 = vmax.f32 %v3573, %v2245
        %v3575 = vmax.f32 %v3574, %v2251
        %v3576 = vmax.f32 %v3575, %v2257
        %v3577 = vmax.f32 %v3576, %v2263
        %v3578 = vmax.f32 %v3577, %v2269
        %v3579 = vmax.f32 %v3578, %v2275
        %v3580 = vmax.f32 %v3579, %v2281
        %v3581 = vmax.f32 %v3580, %v2287
        %v3582 = vmax.f32 %v3581, %v2293
        %v3583 = vmax.f32 %v3582, %v2299
        %v3584 = vmax.f32 %v3583, %v2305
        %v3585 = vmax.f32 %v3584, %v2311
        %v3586 = vmax.f32 %v3585, %v2317
        %v3587 = vmax.f32 %v3586, %v2323
        %v3588 = vmax.f32 %v3587, %v2329
        %v3589 = vmax.f32 %v3588, %v2335
        %v3590 = vmax.f32 %v3589, %v2341
        %v3591 = vmax.f32 %v3590, %v2347
        %v3592 = vmax.f32 %v3591, %v2353
        %v3593 = vmax.f32 %v3592, %v2359
        %v3594 = vmax.f32 %v3593, %v2365
        %v3595 = vmax.f32 %v3594, %v2371
        %v3596 = vmax.f32 %v3595, %v2377
        %v3597 = vmax.f32 %v3596, %v2383
        %v3598 = vmax.f32 %v3597, %v2389
        %v3599 = vmax.f32 %v3598, %v2395
        %v3600 = vmax.f32 %v3599, %v2401
        %v3601 = vmax.f32 %v3600, %v2407
        %v3602 = vmax.f32 %v3601, %v2413
        %v3603 = vmax.f32 %v3602, %v2419
        %v3604 = vmax.f32 %v3603, %v2425
        %v3605 = vmax.f32 %v3604, %v2431
        %v3606 = vmax.f32 %v3605, %v2437
        %v3607 = vmax.f32 %v3606, %v2443
        %v3608 = vmax.f32 %v3607, %v2449
        %v3609 = vmax.f32 %v3608, %v2455
        %v3610 = vmax.f32 %v3609, %v2461
        %v3611 = vmax.f32 %v3610, %v2467
        %v3612 = vmax.f32 %v3611, %v2473
        %v3613 = vmax.f32 %v3612, %v2479
        %v3614 = vmax.f32 %v3613, %v2485
        %v3615 = vmax.f32 %v3614, %v2491
        %v3616 = vmax.f32 %v3615, %v2497
        %v3617 = vmax.f32 %v3616, %v2503
        %v3618 = vmax.f32 %v3617, %v2509
        %v3619 = vmax.f32 %v3618, %v2515
        %v3620 = vmax.f32 %v3619, %v2521
        %v3621 = vmax.f32 %v3620, %v2527
        %v3622 = vrot.slane %v3621, 4
        %v3623 = vmax.f32 %v3621, %v3622
        %v3624 = vrot.slane %v3623, 2
        %v3625 = vmax.f32 %v3623, %v3624
        %v3626 = vrot.slane %v3625, 1
        %v3627 = vmax.f32 %v3625, %v3626
        %v3628 = vmax.f32 %v2596, %v2602
        %v3629 = vmax.f32 %v3628, %v2608
        %v3630 = vmax.f32 %v3629, %v2614
        %v3631 = vmax.f32 %v3630, %v2620
        %v3632 = vmax.f32 %v3631, %v2626
        %v3633 = vmax.f32 %v3632, %v2632
        %v3634 = vmax.f32 %v3633, %v2638
        %v3635 = vmax.f32 %v3634, %v2644
        %v3636 = vmax.f32 %v3635, %v2650
        %v3637 = vmax.f32 %v3636, %v2656
        %v3638 = vmax.f32 %v3637, %v2662
        %v3639 = vmax.f32 %v3638, %v2668
        %v3640 = vmax.f32 %v3639, %v2674
        %v3641 = vmax.f32 %v3640, %v2680
        %v3642 = vmax.f32 %v3641, %v2686
        %v3643 = vmax.f32 %v3642, %v2692
        %v3644 = vmax.f32 %v3643, %v2698
        %v3645 = vmax.f32 %v3644, %v2704
        %v3646 = vmax.f32 %v3645, %v2710
        %v3647 = vmax.f32 %v3646, %v2716
        %v3648 = vmax.f32 %v3647, %v2722
        %v3649 = vmax.f32 %v3648, %v2728
        %v3650 = vmax.f32 %v3649, %v2734
        %v3651 = vmax.f32 %v3650, %v2740
        %v3652 = vmax.f32 %v3651, %v2746
        %v3653 = vmax.f32 %v3652, %v2752
        %v3654 = vmax.f32 %v3653, %v2758
        %v3655 = vmax.f32 %v3654, %v2764
        %v3656 = vmax.f32 %v3655, %v2770
        %v3657 = vmax.f32 %v3656, %v2776
        %v3658 = vmax.f32 %v3657, %v2782
        %v3659 = vmax.f32 %v3658, %v2788
        %v3660 = vmax.f32 %v3659, %v2794
        %v3661 = vmax.f32 %v3660, %v2800
        %v3662 = vmax.f32 %v3661, %v2806
        %v3663 = vmax.f32 %v3662, %v2812
        %v3664 = vmax.f32 %v3663, %v2818
        %v3665 = vmax.f32 %v3664, %v2824
        %v3666 = vmax.f32 %v3665, %v2830
        %v3667 = vmax.f32 %v3666, %v2836
        %v3668 = vmax.f32 %v3667, %v2842
        %v3669 = vmax.f32 %v3668, %v2848
        %v3670 = vmax.f32 %v3669, %v2854
        %v3671 = vmax.f32 %v3670, %v2860
        %v3672 = vmax.f32 %v3671, %v2866
        %v3673 = vmax.f32 %v3672, %v2872
        %v3674 = vmax.f32 %v3673, %v2878
        %v3675 = vmax.f32 %v3674, %v2884
        %v3676 = vmax.f32 %v3675, %v2890
        %v3677 = vmax.f32 %v3676, %v2896
        %v3678 = vmax.f32 %v3677, %v2902
        %v3679 = vmax.f32 %v3678, %v2908
        %v3680 = vmax.f32 %v3679, %v2914
        %v3681 = vmax.f32 %v3680, %v2920
        %v3682 = vmax.f32 %v3681, %v2926
        %v3683 = vmax.f32 %v3682, %v2932
        %v3684 = vmax.f32 %v3683, %v2938
        %v3685 = vmax.f32 %v3684, %v2944
        %v3686 = vmax.f32 %v3685, %v2950
        %v3687 = vmax.f32 %v3686, %v2956
        %v3688 = vmax.f32 %v3687, %v2962
        %v3689 = vmax.f32 %v3688, %v2968
        %v3690 = vmax.f32 %v3689, %v2974
        %v3691 = vmax.f32 %v3690, %v2980
        %v3692 = vmax.f32 %v3691, %v2986
        %v3693 = vmax.f32 %v3692, %v2992
        %v3694 = vmax.f32 %v3693, %v2998
        %v3695 = vmax.f32 %v3694, %v3004
        %v3696 = vmax.f32 %v3695, %v3010
        %v3697 = vmax.f32 %v3696, %v3016
        %v3698 = vmax.f32 %v3697, %v3022
        %v3699 = vmax.f32 %v3698, %v3028
        %v3700 = vmax.f32 %v3699, %v3034
        %v3701 = vmax.f32 %v3700, %v3040
        %v3702 = vmax.f32 %v3701, %v3046
        %v3703 = vmax.f32 %v3702, %v3052
        %v3704 = vmax.f32 %v3703, %v3058
        %v3705 = vmax.f32 %v3704, %v3064
        %v3706 = vmax.f32 %v3705, %v3070
        %v3707 = vmax.f32 %v3706, %v3076
        %v3708 = vmax.f32 %v3707, %v3082
        %v3709 = vmax.f32 %v3708, %v3088
        %v3710 = vmax.f32 %v3709, %v3094
        %v3711 = vmax.f32 %v3710, %v3100
        %v3712 = vmax.f32 %v3711, %v3106
        %v3713 = vmax.f32 %v3712, %v3112
        %v3714 = vmax.f32 %v3713, %v3118
        %v3715 = vmax.f32 %v3714, %v3124
        %v3716 = vmax.f32 %v3715, %v3130
        %v3717 = vmax.f32 %v3716, %v3136
        %v3718 = vmax.f32 %v3717, %v3142
        %v3719 = vmax.f32 %v3718, %v3148
        %v3720 = vmax.f32 %v3719, %v3154
        %v3721 = vmax.f32 %v3720, %v3160
        %v3722 = vmax.f32 %v3721, %v3166
        %v3723 = vmax.f32 %v3722, %v3172
        %v3724 = vmax.f32 %v3723, %v3178
        %v3725 = vmax.f32 %v3724, %v3184
        %v3726 = vmax.f32 %v3725, %v3190
        %v3727 = vmax.f32 %v3726, %v3196
        %v3728 = vmax.f32 %v3727, %v3202
        %v3729 = vmax.f32 %v3728, %v3208
        %v3730 = vmax.f32 %v3729, %v3214
        %v3731 = vmax.f32 %v3730, %v3220
        %v3732 = vmax.f32 %v3731, %v3226
        %v3733 = vmax.f32 %v3732, %v3232
        %v3734 = vmax.f32 %v3733, %v3238
        %v3735 = vmax.f32 %v3734, %v3244
        %v3736 = vmax.f32 %v3735, %v3250
        %v3737 = vmax.f32 %v3736, %v3256
        %v3738 = vmax.f32 %v3737, %v3262
        %v3739 = vmax.f32 %v3738, %v3268
        %v3740 = vmax.f32 %v3739, %v3274
        %v3741 = vmax.f32 %v3740, %v3280
        %v3742 = vmax.f32 %v3741, %v3286
        %v3743 = vmax.f32 %v3742, %v3292
        %v3744 = vmax.f32 %v3743, %v3298
        %v3745 = vmax.f32 %v3744, %v3304
        %v3746 = vmax.f32 %v3745, %v3310
        %v3747 = vmax.f32 %v3746, %v3316
        %v3748 = vmax.f32 %v3747, %v3322
        %v3749 = vmax.f32 %v3748, %v3328
        %v3750 = vmax.f32 %v3749, %v3334
        %v3751 = vmax.f32 %v3750, %v3340
        %v3752 = vmax.f32 %v3751, %v3346
        %v3753 = vmax.f32 %v3752, %v3352
        %v3754 = vmax.f32 %v3753, %v3358
        %v3755 = vrot.slane %v3754, 4
        %v3756 = vmax.f32 %v3754, %v3755
        %v3757 = vrot.slane %v3756, 2
        %v3758 = vmax.f32 %v3756, %v3757
        %v3759 = vrot.slane %v3758, 1
        %v3760 = vmax.f32 %v3758, %v3759
        %v3761 = vmax.f32 %v2598, %v2604
        %v3762 = vmax.f32 %v3761, %v2610
        %v3763 = vmax.f32 %v3762, %v2616
        %v3764 = vmax.f32 %v3763, %v2622
        %v3765 = vmax.f32 %v3764, %v2628
        %v3766 = vmax.f32 %v3765, %v2634
        %v3767 = vmax.f32 %v3766, %v2640
        %v3768 = vmax.f32 %v3767, %v2646
        %v3769 = vmax.f32 %v3768, %v2652
        %v3770 = vmax.f32 %v3769, %v2658
        %v3771 = vmax.f32 %v3770, %v2664
        %v3772 = vmax.f32 %v3771, %v2670
        %v3773 = vmax.f32 %v3772, %v2676
        %v3774 = vmax.f32 %v3773, %v2682
        %v3775 = vmax.f32 %v3774, %v2688
        %v3776 = vmax.f32 %v3775, %v2694
        %v3777 = vmax.f32 %v3776, %v2700
        %v3778 = vmax.f32 %v3777, %v2706
        %v3779 = vmax.f32 %v3778, %v2712
        %v3780 = vmax.f32 %v3779, %v2718
        %v3781 = vmax.f32 %v3780, %v2724
        %v3782 = vmax.f32 %v3781, %v2730
        %v3783 = vmax.f32 %v3782, %v2736
        %v3784 = vmax.f32 %v3783, %v2742
        %v3785 = vmax.f32 %v3784, %v2748
        %v3786 = vmax.f32 %v3785, %v2754
        %v3787 = vmax.f32 %v3786, %v2760
        %v3788 = vmax.f32 %v3787, %v2766
        %v3789 = vmax.f32 %v3788, %v2772
        %v3790 = vmax.f32 %v3789, %v2778
        %v3791 = vmax.f32 %v3790, %v2784
        %v3792 = vmax.f32 %v3791, %v2790
        %v3793 = vmax.f32 %v3792, %v2796
        %v3794 = vmax.f32 %v3793, %v2802
        %v3795 = vmax.f32 %v3794, %v2808
        %v3796 = vmax.f32 %v3795, %v2814
        %v3797 = vmax.f32 %v3796, %v2820
        %v3798 = vmax.f32 %v3797, %v2826
        %v3799 = vmax.f32 %v3798, %v2832
        %v3800 = vmax.f32 %v3799, %v2838
        %v3801 = vmax.f32 %v3800, %v2844
        %v3802 = vmax.f32 %v3801, %v2850
        %v3803 = vmax.f32 %v3802, %v2856
        %v3804 = vmax.f32 %v3803, %v2862
        %v3805 = vmax.f32 %v3804, %v2868
        %v3806 = vmax.f32 %v3805, %v2874
        %v3807 = vmax.f32 %v3806, %v2880
        %v3808 = vmax.f32 %v3807, %v2886
        %v3809 = vmax.f32 %v3808, %v2892
        %v3810 = vmax.f32 %v3809, %v2898
        %v3811 = vmax.f32 %v3810, %v2904
        %v3812 = vmax.f32 %v3811, %v2910
        %v3813 = vmax.f32 %v3812, %v2916
        %v3814 = vmax.f32 %v3813, %v2922
        %v3815 = vmax.f32 %v3814, %v2928
        %v3816 = vmax.f32 %v3815, %v2934
        %v3817 = vmax.f32 %v3816, %v2940
        %v3818 = vmax.f32 %v3817, %v2946
        %v3819 = vmax.f32 %v3818, %v2952
        %v3820 = vmax.f32 %v3819, %v2958
        %v3821 = vmax.f32 %v3820, %v2964
        %v3822 = vmax.f32 %v3821, %v2970
        %v3823 = vmax.f32 %v3822, %v2976
        %v3824 = vmax.f32 %v3823, %v2982
        %v3825 = vmax.f32 %v3824, %v2988
        %v3826 = vmax.f32 %v3825, %v2994
        %v3827 = vmax.f32 %v3826, %v3000
        %v3828 = vmax.f32 %v3827, %v3006
        %v3829 = vmax.f32 %v3828, %v3012
        %v3830 = vmax.f32 %v3829, %v3018
        %v3831 = vmax.f32 %v3830, %v3024
        %v3832 = vmax.f32 %v3831, %v3030
        %v3833 = vmax.f32 %v3832, %v3036
        %v3834 = vmax.f32 %v3833, %v3042
        %v3835 = vmax.f32 %v3834, %v3048
        %v3836 = vmax.f32 %v3835, %v3054
        %v3837 = vmax.f32 %v3836, %v3060
        %v3838 = vmax.f32 %v3837, %v3066
        %v3839 = vmax.f32 %v3838, %v3072
        %v3840 = vmax.f32 %v3839, %v3078
        %v3841 = vmax.f32 %v3840, %v3084
        %v3842 = vmax.f32 %v3841, %v3090
        %v3843 = vmax.f32 %v3842, %v3096
        %v3844 = vmax.f32 %v3843, %v3102
        %v3845 = vmax.f32 %v3844, %v3108
        %v3846 = vmax.f32 %v3845, %v3114
        %v3847 = vmax.f32 %v3846, %v3120
        %v3848 = vmax.f32 %v3847, %v3126
        %v3849 = vmax.f32 %v3848, %v3132
        %v3850 = vmax.f32 %v3849, %v3138
        %v3851 = vmax.f32 %v3850, %v3144
        %v3852 = vmax.f32 %v3851, %v3150
        %v3853 = vmax.f32 %v3852, %v3156
        %v3854 = vmax.f32 %v3853, %v3162
        %v3855 = vmax.f32 %v3854, %v3168
        %v3856 = vmax.f32 %v3855, %v3174
        %v3857 = vmax.f32 %v3856, %v3180
        %v3858 = vmax.f32 %v3857, %v3186
        %v3859 = vmax.f32 %v3858, %v3192
        %v3860 = vmax.f32 %v3859, %v3198
        %v3861 = vmax.f32 %v3860, %v3204
        %v3862 = vmax.f32 %v3861, %v3210
        %v3863 = vmax.f32 %v3862, %v3216
        %v3864 = vmax.f32 %v3863, %v3222
        %v3865 = vmax.f32 %v3864, %v3228
        %v3866 = vmax.f32 %v3865, %v3234
        %v3867 = vmax.f32 %v3866, %v3240
        %v3868 = vmax.f32 %v3867, %v3246
        %v3869 = vmax.f32 %v3868, %v3252
        %v3870 = vmax.f32 %v3869, %v3258
        %v3871 = vmax.f32 %v3870, %v3264
        %v3872 = vmax.f32 %v3871, %v3270
        %v3873 = vmax.f32 %v3872, %v3276
        %v3874 = vmax.f32 %v3873, %v3282
        %v3875 = vmax.f32 %v3874, %v3288
        %v3876 = vmax.f32 %v3875, %v3294
        %v3877 = vmax.f32 %v3876, %v3300
        %v3878 = vmax.f32 %v3877, %v3306
        %v3879 = vmax.f32 %v3878, %v3312
        %v3880 = vmax.f32 %v3879, %v3318
        %v3881 = vmax.f32 %v3880, %v3324
        %v3882 = vmax.f32 %v3881, %v3330
        %v3883 = vmax.f32 %v3882, %v3336
        %v3884 = vmax.f32 %v3883, %v3342
        %v3885 = vmax.f32 %v3884, %v3348
        %v3886 = vmax.f32 %v3885, %v3354
        %v3887 = vmax.f32 %v3886, %v3360
        %v3888 = vrot.slane %v3887, 4
        %v3889 = vmax.f32 %v3887, %v3888
        %v3890 = vrot.slane %v3889, 2
        %v3891 = vmax.f32 %v3889, %v3890
        %v3892 = vrot.slane %v3891, 1
        %v3893 = vmax.f32 %v3891, %v3892
        %v3894 = vsub.f32 %v1763, %v3494
        %v3895 = vsub.f32 %v1765, %v3627
        %v3896 = vsub.f32 %v2596, %v3760
        %v3897 = vsub.f32 %v2598, %v3893
        %v3898 = vsub.f32 %v1769, %v3494
        %v3899 = vsub.f32 %v1771, %v3627
        %v3900 = vsub.f32 %v2602, %v3760
        %v3901 = vsub.f32 %v2604, %v3893
        %v3902 = vsub.f32 %v1775, %v3494
        %v3903 = vsub.f32 %v1777, %v3627
        %v3904 = vsub.f32 %v2608, %v3760
        %v3905 = vsub.f32 %v2610, %v3893
        %v3906 = vsub.f32 %v1781, %v3494
        %v3907 = vsub.f32 %v1783, %v3627
        %v3908 = vsub.f32 %v2614, %v3760
        %v3909 = vsub.f32 %v2616, %v3893
        %v3910 = vsub.f32 %v1787, %v3494
        %v3911 = vsub.f32 %v1789, %v3627
        %v3912 = vsub.f32 %v2620, %v3760
        %v3913 = vsub.f32 %v2622, %v3893
        %v3914 = vsub.f32 %v1793, %v3494
        %v3915 = vsub.f32 %v1795, %v3627
        %v3916 = vsub.f32 %v2626, %v3760
        %v3917 = vsub.f32 %v2628, %v3893
        %v3918 = vsub.f32 %v1799, %v3494
        %v3919 = vsub.f32 %v1801, %v3627
        %v3920 = vsub.f32 %v2632, %v3760
        %v3921 = vsub.f32 %v2634, %v3893
        %v3922 = vsub.f32 %v1805, %v3494
        %v3923 = vsub.f32 %v1807, %v3627
        %v3924 = vsub.f32 %v2638, %v3760
        %v3925 = vsub.f32 %v2640, %v3893
        %v3926 = vsub.f32 %v1811, %v3494
        %v3927 = vsub.f32 %v1813, %v3627
        %v3928 = vsub.f32 %v2644, %v3760
        %v3929 = vsub.f32 %v2646, %v3893
        %v3930 = vsub.f32 %v1817, %v3494
        %v3931 = vsub.f32 %v1819, %v3627
        %v3932 = vsub.f32 %v2650, %v3760
        %v3933 = vsub.f32 %v2652, %v3893
        %v3934 = vsub.f32 %v1823, %v3494
        %v3935 = vsub.f32 %v1825, %v3627
        %v3936 = vsub.f32 %v2656, %v3760
        %v3937 = vsub.f32 %v2658, %v3893
        %v3938 = vsub.f32 %v1829, %v3494
        %v3939 = vsub.f32 %v1831, %v3627
        %v3940 = vsub.f32 %v2662, %v3760
        %v3941 = vsub.f32 %v2664, %v3893
        %v3942 = vsub.f32 %v1835, %v3494
        %v3943 = vsub.f32 %v1837, %v3627
        %v3944 = vsub.f32 %v2668, %v3760
        %v3945 = vsub.f32 %v2670, %v3893
        %v3946 = vsub.f32 %v1841, %v3494
        %v3947 = vsub.f32 %v1843, %v3627
        %v3948 = vsub.f32 %v2674, %v3760
        %v3949 = vsub.f32 %v2676, %v3893
        %v3950 = vsub.f32 %v1847, %v3494
        %v3951 = vsub.f32 %v1849, %v3627
        %v3952 = vsub.f32 %v2680, %v3760
        %v3953 = vsub.f32 %v2682, %v3893
        %v3954 = vsub.f32 %v1853, %v3494
        %v3955 = vsub.f32 %v1855, %v3627
        %v3956 = vsub.f32 %v2686, %v3760
        %v3957 = vsub.f32 %v2688, %v3893
        %v3958 = vsub.f32 %v1859, %v3494
        %v3959 = vsub.f32 %v1861, %v3627
        %v3960 = vsub.f32 %v2692, %v3760
        %v3961 = vsub.f32 %v2694, %v3893
        %v3962 = vsub.f32 %v1865, %v3494
        %v3963 = vsub.f32 %v1867, %v3627
        %v3964 = vsub.f32 %v2698, %v3760
        %v3965 = vsub.f32 %v2700, %v3893
        %v3966 = vsub.f32 %v1871, %v3494
        %v3967 = vsub.f32 %v1873, %v3627
        %v3968 = vsub.f32 %v2704, %v3760
        %v3969 = vsub.f32 %v2706, %v3893
        %v3970 = vsub.f32 %v1877, %v3494
        %v3971 = vsub.f32 %v1879, %v3627
        %v3972 = vsub.f32 %v2710, %v3760
        %v3973 = vsub.f32 %v2712, %v3893
        %v3974 = vsub.f32 %v1883, %v3494
        %v3975 = vsub.f32 %v1885, %v3627
        %v3976 = vsub.f32 %v2716, %v3760
        %v3977 = vsub.f32 %v2718, %v3893
        %v3978 = vsub.f32 %v1889, %v3494
        %v3979 = vsub.f32 %v1891, %v3627
        %v3980 = vsub.f32 %v2722, %v3760
        %v3981 = vsub.f32 %v2724, %v3893
        %v3982 = vsub.f32 %v1895, %v3494
        %v3983 = vsub.f32 %v1897, %v3627
        %v3984 = vsub.f32 %v2728, %v3760
        %v3985 = vsub.f32 %v2730, %v3893
        %v3986 = vsub.f32 %v1901, %v3494
        %v3987 = vsub.f32 %v1903, %v3627
        %v3988 = vsub.f32 %v2734, %v3760
        %v3989 = vsub.f32 %v2736, %v3893
        %v3990 = vsub.f32 %v1907, %v3494
        %v3991 = vsub.f32 %v1909, %v3627
        %v3992 = vsub.f32 %v2740, %v3760
        %v3993 = vsub.f32 %v2742, %v3893
        %v3994 = vsub.f32 %v1913, %v3494
        %v3995 = vsub.f32 %v1915, %v3627
        %v3996 = vsub.f32 %v2746, %v3760
        %v3997 = vsub.f32 %v2748, %v3893
        %v3998 = vsub.f32 %v1919, %v3494
        %v3999 = vsub.f32 %v1921, %v3627
        %v4000 = vsub.f32 %v2752, %v3760
        %v4001 = vsub.f32 %v2754, %v3893
        %v4002 = vsub.f32 %v1925, %v3494
        %v4003 = vsub.f32 %v1927, %v3627
        %v4004 = vsub.f32 %v2758, %v3760
        %v4005 = vsub.f32 %v2760, %v3893
        %v4006 = vsub.f32 %v1931, %v3494
        %v4007 = vsub.f32 %v1933, %v3627
        %v4008 = vsub.f32 %v2764, %v3760
        %v4009 = vsub.f32 %v2766, %v3893
        %v4010 = vsub.f32 %v1937, %v3494
        %v4011 = vsub.f32 %v1939, %v3627
        %v4012 = vsub.f32 %v2770, %v3760
        %v4013 = vsub.f32 %v2772, %v3893
        %v4014 = vsub.f32 %v1943, %v3494
        %v4015 = vsub.f32 %v1945, %v3627
        %v4016 = vsub.f32 %v2776, %v3760
        %v4017 = vsub.f32 %v2778, %v3893
        %v4018 = vsub.f32 %v1949, %v3494
        %v4019 = vsub.f32 %v1951, %v3627
        %v4020 = vsub.f32 %v2782, %v3760
        %v4021 = vsub.f32 %v2784, %v3893
        %v4022 = vsub.f32 %v1955, %v3494
        %v4023 = vsub.f32 %v1957, %v3627
        %v4024 = vsub.f32 %v2788, %v3760
        %v4025 = vsub.f32 %v2790, %v3893
        %v4026 = vsub.f32 %v1961, %v3494
        %v4027 = vsub.f32 %v1963, %v3627
        %v4028 = vsub.f32 %v2794, %v3760
        %v4029 = vsub.f32 %v2796, %v3893
        %v4030 = vsub.f32 %v1967, %v3494
        %v4031 = vsub.f32 %v1969, %v3627
        %v4032 = vsub.f32 %v2800, %v3760
        %v4033 = vsub.f32 %v2802, %v3893
        %v4034 = vsub.f32 %v1973, %v3494
        %v4035 = vsub.f32 %v1975, %v3627
        %v4036 = vsub.f32 %v2806, %v3760
        %v4037 = vsub.f32 %v2808, %v3893
        %v4038 = vsub.f32 %v1979, %v3494
        %v4039 = vsub.f32 %v1981, %v3627
        %v4040 = vsub.f32 %v2812, %v3760
        %v4041 = vsub.f32 %v2814, %v3893
        %v4042 = vsub.f32 %v1985, %v3494
        %v4043 = vsub.f32 %v1987, %v3627
        %v4044 = vsub.f32 %v2818, %v3760
        %v4045 = vsub.f32 %v2820, %v3893
        %v4046 = vsub.f32 %v1991, %v3494
        %v4047 = vsub.f32 %v1993, %v3627
        %v4048 = vsub.f32 %v2824, %v3760
        %v4049 = vsub.f32 %v2826, %v3893
        %v4050 = vsub.f32 %v1997, %v3494
        %v4051 = vsub.f32 %v1999, %v3627
        %v4052 = vsub.f32 %v2830, %v3760
        %v4053 = vsub.f32 %v2832, %v3893
        %v4054 = vsub.f32 %v2003, %v3494
        %v4055 = vsub.f32 %v2005, %v3627
        %v4056 = vsub.f32 %v2836, %v3760
        %v4057 = vsub.f32 %v2838, %v3893
        %v4058 = vsub.f32 %v2009, %v3494
        %v4059 = vsub.f32 %v2011, %v3627
        %v4060 = vsub.f32 %v2842, %v3760
        %v4061 = vsub.f32 %v2844, %v3893
        %v4062 = vsub.f32 %v2015, %v3494
        %v4063 = vsub.f32 %v2017, %v3627
        %v4064 = vsub.f32 %v2848, %v3760
        %v4065 = vsub.f32 %v2850, %v3893
        %v4066 = vsub.f32 %v2021, %v3494
        %v4067 = vsub.f32 %v2023, %v3627
        %v4068 = vsub.f32 %v2854, %v3760
        %v4069 = vsub.f32 %v2856, %v3893
        %v4070 = vsub.f32 %v2027, %v3494
        %v4071 = vsub.f32 %v2029, %v3627
        %v4072 = vsub.f32 %v2860, %v3760
        %v4073 = vsub.f32 %v2862, %v3893
        %v4074 = vsub.f32 %v2033, %v3494
        %v4075 = vsub.f32 %v2035, %v3627
        %v4076 = vsub.f32 %v2866, %v3760
        %v4077 = vsub.f32 %v2868, %v3893
        %v4078 = vsub.f32 %v2039, %v3494
        %v4079 = vsub.f32 %v2041, %v3627
        %v4080 = vsub.f32 %v2872, %v3760
        %v4081 = vsub.f32 %v2874, %v3893
        %v4082 = vsub.f32 %v2045, %v3494
        %v4083 = vsub.f32 %v2047, %v3627
        %v4084 = vsub.f32 %v2878, %v3760
        %v4085 = vsub.f32 %v2880, %v3893
        %v4086 = vsub.f32 %v2051, %v3494
        %v4087 = vsub.f32 %v2053, %v3627
        %v4088 = vsub.f32 %v2884, %v3760
        %v4089 = vsub.f32 %v2886, %v3893
        %v4090 = vsub.f32 %v2057, %v3494
        %v4091 = vsub.f32 %v2059, %v3627
        %v4092 = vsub.f32 %v2890, %v3760
        %v4093 = vsub.f32 %v2892, %v3893
        %v4094 = vsub.f32 %v2063, %v3494
        %v4095 = vsub.f32 %v2065, %v3627
        %v4096 = vsub.f32 %v2896, %v3760
        %v4097 = vsub.f32 %v2898, %v3893
        %v4098 = vsub.f32 %v2069, %v3494
        %v4099 = vsub.f32 %v2071, %v3627
        %v4100 = vsub.f32 %v2902, %v3760
        %v4101 = vsub.f32 %v2904, %v3893
        %v4102 = vsub.f32 %v2075, %v3494
        %v4103 = vsub.f32 %v2077, %v3627
        %v4104 = vsub.f32 %v2908, %v3760
        %v4105 = vsub.f32 %v2910, %v3893
        %v4106 = vsub.f32 %v2081, %v3494
        %v4107 = vsub.f32 %v2083, %v3627
        %v4108 = vsub.f32 %v2914, %v3760
        %v4109 = vsub.f32 %v2916, %v3893
        %v4110 = vsub.f32 %v2087, %v3494
        %v4111 = vsub.f32 %v2089, %v3627
        %v4112 = vsub.f32 %v2920, %v3760
        %v4113 = vsub.f32 %v2922, %v3893
        %v4114 = vsub.f32 %v2093, %v3494
        %v4115 = vsub.f32 %v2095, %v3627
        %v4116 = vsub.f32 %v2926, %v3760
        %v4117 = vsub.f32 %v2928, %v3893
        %v4118 = vsub.f32 %v2099, %v3494
        %v4119 = vsub.f32 %v2101, %v3627
        %v4120 = vsub.f32 %v2932, %v3760
        %v4121 = vsub.f32 %v2934, %v3893
        %v4122 = vsub.f32 %v2105, %v3494
        %v4123 = vsub.f32 %v2107, %v3627
        %v4124 = vsub.f32 %v2938, %v3760
        %v4125 = vsub.f32 %v2940, %v3893
        %v4126 = vsub.f32 %v2111, %v3494
        %v4127 = vsub.f32 %v2113, %v3627
        %v4128 = vsub.f32 %v2944, %v3760
        %v4129 = vsub.f32 %v2946, %v3893
        %v4130 = vsub.f32 %v2117, %v3494
        %v4131 = vsub.f32 %v2119, %v3627
        %v4132 = vsub.f32 %v2950, %v3760
        %v4133 = vsub.f32 %v2952, %v3893
        %v4134 = vsub.f32 %v2123, %v3494
        %v4135 = vsub.f32 %v2125, %v3627
        %v4136 = vsub.f32 %v2956, %v3760
        %v4137 = vsub.f32 %v2958, %v3893
        %v4138 = vsub.f32 %v2129, %v3494
        %v4139 = vsub.f32 %v2131, %v3627
        %v4140 = vsub.f32 %v2962, %v3760
        %v4141 = vsub.f32 %v2964, %v3893
        %v4142 = vsub.f32 %v2135, %v3494
        %v4143 = vsub.f32 %v2137, %v3627
        %v4144 = vsub.f32 %v2968, %v3760
        %v4145 = vsub.f32 %v2970, %v3893
        %v4146 = vsub.f32 %v2141, %v3494
        %v4147 = vsub.f32 %v2143, %v3627
        %v4148 = vsub.f32 %v2974, %v3760
        %v4149 = vsub.f32 %v2976, %v3893
        %v4150 = vsub.f32 %v2147, %v3494
        %v4151 = vsub.f32 %v2149, %v3627
        %v4152 = vsub.f32 %v2980, %v3760
        %v4153 = vsub.f32 %v2982, %v3893
        %v4154 = vsub.f32 %v2153, %v3494
        %v4155 = vsub.f32 %v2155, %v3627
        %v4156 = vsub.f32 %v2986, %v3760
        %v4157 = vsub.f32 %v2988, %v3893
        %v4158 = vsub.f32 %v2159, %v3494
        %v4159 = vsub.f32 %v2161, %v3627
        %v4160 = vsub.f32 %v2992, %v3760
        %v4161 = vsub.f32 %v2994, %v3893
        %v4162 = vsub.f32 %v2165, %v3494
        %v4163 = vsub.f32 %v2167, %v3627
        %v4164 = vsub.f32 %v2998, %v3760
        %v4165 = vsub.f32 %v3000, %v3893
        %v4166 = vsub.f32 %v2171, %v3494
        %v4167 = vsub.f32 %v2173, %v3627
        %v4168 = vsub.f32 %v3004, %v3760
        %v4169 = vsub.f32 %v3006, %v3893
        %v4170 = vsub.f32 %v2177, %v3494
        %v4171 = vsub.f32 %v2179, %v3627
        %v4172 = vsub.f32 %v3010, %v3760
        %v4173 = vsub.f32 %v3012, %v3893
        %v4174 = vsub.f32 %v2183, %v3494
        %v4175 = vsub.f32 %v2185, %v3627
        %v4176 = vsub.f32 %v3016, %v3760
        %v4177 = vsub.f32 %v3018, %v3893
        %v4178 = vsub.f32 %v2189, %v3494
        %v4179 = vsub.f32 %v2191, %v3627
        %v4180 = vsub.f32 %v3022, %v3760
        %v4181 = vsub.f32 %v3024, %v3893
        %v4182 = vsub.f32 %v2195, %v3494
        %v4183 = vsub.f32 %v2197, %v3627
        %v4184 = vsub.f32 %v3028, %v3760
        %v4185 = vsub.f32 %v3030, %v3893
        %v4186 = vsub.f32 %v2201, %v3494
        %v4187 = vsub.f32 %v2203, %v3627
        %v4188 = vsub.f32 %v3034, %v3760
        %v4189 = vsub.f32 %v3036, %v3893
        %v4190 = vsub.f32 %v2207, %v3494
        %v4191 = vsub.f32 %v2209, %v3627
        %v4192 = vsub.f32 %v3040, %v3760
        %v4193 = vsub.f32 %v3042, %v3893
        %v4194 = vsub.f32 %v2213, %v3494
        %v4195 = vsub.f32 %v2215, %v3627
        %v4196 = vsub.f32 %v3046, %v3760
        %v4197 = vsub.f32 %v3048, %v3893
        %v4198 = vsub.f32 %v2219, %v3494
        %v4199 = vsub.f32 %v2221, %v3627
        %v4200 = vsub.f32 %v3052, %v3760
        %v4201 = vsub.f32 %v3054, %v3893
        %v4202 = vsub.f32 %v2225, %v3494
        %v4203 = vsub.f32 %v2227, %v3627
        %v4204 = vsub.f32 %v3058, %v3760
        %v4205 = vsub.f32 %v3060, %v3893
        %v4206 = vsub.f32 %v2231, %v3494
        %v4207 = vsub.f32 %v2233, %v3627
        %v4208 = vsub.f32 %v3064, %v3760
        %v4209 = vsub.f32 %v3066, %v3893
        %v4210 = vsub.f32 %v2237, %v3494
        %v4211 = vsub.f32 %v2239, %v3627
        %v4212 = vsub.f32 %v3070, %v3760
        %v4213 = vsub.f32 %v3072, %v3893
        %v4214 = vsub.f32 %v2243, %v3494
        %v4215 = vsub.f32 %v2245, %v3627
        %v4216 = vsub.f32 %v3076, %v3760
        %v4217 = vsub.f32 %v3078, %v3893
        %v4218 = vsub.f32 %v2249, %v3494
        %v4219 = vsub.f32 %v2251, %v3627
        %v4220 = vsub.f32 %v3082, %v3760
        %v4221 = vsub.f32 %v3084, %v3893
        %v4222 = vsub.f32 %v2255, %v3494
        %v4223 = vsub.f32 %v2257, %v3627
        %v4224 = vsub.f32 %v3088, %v3760
        %v4225 = vsub.f32 %v3090, %v3893
        %v4226 = vsub.f32 %v2261, %v3494
        %v4227 = vsub.f32 %v2263, %v3627
        %v4228 = vsub.f32 %v3094, %v3760
        %v4229 = vsub.f32 %v3096, %v3893
        %v4230 = vsub.f32 %v2267, %v3494
        %v4231 = vsub.f32 %v2269, %v3627
        %v4232 = vsub.f32 %v3100, %v3760
        %v4233 = vsub.f32 %v3102, %v3893
        %v4234 = vsub.f32 %v2273, %v3494
        %v4235 = vsub.f32 %v2275, %v3627
        %v4236 = vsub.f32 %v3106, %v3760
        %v4237 = vsub.f32 %v3108, %v3893
        %v4238 = vsub.f32 %v2279, %v3494
        %v4239 = vsub.f32 %v2281, %v3627
        %v4240 = vsub.f32 %v3112, %v3760
        %v4241 = vsub.f32 %v3114, %v3893
        %v4242 = vsub.f32 %v2285, %v3494
        %v4243 = vsub.f32 %v2287, %v3627
        %v4244 = vsub.f32 %v3118, %v3760
        %v4245 = vsub.f32 %v3120, %v3893
        %v4246 = vsub.f32 %v2291, %v3494
        %v4247 = vsub.f32 %v2293, %v3627
        %v4248 = vsub.f32 %v3124, %v3760
        %v4249 = vsub.f32 %v3126, %v3893
        %v4250 = vsub.f32 %v2297, %v3494
        %v4251 = vsub.f32 %v2299, %v3627
        %v4252 = vsub.f32 %v3130, %v3760
        %v4253 = vsub.f32 %v3132, %v3893
        %v4254 = vsub.f32 %v2303, %v3494
        %v4255 = vsub.f32 %v2305, %v3627
        %v4256 = vsub.f32 %v3136, %v3760
        %v4257 = vsub.f32 %v3138, %v3893
        %v4258 = vsub.f32 %v2309, %v3494
        %v4259 = vsub.f32 %v2311, %v3627
        %v4260 = vsub.f32 %v3142, %v3760
        %v4261 = vsub.f32 %v3144, %v3893
        %v4262 = vsub.f32 %v2315, %v3494
        %v4263 = vsub.f32 %v2317, %v3627
        %v4264 = vsub.f32 %v3148, %v3760
        %v4265 = vsub.f32 %v3150, %v3893
        %v4266 = vsub.f32 %v2321, %v3494
        %v4267 = vsub.f32 %v2323, %v3627
        %v4268 = vsub.f32 %v3154, %v3760
        %v4269 = vsub.f32 %v3156, %v3893
        %v4270 = vsub.f32 %v2327, %v3494
        %v4271 = vsub.f32 %v2329, %v3627
        %v4272 = vsub.f32 %v3160, %v3760
        %v4273 = vsub.f32 %v3162, %v3893
        %v4274 = vsub.f32 %v2333, %v3494
        %v4275 = vsub.f32 %v2335, %v3627
        %v4276 = vsub.f32 %v3166, %v3760
        %v4277 = vsub.f32 %v3168, %v3893
        %v4278 = vsub.f32 %v2339, %v3494
        %v4279 = vsub.f32 %v2341, %v3627
        %v4280 = vsub.f32 %v3172, %v3760
        %v4281 = vsub.f32 %v3174, %v3893
        %v4282 = vsub.f32 %v2345, %v3494
        %v4283 = vsub.f32 %v2347, %v3627
        %v4284 = vsub.f32 %v3178, %v3760
        %v4285 = vsub.f32 %v3180, %v3893
        %v4286 = vsub.f32 %v2351, %v3494
        %v4287 = vsub.f32 %v2353, %v3627
        %v4288 = vsub.f32 %v3184, %v3760
        %v4289 = vsub.f32 %v3186, %v3893
        %v4290 = vsub.f32 %v2357, %v3494
        %v4291 = vsub.f32 %v2359, %v3627
        %v4292 = vsub.f32 %v3190, %v3760
        %v4293 = vsub.f32 %v3192, %v3893
        %v4294 = vsub.f32 %v2363, %v3494
        %v4295 = vsub.f32 %v2365, %v3627
        %v4296 = vsub.f32 %v3196, %v3760
        %v4297 = vsub.f32 %v3198, %v3893
        %v4298 = vsub.f32 %v2369, %v3494
        %v4299 = vsub.f32 %v2371, %v3627
        %v4300 = vsub.f32 %v3202, %v3760
        %v4301 = vsub.f32 %v3204, %v3893
        %v4302 = vsub.f32 %v2375, %v3494
        %v4303 = vsub.f32 %v2377, %v3627
        %v4304 = vsub.f32 %v3208, %v3760
        %v4305 = vsub.f32 %v3210, %v3893
        %v4306 = vsub.f32 %v2381, %v3494
        %v4307 = vsub.f32 %v2383, %v3627
        %v4308 = vsub.f32 %v3214, %v3760
        %v4309 = vsub.f32 %v3216, %v3893
        %v4310 = vsub.f32 %v2387, %v3494
        %v4311 = vsub.f32 %v2389, %v3627
        %v4312 = vsub.f32 %v3220, %v3760
        %v4313 = vsub.f32 %v3222, %v3893
        %v4314 = vsub.f32 %v2393, %v3494
        %v4315 = vsub.f32 %v2395, %v3627
        %v4316 = vsub.f32 %v3226, %v3760
        %v4317 = vsub.f32 %v3228, %v3893
        %v4318 = vsub.f32 %v2399, %v3494
        %v4319 = vsub.f32 %v2401, %v3627
        %v4320 = vsub.f32 %v3232, %v3760
        %v4321 = vsub.f32 %v3234, %v3893
        %v4322 = vsub.f32 %v2405, %v3494
        %v4323 = vsub.f32 %v2407, %v3627
        %v4324 = vsub.f32 %v3238, %v3760
        %v4325 = vsub.f32 %v3240, %v3893
        %v4326 = vsub.f32 %v2411, %v3494
        %v4327 = vsub.f32 %v2413, %v3627
        %v4328 = vsub.f32 %v3244, %v3760
        %v4329 = vsub.f32 %v3246, %v3893
        %v4330 = vsub.f32 %v2417, %v3494
        %v4331 = vsub.f32 %v2419, %v3627
        %v4332 = vsub.f32 %v3250, %v3760
        %v4333 = vsub.f32 %v3252, %v3893
        %v4334 = vsub.f32 %v2423, %v3494
        %v4335 = vsub.f32 %v2425, %v3627
        %v4336 = vsub.f32 %v3256, %v3760
        %v4337 = vsub.f32 %v3258, %v3893
        %v4338 = vsub.f32 %v2429, %v3494
        %v4339 = vsub.f32 %v2431, %v3627
        %v4340 = vsub.f32 %v3262, %v3760
        %v4341 = vsub.f32 %v3264, %v3893
        %v4342 = vsub.f32 %v2435, %v3494
        %v4343 = vsub.f32 %v2437, %v3627
        %v4344 = vsub.f32 %v3268, %v3760
        %v4345 = vsub.f32 %v3270, %v3893
        %v4346 = vsub.f32 %v2441, %v3494
        %v4347 = vsub.f32 %v2443, %v3627
        %v4348 = vsub.f32 %v3274, %v3760
        %v4349 = vsub.f32 %v3276, %v3893
        %v4350 = vsub.f32 %v2447, %v3494
        %v4351 = vsub.f32 %v2449, %v3627
        %v4352 = vsub.f32 %v3280, %v3760
        %v4353 = vsub.f32 %v3282, %v3893
        %v4354 = vsub.f32 %v2453, %v3494
        %v4355 = vsub.f32 %v2455, %v3627
        %v4356 = vsub.f32 %v3286, %v3760
        %v4357 = vsub.f32 %v3288, %v3893
        %v4358 = vsub.f32 %v2459, %v3494
        %v4359 = vsub.f32 %v2461, %v3627
        %v4360 = vsub.f32 %v3292, %v3760
        %v4361 = vsub.f32 %v3294, %v3893
        %v4362 = vsub.f32 %v2465, %v3494
        %v4363 = vsub.f32 %v2467, %v3627
        %v4364 = vsub.f32 %v3298, %v3760
        %v4365 = vsub.f32 %v3300, %v3893
        %v4366 = vsub.f32 %v2471, %v3494
        %v4367 = vsub.f32 %v2473, %v3627
        %v4368 = vsub.f32 %v3304, %v3760
        %v4369 = vsub.f32 %v3306, %v3893
        %v4370 = vsub.f32 %v2477, %v3494
        %v4371 = vsub.f32 %v2479, %v3627
        %v4372 = vsub.f32 %v3310, %v3760
        %v4373 = vsub.f32 %v3312, %v3893
        %v4374 = vsub.f32 %v2483, %v3494
        %v4375 = vsub.f32 %v2485, %v3627
        %v4376 = vsub.f32 %v3316, %v3760
        %v4377 = vsub.f32 %v3318, %v3893
        %v4378 = vsub.f32 %v2489, %v3494
        %v4379 = vsub.f32 %v2491, %v3627
        %v4380 = vsub.f32 %v3322, %v3760
        %v4381 = vsub.f32 %v3324, %v3893
        %v4382 = vsub.f32 %v2495, %v3494
        %v4383 = vsub.f32 %v2497, %v3627
        %v4384 = vsub.f32 %v3328, %v3760
        %v4385 = vsub.f32 %v3330, %v3893
        %v4386 = vsub.f32 %v2501, %v3494
        %v4387 = vsub.f32 %v2503, %v3627
        %v4388 = vsub.f32 %v3334, %v3760
        %v4389 = vsub.f32 %v3336, %v3893
        %v4390 = vsub.f32 %v2507, %v3494
        %v4391 = vsub.f32 %v2509, %v3627
        %v4392 = vsub.f32 %v3340, %v3760
        %v4393 = vsub.f32 %v3342, %v3893
        %v4394 = vsub.f32 %v2513, %v3494
        %v4395 = vsub.f32 %v2515, %v3627
        %v4396 = vsub.f32 %v3346, %v3760
        %v4397 = vsub.f32 %v3348, %v3893
        %v4398 = vsub.f32 %v2519, %v3494
        %v4399 = vsub.f32 %v2521, %v3627
        %v4400 = vsub.f32 %v3352, %v3760
        %v4401 = vsub.f32 %v3354, %v3893
        %v4402 = vsub.f32 %v2525, %v3494
        %v4403 = vsub.f32 %v2527, %v3627
        %v4404 = vsub.f32 %v3358, %v3760
        %v4405 = vsub.f32 %v3360, %v3893
        %v4406 = vmul.f32 %v3894, 1.442695
        %v4407 = vpow.pop %v4406
        %v4408 = vmul.f32 %v3895, 1.442695
        %v4409 = vpow.pop %v4408
        %v4410 = vmul.f32 %v3896, 1.442695
        %v4411 = vpow.pop %v4410
        %v4412 = vmul.f32 %v3897, 1.442695
        %v4413 = vpow.pop %v4412
        %v4414 = vmul.f32 %v3898, 1.442695
        %v4415 = vpow.pop %v4414
        %v4416 = vmul.f32 %v3899, 1.442695
        %v4417 = vpow.pop %v4416
        %v4418 = vmul.f32 %v3900, 1.442695
        %v4419 = vpow.pop %v4418
        %v4420 = vmul.f32 %v3901, 1.442695
        %v4421 = vpow.pop %v4420
        %v4422 = vmul.f32 %v3902, 1.442695
        %v4423 = vpow.pop %v4422
        %v4424 = vmul.f32 %v3903, 1.442695
        %v4425 = vpow.pop %v4424
        %v4426 = vmul.f32 %v3904, 1.442695
        %v4427 = vpow.pop %v4426
        %v4428 = vmul.f32 %v3905, 1.442695
        %v4429 = vpow.pop %v4428
        %v4430 = vmul.f32 %v3906, 1.442695
        %v4431 = vpow.pop %v4430
        %v4432 = vmul.f32 %v3907, 1.442695
        %v4433 = vpow.pop %v4432
        %v4434 = vmul.f32 %v3908, 1.442695
        %v4435 = vpow.pop %v4434
        %v4436 = vmul.f32 %v3909, 1.442695
        %v4437 = vpow.pop %v4436
        %v4438 = vmul.f32 %v3910, 1.442695
        %v4439 = vpow.pop %v4438
        %v4440 = vmul.f32 %v3911, 1.442695
        %v4441 = vpow.pop %v4440
        %v4442 = vmul.f32 %v3912, 1.442695
        %v4443 = vpow.pop %v4442
        %v4444 = vmul.f32 %v3913, 1.442695
        %v4445 = vpow.pop %v4444
        %v4446 = vmul.f32 %v3914, 1.442695
        %v4447 = vpow.pop %v4446
        %v4448 = vmul.f32 %v3915, 1.442695
        %v4449 = vpow.pop %v4448
        %v4450 = vmul.f32 %v3916, 1.442695
        %v4451 = vpow.pop %v4450
        %v4452 = vmul.f32 %v3917, 1.442695
        %v4453 = vpow.pop %v4452
        %v4454 = vmul.f32 %v3918, 1.442695
        %v4455 = vpow.pop %v4454
        %v4456 = vmul.f32 %v3919, 1.442695
        %v4457 = vpow.pop %v4456
        %v4458 = vmul.f32 %v3920, 1.442695
        %v4459 = vpow.pop %v4458
        %v4460 = vmul.f32 %v3921, 1.442695
        %v4461 = vpow.pop %v4460
        %v4462 = vmul.f32 %v3922, 1.442695
        %v4463 = vpow.pop %v4462
        %v4464 = vmul.f32 %v3923, 1.442695
        %v4465 = vpow.pop %v4464
        %v4466 = vmul.f32 %v3924, 1.442695
        %v4467 = vpow.pop %v4466
        %v4468 = vmul.f32 %v3925, 1.442695
        %v4469 = vpow.pop %v4468
        %v4470 = vmul.f32 %v3926, 1.442695
        %v4471 = vpow.pop %v4470
        %v4472 = vmul.f32 %v3927, 1.442695
        %v4473 = vpow.pop %v4472
        %v4474 = vmul.f32 %v3928, 1.442695
        %v4475 = vpow.pop %v4474
        %v4476 = vmul.f32 %v3929, 1.442695
        %v4477 = vpow.pop %v4476
        %v4478 = vmul.f32 %v3930, 1.442695
        %v4479 = vpow.pop %v4478
        %v4480 = vmul.f32 %v3931, 1.442695
        %v4481 = vpow.pop %v4480
        %v4482 = vmul.f32 %v3932, 1.442695
        %v4483 = vpow.pop %v4482
        %v4484 = vmul.f32 %v3933, 1.442695
        %v4485 = vpow.pop %v4484
        %v4486 = vmul.f32 %v3934, 1.442695
        %v4487 = vpow.pop %v4486
        %v4488 = vmul.f32 %v3935, 1.442695
        %v4489 = vpow.pop %v4488
        %v4490 = vmul.f32 %v3936, 1.442695
        %v4491 = vpow.pop %v4490
        %v4492 = vmul.f32 %v3937, 1.442695
        %v4493 = vpow.pop %v4492
        %v4494 = vmul.f32 %v3938, 1.442695
        %v4495 = vpow.pop %v4494
        %v4496 = vmul.f32 %v3939, 1.442695
        %v4497 = vpow.pop %v4496
        %v4498 = vmul.f32 %v3940, 1.442695
        %v4499 = vpow.pop %v4498
        %v4500 = vmul.f32 %v3941, 1.442695
        %v4501 = vpow.pop %v4500
        %v4502 = vmul.f32 %v3942, 1.442695
        %v4503 = vpow.pop %v4502
        %v4504 = vmul.f32 %v3943, 1.442695
        %v4505 = vpow.pop %v4504
        %v4506 = vmul.f32 %v3944, 1.442695
        %v4507 = vpow.pop %v4506
        %v4508 = vmul.f32 %v3945, 1.442695
        %v4509 = vpow.pop %v4508
        %v4510 = vmul.f32 %v3946, 1.442695
        %v4511 = vpow.pop %v4510
        %v4512 = vmul.f32 %v3947, 1.442695
        %v4513 = vpow.pop %v4512
        %v4514 = vmul.f32 %v3948, 1.442695
        %v4515 = vpow.pop %v4514
        %v4516 = vmul.f32 %v3949, 1.442695
        %v4517 = vpow.pop %v4516
        %v4518 = vmul.f32 %v3950, 1.442695
        %v4519 = vpow.pop %v4518
        %v4520 = vmul.f32 %v3951, 1.442695
        %v4521 = vpow.pop %v4520
        %v4522 = vmul.f32 %v3952, 1.442695
        %v4523 = vpow.pop %v4522
        %v4524 = vmul.f32 %v3953, 1.442695
        %v4525 = vpow.pop %v4524
        %v4526 = vmul.f32 %v3954, 1.442695
        %v4527 = vpow.pop %v4526
        %v4528 = vmul.f32 %v3955, 1.442695
        %v4529 = vpow.pop %v4528
        %v4530 = vmul.f32 %v3956, 1.442695
        %v4531 = vpow.pop %v4530
        %v4532 = vmul.f32 %v3957, 1.442695
        %v4533 = vpow.pop %v4532
        %v4534 = vmul.f32 %v3958, 1.442695
        %v4535 = vpow.pop %v4534
        %v4536 = vmul.f32 %v3959, 1.442695
        %v4537 = vpow.pop %v4536
        %v4538 = vmul.f32 %v3960, 1.442695
        %v4539 = vpow.pop %v4538
        %v4540 = vmul.f32 %v3961, 1.442695
        %v4541 = vpow.pop %v4540
        %v4542 = vmul.f32 %v3962, 1.442695
        %v4543 = vpow.pop %v4542
        %v4544 = vmul.f32 %v3963, 1.442695
        %v4545 = vpow.pop %v4544
        %v4546 = vmul.f32 %v3964, 1.442695
        %v4547 = vpow.pop %v4546
        %v4548 = vmul.f32 %v3965, 1.442695
        %v4549 = vpow.pop %v4548
        %v4550 = vmul.f32 %v3966, 1.442695
        %v4551 = vpow.pop %v4550
        %v4552 = vmul.f32 %v3967, 1.442695
        %v4553 = vpow.pop %v4552
        %v4554 = vmul.f32 %v3968, 1.442695
        %v4555 = vpow.pop %v4554
        %v4556 = vmul.f32 %v3969, 1.442695
        %v4557 = vpow.pop %v4556
        %v4558 = vmul.f32 %v3970, 1.442695
        %v4559 = vpow.pop %v4558
        %v4560 = vmul.f32 %v3971, 1.442695
        %v4561 = vpow.pop %v4560
        %v4562 = vmul.f32 %v3972, 1.442695
        %v4563 = vpow.pop %v4562
        %v4564 = vmul.f32 %v3973, 1.442695
        %v4565 = vpow.pop %v4564
        %v4566 = vmul.f32 %v3974, 1.442695
        %v4567 = vpow.pop %v4566
        %v4568 = vmul.f32 %v3975, 1.442695
        %v4569 = vpow.pop %v4568
        %v4570 = vmul.f32 %v3976, 1.442695
        %v4571 = vpow.pop %v4570
        %v4572 = vmul.f32 %v3977, 1.442695
        %v4573 = vpow.pop %v4572
        %v4574 = vmul.f32 %v3978, 1.442695
        %v4575 = vpow.pop %v4574
        %v4576 = vmul.f32 %v3979, 1.442695
        %v4577 = vpow.pop %v4576
        %v4578 = vmul.f32 %v3980, 1.442695
        %v4579 = vpow.pop %v4578
        %v4580 = vmul.f32 %v3981, 1.442695
        %v4581 = vpow.pop %v4580
        %v4582 = vmul.f32 %v3982, 1.442695
        %v4583 = vpow.pop %v4582
        %v4584 = vmul.f32 %v3983, 1.442695
        %v4585 = vpow.pop %v4584
        %v4586 = vmul.f32 %v3984, 1.442695
        %v4587 = vpow.pop %v4586
        %v4588 = vmul.f32 %v3985, 1.442695
        %v4589 = vpow.pop %v4588
        %v4590 = vmul.f32 %v3986, 1.442695
        %v4591 = vpow.pop %v4590
        %v4592 = vmul.f32 %v3987, 1.442695
        %v4593 = vpow.pop %v4592
        %v4594 = vmul.f32 %v3988, 1.442695
        %v4595 = vpow.pop %v4594
        %v4596 = vmul.f32 %v3989, 1.442695
        %v4597 = vpow.pop %v4596
        %v4598 = vmul.f32 %v3990, 1.442695
        %v4599 = vpow.pop %v4598
        %v4600 = vmul.f32 %v3991, 1.442695
        %v4601 = vpow.pop %v4600
        %v4602 = vmul.f32 %v3992, 1.442695
        %v4603 = vpow.pop %v4602
        %v4604 = vmul.f32 %v3993, 1.442695
        %v4605 = vpow.pop %v4604
        %v4606 = vmul.f32 %v3994, 1.442695
        %v4607 = vpow.pop %v4606
        %v4608 = vmul.f32 %v3995, 1.442695
        %v4609 = vpow.pop %v4608
        %v4610 = vmul.f32 %v3996, 1.442695
        %v4611 = vpow.pop %v4610
        %v4612 = vmul.f32 %v3997, 1.442695
        %v4613 = vpow.pop %v4612
        %v4614 = vmul.f32 %v3998, 1.442695
        %v4615 = vpow.pop %v4614
        %v4616 = vmul.f32 %v3999, 1.442695
        %v4617 = vpow.pop %v4616
        %v4618 = vmul.f32 %v4000, 1.442695
        %v4619 = vpow.pop %v4618
        %v4620 = vmul.f32 %v4001, 1.442695
        %v4621 = vpow.pop %v4620
        %v4622 = vmul.f32 %v4002, 1.442695
        %v4623 = vpow.pop %v4622
        %v4624 = vmul.f32 %v4003, 1.442695
        %v4625 = vpow.pop %v4624
        %v4626 = vmul.f32 %v4004, 1.442695
        %v4627 = vpow.pop %v4626
        %v4628 = vmul.f32 %v4005, 1.442695
        %v4629 = vpow.pop %v4628
        %v4630 = vmul.f32 %v4006, 1.442695
        %v4631 = vpow.pop %v4630
        %v4632 = vmul.f32 %v4007, 1.442695
        %v4633 = vpow.pop %v4632
        %v4634 = vmul.f32 %v4008, 1.442695
        %v4635 = vpow.pop %v4634
        %v4636 = vmul.f32 %v4009, 1.442695
        %v4637 = vpow.pop %v4636
        %v4638 = vmul.f32 %v4010, 1.442695
        %v4639 = vpow.pop %v4638
        %v4640 = vmul.f32 %v4011, 1.442695
        %v4641 = vpow.pop %v4640
        %v4642 = vmul.f32 %v4012, 1.442695
        %v4643 = vpow.pop %v4642
        %v4644 = vmul.f32 %v4013, 1.442695
        %v4645 = vpow.pop %v4644
        %v4646 = vmul.f32 %v4014, 1.442695
        %v4647 = vpow.pop %v4646
        %v4648 = vmul.f32 %v4015, 1.442695
        %v4649 = vpow.pop %v4648
        %v4650 = vmul.f32 %v4016, 1.442695
        %v4651 = vpow.pop %v4650
        %v4652 = vmul.f32 %v4017, 1.442695
        %v4653 = vpow.pop %v4652
        %v4654 = vmul.f32 %v4018, 1.442695
        %v4655 = vpow.pop %v4654
        %v4656 = vmul.f32 %v4019, 1.442695
        %v4657 = vpow.pop %v4656
        %v4658 = vmul.f32 %v4020, 1.442695
        %v4659 = vpow.pop %v4658
        %v4660 = vmul.f32 %v4021, 1.442695
        %v4661 = vpow.pop %v4660
        %v4662 = vmul.f32 %v4022, 1.442695
        %v4663 = vpow.pop %v4662
        %v4664 = vmul.f32 %v4023, 1.442695
        %v4665 = vpow.pop %v4664
        %v4666 = vmul.f32 %v4024, 1.442695
        %v4667 = vpow.pop %v4666
        %v4668 = vmul.f32 %v4025, 1.442695
        %v4669 = vpow.pop %v4668
        %v4670 = vmul.f32 %v4026, 1.442695
        %v4671 = vpow.pop %v4670
        %v4672 = vmul.f32 %v4027, 1.442695
        %v4673 = vpow.pop %v4672
        %v4674 = vmul.f32 %v4028, 1.442695
        %v4675 = vpow.pop %v4674
        %v4676 = vmul.f32 %v4029, 1.442695
        %v4677 = vpow.pop %v4676
        %v4678 = vmul.f32 %v4030, 1.442695
        %v4679 = vpow.pop %v4678
        %v4680 = vmul.f32 %v4031, 1.442695
        %v4681 = vpow.pop %v4680
        %v4682 = vmul.f32 %v4032, 1.442695
        %v4683 = vpow.pop %v4682
        %v4684 = vmul.f32 %v4033, 1.442695
        %v4685 = vpow.pop %v4684
        %v4686 = vmul.f32 %v4034, 1.442695
        %v4687 = vpow.pop %v4686
        %v4688 = vmul.f32 %v4035, 1.442695
        %v4689 = vpow.pop %v4688
        %v4690 = vmul.f32 %v4036, 1.442695
        %v4691 = vpow.pop %v4690
        %v4692 = vmul.f32 %v4037, 1.442695
        %v4693 = vpow.pop %v4692
        %v4694 = vmul.f32 %v4038, 1.442695
        %v4695 = vpow.pop %v4694
        %v4696 = vmul.f32 %v4039, 1.442695
        %v4697 = vpow.pop %v4696
        %v4698 = vmul.f32 %v4040, 1.442695
        %v4699 = vpow.pop %v4698
        %v4700 = vmul.f32 %v4041, 1.442695
        %v4701 = vpow.pop %v4700
        %v4702 = vmul.f32 %v4042, 1.442695
        %v4703 = vpow.pop %v4702
        %v4704 = vmul.f32 %v4043, 1.442695
        %v4705 = vpow.pop %v4704
        %v4706 = vmul.f32 %v4044, 1.442695
        %v4707 = vpow.pop %v4706
        %v4708 = vmul.f32 %v4045, 1.442695
        %v4709 = vpow.pop %v4708
        %v4710 = vmul.f32 %v4046, 1.442695
        %v4711 = vpow.pop %v4710
        %v4712 = vmul.f32 %v4047, 1.442695
        %v4713 = vpow.pop %v4712
        %v4714 = vmul.f32 %v4048, 1.442695
        %v4715 = vpow.pop %v4714
        %v4716 = vmul.f32 %v4049, 1.442695
        %v4717 = vpow.pop %v4716
        %v4718 = vmul.f32 %v4050, 1.442695
        %v4719 = vpow.pop %v4718
        %v4720 = vmul.f32 %v4051, 1.442695
        %v4721 = vpow.pop %v4720
        %v4722 = vmul.f32 %v4052, 1.442695
        %v4723 = vpow.pop %v4722
        %v4724 = vmul.f32 %v4053, 1.442695
        %v4725 = vpow.pop %v4724
        %v4726 = vmul.f32 %v4054, 1.442695
        %v4727 = vpow.pop %v4726
        %v4728 = vmul.f32 %v4055, 1.442695
        %v4729 = vpow.pop %v4728
        %v4730 = vmul.f32 %v4056, 1.442695
        %v4731 = vpow.pop %v4730
        %v4732 = vmul.f32 %v4057, 1.442695
        %v4733 = vpow.pop %v4732
        %v4734 = vmul.f32 %v4058, 1.442695
        %v4735 = vpow.pop %v4734
        %v4736 = vmul.f32 %v4059, 1.442695
        %v4737 = vpow.pop %v4736
        %v4738 = vmul.f32 %v4060, 1.442695
        %v4739 = vpow.pop %v4738
        %v4740 = vmul.f32 %v4061, 1.442695
        %v4741 = vpow.pop %v4740
        %v4742 = vmul.f32 %v4062, 1.442695
        %v4743 = vpow.pop %v4742
        %v4744 = vmul.f32 %v4063, 1.442695
        %v4745 = vpow.pop %v4744
        %v4746 = vmul.f32 %v4064, 1.442695
        %v4747 = vpow.pop %v4746
        %v4748 = vmul.f32 %v4065, 1.442695
        %v4749 = vpow.pop %v4748
        %v4750 = vmul.f32 %v4066, 1.442695
        %v4751 = vpow.pop %v4750
        %v4752 = vmul.f32 %v4067, 1.442695
        %v4753 = vpow.pop %v4752
        %v4754 = vmul.f32 %v4068, 1.442695
        %v4755 = vpow.pop %v4754
        %v4756 = vmul.f32 %v4069, 1.442695
        %v4757 = vpow.pop %v4756
        %v4758 = vmul.f32 %v4070, 1.442695
        %v4759 = vpow.pop %v4758
        %v4760 = vmul.f32 %v4071, 1.442695
        %v4761 = vpow.pop %v4760
        %v4762 = vmul.f32 %v4072, 1.442695
        %v4763 = vpow.pop %v4762
        %v4764 = vmul.f32 %v4073, 1.442695
        %v4765 = vpow.pop %v4764
        %v4766 = vmul.f32 %v4074, 1.442695
        %v4767 = vpow.pop %v4766
        %v4768 = vmul.f32 %v4075, 1.442695
        %v4769 = vpow.pop %v4768
        %v4770 = vmul.f32 %v4076, 1.442695
        %v4771 = vpow.pop %v4770
        %v4772 = vmul.f32 %v4077, 1.442695
        %v4773 = vpow.pop %v4772
        %v4774 = vmul.f32 %v4078, 1.442695
        %v4775 = vpow.pop %v4774
        %v4776 = vmul.f32 %v4079, 1.442695
        %v4777 = vpow.pop %v4776
        %v4778 = vmul.f32 %v4080, 1.442695
        %v4779 = vpow.pop %v4778
        %v4780 = vmul.f32 %v4081, 1.442695
        %v4781 = vpow.pop %v4780
        %v4782 = vmul.f32 %v4082, 1.442695
        %v4783 = vpow.pop %v4782
        %v4784 = vmul.f32 %v4083, 1.442695
        %v4785 = vpow.pop %v4784
        %v4786 = vmul.f32 %v4084, 1.442695
        %v4787 = vpow.pop %v4786
        %v4788 = vmul.f32 %v4085, 1.442695
        %v4789 = vpow.pop %v4788
        %v4790 = vmul.f32 %v4086, 1.442695
        %v4791 = vpow.pop %v4790
        %v4792 = vmul.f32 %v4087, 1.442695
        %v4793 = vpow.pop %v4792
        %v4794 = vmul.f32 %v4088, 1.442695
        %v4795 = vpow.pop %v4794
        %v4796 = vmul.f32 %v4089, 1.442695
        %v4797 = vpow.pop %v4796
        %v4798 = vmul.f32 %v4090, 1.442695
        %v4799 = vpow.pop %v4798
        %v4800 = vmul.f32 %v4091, 1.442695
        %v4801 = vpow.pop %v4800
        %v4802 = vmul.f32 %v4092, 1.442695
        %v4803 = vpow.pop %v4802
        %v4804 = vmul.f32 %v4093, 1.442695
        %v4805 = vpow.pop %v4804
        %v4806 = vmul.f32 %v4094, 1.442695
        %v4807 = vpow.pop %v4806
        %v4808 = vmul.f32 %v4095, 1.442695
        %v4809 = vpow.pop %v4808
        %v4810 = vmul.f32 %v4096, 1.442695
        %v4811 = vpow.pop %v4810
        %v4812 = vmul.f32 %v4097, 1.442695
        %v4813 = vpow.pop %v4812
        %v4814 = vmul.f32 %v4098, 1.442695
        %v4815 = vpow.pop %v4814
        %v4816 = vmul.f32 %v4099, 1.442695
        %v4817 = vpow.pop %v4816
        %v4818 = vmul.f32 %v4100, 1.442695
        %v4819 = vpow.pop %v4818
        %v4820 = vmul.f32 %v4101, 1.442695
        %v4821 = vpow.pop %v4820
        %v4822 = vmul.f32 %v4102, 1.442695
        %v4823 = vpow.pop %v4822
        %v4824 = vmul.f32 %v4103, 1.442695
        %v4825 = vpow.pop %v4824
        %v4826 = vmul.f32 %v4104, 1.442695
        %v4827 = vpow.pop %v4826
        %v4828 = vmul.f32 %v4105, 1.442695
        %v4829 = vpow.pop %v4828
        %v4830 = vmul.f32 %v4106, 1.442695
        %v4831 = vpow.pop %v4830
        %v4832 = vmul.f32 %v4107, 1.442695
        %v4833 = vpow.pop %v4832
        %v4834 = vmul.f32 %v4108, 1.442695
        %v4835 = vpow.pop %v4834
        %v4836 = vmul.f32 %v4109, 1.442695
        %v4837 = vpow.pop %v4836
        %v4838 = vmul.f32 %v4110, 1.442695
        %v4839 = vpow.pop %v4838
        %v4840 = vmul.f32 %v4111, 1.442695
        %v4841 = vpow.pop %v4840
        %v4842 = vmul.f32 %v4112, 1.442695
        %v4843 = vpow.pop %v4842
        %v4844 = vmul.f32 %v4113, 1.442695
        %v4845 = vpow.pop %v4844
        %v4846 = vmul.f32 %v4114, 1.442695
        %v4847 = vpow.pop %v4846
        %v4848 = vmul.f32 %v4115, 1.442695
        %v4849 = vpow.pop %v4848
        %v4850 = vmul.f32 %v4116, 1.442695
        %v4851 = vpow.pop %v4850
        %v4852 = vmul.f32 %v4117, 1.442695
        %v4853 = vpow.pop %v4852
        %v4854 = vmul.f32 %v4118, 1.442695
        %v4855 = vpow.pop %v4854
        %v4856 = vmul.f32 %v4119, 1.442695
        %v4857 = vpow.pop %v4856
        %v4858 = vmul.f32 %v4120, 1.442695
        %v4859 = vpow.pop %v4858
        %v4860 = vmul.f32 %v4121, 1.442695
        %v4861 = vpow.pop %v4860
        %v4862 = vmul.f32 %v4122, 1.442695
        %v4863 = vpow.pop %v4862
        %v4864 = vmul.f32 %v4123, 1.442695
        %v4865 = vpow.pop %v4864
        %v4866 = vmul.f32 %v4124, 1.442695
        %v4867 = vpow.pop %v4866
        %v4868 = vmul.f32 %v4125, 1.442695
        %v4869 = vpow.pop %v4868
        %v4870 = vmul.f32 %v4126, 1.442695
        %v4871 = vpow.pop %v4870
        %v4872 = vmul.f32 %v4127, 1.442695
        %v4873 = vpow.pop %v4872
        %v4874 = vmul.f32 %v4128, 1.442695
        %v4875 = vpow.pop %v4874
        %v4876 = vmul.f32 %v4129, 1.442695
        %v4877 = vpow.pop %v4876
        %v4878 = vmul.f32 %v4130, 1.442695
        %v4879 = vpow.pop %v4878
        %v4880 = vmul.f32 %v4131, 1.442695
        %v4881 = vpow.pop %v4880
        %v4882 = vmul.f32 %v4132, 1.442695
        %v4883 = vpow.pop %v4882
        %v4884 = vmul.f32 %v4133, 1.442695
        %v4885 = vpow.pop %v4884
        %v4886 = vmul.f32 %v4134, 1.442695
        %v4887 = vpow.pop %v4886
        %v4888 = vmul.f32 %v4135, 1.442695
        %v4889 = vpow.pop %v4888
        %v4890 = vmul.f32 %v4136, 1.442695
        %v4891 = vpow.pop %v4890
        %v4892 = vmul.f32 %v4137, 1.442695
        %v4893 = vpow.pop %v4892
        %v4894 = vmul.f32 %v4138, 1.442695
        %v4895 = vpow.pop %v4894
        %v4896 = vmul.f32 %v4139, 1.442695
        %v4897 = vpow.pop %v4896
        %v4898 = vmul.f32 %v4140, 1.442695
        %v4899 = vpow.pop %v4898
        %v4900 = vmul.f32 %v4141, 1.442695
        %v4901 = vpow.pop %v4900
        %v4902 = vmul.f32 %v4142, 1.442695
        %v4903 = vpow.pop %v4902
        %v4904 = vmul.f32 %v4143, 1.442695
        %v4905 = vpow.pop %v4904
        %v4906 = vmul.f32 %v4144, 1.442695
        %v4907 = vpow.pop %v4906
        %v4908 = vmul.f32 %v4145, 1.442695
        %v4909 = vpow.pop %v4908
        %v4910 = vmul.f32 %v4146, 1.442695
        %v4911 = vpow.pop %v4910
        %v4912 = vmul.f32 %v4147, 1.442695
        %v4913 = vpow.pop %v4912
        %v4914 = vmul.f32 %v4148, 1.442695
        %v4915 = vpow.pop %v4914
        %v4916 = vmul.f32 %v4149, 1.442695
        %v4917 = vpow.pop %v4916
        %v4918 = vmul.f32 %v4150, 1.442695
        %v4919 = vpow.pop %v4918
        %v4920 = vmul.f32 %v4151, 1.442695
        %v4921 = vpow.pop %v4920
        %v4922 = vmul.f32 %v4152, 1.442695
        %v4923 = vpow.pop %v4922
        %v4924 = vmul.f32 %v4153, 1.442695
        %v4925 = vpow.pop %v4924
        %v4926 = vmul.f32 %v4154, 1.442695
        %v4927 = vpow.pop %v4926
        %v4928 = vmul.f32 %v4155, 1.442695
        %v4929 = vpow.pop %v4928
        %v4930 = vmul.f32 %v4156, 1.442695
        %v4931 = vpow.pop %v4930
        %v4932 = vmul.f32 %v4157, 1.442695
        %v4933 = vpow.pop %v4932
        %v4934 = vmul.f32 %v4158, 1.442695
        %v4935 = vpow.pop %v4934
        %v4936 = vmul.f32 %v4159, 1.442695
        %v4937 = vpow.pop %v4936
        %v4938 = vmul.f32 %v4160, 1.442695
        %v4939 = vpow.pop %v4938
        %v4940 = vmul.f32 %v4161, 1.442695
        %v4941 = vpow.pop %v4940
        %v4942 = vmul.f32 %v4162, 1.442695
        %v4943 = vpow.pop %v4942
        %v4944 = vmul.f32 %v4163, 1.442695
        %v4945 = vpow.pop %v4944
        %v4946 = vmul.f32 %v4164, 1.442695
        %v4947 = vpow.pop %v4946
        %v4948 = vmul.f32 %v4165, 1.442695
        %v4949 = vpow.pop %v4948
        %v4950 = vmul.f32 %v4166, 1.442695
        %v4951 = vpow.pop %v4950
        %v4952 = vmul.f32 %v4167, 1.442695
        %v4953 = vpow.pop %v4952
        %v4954 = vmul.f32 %v4168, 1.442695
        %v4955 = vpow.pop %v4954
        %v4956 = vmul.f32 %v4169, 1.442695
        %v4957 = vpow.pop %v4956
        %v4958 = vmul.f32 %v4170, 1.442695
        %v4959 = vpow.pop %v4958
        %v4960 = vmul.f32 %v4171, 1.442695
        %v4961 = vpow.pop %v4960
        %v4962 = vmul.f32 %v4172, 1.442695
        %v4963 = vpow.pop %v4962
        %v4964 = vmul.f32 %v4173, 1.442695
        %v4965 = vpow.pop %v4964
        %v4966 = vmul.f32 %v4174, 1.442695
        %v4967 = vpow.pop %v4966
        %v4968 = vmul.f32 %v4175, 1.442695
        %v4969 = vpow.pop %v4968
        %v4970 = vmul.f32 %v4176, 1.442695
        %v4971 = vpow.pop %v4970
        %v4972 = vmul.f32 %v4177, 1.442695
        %v4973 = vpow.pop %v4972
        %v4974 = vmul.f32 %v4178, 1.442695
        %v4975 = vpow.pop %v4974
        %v4976 = vmul.f32 %v4179, 1.442695
        %v4977 = vpow.pop %v4976
        %v4978 = vmul.f32 %v4180, 1.442695
        %v4979 = vpow.pop %v4978
        %v4980 = vmul.f32 %v4181, 1.442695
        %v4981 = vpow.pop %v4980
        %v4982 = vmul.f32 %v4182, 1.442695
        %v4983 = vpow.pop %v4982
        %v4984 = vmul.f32 %v4183, 1.442695
        %v4985 = vpow.pop %v4984
        %v4986 = vmul.f32 %v4184, 1.442695
        %v4987 = vpow.pop %v4986
        %v4988 = vmul.f32 %v4185, 1.442695
        %v4989 = vpow.pop %v4988
        %v4990 = vmul.f32 %v4186, 1.442695
        %v4991 = vpow.pop %v4990
        %v4992 = vmul.f32 %v4187, 1.442695
        %v4993 = vpow.pop %v4992
        %v4994 = vmul.f32 %v4188, 1.442695
        %v4995 = vpow.pop %v4994
        %v4996 = vmul.f32 %v4189, 1.442695
        %v4997 = vpow.pop %v4996
        %v4998 = vmul.f32 %v4190, 1.442695
        %v4999 = vpow.pop %v4998
        %v5000 = vmul.f32 %v4191, 1.442695
        %v5001 = vpow.pop %v5000
        %v5002 = vmul.f32 %v4192, 1.442695
        %v5003 = vpow.pop %v5002
        %v5004 = vmul.f32 %v4193, 1.442695
        %v5005 = vpow.pop %v5004
        %v5006 = vmul.f32 %v4194, 1.442695
        %v5007 = vpow.pop %v5006
        %v5008 = vmul.f32 %v4195, 1.442695
        %v5009 = vpow.pop %v5008
        %v5010 = vmul.f32 %v4196, 1.442695
        %v5011 = vpow.pop %v5010
        %v5012 = vmul.f32 %v4197, 1.442695
        %v5013 = vpow.pop %v5012
        %v5014 = vmul.f32 %v4198, 1.442695
        %v5015 = vpow.pop %v5014
        %v5016 = vmul.f32 %v4199, 1.442695
        %v5017 = vpow.pop %v5016
        %v5018 = vmul.f32 %v4200, 1.442695
        %v5019 = vpow.pop %v5018
        %v5020 = vmul.f32 %v4201, 1.442695
        %v5021 = vpow.pop %v5020
        %v5022 = vmul.f32 %v4202, 1.442695
        %v5023 = vpow.pop %v5022
        %v5024 = vmul.f32 %v4203, 1.442695
        %v5025 = vpow.pop %v5024
        %v5026 = vmul.f32 %v4204, 1.442695
        %v5027 = vpow.pop %v5026
        %v5028 = vmul.f32 %v4205, 1.442695
        %v5029 = vpow.pop %v5028
        %v5030 = vmul.f32 %v4206, 1.442695
        %v5031 = vpow.pop %v5030
        %v5032 = vmul.f32 %v4207, 1.442695
        %v5033 = vpow.pop %v5032
        %v5034 = vmul.f32 %v4208, 1.442695
        %v5035 = vpow.pop %v5034
        %v5036 = vmul.f32 %v4209, 1.442695
        %v5037 = vpow.pop %v5036
        %v5038 = vmul.f32 %v4210, 1.442695
        %v5039 = vpow.pop %v5038
        %v5040 = vmul.f32 %v4211, 1.442695
        %v5041 = vpow.pop %v5040
        %v5042 = vmul.f32 %v4212, 1.442695
        %v5043 = vpow.pop %v5042
        %v5044 = vmul.f32 %v4213, 1.442695
        %v5045 = vpow.pop %v5044
        %v5046 = vmul.f32 %v4214, 1.442695
        %v5047 = vpow.pop %v5046
        %v5048 = vmul.f32 %v4215, 1.442695
        %v5049 = vpow.pop %v5048
        %v5050 = vmul.f32 %v4216, 1.442695
        %v5051 = vpow.pop %v5050
        %v5052 = vmul.f32 %v4217, 1.442695
        %v5053 = vpow.pop %v5052
        %v5054 = vmul.f32 %v4218, 1.442695
        %v5055 = vpow.pop %v5054
        %v5056 = vmul.f32 %v4219, 1.442695
        %v5057 = vpow.pop %v5056
        %v5058 = vmul.f32 %v4220, 1.442695
        %v5059 = vpow.pop %v5058
        %v5060 = vmul.f32 %v4221, 1.442695
        %v5061 = vpow.pop %v5060
        %v5062 = vmul.f32 %v4222, 1.442695
        %v5063 = vpow.pop %v5062
        %v5064 = vmul.f32 %v4223, 1.442695
        %v5065 = vpow.pop %v5064
        %v5066 = vmul.f32 %v4224, 1.442695
        %v5067 = vpow.pop %v5066
        %v5068 = vmul.f32 %v4225, 1.442695
        %v5069 = vpow.pop %v5068
        %v5070 = vmul.f32 %v4226, 1.442695
        %v5071 = vpow.pop %v5070
        %v5072 = vmul.f32 %v4227, 1.442695
        %v5073 = vpow.pop %v5072
        %v5074 = vmul.f32 %v4228, 1.442695
        %v5075 = vpow.pop %v5074
        %v5076 = vmul.f32 %v4229, 1.442695
        %v5077 = vpow.pop %v5076
        %v5078 = vmul.f32 %v4230, 1.442695
        %v5079 = vpow.pop %v5078
        %v5080 = vmul.f32 %v4231, 1.442695
        %v5081 = vpow.pop %v5080
        %v5082 = vmul.f32 %v4232, 1.442695
        %v5083 = vpow.pop %v5082
        %v5084 = vmul.f32 %v4233, 1.442695
        %v5085 = vpow.pop %v5084
        %v5086 = vmul.f32 %v4234, 1.442695
        %v5087 = vpow.pop %v5086
        %v5088 = vmul.f32 %v4235, 1.442695
        %v5089 = vpow.pop %v5088
        %v5090 = vmul.f32 %v4236, 1.442695
        %v5091 = vpow.pop %v5090
        %v5092 = vmul.f32 %v4237, 1.442695
        %v5093 = vpow.pop %v5092
        %v5094 = vmul.f32 %v4238, 1.442695
        %v5095 = vpow.pop %v5094
        %v5096 = vmul.f32 %v4239, 1.442695
        %v5097 = vpow.pop %v5096
        %v5098 = vmul.f32 %v4240, 1.442695
        %v5099 = vpow.pop %v5098
        %v5100 = vmul.f32 %v4241, 1.442695
        %v5101 = vpow.pop %v5100
        %v5102 = vmul.f32 %v4242, 1.442695
        %v5103 = vpow.pop %v5102
        %v5104 = vmul.f32 %v4243, 1.442695
        %v5105 = vpow.pop %v5104
        %v5106 = vmul.f32 %v4244, 1.442695
        %v5107 = vpow.pop %v5106
        %v5108 = vmul.f32 %v4245, 1.442695
        %v5109 = vpow.pop %v5108
        %v5110 = vmul.f32 %v4246, 1.442695
        %v5111 = vpow.pop %v5110
        %v5112 = vmul.f32 %v4247, 1.442695
        %v5113 = vpow.pop %v5112
        %v5114 = vmul.f32 %v4248, 1.442695
        %v5115 = vpow.pop %v5114
        %v5116 = vmul.f32 %v4249, 1.442695
        %v5117 = vpow.pop %v5116
        %v5118 = vmul.f32 %v4250, 1.442695
        %v5119 = vpow.pop %v5118
        %v5120 = vmul.f32 %v4251, 1.442695
        %v5121 = vpow.pop %v5120
        %v5122 = vmul.f32 %v4252, 1.442695
        %v5123 = vpow.pop %v5122
        %v5124 = vmul.f32 %v4253, 1.442695
        %v5125 = vpow.pop %v5124
        %v5126 = vmul.f32 %v4254, 1.442695
        %v5127 = vpow.pop %v5126
        %v5128 = vmul.f32 %v4255, 1.442695
        %v5129 = vpow.pop %v5128
        %v5130 = vmul.f32 %v4256, 1.442695
        %v5131 = vpow.pop %v5130
        %v5132 = vmul.f32 %v4257, 1.442695
        %v5133 = vpow.pop %v5132
        %v5134 = vmul.f32 %v4258, 1.442695
        %v5135 = vpow.pop %v5134
        %v5136 = vmul.f32 %v4259, 1.442695
        %v5137 = vpow.pop %v5136
        %v5138 = vmul.f32 %v4260, 1.442695
        %v5139 = vpow.pop %v5138
        %v5140 = vmul.f32 %v4261, 1.442695
        %v5141 = vpow.pop %v5140
        %v5142 = vmul.f32 %v4262, 1.442695
        %v5143 = vpow.pop %v5142
        %v5144 = vmul.f32 %v4263, 1.442695
        %v5145 = vpow.pop %v5144
        %v5146 = vmul.f32 %v4264, 1.442695
        %v5147 = vpow.pop %v5146
        %v5148 = vmul.f32 %v4265, 1.442695
        %v5149 = vpow.pop %v5148
        %v5150 = vmul.f32 %v4266, 1.442695
        %v5151 = vpow.pop %v5150
        %v5152 = vmul.f32 %v4267, 1.442695
        %v5153 = vpow.pop %v5152
        %v5154 = vmul.f32 %v4268, 1.442695
        %v5155 = vpow.pop %v5154
        %v5156 = vmul.f32 %v4269, 1.442695
        %v5157 = vpow.pop %v5156
        %v5158 = vmul.f32 %v4270, 1.442695
        %v5159 = vpow.pop %v5158
        %v5160 = vmul.f32 %v4271, 1.442695
        %v5161 = vpow.pop %v5160
        %v5162 = vmul.f32 %v4272, 1.442695
        %v5163 = vpow.pop %v5162
        %v5164 = vmul.f32 %v4273, 1.442695
        %v5165 = vpow.pop %v5164
        %v5166 = vmul.f32 %v4274, 1.442695
        %v5167 = vpow.pop %v5166
        %v5168 = vmul.f32 %v4275, 1.442695
        %v5169 = vpow.pop %v5168
        %v5170 = vmul.f32 %v4276, 1.442695
        %v5171 = vpow.pop %v5170
        %v5172 = vmul.f32 %v4277, 1.442695
        %v5173 = vpow.pop %v5172
        %v5174 = vmul.f32 %v4278, 1.442695
        %v5175 = vpow.pop %v5174
        %v5176 = vmul.f32 %v4279, 1.442695
        %v5177 = vpow.pop %v5176
        %v5178 = vmul.f32 %v4280, 1.442695
        %v5179 = vpow.pop %v5178
        %v5180 = vmul.f32 %v4281, 1.442695
        %v5181 = vpow.pop %v5180
        %v5182 = vmul.f32 %v4282, 1.442695
        %v5183 = vpow.pop %v5182
        %v5184 = vmul.f32 %v4283, 1.442695
        %v5185 = vpow.pop %v5184
        %v5186 = vmul.f32 %v4284, 1.442695
        %v5187 = vpow.pop %v5186
        %v5188 = vmul.f32 %v4285, 1.442695
        %v5189 = vpow.pop %v5188
        %v5190 = vmul.f32 %v4286, 1.442695
        %v5191 = vpow.pop %v5190
        %v5192 = vmul.f32 %v4287, 1.442695
        %v5193 = vpow.pop %v5192
        %v5194 = vmul.f32 %v4288, 1.442695
        %v5195 = vpow.pop %v5194
        %v5196 = vmul.f32 %v4289, 1.442695
        %v5197 = vpow.pop %v5196
        %v5198 = vmul.f32 %v4290, 1.442695
        %v5199 = vpow.pop %v5198
        %v5200 = vmul.f32 %v4291, 1.442695
        %v5201 = vpow.pop %v5200
        %v5202 = vmul.f32 %v4292, 1.442695
        %v5203 = vpow.pop %v5202
        %v5204 = vmul.f32 %v4293, 1.442695
        %v5205 = vpow.pop %v5204
        %v5206 = vmul.f32 %v4294, 1.442695
        %v5207 = vpow.pop %v5206
        %v5208 = vmul.f32 %v4295, 1.442695
        %v5209 = vpow.pop %v5208
        %v5210 = vmul.f32 %v4296, 1.442695
        %v5211 = vpow.pop %v5210
        %v5212 = vmul.f32 %v4297, 1.442695
        %v5213 = vpow.pop %v5212
        %v5214 = vmul.f32 %v4298, 1.442695
        %v5215 = vpow.pop %v5214
        %v5216 = vmul.f32 %v4299, 1.442695
        %v5217 = vpow.pop %v5216
        %v5218 = vmul.f32 %v4300, 1.442695
        %v5219 = vpow.pop %v5218
        %v5220 = vmul.f32 %v4301, 1.442695
        %v5221 = vpow.pop %v5220
        %v5222 = vmul.f32 %v4302, 1.442695
        %v5223 = vpow.pop %v5222
        %v5224 = vmul.f32 %v4303, 1.442695
        %v5225 = vpow.pop %v5224
        %v5226 = vmul.f32 %v4304, 1.442695
        %v5227 = vpow.pop %v5226
        %v5228 = vmul.f32 %v4305, 1.442695
        %v5229 = vpow.pop %v5228
        %v5230 = vmul.f32 %v4306, 1.442695
        %v5231 = vpow.pop %v5230
        %v5232 = vmul.f32 %v4307, 1.442695
        %v5233 = vpow.pop %v5232
        %v5234 = vmul.f32 %v4308, 1.442695
        %v5235 = vpow.pop %v5234
        %v5236 = vmul.f32 %v4309, 1.442695
        %v5237 = vpow.pop %v5236
        %v5238 = vmul.f32 %v4310, 1.442695
        %v5239 = vpow.pop %v5238
        %v5240 = vmul.f32 %v4311, 1.442695
        %v5241 = vpow.pop %v5240
        %v5242 = vmul.f32 %v4312, 1.442695
        %v5243 = vpow.pop %v5242
        %v5244 = vmul.f32 %v4313, 1.442695
        %v5245 = vpow.pop %v5244
        %v5246 = vmul.f32 %v4314, 1.442695
        %v5247 = vpow.pop %v5246
        %v5248 = vmul.f32 %v4315, 1.442695
        %v5249 = vpow.pop %v5248
        %v5250 = vmul.f32 %v4316, 1.442695
        %v5251 = vpow.pop %v5250
        %v5252 = vmul.f32 %v4317, 1.442695
        %v5253 = vpow.pop %v5252
        %v5254 = vmul.f32 %v4318, 1.442695
        %v5255 = vpow.pop %v5254
        %v5256 = vmul.f32 %v4319, 1.442695
        %v5257 = vpow.pop %v5256
        %v5258 = vmul.f32 %v4320, 1.442695
        %v5259 = vpow.pop %v5258
        %v5260 = vmul.f32 %v4321, 1.442695
        %v5261 = vpow.pop %v5260
        %v5262 = vmul.f32 %v4322, 1.442695
        %v5263 = vpow.pop %v5262
        %v5264 = vmul.f32 %v4323, 1.442695
        %v5265 = vpow.pop %v5264
        %v5266 = vmul.f32 %v4324, 1.442695
        %v5267 = vpow.pop %v5266
        %v5268 = vmul.f32 %v4325, 1.442695
        %v5269 = vpow.pop %v5268
        %v5270 = vmul.f32 %v4326, 1.442695
        %v5271 = vpow.pop %v5270
        %v5272 = vmul.f32 %v4327, 1.442695
        %v5273 = vpow.pop %v5272
        %v5274 = vmul.f32 %v4328, 1.442695
        %v5275 = vpow.pop %v5274
        %v5276 = vmul.f32 %v4329, 1.442695
        %v5277 = vpow.pop %v5276
        %v5278 = vmul.f32 %v4330, 1.442695
        %v5279 = vpow.pop %v5278
        %v5280 = vmul.f32 %v4331, 1.442695
        %v5281 = vpow.pop %v5280
        %v5282 = vmul.f32 %v4332, 1.442695
        %v5283 = vpow.pop %v5282
        %v5284 = vmul.f32 %v4333, 1.442695
        %v5285 = vpow.pop %v5284
        %v5286 = vmul.f32 %v4334, 1.442695
        %v5287 = vpow.pop %v5286
        %v5288 = vmul.f32 %v4335, 1.442695
        %v5289 = vpow.pop %v5288
        %v5290 = vmul.f32 %v4336, 1.442695
        %v5291 = vpow.pop %v5290
        %v5292 = vmul.f32 %v4337, 1.442695
        %v5293 = vpow.pop %v5292
        %v5294 = vmul.f32 %v4338, 1.442695
        %v5295 = vpow.pop %v5294
        %v5296 = vmul.f32 %v4339, 1.442695
        %v5297 = vpow.pop %v5296
        %v5298 = vmul.f32 %v4340, 1.442695
        %v5299 = vpow.pop %v5298
        %v5300 = vmul.f32 %v4341, 1.442695
        %v5301 = vpow.pop %v5300
        %v5302 = vmul.f32 %v4342, 1.442695
        %v5303 = vpow.pop %v5302
        %v5304 = vmul.f32 %v4343, 1.442695
        %v5305 = vpow.pop %v5304
        %v5306 = vmul.f32 %v4344, 1.442695
        %v5307 = vpow.pop %v5306
        %v5308 = vmul.f32 %v4345, 1.442695
        %v5309 = vpow.pop %v5308
        %v5310 = vmul.f32 %v4346, 1.442695
        %v5311 = vpow.pop %v5310
        %v5312 = vmul.f32 %v4347, 1.442695
        %v5313 = vpow.pop %v5312
        %v5314 = vmul.f32 %v4348, 1.442695
        %v5315 = vpow.pop %v5314
        %v5316 = vmul.f32 %v4349, 1.442695
        %v5317 = vpow.pop %v5316
        %v5318 = vmul.f32 %v4350, 1.442695
        %v5319 = vpow.pop %v5318
        %v5320 = vmul.f32 %v4351, 1.442695
        %v5321 = vpow.pop %v5320
        %v5322 = vmul.f32 %v4352, 1.442695
        %v5323 = vpow.pop %v5322
        %v5324 = vmul.f32 %v4353, 1.442695
        %v5325 = vpow.pop %v5324
        %v5326 = vmul.f32 %v4354, 1.442695
        %v5327 = vpow.pop %v5326
        %v5328 = vmul.f32 %v4355, 1.442695
        %v5329 = vpow.pop %v5328
        %v5330 = vmul.f32 %v4356, 1.442695
        %v5331 = vpow.pop %v5330
        %v5332 = vmul.f32 %v4357, 1.442695
        %v5333 = vpow.pop %v5332
        %v5334 = vmul.f32 %v4358, 1.442695
        %v5335 = vpow.pop %v5334
        %v5336 = vmul.f32 %v4359, 1.442695
        %v5337 = vpow.pop %v5336
        %v5338 = vmul.f32 %v4360, 1.442695
        %v5339 = vpow.pop %v5338
        %v5340 = vmul.f32 %v4361, 1.442695
        %v5341 = vpow.pop %v5340
        %v5342 = vmul.f32 %v4362, 1.442695
        %v5343 = vpow.pop %v5342
        %v5344 = vmul.f32 %v4363, 1.442695
        %v5345 = vpow.pop %v5344
        %v5346 = vmul.f32 %v4364, 1.442695
        %v5347 = vpow.pop %v5346
        %v5348 = vmul.f32 %v4365, 1.442695
        %v5349 = vpow.pop %v5348
        %v5350 = vmul.f32 %v4366, 1.442695
        %v5351 = vpow.pop %v5350
        %v5352 = vmul.f32 %v4367, 1.442695
        %v5353 = vpow.pop %v5352
        %v5354 = vmul.f32 %v4368, 1.442695
        %v5355 = vpow.pop %v5354
        %v5356 = vmul.f32 %v4369, 1.442695
        %v5357 = vpow.pop %v5356
        %v5358 = vmul.f32 %v4370, 1.442695
        %v5359 = vpow.pop %v5358
        %v5360 = vmul.f32 %v4371, 1.442695
        %v5361 = vpow.pop %v5360
        %v5362 = vmul.f32 %v4372, 1.442695
        %v5363 = vpow.pop %v5362
        %v5364 = vmul.f32 %v4373, 1.442695
        %v5365 = vpow.pop %v5364
        %v5366 = vmul.f32 %v4374, 1.442695
        %v5367 = vpow.pop %v5366
        %v5368 = vmul.f32 %v4375, 1.442695
        %v5369 = vpow.pop %v5368
        %v5370 = vmul.f32 %v4376, 1.442695
        %v5371 = vpow.pop %v5370
        %v5372 = vmul.f32 %v4377, 1.442695
        %v5373 = vpow.pop %v5372
        %v5374 = vmul.f32 %v4378, 1.442695
        %v5375 = vpow.pop %v5374
        %v5376 = vmul.f32 %v4379, 1.442695
        %v5377 = vpow.pop %v5376
        %v5378 = vmul.f32 %v4380, 1.442695
        %v5379 = vpow.pop %v5378
        %v5380 = vmul.f32 %v4381, 1.442695
        %v5381 = vpow.pop %v5380
        %v5382 = vmul.f32 %v4382, 1.442695
        %v5383 = vpow.pop %v5382
        %v5384 = vmul.f32 %v4383, 1.442695
        %v5385 = vpow.pop %v5384
        %v5386 = vmul.f32 %v4384, 1.442695
        %v5387 = vpow.pop %v5386
        %v5388 = vmul.f32 %v4385, 1.442695
        %v5389 = vpow.pop %v5388
        %v5390 = vmul.f32 %v4386, 1.442695
        %v5391 = vpow.pop %v5390
        %v5392 = vmul.f32 %v4387, 1.442695
        %v5393 = vpow.pop %v5392
        %v5394 = vmul.f32 %v4388, 1.442695
        %v5395 = vpow.pop %v5394
        %v5396 = vmul.f32 %v4389, 1.442695
        %v5397 = vpow.pop %v5396
        %v5398 = vmul.f32 %v4390, 1.442695
        %v5399 = vpow.pop %v5398
        %v5400 = vmul.f32 %v4391, 1.442695
        %v5401 = vpow.pop %v5400
        %v5402 = vmul.f32 %v4392, 1.442695
        %v5403 = vpow.pop %v5402
        %v5404 = vmul.f32 %v4393, 1.442695
        %v5405 = vpow.pop %v5404
        %v5406 = vmul.f32 %v4394, 1.442695
        %v5407 = vpow.pop %v5406
        %v5408 = vmul.f32 %v4395, 1.442695
        %v5409 = vpow.pop %v5408
        %v5410 = vmul.f32 %v4396, 1.442695
        %v5411 = vpow.pop %v5410
        %v5412 = vmul.f32 %v4397, 1.442695
        %v5413 = vpow.pop %v5412
        %v5414 = vmul.f32 %v4398, 1.442695
        %v5415 = vpow.pop %v5414
        %v5416 = vmul.f32 %v4399, 1.442695
        %v5417 = vpow.pop %v5416
        %v5418 = vmul.f32 %v4400, 1.442695
        %v5419 = vpow.pop %v5418
        %v5420 = vmul.f32 %v4401, 1.442695
        %v5421 = vpow.pop %v5420
        %v5422 = vmul.f32 %v4402, 1.442695
        %v5423 = vpow.pop %v5422
        %v5424 = vmul.f32 %v4403, 1.442695
        %v5425 = vpow.pop %v5424
        %v5426 = vmul.f32 %v4404, 1.442695
        %v5427 = vpow.pop %v5426
        %v5428 = vmul.f32 %v4405, 1.442695
        %v5429 = vpow.pop %v5428
        %v5430 = vadd.f32 %v4407, %v4415
        %v5431 = vadd.f32 %v5430, %v4423
        %v5432 = vadd.f32 %v5431, %v4431
        %v5433 = vadd.f32 %v5432, %v4439
        %v5434 = vadd.f32 %v5433, %v4447
        %v5435 = vadd.f32 %v5434, %v4455
        %v5436 = vadd.f32 %v5435, %v4463
        %v5437 = vadd.f32 %v5436, %v4471
        %v5438 = vadd.f32 %v5437, %v4479
        %v5439 = vadd.f32 %v5438, %v4487
        %v5440 = vadd.f32 %v5439, %v4495
        %v5441 = vadd.f32 %v5440, %v4503
        %v5442 = vadd.f32 %v5441, %v4511
        %v5443 = vadd.f32 %v5442, %v4519
        %v5444 = vadd.f32 %v5443, %v4527
        %v5445 = vadd.f32 %v5444, %v4535
        %v5446 = vadd.f32 %v5445, %v4543
        %v5447 = vadd.f32 %v5446, %v4551
        %v5448 = vadd.f32 %v5447, %v4559
        %v5449 = vadd.f32 %v5448, %v4567
        %v5450 = vadd.f32 %v5449, %v4575
        %v5451 = vadd.f32 %v5450, %v4583
        %v5452 = vadd.f32 %v5451, %v4591
        %v5453 = vadd.f32 %v5452, %v4599
        %v5454 = vadd.f32 %v5453, %v4607
        %v5455 = vadd.f32 %v5454, %v4615
        %v5456 = vadd.f32 %v5455, %v4623
        %v5457 = vadd.f32 %v5456, %v4631
        %v5458 = vadd.f32 %v5457, %v4639
        %v5459 = vadd.f32 %v5458, %v4647
        %v5460 = vadd.f32 %v5459, %v4655
        %v5461 = vadd.f32 %v5460, %v4663
        %v5462 = vadd.f32 %v5461, %v4671
        %v5463 = vadd.f32 %v5462, %v4679
        %v5464 = vadd.f32 %v5463, %v4687
        %v5465 = vadd.f32 %v5464, %v4695
        %v5466 = vadd.f32 %v5465, %v4703
        %v5467 = vadd.f32 %v5466, %v4711
        %v5468 = vadd.f32 %v5467, %v4719
        %v5469 = vadd.f32 %v5468, %v4727
        %v5470 = vadd.f32 %v5469, %v4735
        %v5471 = vadd.f32 %v5470, %v4743
        %v5472 = vadd.f32 %v5471, %v4751
        %v5473 = vadd.f32 %v5472, %v4759
        %v5474 = vadd.f32 %v5473, %v4767
        %v5475 = vadd.f32 %v5474, %v4775
        %v5476 = vadd.f32 %v5475, %v4783
        %v5477 = vadd.f32 %v5476, %v4791
        %v5478 = vadd.f32 %v5477, %v4799
        %v5479 = vadd.f32 %v5478, %v4807
        %v5480 = vadd.f32 %v5479, %v4815
        %v5481 = vadd.f32 %v5480, %v4823
        %v5482 = vadd.f32 %v5481, %v4831
        %v5483 = vadd.f32 %v5482, %v4839
        %v5484 = vadd.f32 %v5483, %v4847
        %v5485 = vadd.f32 %v5484, %v4855
        %v5486 = vadd.f32 %v5485, %v4863
        %v5487 = vadd.f32 %v5486, %v4871
        %v5488 = vadd.f32 %v5487, %v4879
        %v5489 = vadd.f32 %v5488, %v4887
        %v5490 = vadd.f32 %v5489, %v4895
        %v5491 = vadd.f32 %v5490, %v4903
        %v5492 = vadd.f32 %v5491, %v4911
        %v5493 = vadd.f32 %v5492, %v4919
        %v5494 = vadd.f32 %v5493, %v4927
        %v5495 = vadd.f32 %v5494, %v4935
        %v5496 = vadd.f32 %v5495, %v4943
        %v5497 = vadd.f32 %v5496, %v4951
        %v5498 = vadd.f32 %v5497, %v4959
        %v5499 = vadd.f32 %v5498, %v4967
        %v5500 = vadd.f32 %v5499, %v4975
        %v5501 = vadd.f32 %v5500, %v4983
        %v5502 = vadd.f32 %v5501, %v4991
        %v5503 = vadd.f32 %v5502, %v4999
        %v5504 = vadd.f32 %v5503, %v5007
        %v5505 = vadd.f32 %v5504, %v5015
        %v5506 = vadd.f32 %v5505, %v5023
        %v5507 = vadd.f32 %v5506, %v5031
        %v5508 = vadd.f32 %v5507, %v5039
        %v5509 = vadd.f32 %v5508, %v5047
        %v5510 = vadd.f32 %v5509, %v5055
        %v5511 = vadd.f32 %v5510, %v5063
        %v5512 = vadd.f32 %v5511, %v5071
        %v5513 = vadd.f32 %v5512, %v5079
        %v5514 = vadd.f32 %v5513, %v5087
        %v5515 = vadd.f32 %v5514, %v5095
        %v5516 = vadd.f32 %v5515, %v5103
        %v5517 = vadd.f32 %v5516, %v5111
        %v5518 = vadd.f32 %v5517, %v5119
        %v5519 = vadd.f32 %v5518, %v5127
        %v5520 = vadd.f32 %v5519, %v5135
        %v5521 = vadd.f32 %v5520, %v5143
        %v5522 = vadd.f32 %v5521, %v5151
        %v5523 = vadd.f32 %v5522, %v5159
        %v5524 = vadd.f32 %v5523, %v5167
        %v5525 = vadd.f32 %v5524, %v5175
        %v5526 = vadd.f32 %v5525, %v5183
        %v5527 = vadd.f32 %v5526, %v5191
        %v5528 = vadd.f32 %v5527, %v5199
        %v5529 = vadd.f32 %v5528, %v5207
        %v5530 = vadd.f32 %v5529, %v5215
        %v5531 = vadd.f32 %v5530, %v5223
        %v5532 = vadd.f32 %v5531, %v5231
        %v5533 = vadd.f32 %v5532, %v5239
        %v5534 = vadd.f32 %v5533, %v5247
        %v5535 = vadd.f32 %v5534, %v5255
        %v5536 = vadd.f32 %v5535, %v5263
        %v5537 = vadd.f32 %v5536, %v5271
        %v5538 = vadd.f32 %v5537, %v5279
        %v5539 = vadd.f32 %v5538, %v5287
        %v5540 = vadd.f32 %v5539, %v5295
        %v5541 = vadd.f32 %v5540, %v5303
        %v5542 = vadd.f32 %v5541, %v5311
        %v5543 = vadd.f32 %v5542, %v5319
        %v5544 = vadd.f32 %v5543, %v5327
        %v5545 = vadd.f32 %v5544, %v5335
        %v5546 = vadd.f32 %v5545, %v5343
        %v5547 = vadd.f32 %v5546, %v5351
        %v5548 = vadd.f32 %v5547, %v5359
        %v5549 = vadd.f32 %v5548, %v5367
        %v5550 = vadd.f32 %v5549, %v5375
        %v5551 = vadd.f32 %v5550, %v5383
        %v5552 = vadd.f32 %v5551, %v5391
        %v5553 = vadd.f32 %v5552, %v5399
        %v5554 = vadd.f32 %v5553, %v5407
        %v5555 = vadd.f32 %v5554, %v5415
        %v5556 = vadd.f32 %v5555, %v5423
        %v5557 = vrot.slane %v5556, 4
        %v5558 = vadd.f32 %v5556, %v5557
        %v5559 = vrot.slane %v5558, 2
        %v5560 = vadd.f32 %v5558, %v5559
        %v5561 = vrot.slane %v5560, 1
        %v5562 = vadd.f32 %v5560, %v5561
        %v5563 = vadd.f32 %v4409, %v4417
        %v5564 = vadd.f32 %v5563, %v4425
        %v5565 = vadd.f32 %v5564, %v4433
        %v5566 = vadd.f32 %v5565, %v4441
        %v5567 = vadd.f32 %v5566, %v4449
        %v5568 = vadd.f32 %v5567, %v4457
        %v5569 = vadd.f32 %v5568, %v4465
        %v5570 = vadd.f32 %v5569, %v4473
        %v5571 = vadd.f32 %v5570, %v4481
        %v5572 = vadd.f32 %v5571, %v4489
        %v5573 = vadd.f32 %v5572, %v4497
        %v5574 = vadd.f32 %v5573, %v4505
        %v5575 = vadd.f32 %v5574, %v4513
        %v5576 = vadd.f32 %v5575, %v4521
        %v5577 = vadd.f32 %v5576, %v4529
        %v5578 = vadd.f32 %v5577, %v4537
        %v5579 = vadd.f32 %v5578, %v4545
        %v5580 = vadd.f32 %v5579, %v4553
        %v5581 = vadd.f32 %v5580, %v4561
        %v5582 = vadd.f32 %v5581, %v4569
        %v5583 = vadd.f32 %v5582, %v4577
        %v5584 = vadd.f32 %v5583, %v4585
        %v5585 = vadd.f32 %v5584, %v4593
        %v5586 = vadd.f32 %v5585, %v4601
        %v5587 = vadd.f32 %v5586, %v4609
        %v5588 = vadd.f32 %v5587, %v4617
        %v5589 = vadd.f32 %v5588, %v4625
        %v5590 = vadd.f32 %v5589, %v4633
        %v5591 = vadd.f32 %v5590, %v4641
        %v5592 = vadd.f32 %v5591, %v4649
        %v5593 = vadd.f32 %v5592, %v4657
        %v5594 = vadd.f32 %v5593, %v4665
        %v5595 = vadd.f32 %v5594, %v4673
        %v5596 = vadd.f32 %v5595, %v4681
        %v5597 = vadd.f32 %v5596, %v4689
        %v5598 = vadd.f32 %v5597, %v4697
        %v5599 = vadd.f32 %v5598, %v4705
        %v5600 = vadd.f32 %v5599, %v4713
        %v5601 = vadd.f32 %v5600, %v4721
        %v5602 = vadd.f32 %v5601, %v4729
        %v5603 = vadd.f32 %v5602, %v4737
        %v5604 = vadd.f32 %v5603, %v4745
        %v5605 = vadd.f32 %v5604, %v4753
        %v5606 = vadd.f32 %v5605, %v4761
        %v5607 = vadd.f32 %v5606, %v4769
        %v5608 = vadd.f32 %v5607, %v4777
        %v5609 = vadd.f32 %v5608, %v4785
        %v5610 = vadd.f32 %v5609, %v4793
        %v5611 = vadd.f32 %v5610, %v4801
        %v5612 = vadd.f32 %v5611, %v4809
        %v5613 = vadd.f32 %v5612, %v4817
        %v5614 = vadd.f32 %v5613, %v4825
        %v5615 = vadd.f32 %v5614, %v4833
        %v5616 = vadd.f32 %v5615, %v4841
        %v5617 = vadd.f32 %v5616, %v4849
        %v5618 = vadd.f32 %v5617, %v4857
        %v5619 = vadd.f32 %v5618, %v4865
        %v5620 = vadd.f32 %v5619, %v4873
        %v5621 = vadd.f32 %v5620, %v4881
        %v5622 = vadd.f32 %v5621, %v4889
        %v5623 = vadd.f32 %v5622, %v4897
        %v5624 = vadd.f32 %v5623, %v4905
        %v5625 = vadd.f32 %v5624, %v4913
        %v5626 = vadd.f32 %v5625, %v4921
        %v5627 = vadd.f32 %v5626, %v4929
        %v5628 = vadd.f32 %v5627, %v4937
        %v5629 = vadd.f32 %v5628, %v4945
        %v5630 = vadd.f32 %v5629, %v4953
        %v5631 = vadd.f32 %v5630, %v4961
        %v5632 = vadd.f32 %v5631, %v4969
        %v5633 = vadd.f32 %v5632, %v4977
        %v5634 = vadd.f32 %v5633, %v4985
        %v5635 = vadd.f32 %v5634, %v4993
        %v5636 = vadd.f32 %v5635, %v5001
        %v5637 = vadd.f32 %v5636, %v5009
        %v5638 = vadd.f32 %v5637, %v5017
        %v5639 = vadd.f32 %v5638, %v5025
        %v5640 = vadd.f32 %v5639, %v5033
        %v5641 = vadd.f32 %v5640, %v5041
        %v5642 = vadd.f32 %v5641, %v5049
        %v5643 = vadd.f32 %v5642, %v5057
        %v5644 = vadd.f32 %v5643, %v5065
        %v5645 = vadd.f32 %v5644, %v5073
        %v5646 = vadd.f32 %v5645, %v5081
        %v5647 = vadd.f32 %v5646, %v5089
        %v5648 = vadd.f32 %v5647, %v5097
        %v5649 = vadd.f32 %v5648, %v5105
        %v5650 = vadd.f32 %v5649, %v5113
        %v5651 = vadd.f32 %v5650, %v5121
        %v5652 = vadd.f32 %v5651, %v5129
        %v5653 = vadd.f32 %v5652, %v5137
        %v5654 = vadd.f32 %v5653, %v5145
        %v5655 = vadd.f32 %v5654, %v5153
        %v5656 = vadd.f32 %v5655, %v5161
        %v5657 = vadd.f32 %v5656, %v5169
        %v5658 = vadd.f32 %v5657, %v5177
        %v5659 = vadd.f32 %v5658, %v5185
        %v5660 = vadd.f32 %v5659, %v5193
        %v5661 = vadd.f32 %v5660, %v5201
        %v5662 = vadd.f32 %v5661, %v5209
        %v5663 = vadd.f32 %v5662, %v5217
        %v5664 = vadd.f32 %v5663, %v5225
        %v5665 = vadd.f32 %v5664, %v5233
        %v5666 = vadd.f32 %v5665, %v5241
        %v5667 = vadd.f32 %v5666, %v5249
        %v5668 = vadd.f32 %v5667, %v5257
        %v5669 = vadd.f32 %v5668, %v5265
        %v5670 = vadd.f32 %v5669, %v5273
        %v5671 = vadd.f32 %v5670, %v5281
        %v5672 = vadd.f32 %v5671, %v5289
        %v5673 = vadd.f32 %v5672, %v5297
        %v5674 = vadd.f32 %v5673, %v5305
        %v5675 = vadd.f32 %v5674, %v5313
        %v5676 = vadd.f32 %v5675, %v5321
        %v5677 = vadd.f32 %v5676, %v5329
        %v5678 = vadd.f32 %v5677, %v5337
        %v5679 = vadd.f32 %v5678, %v5345
        %v5680 = vadd.f32 %v5679, %v5353
        %v5681 = vadd.f32 %v5680, %v5361
        %v5682 = vadd.f32 %v5681, %v5369
        %v5683 = vadd.f32 %v5682, %v5377
        %v5684 = vadd.f32 %v5683, %v5385
        %v5685 = vadd.f32 %v5684, %v5393
        %v5686 = vadd.f32 %v5685, %v5401
        %v5687 = vadd.f32 %v5686, %v5409
        %v5688 = vadd.f32 %v5687, %v5417
        %v5689 = vadd.f32 %v5688, %v5425
        %v5690 = vrot.slane %v5689, 4
        %v5691 = vadd.f32 %v5689, %v5690
        %v5692 = vrot.slane %v5691, 2
        %v5693 = vadd.f32 %v5691, %v5692
        %v5694 = vrot.slane %v5693, 1
        %v5695 = vadd.f32 %v5693, %v5694
        %v5696 = vadd.f32 %v4411, %v4419
        %v5697 = vadd.f32 %v5696, %v4427
        %v5698 = vadd.f32 %v5697, %v4435
        %v5699 = vadd.f32 %v5698, %v4443
        %v5700 = vadd.f32 %v5699, %v4451
        %v5701 = vadd.f32 %v5700, %v4459
        %v5702 = vadd.f32 %v5701, %v4467
        %v5703 = vadd.f32 %v5702, %v4475
        %v5704 = vadd.f32 %v5703, %v4483
        %v5705 = vadd.f32 %v5704, %v4491
        %v5706 = vadd.f32 %v5705, %v4499
        %v5707 = vadd.f32 %v5706, %v4507
        %v5708 = vadd.f32 %v5707, %v4515
        %v5709 = vadd.f32 %v5708, %v4523
        %v5710 = vadd.f32 %v5709, %v4531
        %v5711 = vadd.f32 %v5710, %v4539
        %v5712 = vadd.f32 %v5711, %v4547
        %v5713 = vadd.f32 %v5712, %v4555
        %v5714 = vadd.f32 %v5713, %v4563
        %v5715 = vadd.f32 %v5714, %v4571
        %v5716 = vadd.f32 %v5715, %v4579
        %v5717 = vadd.f32 %v5716, %v4587
        %v5718 = vadd.f32 %v5717, %v4595
        %v5719 = vadd.f32 %v5718, %v4603
        %v5720 = vadd.f32 %v5719, %v4611
        %v5721 = vadd.f32 %v5720, %v4619
        %v5722 = vadd.f32 %v5721, %v4627
        %v5723 = vadd.f32 %v5722, %v4635
        %v5724 = vadd.f32 %v5723, %v4643
        %v5725 = vadd.f32 %v5724, %v4651
        %v5726 = vadd.f32 %v5725, %v4659
        %v5727 = vadd.f32 %v5726, %v4667
        %v5728 = vadd.f32 %v5727, %v4675
        %v5729 = vadd.f32 %v5728, %v4683
        %v5730 = vadd.f32 %v5729, %v4691
        %v5731 = vadd.f32 %v5730, %v4699
        %v5732 = vadd.f32 %v5731, %v4707
        %v5733 = vadd.f32 %v5732, %v4715
        %v5734 = vadd.f32 %v5733, %v4723
        %v5735 = vadd.f32 %v5734, %v4731
        %v5736 = vadd.f32 %v5735, %v4739
        %v5737 = vadd.f32 %v5736, %v4747
        %v5738 = vadd.f32 %v5737, %v4755
        %v5739 = vadd.f32 %v5738, %v4763
        %v5740 = vadd.f32 %v5739, %v4771
        %v5741 = vadd.f32 %v5740, %v4779
        %v5742 = vadd.f32 %v5741, %v4787
        %v5743 = vadd.f32 %v5742, %v4795
        %v5744 = vadd.f32 %v5743, %v4803
        %v5745 = vadd.f32 %v5744, %v4811
        %v5746 = vadd.f32 %v5745, %v4819
        %v5747 = vadd.f32 %v5746, %v4827
        %v5748 = vadd.f32 %v5747, %v4835
        %v5749 = vadd.f32 %v5748, %v4843
        %v5750 = vadd.f32 %v5749, %v4851
        %v5751 = vadd.f32 %v5750, %v4859
        %v5752 = vadd.f32 %v5751, %v4867
        %v5753 = vadd.f32 %v5752, %v4875
        %v5754 = vadd.f32 %v5753, %v4883
        %v5755 = vadd.f32 %v5754, %v4891
        %v5756 = vadd.f32 %v5755, %v4899
        %v5757 = vadd.f32 %v5756, %v4907
        %v5758 = vadd.f32 %v5757, %v4915
        %v5759 = vadd.f32 %v5758, %v4923
        %v5760 = vadd.f32 %v5759, %v4931
        %v5761 = vadd.f32 %v5760, %v4939
        %v5762 = vadd.f32 %v5761, %v4947
        %v5763 = vadd.f32 %v5762, %v4955
        %v5764 = vadd.f32 %v5763, %v4963
        %v5765 = vadd.f32 %v5764, %v4971
        %v5766 = vadd.f32 %v5765, %v4979
        %v5767 = vadd.f32 %v5766, %v4987
        %v5768 = vadd.f32 %v5767, %v4995
        %v5769 = vadd.f32 %v5768, %v5003
        %v5770 = vadd.f32 %v5769, %v5011
        %v5771 = vadd.f32 %v5770, %v5019
        %v5772 = vadd.f32 %v5771, %v5027
        %v5773 = vadd.f32 %v5772, %v5035
        %v5774 = vadd.f32 %v5773, %v5043
        %v5775 = vadd.f32 %v5774, %v5051
        %v5776 = vadd.f32 %v5775, %v5059
        %v5777 = vadd.f32 %v5776, %v5067
        %v5778 = vadd.f32 %v5777, %v5075
        %v5779 = vadd.f32 %v5778, %v5083
        %v5780 = vadd.f32 %v5779, %v5091
        %v5781 = vadd.f32 %v5780, %v5099
        %v5782 = vadd.f32 %v5781, %v5107
        %v5783 = vadd.f32 %v5782, %v5115
        %v5784 = vadd.f32 %v5783, %v5123
        %v5785 = vadd.f32 %v5784, %v5131
        %v5786 = vadd.f32 %v5785, %v5139
        %v5787 = vadd.f32 %v5786, %v5147
        %v5788 = vadd.f32 %v5787, %v5155
        %v5789 = vadd.f32 %v5788, %v5163
        %v5790 = vadd.f32 %v5789, %v5171
        %v5791 = vadd.f32 %v5790, %v5179
        %v5792 = vadd.f32 %v5791, %v5187
        %v5793 = vadd.f32 %v5792, %v5195
        %v5794 = vadd.f32 %v5793, %v5203
        %v5795 = vadd.f32 %v5794, %v5211
        %v5796 = vadd.f32 %v5795, %v5219
        %v5797 = vadd.f32 %v5796, %v5227
        %v5798 = vadd.f32 %v5797, %v5235
        %v5799 = vadd.f32 %v5798, %v5243
        %v5800 = vadd.f32 %v5799, %v5251
        %v5801 = vadd.f32 %v5800, %v5259
        %v5802 = vadd.f32 %v5801, %v5267
        %v5803 = vadd.f32 %v5802, %v5275
        %v5804 = vadd.f32 %v5803, %v5283
        %v5805 = vadd.f32 %v5804, %v5291
        %v5806 = vadd.f32 %v5805, %v5299
        %v5807 = vadd.f32 %v5806, %v5307
        %v5808 = vadd.f32 %v5807, %v5315
        %v5809 = vadd.f32 %v5808, %v5323
        %v5810 = vadd.f32 %v5809, %v5331
        %v5811 = vadd.f32 %v5810, %v5339
        %v5812 = vadd.f32 %v5811, %v5347
        %v5813 = vadd.f32 %v5812, %v5355
        %v5814 = vadd.f32 %v5813, %v5363
        %v5815 = vadd.f32 %v5814, %v5371
        %v5816 = vadd.f32 %v5815, %v5379
        %v5817 = vadd.f32 %v5816, %v5387
        %v5818 = vadd.f32 %v5817, %v5395
        %v5819 = vadd.f32 %v5818, %v5403
        %v5820 = vadd.f32 %v5819, %v5411
        %v5821 = vadd.f32 %v5820, %v5419
        %v5822 = vadd.f32 %v5821, %v5427
        %v5823 = vrot.slane %v5822, 4
        %v5824 = vadd.f32 %v5822, %v5823
        %v5825 = vrot.slane %v5824, 2
        %v5826 = vadd.f32 %v5824, %v5825
        %v5827 = vrot.slane %v5826, 1
        %v5828 = vadd.f32 %v5826, %v5827
        %v5829 = vadd.f32 %v4413, %v4421
        %v5830 = vadd.f32 %v5829, %v4429
        %v5831 = vadd.f32 %v5830, %v4437
        %v5832 = vadd.f32 %v5831, %v4445
        %v5833 = vadd.f32 %v5832, %v4453
        %v5834 = vadd.f32 %v5833, %v4461
        %v5835 = vadd.f32 %v5834, %v4469
        %v5836 = vadd.f32 %v5835, %v4477
        %v5837 = vadd.f32 %v5836, %v4485
        %v5838 = vadd.f32 %v5837, %v4493
        %v5839 = vadd.f32 %v5838, %v4501
        %v5840 = vadd.f32 %v5839, %v4509
        %v5841 = vadd.f32 %v5840, %v4517
        %v5842 = vadd.f32 %v5841, %v4525
        %v5843 = vadd.f32 %v5842, %v4533
        %v5844 = vadd.f32 %v5843, %v4541
        %v5845 = vadd.f32 %v5844, %v4549
        %v5846 = vadd.f32 %v5845, %v4557
        %v5847 = vadd.f32 %v5846, %v4565
        %v5848 = vadd.f32 %v5847, %v4573
        %v5849 = vadd.f32 %v5848, %v4581
        %v5850 = vadd.f32 %v5849, %v4589
        %v5851 = vadd.f32 %v5850, %v4597
        %v5852 = vadd.f32 %v5851, %v4605
        %v5853 = vadd.f32 %v5852, %v4613
        %v5854 = vadd.f32 %v5853, %v4621
        %v5855 = vadd.f32 %v5854, %v4629
        %v5856 = vadd.f32 %v5855, %v4637
        %v5857 = vadd.f32 %v5856, %v4645
        %v5858 = vadd.f32 %v5857, %v4653
        %v5859 = vadd.f32 %v5858, %v4661
        %v5860 = vadd.f32 %v5859, %v4669
        %v5861 = vadd.f32 %v5860, %v4677
        %v5862 = vadd.f32 %v5861, %v4685
        %v5863 = vadd.f32 %v5862, %v4693
        %v5864 = vadd.f32 %v5863, %v4701
        %v5865 = vadd.f32 %v5864, %v4709
        %v5866 = vadd.f32 %v5865, %v4717
        %v5867 = vadd.f32 %v5866, %v4725
        %v5868 = vadd.f32 %v5867, %v4733
        %v5869 = vadd.f32 %v5868, %v4741
        %v5870 = vadd.f32 %v5869, %v4749
        %v5871 = vadd.f32 %v5870, %v4757
        %v5872 = vadd.f32 %v5871, %v4765
        %v5873 = vadd.f32 %v5872, %v4773
        %v5874 = vadd.f32 %v5873, %v4781
        %v5875 = vadd.f32 %v5874, %v4789
        %v5876 = vadd.f32 %v5875, %v4797
        %v5877 = vadd.f32 %v5876, %v4805
        %v5878 = vadd.f32 %v5877, %v4813
        %v5879 = vadd.f32 %v5878, %v4821
        %v5880 = vadd.f32 %v5879, %v4829
        %v5881 = vadd.f32 %v5880, %v4837
        %v5882 = vadd.f32 %v5881, %v4845
        %v5883 = vadd.f32 %v5882, %v4853
        %v5884 = vadd.f32 %v5883, %v4861
        %v5885 = vadd.f32 %v5884, %v4869
        %v5886 = vadd.f32 %v5885, %v4877
        %v5887 = vadd.f32 %v5886, %v4885
        %v5888 = vadd.f32 %v5887, %v4893
        %v5889 = vadd.f32 %v5888, %v4901
        %v5890 = vadd.f32 %v5889, %v4909
        %v5891 = vadd.f32 %v5890, %v4917
        %v5892 = vadd.f32 %v5891, %v4925
        %v5893 = vadd.f32 %v5892, %v4933
        %v5894 = vadd.f32 %v5893, %v4941
        %v5895 = vadd.f32 %v5894, %v4949
        %v5896 = vadd.f32 %v5895, %v4957
        %v5897 = vadd.f32 %v5896, %v4965
        %v5898 = vadd.f32 %v5897, %v4973
        %v5899 = vadd.f32 %v5898, %v4981
        %v5900 = vadd.f32 %v5899, %v4989
        %v5901 = vadd.f32 %v5900, %v4997
        %v5902 = vadd.f32 %v5901, %v5005
        %v5903 = vadd.f32 %v5902, %v5013
        %v5904 = vadd.f32 %v5903, %v5021
        %v5905 = vadd.f32 %v5904, %v5029
        %v5906 = vadd.f32 %v5905, %v5037
        %v5907 = vadd.f32 %v5906, %v5045
        %v5908 = vadd.f32 %v5907, %v5053
        %v5909 = vadd.f32 %v5908, %v5061
        %v5910 = vadd.f32 %v5909, %v5069
        %v5911 = vadd.f32 %v5910, %v5077
        %v5912 = vadd.f32 %v5911, %v5085
        %v5913 = vadd.f32 %v5912, %v5093
        %v5914 = vadd.f32 %v5913, %v5101
        %v5915 = vadd.f32 %v5914, %v5109
        %v5916 = vadd.f32 %v5915, %v5117
        %v5917 = vadd.f32 %v5916, %v5125
        %v5918 = vadd.f32 %v5917, %v5133
        %v5919 = vadd.f32 %v5918, %v5141
        %v5920 = vadd.f32 %v5919, %v5149
        %v5921 = vadd.f32 %v5920, %v5157
        %v5922 = vadd.f32 %v5921, %v5165
        %v5923 = vadd.f32 %v5922, %v5173
        %v5924 = vadd.f32 %v5923, %v5181
        %v5925 = vadd.f32 %v5924, %v5189
        %v5926 = vadd.f32 %v5925, %v5197
        %v5927 = vadd.f32 %v5926, %v5205
        %v5928 = vadd.f32 %v5927, %v5213
        %v5929 = vadd.f32 %v5928, %v5221
        %v5930 = vadd.f32 %v5929, %v5229
        %v5931 = vadd.f32 %v5930, %v5237
        %v5932 = vadd.f32 %v5931, %v5245
        %v5933 = vadd.f32 %v5932, %v5253
        %v5934 = vadd.f32 %v5933, %v5261
        %v5935 = vadd.f32 %v5934, %v5269
        %v5936 = vadd.f32 %v5935, %v5277
        %v5937 = vadd.f32 %v5936, %v5285
        %v5938 = vadd.f32 %v5937, %v5293
        %v5939 = vadd.f32 %v5938, %v5301
        %v5940 = vadd.f32 %v5939, %v5309
        %v5941 = vadd.f32 %v5940, %v5317
        %v5942 = vadd.f32 %v5941, %v5325
        %v5943 = vadd.f32 %v5942, %v5333
        %v5944 = vadd.f32 %v5943, %v5341
        %v5945 = vadd.f32 %v5944, %v5349
        %v5946 = vadd.f32 %v5945, %v5357
        %v5947 = vadd.f32 %v5946, %v5365
        %v5948 = vadd.f32 %v5947, %v5373
        %v5949 = vadd.f32 %v5948, %v5381
        %v5950 = vadd.f32 %v5949, %v5389
        %v5951 = vadd.f32 %v5950, %v5397
        %v5952 = vadd.f32 %v5951, %v5405
        %v5953 = vadd.f32 %v5952, %v5413
        %v5954 = vadd.f32 %v5953, %v5421
        %v5955 = vadd.f32 %v5954, %v5429
        %v5956 = vrot.slane %v5955, 4
        %v5957 = vadd.f32 %v5955, %v5956
        %v5958 = vrot.slane %v5957, 2
        %v5959 = vadd.f32 %v5957, %v5958
        %v5960 = vrot.slane %v5959, 1
        %v5961 = vadd.f32 %v5959, %v5960
        %v5962 = vld [vmem:[#allocation3] sm:$0xff]
        %v5963 = vld [vmem:[#allocation3 + $0x8] sm:$0xff]
        %v5964 = vld [vmem:[#allocation3 + $0x10] sm:$0xff]
        %v5965 = vld [vmem:[#allocation3 + $0x18] sm:$0xff]
        %v5966 = vld [vmem:[#allocation3 + $0x20] sm:$0xff]
        %v5967 = vld [vmem:[#allocation3 + $0x28] sm:$0xff]
        %v5968 = vld [vmem:[#allocation3 + $0x30] sm:$0xff]
        %v5969 = vld [vmem:[#allocation3 + $0x38] sm:$0xff]
        %v5970 = vld [vmem:[#allocation3 + $0x40] sm:$0xff]
        %v5971 = vld [vmem:[#allocation3 + $0x48] sm:$0xff]
        %v5972 = vld [vmem:[#allocation3 + $0x50] sm:$0xff]
        %v5973 = vld [vmem:[#allocation3 + $0x58] sm:$0xff]
        %v5974 = vld [vmem:[#allocation3 + $0x60] sm:$0xff]
        %v5975 = vld [vmem:[#allocation3 + $0x68] sm:$0xff]
        %v5976 = vld [vmem:[#allocation3 + $0x70] sm:$0xff]
        %v5977 = vld [vmem:[#allocation3 + $0x78] sm:$0xff]
        %5978 = vmatprep.subr.mxu0 %v4409
        %5979 = vmatpush1.msra.mxu0 %v4407
        %5980 = vmatprep.subr.mxu0 %v4417
        %5981 = vmatpush1.msra.mxu0 %v4415
        %5982 = vmatprep.subr.mxu0 %v4425
        %5983 = vmatpush1.msra.mxu0 %v4423
        %5984 = vmatprep.subr.mxu0 %v4433
        %5985 = vmatpush1.msra.mxu0 %v4431
        %5986 = vmatprep.subr.mxu0 %v4441
        %5987 = vmatpush1.msra.mxu0 %v4439
        %5988 = vmatprep.subr.mxu0 %v4449
        %5989 = vmatpush1.msra.mxu0 %v4447
        %5990 = vmatprep.subr.mxu0 %v4457
        %5991 = vmatpush1.msra.mxu0 %v4455
        %5992 = vmatprep.subr.mxu0 %v4465
        %5993 = vmatpush1.msra.mxu0 %v4463
        %5994 = vmatprep.subr.mxu0 %v4473
        %5995 = vmatpush1.msra.mxu0 %v4471
        %5996 = vmatprep.subr.mxu0 %v4481
        %5997 = vmatpush1.msra.mxu0 %v4479
        %5998 = vmatprep.subr.mxu0 %v4489
        %5999 = vmatpush1.msra.mxu0 %v4487
        %6000 = vmatprep.subr.mxu0 %v4497
        %6001 = vmatpush1.msra.mxu0 %v4495
        %6002 = vmatprep.subr.mxu0 %v4505
        %6003 = vmatpush1.msra.mxu0 %v4503
        %6004 = vmatprep.subr.mxu0 %v4513
        %6005 = vmatpush1.msra.mxu0 %v4511
        %6006 = vmatprep.subr.mxu0 %v4521
        %6007 = vmatpush1.msra.mxu0 %v4519
        %6008 = vmatprep.subr.mxu0 %v4529
        %6009 = vmatpush1.msra.mxu0 %v4527
        %6010 = vmatprep.subr.mxu0 %v4537
        %6011 = vmatpush1.msra.mxu0 %v4535
        %6012 = vmatprep.subr.mxu0 %v4545
        %6013 = vmatpush1.msra.mxu0 %v4543
        %6014 = vmatprep.subr.mxu0 %v4553
        %6015 = vmatpush1.msra.mxu0 %v4551
        %6016 = vmatprep.subr.mxu0 %v4561
        %6017 = vmatpush1.msra.mxu0 %v4559
        %6018 = vmatprep.subr.mxu0 %v4569
        %6019 = vmatpush1.msra.mxu0 %v4567
        %6020 = vmatprep.subr.mxu0 %v4577
        %6021 = vmatpush1.msra.mxu0 %v4575
        %6022 = vmatprep.subr.mxu0 %v4585
        %6023 = vmatpush1.msra.mxu0 %v4583
        %6024 = vmatprep.subr.mxu0 %v4593
        %6025 = vmatpush1.msra.mxu0 %v4591
        %6026 = vmatprep.subr.mxu0 %v4601
        %6027 = vmatpush1.msra.mxu0 %v4599
        %6028 = vmatprep.subr.mxu0 %v4609
        %6029 = vmatpush1.msra.mxu0 %v4607
        %6030 = vmatprep.subr.mxu0 %v4617
        %6031 = vmatpush1.msra.mxu0 %v4615
        %6032 = vmatprep.subr.mxu0 %v4625
        %6033 = vmatpush1.msra.mxu0 %v4623
        %6034 = vmatprep.subr.mxu0 %v4633
        %6035 = vmatpush1.msra.mxu0 %v4631
        %6036 = vmatprep.subr.mxu0 %v4641
        %6037 = vmatpush1.msra.mxu0 %v4639
        %6038 = vmatprep.subr.mxu0 %v4649
        %6039 = vmatpush1.msra.mxu0 %v4647
        %6040 = vmatprep.subr.mxu0 %v4657
        %6041 = vmatpush1.msra.mxu0 %v4655
        %6042 = vmatprep.mubr.f32.mxu0 %v5963
        %6043 = vmatmul.mubr.f32.gmra.mrb[0].mxu0 %v5962
        %v6044 = vpop.f32.mrb[0].mxu0
        %v6045 = vadd.f32 0.0, %v6044
        %v6046 = vpop.f32.mrb[0].mxu0
        %v6047 = vadd.f32 0.0, %v6046
        %6048 = vmatprep.mubr.f32.mxu0 %v5971
        %6049 = vmatmul.mubr.f32.gmra.mrb[0].mxu0 %v5970
        %v6050 = vpop.f32.mrb[0].mxu0
        %v6051 = vadd.f32 0.0, %v6050
        %v6052 = vpop.f32.mrb[0].mxu0
        %v6053 = vadd.f32 0.0, %v6052
        %6054 = vdwg.mxu0
        %6055 = vmatprep.subr.mxu0 %v4665
        %6056 = vmatpush1.msra.mxu0 %v4663
        %6057 = vmatprep.subr.mxu0 %v4673
        %6058 = vmatpush1.msra.mxu0 %v4671
        %6059 = vmatprep.subr.mxu0 %v4681
        %6060 = vmatpush1.msra.mxu0 %v4679
        %6061 = vmatprep.subr.mxu0 %v4689
        %6062 = vmatpush1.msra.mxu0 %v4687
        %6063 = vmatprep.subr.mxu0 %v4697
        %6064 = vmatpush1.msra.mxu0 %v4695
        %6065 = vmatprep.subr.mxu0 %v4705
        %6066 = vmatpush1.msra.mxu0 %v4703
        %6067 = vmatprep.subr.mxu0 %v4713
        %6068 = vmatpush1.msra.mxu0 %v4711
        %6069 = vmatprep.subr.mxu0 %v4721
        %6070 = vmatpush1.msra.mxu0 %v4719
        %6071 = vmatprep.subr.mxu0 %v4729
        %6072 = vmatpush1.msra.mxu0 %v4727
        %6073 = vmatprep.subr.mxu0 %v4737
        %6074 = vmatpush1.msra.mxu0 %v4735
        %6075 = vmatprep.subr.mxu0 %v4745
        %6076 = vmatpush1.msra.mxu0 %v4743
        %6077 = vmatprep.subr.mxu0 %v4753
        %6078 = vmatpush1.msra.mxu0 %v4751
        %6079 = vmatprep.subr.mxu0 %v4761
        %6080 = vmatpush1.msra.mxu0 %v4759
        %6081 = vmatprep.subr.mxu0 %v4769
        %6082 = vmatpush1.msra.mxu0 %v4767
        %6083 = vmatprep.subr.mxu0 %v4777
        %6084 = vmatpush1.msra.mxu0 %v4775
        %6085 = vmatprep.subr.mxu0 %v4785
        %6086 = vmatpush1.msra.mxu0 %v4783
        %6087 = vmatprep.subr.mxu0 %v4793
        %6088 = vmatpush1.msra.mxu0 %v4791
        %6089 = vmatprep.subr.mxu0 %v4801
        %6090 = vmatpush1.msra.mxu0 %v4799
        %6091 = vmatprep.subr.mxu0 %v4809
        %6092 = vmatpush1.msra.mxu0 %v4807
        %6093 = vmatprep.subr.mxu0 %v4817
        %6094 = vmatpush1.msra.mxu0 %v4815
        %6095 = vmatprep.subr.mxu0 %v4825
        %6096 = vmatpush1.msra.mxu0 %v4823
        %6097 = vmatprep.subr.mxu0 %v4833
        %6098 = vmatpush1.msra.mxu0 %v4831
        %6099 = vmatprep.subr.mxu0 %v4841
        %6100 = vmatpush1.msra.mxu0 %v4839
        %6101 = vmatprep.subr.mxu0 %v4849
        %6102 = vmatpush1.msra.mxu0 %v4847
        %6103 = vmatprep.subr.mxu0 %v4857
        %6104 = vmatpush1.msra.mxu0 %v4855
        %6105 = vmatprep.subr.mxu0 %v4865
        %6106 = vmatpush1.msra.mxu0 %v4863
        %6107 = vmatprep.subr.mxu0 %v4873
        %6108 = vmatpush1.msra.mxu0 %v4871
        %6109 = vmatprep.subr.mxu0 %v4881
        %6110 = vmatpush1.msra.mxu0 %v4879
        %6111 = vmatprep.subr.mxu0 %v4889
        %6112 = vmatpush1.msra.mxu0 %v4887
        %6113 = vmatprep.subr.mxu0 %v4897
        %6114 = vmatpush1.msra.mxu0 %v4895
        %6115 = vmatprep.subr.mxu0 %v4905
        %6116 = vmatpush1.msra.mxu0 %v4903
        %6117 = vmatprep.subr.mxu0 %v4913
        %6118 = vmatpush1.msra.mxu0 %v4911
        %6119 = vmatprep.mubr.f32.mxu0 %v5965
        %6120 = vmatmul.mubr.f32.gmra.mrb[0].mxu0 %v5964
        %v6121 = vpop.f32.mrb[0].mxu0
        %v6122 = vadd.f32 %v6045, %v6121
        %v6123 = vpop.f32.mrb[0].mxu0
        %v6124 = vadd.f32 %v6047, %v6123
        %6125 = vmatprep.mubr.f32.mxu0 %v5973
        %6126 = vmatmul.mubr.f32.gmra.mrb[0].mxu0 %v5972
        %v6127 = vpop.f32.mrb[0].mxu0
        %v6128 = vadd.f32 %v6051, %v6127
        %v6129 = vpop.f32.mrb[0].mxu0
        %v6130 = vadd.f32 %v6053, %v6129
        %6131 = vdwg.mxu0
        %6132 = vmatprep.subr.mxu0 %v4921
        %6133 = vmatpush1.msra.mxu0 %v4919
        %6134 = vmatprep.subr.mxu0 %v4929
        %6135 = vmatpush1.msra.mxu0 %v4927
        %6136 = vmatprep.subr.mxu0 %v4937
        %6137 = vmatpush1.msra.mxu0 %v4935
        %6138 = vmatprep.subr.mxu0 %v4945
        %6139 = vmatpush1.msra.mxu0 %v4943
        %6140 = vmatprep.subr.mxu0 %v4953
        %6141 = vmatpush1.msra.mxu0 %v4951
        %6142 = vmatprep.subr.mxu0 %v4961
        %6143 = vmatpush1.msra.mxu0 %v4959
        %6144 = vmatprep.subr.mxu0 %v4969
        %6145 = vmatpush1.msra.mxu0 %v4967
        %6146 = vmatprep.subr.mxu0 %v4977
        %6147 = vmatpush1.msra.mxu0 %v4975
        %6148 = vmatprep.subr.mxu0 %v4985
        %6149 = vmatpush1.msra.mxu0 %v4983
        %6150 = vmatprep.subr.mxu0 %v4993
        %6151 = vmatpush1.msra.mxu0 %v4991
        %6152 = vmatprep.subr.mxu0 %v5001
        %6153 = vmatpush1.msra.mxu0 %v4999
        %6154 = vmatprep.subr.mxu0 %v5009
        %6155 = vmatpush1.msra.mxu0 %v5007
        %6156 = vmatprep.subr.mxu0 %v5017
        %6157 = vmatpush1.msra.mxu0 %v5015
        %6158 = vmatprep.subr.mxu0 %v5025
        %6159 = vmatpush1.msra.mxu0 %v5023
        %6160 = vmatprep.subr.mxu0 %v5033
        %6161 = vmatpush1.msra.mxu0 %v5031
        %6162 = vmatprep.subr.mxu0 %v5041
        %6163 = vmatpush1.msra.mxu0 %v5039
        %6164 = vmatprep.subr.mxu0 %v5049
        %6165 = vmatpush1.msra.mxu0 %v5047
        %6166 = vmatprep.subr.mxu0 %v5057
        %6167 = vmatpush1.msra.mxu0 %v5055
        %6168 = vmatprep.subr.mxu0 %v5065
        %6169 = vmatpush1.msra.mxu0 %v5063
        %6170 = vmatprep.subr.mxu0 %v5073
        %6171 = vmatpush1.msra.mxu0 %v5071
        %6172 = vmatprep.subr.mxu0 %v5081
        %6173 = vmatpush1.msra.mxu0 %v5079
        %6174 = vmatprep.subr.mxu0 %v5089
        %6175 = vmatpush1.msra.mxu0 %v5087
        %6176 = vmatprep.subr.mxu0 %v5097
        %6177 = vmatpush1.msra.mxu0 %v5095
        %6178 = vmatprep.subr.mxu0 %v5105
        %6179 = vmatpush1.msra.mxu0 %v5103
        %6180 = vmatprep.subr.mxu0 %v5113
        %6181 = vmatpush1.msra.mxu0 %v5111
        %6182 = vmatprep.subr.mxu0 %v5121
        %6183 = vmatpush1.msra.mxu0 %v5119
        %6184 = vmatprep.subr.mxu0 %v5129
        %6185 = vmatpush1.msra.mxu0 %v5127
        %6186 = vmatprep.subr.mxu0 %v5137
        %6187 = vmatpush1.msra.mxu0 %v5135
        %6188 = vmatprep.subr.mxu0 %v5145
        %6189 = vmatpush1.msra.mxu0 %v5143
        %6190 = vmatprep.subr.mxu0 %v5153
        %6191 = vmatpush1.msra.mxu0 %v5151
        %6192 = vmatprep.subr.mxu0 %v5161
        %6193 = vmatpush1.msra.mxu0 %v5159
        %6194 = vmatprep.subr.mxu0 %v5169
        %6195 = vmatpush1.msra.mxu0 %v5167
        %6196 = vmatprep.mubr.f32.mxu0 %v5967
        %6197 = vmatmul.mubr.f32.gmra.mrb[0].mxu0 %v5966
        %v6198 = vpop.f32.mrb[0].mxu0
        %v6199 = vadd.f32 %v6122, %v6198
        %v6200 = vpop.f32.mrb[0].mxu0
        %v6201 = vadd.f32 %v6124, %v6200
        %6202 = vmatprep.mubr.f32.mxu0 %v5975
        %6203 = vmatmul.mubr.f32.gmra.mrb[0].mxu0 %v5974
        %v6204 = vpop.f32.mrb[0].mxu0
        %v6205 = vadd.f32 %v6128, %v6204
        %v6206 = vpop.f32.mrb[0].mxu0
        %v6207 = vadd.f32 %v6130, %v6206
        %6208 = vdwg.mxu0
        %6209 = vmatprep.subr.mxu0 %v5177
        %6210 = vmatpush1.msra.mxu0 %v5175
        %6211 = vmatprep.subr.mxu0 %v5185
        %6212 = vmatpush1.msra.mxu0 %v5183
        %6213 = vmatprep.subr.mxu0 %v5193
        %6214 = vmatpush1.msra.mxu0 %v5191
        %6215 = vmatprep.subr.mxu0 %v5201
        %6216 = vmatpush1.msra.mxu0 %v5199
        %6217 = vmatprep.subr.mxu0 %v5209
        %6218 = vmatpush1.msra.mxu0 %v5207
        %6219 = vmatprep.subr.mxu0 %v5217
        %6220 = vmatpush1.msra.mxu0 %v5215
        %6221 = vmatprep.subr.mxu0 %v5225
        %6222 = vmatpush1.msra.mxu0 %v5223
        %6223 = vmatprep.subr.mxu0 %v5233
        %6224 = vmatpush1.msra.mxu0 %v5231
        %6225 = vmatprep.subr.mxu0 %v5241
        %6226 = vmatpush1.msra.mxu0 %v5239
        %6227 = vmatprep.subr.mxu0 %v5249
        %6228 = vmatpush1.msra.mxu0 %v5247
        %6229 = vmatprep.subr.mxu0 %v5257
        %6230 = vmatpush1.msra.mxu0 %v5255
        %6231 = vmatprep.subr.mxu0 %v5265
        %6232 = vmatpush1.msra.mxu0 %v5263
        %6233 = vmatprep.subr.mxu0 %v5273
        %6234 = vmatpush1.msra.mxu0 %v5271
        %6235 = vmatprep.subr.mxu0 %v5281
        %6236 = vmatpush1.msra.mxu0 %v5279
        %6237 = vmatprep.subr.mxu0 %v5289
        %6238 = vmatpush1.msra.mxu0 %v5287
        %6239 = vmatprep.subr.mxu0 %v5297
        %6240 = vmatpush1.msra.mxu0 %v5295
        %6241 = vmatprep.subr.mxu0 %v5305
        %6242 = vmatpush1.msra.mxu0 %v5303
        %6243 = vmatprep.subr.mxu0 %v5313
        %6244 = vmatpush1.msra.mxu0 %v5311
        %6245 = vmatprep.subr.mxu0 %v5321
        %6246 = vmatpush1.msra.mxu0 %v5319
        %6247 = vmatprep.subr.mxu0 %v5329
        %6248 = vmatpush1.msra.mxu0 %v5327
        %6249 = vmatprep.subr.mxu0 %v5337
        %6250 = vmatpush1.msra.mxu0 %v5335
        %6251 = vmatprep.subr.mxu0 %v5345
        %6252 = vmatpush1.msra.mxu0 %v5343
        %6253 = vmatprep.subr.mxu0 %v5353
        %6254 = vmatpush1.msra.mxu0 %v5351
        %6255 = vmatprep.subr.mxu0 %v5361
        %6256 = vmatpush1.msra.mxu0 %v5359
        %6257 = vmatprep.subr.mxu0 %v5369
        %6258 = vmatpush1.msra.mxu0 %v5367
        %6259 = vmatprep.subr.mxu0 %v5377
        %6260 = vmatpush1.msra.mxu0 %v5375
        %6261 = vmatprep.subr.mxu0 %v5385
        %6262 = vmatpush1.msra.mxu0 %v5383
        %6263 = vmatprep.subr.mxu0 %v5393
        %6264 = vmatpush1.msra.mxu0 %v5391
        %6265 = vmatprep.subr.mxu0 %v5401
        %6266 = vmatpush1.msra.mxu0 %v5399
        %6267 = vmatprep.subr.mxu0 %v5409
        %6268 = vmatpush1.msra.mxu0 %v5407
        %6269 = vmatprep.subr.mxu0 %v5417
        %6270 = vmatpush1.msra.mxu0 %v5415
        %6271 = vmatprep.subr.mxu0 %v5425
        %6272 = vmatpush1.msra.mxu0 %v5423
        %6273 = vmatprep.mubr.f32.mxu0 %v5969
        %6274 = vmatmul.mubr.f32.gmra.mrb[0].mxu0 %v5968
        %v6275 = vpop.f32.mrb[0].mxu0
        %v6276 = vadd.f32 %v6199, %v6275
        %v6277 = vpop.f32.mrb[0].mxu0
        %v6278 = vadd.f32 %v6201, %v6277
        %6279 = vmatprep.mubr.f32.mxu0 %v5977
        %6280 = vmatmul.mubr.f32.gmra.mrb[0].mxu0 %v5976
        %v6281 = vpop.f32.mrb[0].mxu0
        %v6282 = vadd.f32 %v6205, %v6281
        %v6283 = vpop.f32.mrb[0].mxu0
        %v6284 = vadd.f32 %v6207, %v6283
        %6285 = vdwg.mxu0
        %6286 = vmatprep.subr.mxu0 %v4413
        %6287 = vmatpush1.msra.mxu0 %v4411
        %6288 = vmatprep.subr.mxu0 %v4421
        %6289 = vmatpush1.msra.mxu0 %v4419
        %6290 = vmatprep.subr.mxu0 %v4429
        %6291 = vmatpush1.msra.mxu0 %v4427
        %6292 = vmatprep.subr.mxu0 %v4437
        %6293 = vmatpush1.msra.mxu0 %v4435
        %6294 = vmatprep.subr.mxu0 %v4445
        %6295 = vmatpush1.msra.mxu0 %v4443
        %6296 = vmatprep.subr.mxu0 %v4453
        %6297 = vmatpush1.msra.mxu0 %v4451
        %6298 = vmatprep.subr.mxu0 %v4461
        %6299 = vmatpush1.msra.mxu0 %v4459
        %6300 = vmatprep.subr.mxu0 %v4469
        %6301 = vmatpush1.msra.mxu0 %v4467
        %6302 = vmatprep.subr.mxu0 %v4477
        %6303 = vmatpush1.msra.mxu0 %v4475
        %6304 = vmatprep.subr.mxu0 %v4485
        %6305 = vmatpush1.msra.mxu0 %v4483
        %6306 = vmatprep.subr.mxu0 %v4493
        %6307 = vmatpush1.msra.mxu0 %v4491
        %6308 = vmatprep.subr.mxu0 %v4501
        %6309 = vmatpush1.msra.mxu0 %v4499
        %6310 = vmatprep.subr.mxu0 %v4509
        %6311 = vmatpush1.msra.mxu0 %v4507
        %6312 = vmatprep.subr.mxu0 %v4517
        %6313 = vmatpush1.msra.mxu0 %v4515
        %6314 = vmatprep.subr.mxu0 %v4525
        %6315 = vmatpush1.msra.mxu0 %v4523
        %6316 = vmatprep.subr.mxu0 %v4533
        %6317 = vmatpush1.msra.mxu0 %v4531
        %6318 = vmatprep.subr.mxu0 %v4541
        %6319 = vmatpush1.msra.mxu0 %v4539
        %6320 = vmatprep.subr.mxu0 %v4549
        %6321 = vmatpush1.msra.mxu0 %v4547
        %6322 = vmatprep.subr.mxu0 %v4557
        %6323 = vmatpush1.msra.mxu0 %v4555
        %6324 = vmatprep.subr.mxu0 %v4565
        %6325 = vmatpush1.msra.mxu0 %v4563
        %6326 = vmatprep.subr.mxu0 %v4573
        %6327 = vmatpush1.msra.mxu0 %v4571
        %6328 = vmatprep.subr.mxu0 %v4581
        %6329 = vmatpush1.msra.mxu0 %v4579
        %6330 = vmatprep.subr.mxu0 %v4589
        %6331 = vmatpush1.msra.mxu0 %v4587
        %6332 = vmatprep.subr.mxu0 %v4597
        %6333 = vmatpush1.msra.mxu0 %v4595
        %6334 = vmatprep.subr.mxu0 %v4605
        %6335 = vmatpush1.msra.mxu0 %v4603
        %6336 = vmatprep.subr.mxu0 %v4613
        %6337 = vmatpush1.msra.mxu0 %v4611
        %6338 = vmatprep.subr.mxu0 %v4621
        %6339 = vmatpush1.msra.mxu0 %v4619
        %6340 = vmatprep.subr.mxu0 %v4629
        %6341 = vmatpush1.msra.mxu0 %v4627
        %6342 = vmatprep.subr.mxu0 %v4637
        %6343 = vmatpush1.msra.mxu0 %v4635
        %6344 = vmatprep.subr.mxu0 %v4645
        %6345 = vmatpush1.msra.mxu0 %v4643
        %6346 = vmatprep.subr.mxu0 %v4653
        %6347 = vmatpush1.msra.mxu0 %v4651
        %6348 = vmatprep.subr.mxu0 %v4661
        %6349 = vmatpush1.msra.mxu0 %v4659
        %6350 = vmatprep.mubr.f32.mxu0 %v5963
        %6351 = vmatmul.mubr.f32.gmra.mrb[0].mxu0 %v5962
        %v6352 = vpop.f32.mrb[0].mxu0
        %v6353 = vadd.f32 0.0, %v6352
        %v6354 = vpop.f32.mrb[0].mxu0
        %v6355 = vadd.f32 0.0, %v6354
        %6356 = vmatprep.mubr.f32.mxu0 %v5971
        %6357 = vmatmul.mubr.f32.gmra.mrb[0].mxu0 %v5970
        %v6358 = vpop.f32.mrb[0].mxu0
        %v6359 = vadd.f32 0.0, %v6358
        %v6360 = vpop.f32.mrb[0].mxu0
        %v6361 = vadd.f32 0.0, %v6360
        %6362 = vdwg.mxu0
        %6363 = vmatprep.subr.mxu0 %v4669
        %6364 = vmatpush1.msra.mxu0 %v4667
        %6365 = vmatprep.subr.mxu0 %v4677
        %6366 = vmatpush1.msra.mxu0 %v4675
        %6367 = vmatprep.subr.mxu0 %v4685
        %6368 = vmatpush1.msra.mxu0 %v4683
        %6369 = vmatprep.subr.mxu0 %v4693
        %6370 = vmatpush1.msra.mxu0 %v4691
        %6371 = vmatprep.subr.mxu0 %v4701
        %6372 = vmatpush1.msra.mxu0 %v4699
        %6373 = vmatprep.subr.mxu0 %v4709
        %6374 = vmatpush1.msra.mxu0 %v4707
        %6375 = vmatprep.subr.mxu0 %v4717
        %6376 = vmatpush1.msra.mxu0 %v4715
        %6377 = vmatprep.subr.mxu0 %v4725
        %6378 = vmatpush1.msra.mxu0 %v4723
        %6379 = vmatprep.subr.mxu0 %v4733
        %6380 = vmatpush1.msra.mxu0 %v4731
        %6381 = vmatprep.subr.mxu0 %v4741
        %6382 = vmatpush1.msra.mxu0 %v4739
        %6383 = vmatprep.subr.mxu0 %v4749
        %6384 = vmatpush1.msra.mxu0 %v4747
        %6385 = vmatprep.subr.mxu0 %v4757
        %6386 = vmatpush1.msra.mxu0 %v4755
        %6387 = vmatprep.subr.mxu0 %v4765
        %6388 = vmatpush1.msra.mxu0 %v4763
        %6389 = vmatprep.subr.mxu0 %v4773
        %6390 = vmatpush1.msra.mxu0 %v4771
        %6391 = vmatprep.subr.mxu0 %v4781
        %6392 = vmatpush1.msra.mxu0 %v4779
        %6393 = vmatprep.subr.mxu0 %v4789
        %6394 = vmatpush1.msra.mxu0 %v4787
        %6395 = vmatprep.subr.mxu0 %v4797
        %6396 = vmatpush1.msra.mxu0 %v4795
        %6397 = vmatprep.subr.mxu0 %v4805
        %6398 = vmatpush1.msra.mxu0 %v4803
        %6399 = vmatprep.subr.mxu0 %v4813
        %6400 = vmatpush1.msra.mxu0 %v4811
        %6401 = vmatprep.subr.mxu0 %v4821
        %6402 = vmatpush1.msra.mxu0 %v4819
        %6403 = vmatprep.subr.mxu0 %v4829
        %6404 = vmatpush1.msra.mxu0 %v4827
        %6405 = vmatprep.subr.mxu0 %v4837
        %6406 = vmatpush1.msra.mxu0 %v4835
        %6407 = vmatprep.subr.mxu0 %v4845
        %6408 = vmatpush1.msra.mxu0 %v4843
        %6409 = vmatprep.subr.mxu0 %v4853
        %6410 = vmatpush1.msra.mxu0 %v4851
        %6411 = vmatprep.subr.mxu0 %v4861
        %6412 = vmatpush1.msra.mxu0 %v4859
        %6413 = vmatprep.subr.mxu0 %v4869
        %6414 = vmatpush1.msra.mxu0 %v4867
        %6415 = vmatprep.subr.mxu0 %v4877
        %6416 = vmatpush1.msra.mxu0 %v4875
        %6417 = vmatprep.subr.mxu0 %v4885
        %6418 = vmatpush1.msra.mxu0 %v4883
        %6419 = vmatprep.subr.mxu0 %v4893
        %6420 = vmatpush1.msra.mxu0 %v4891
        %6421 = vmatprep.subr.mxu0 %v4901
        %6422 = vmatpush1.msra.mxu0 %v4899
        %6423 = vmatprep.subr.mxu0 %v4909
        %6424 = vmatpush1.msra.mxu0 %v4907
        %6425 = vmatprep.subr.mxu0 %v4917
        %6426 = vmatpush1.msra.mxu0 %v4915
        %6427 = vmatprep.mubr.f32.mxu0 %v5965
        %6428 = vmatmul.mubr.f32.gmra.mrb[0].mxu0 %v5964
        %v6429 = vpop.f32.mrb[0].mxu0
        %v6430 = vadd.f32 %v6353, %v6429
        %v6431 = vpop.f32.mrb[0].mxu0
        %v6432 = vadd.f32 %v6355, %v6431
        %6433 = vmatprep.mubr.f32.mxu0 %v5973
        %6434 = vmatmul.mubr.f32.gmra.mrb[0].mxu0 %v5972
        %v6435 = vpop.f32.mrb[0].mxu0
        %v6436 = vadd.f32 %v6359, %v6435
        %v6437 = vpop.f32.mrb[0].mxu0
        %v6438 = vadd.f32 %v6361, %v6437
        %6439 = vdwg.mxu0
        %6440 = vmatprep.subr.mxu0 %v4925
        %6441 = vmatpush1.msra.mxu0 %v4923
        %6442 = vmatprep.subr.mxu0 %v4933
        %6443 = vmatpush1.msra.mxu0 %v4931
        %6444 = vmatprep.subr.mxu0 %v4941
        %6445 = vmatpush1.msra.mxu0 %v4939
        %6446 = vmatprep.subr.mxu0 %v4949
        %6447 = vmatpush1.msra.mxu0 %v4947
        %6448 = vmatprep.subr.mxu0 %v4957
        %6449 = vmatpush1.msra.mxu0 %v4955
        %6450 = vmatprep.subr.mxu0 %v4965
        %6451 = vmatpush1.msra.mxu0 %v4963
        %6452 = vmatprep.subr.mxu0 %v4973
        %6453 = vmatpush1.msra.mxu0 %v4971
        %6454 = vmatprep.subr.mxu0 %v4981
        %6455 = vmatpush1.msra.mxu0 %v4979
        %6456 = vmatprep.subr.mxu0 %v4989
        %6457 = vmatpush1.msra.mxu0 %v4987
        %6458 = vmatprep.subr.mxu0 %v4997
        %6459 = vmatpush1.msra.mxu0 %v4995
        %6460 = vmatprep.subr.mxu0 %v5005
        %6461 = vmatpush1.msra.mxu0 %v5003
        %6462 = vmatprep.subr.mxu0 %v5013
        %6463 = vmatpush1.msra.mxu0 %v5011
        %6464 = vmatprep.subr.mxu0 %v5021
        %6465 = vmatpush1.msra.mxu0 %v5019
        %6466 = vmatprep.subr.mxu0 %v5029
        %6467 = vmatpush1.msra.mxu0 %v5027
        %6468 = vmatprep.subr.mxu0 %v5037
        %6469 = vmatpush1.msra.mxu0 %v5035
        %6470 = vmatprep.subr.mxu0 %v5045
        %6471 = vmatpush1.msra.mxu0 %v5043
        %6472 = vmatprep.subr.mxu0 %v5053
        %6473 = vmatpush1.msra.mxu0 %v5051
        %6474 = vmatprep.subr.mxu0 %v5061
        %6475 = vmatpush1.msra.mxu0 %v5059
        %6476 = vmatprep.subr.mxu0 %v5069
        %6477 = vmatpush1.msra.mxu0 %v5067
        %6478 = vmatprep.subr.mxu0 %v5077
        %6479 = vmatpush1.msra.mxu0 %v5075
        %6480 = vmatprep.subr.mxu0 %v5085
        %6481 = vmatpush1.msra.mxu0 %v5083
        %6482 = vmatprep.subr.mxu0 %v5093
        %6483 = vmatpush1.msra.mxu0 %v5091
        %6484 = vmatprep.subr.mxu0 %v5101
        %6485 = vmatpush1.msra.mxu0 %v5099
        %6486 = vmatprep.subr.mxu0 %v5109
        %6487 = vmatpush1.msra.mxu0 %v5107
        %6488 = vmatprep.subr.mxu0 %v5117
        %6489 = vmatpush1.msra.mxu0 %v5115
        %6490 = vmatprep.subr.mxu0 %v5125
        %6491 = vmatpush1.msra.mxu0 %v5123
        %6492 = vmatprep.subr.mxu0 %v5133
        %6493 = vmatpush1.msra.mxu0 %v5131
        %6494 = vmatprep.subr.mxu0 %v5141
        %6495 = vmatpush1.msra.mxu0 %v5139
        %6496 = vmatprep.subr.mxu0 %v5149
        %6497 = vmatpush1.msra.mxu0 %v5147
        %6498 = vmatprep.subr.mxu0 %v5157
        %6499 = vmatpush1.msra.mxu0 %v5155
        %6500 = vmatprep.subr.mxu0 %v5165
        %6501 = vmatpush1.msra.mxu0 %v5163
        %6502 = vmatprep.subr.mxu0 %v5173
        %6503 = vmatpush1.msra.mxu0 %v5171
        %6504 = vmatprep.mubr.f32.mxu0 %v5967
        %6505 = vmatmul.mubr.f32.gmra.mrb[0].mxu0 %v5966
        %v6506 = vpop.f32.mrb[0].mxu0
        %v6507 = vadd.f32 %v6430, %v6506
        %v6508 = vpop.f32.mrb[0].mxu0
        %v6509 = vadd.f32 %v6432, %v6508
        %6510 = vmatprep.mubr.f32.mxu0 %v5975
        %6511 = vmatmul.mubr.f32.gmra.mrb[0].mxu0 %v5974
        %v6512 = vpop.f32.mrb[0].mxu0
        %v6513 = vadd.f32 %v6436, %v6512
        %v6514 = vpop.f32.mrb[0].mxu0
        %v6515 = vadd.f32 %v6438, %v6514
        %6516 = vdwg.mxu0
        %6517 = vmatprep.subr.mxu0 %v5181
        %6518 = vmatpush1.msra.mxu0 %v5179
        %6519 = vmatprep.subr.mxu0 %v5189
        %6520 = vmatpush1.msra.mxu0 %v5187
        %6521 = vmatprep.subr.mxu0 %v5197
        %6522 = vmatpush1.msra.mxu0 %v5195
        %6523 = vmatprep.subr.mxu0 %v5205
        %6524 = vmatpush1.msra.mxu0 %v5203
        %6525 = vmatprep.subr.mxu0 %v5213
        %6526 = vmatpush1.msra.mxu0 %v5211
        %6527 = vmatprep.subr.mxu0 %v5221
        %6528 = vmatpush1.msra.mxu0 %v5219
        %6529 = vmatprep.subr.mxu0 %v5229
        %6530 = vmatpush1.msra.mxu0 %v5227
        %6531 = vmatprep.subr.mxu0 %v5237
        %6532 = vmatpush1.msra.mxu0 %v5235
        %6533 = vmatprep.subr.mxu0 %v5245
        %6534 = vmatpush1.msra.mxu0 %v5243
        %6535 = vmatprep.subr.mxu0 %v5253
        %6536 = vmatpush1.msra.mxu0 %v5251
        %6537 = vmatprep.subr.mxu0 %v5261
        %6538 = vmatpush1.msra.mxu0 %v5259
        %6539 = vmatprep.subr.mxu0 %v5269
        %6540 = vmatpush1.msra.mxu0 %v5267
        %6541 = vmatprep.subr.mxu0 %v5277
        %6542 = vmatpush1.msra.mxu0 %v5275
        %6543 = vmatprep.subr.mxu0 %v5285
        %6544 = vmatpush1.msra.mxu0 %v5283
        %6545 = vmatprep.subr.mxu0 %v5293
        %6546 = vmatpush1.msra.mxu0 %v5291
        %6547 = vmatprep.subr.mxu0 %v5301
        %6548 = vmatpush1.msra.mxu0 %v5299
        %6549 = vmatprep.subr.mxu0 %v5309
        %6550 = vmatpush1.msra.mxu0 %v5307
        %6551 = vmatprep.subr.mxu0 %v5317
        %6552 = vmatpush1.msra.mxu0 %v5315
        %6553 = vmatprep.subr.mxu0 %v5325
        %6554 = vmatpush1.msra.mxu0 %v5323
        %6555 = vmatprep.subr.mxu0 %v5333
        %6556 = vmatpush1.msra.mxu0 %v5331
        %6557 = vmatprep.subr.mxu0 %v5341
        %6558 = vmatpush1.msra.mxu0 %v5339
        %6559 = vmatprep.subr.mxu0 %v5349
        %6560 = vmatpush1.msra.mxu0 %v5347
        %6561 = vmatprep.subr.mxu0 %v5357
        %6562 = vmatpush1.msra.mxu0 %v5355
        %6563 = vmatprep.subr.mxu0 %v5365
        %6564 = vmatpush1.msra.mxu0 %v5363
        %6565 = vmatprep.subr.mxu0 %v5373
        %6566 = vmatpush1.msra.mxu0 %v5371
        %6567 = vmatprep.subr.mxu0 %v5381
        %6568 = vmatpush1.msra.mxu0 %v5379
        %6569 = vmatprep.subr.mxu0 %v5389
        %6570 = vmatpush1.msra.mxu0 %v5387
        %6571 = vmatprep.subr.mxu0 %v5397
        %6572 = vmatpush1.msra.mxu0 %v5395
        %6573 = vmatprep.subr.mxu0 %v5405
        %6574 = vmatpush1.msra.mxu0 %v5403
        %6575 = vmatprep.subr.mxu0 %v5413
        %6576 = vmatpush1.msra.mxu0 %v5411
        %6577 = vmatprep.subr.mxu0 %v5421
        %6578 = vmatpush1.msra.mxu0 %v5419
        %6579 = vmatprep.subr.mxu0 %v5429
        %6580 = vmatpush1.msra.mxu0 %v5427
        %6581 = vmatprep.mubr.f32.mxu0 %v5969
        %6582 = vmatmul.mubr.f32.gmra.mrb[0].mxu0 %v5968
        %v6583 = vpop.f32.mrb[0].mxu0
        %v6584 = vadd.f32 %v6507, %v6583
        %v6585 = vpop.f32.mrb[0].mxu0
        %v6586 = vadd.f32 %v6509, %v6585
        %6587 = vmatprep.mubr.f32.mxu0 %v5977
        %6588 = vmatmul.mubr.f32.gmra.mrb[0].mxu0 %v5976
        %v6589 = vpop.f32.mrb[0].mxu0
        %v6590 = vadd.f32 %v6513, %v6589
        %v6591 = vpop.f32.mrb[0].mxu0
        %v6592 = vadd.f32 %v6515, %v6591
        %6593 = vdwg.mxu0
        %v6594 = vrcp.pop %v5562
        %v6595 = vrcp.pop %v5695
        %v6596 = vrcp.pop %v5828
        %v6597 = vrcp.pop %v5961
        %v6598 = vmul.f32 %v6276, %v6594
        %v6599 = vmul.f32 %v6278, %v6595
        %v6600 = vmul.f32 %v6584, %v6596
        %v6601 = vmul.f32 %v6586, %v6597
        %v6602 = vmul.f32 %v6282, %v6594
        %v6603 = vmul.f32 %v6284, %v6595
        %v6604 = vmul.f32 %v6590, %v6596
        %v6605 = vmul.f32 %v6592, %v6597
        %v6606 = vld [vmem:[%s3] sm:$0xff]
        %v6607 = vld [vmem:[%s3 + $0x8] sm:$0xff]
        %v6608 = vld [vmem:[%s3 + $0x10] sm:$0xff]
        %v6609 = vld [vmem:[%s3 + $0x18] sm:$0xff]
        %v6610 = vld [vmem:[%s4] sm:$0xff]
        %v6611 = vld [vmem:[%s4 + $0x8] sm:$0xff]
        %v6612 = vld [vmem:[%s4 + $0x10] sm:$0xff]
        %v6613 = vld [vmem:[%s4 + $0x18] sm:$0xff]
        %6615 = vset.pattern.permute.xlu0 0
        %6616 = vperm.xlu0 %6615, %v6610
        %v6617 = vpop.permute.xlu0 %6616
        %6620 = vset.pattern.permute.xlu0 0
        %6621 = vperm.xlu0 %6620, %v6611
        %v6622 = vpop.permute.xlu0 %6621
        %6625 = vset.pattern.permute.xlu0 0
        %6626 = vperm.xlu0 %6625, %v6612
        %v6627 = vpop.permute.xlu0 %6626
        %6630 = vset.pattern.permute.xlu0 0
        %6631 = vperm.xlu0 %6630, %v6613
        %v6632 = vpop.permute.xlu0 %6631
        %v6635 = vsel %vm1311, %v6606, 0
        %v6638 = vsel %vm1311, %v6607, 0
        %v6641 = vsel %vm1311, %v6608, 0
        %v6644 = vsel %vm1311, %v6609, 0
        %6646 = vmatprep.subr.mxu0 %v6599
        %6647 = vmatpush1.msra.mxu0 %v6598
        %6648 = vmatprep.subr.mxu0 %v6603
        %6649 = vmatpush1.msra.mxu0 %v6602
        %6650 = vmatprep.subr.mxu0 0.0
        %6651 = vmatpush1.msra.mxu0 0.0
        %6652 = vmatprep.subr.mxu0 0.0
        %6653 = vmatpush1.msra.mxu0 0.0
        %6654 = vmatprep.subr.mxu0 0.0
        %6655 = vmatpush1.msra.mxu0 0.0
        %6656 = vmatprep.subr.mxu0 0.0
        %6657 = vmatpush1.msra.mxu0 0.0
        %6658 = vmatprep.subr.mxu0 0.0
        %6659 = vmatpush1.msra.mxu0 0.0
        %6660 = vmatprep.subr.mxu0 0.0
        %6661 = vmatpush1.msra.mxu0 0.0
        %6662 = vmatprep.subr.mxu0 0.0
        %6663 = vmatpush1.msra.mxu0 0.0
        %6664 = vmatprep.subr.mxu0 0.0
        %6665 = vmatpush1.msra.mxu0 0.0
        %6666 = vmatprep.subr.mxu0 0.0
        %6667 = vmatpush1.msra.mxu0 0.0
        %6668 = vmatprep.subr.mxu0 0.0
        %6669 = vmatpush1.msra.mxu0 0.0
        %6670 = vmatprep.subr.mxu0 0.0
        %6671 = vmatpush1.msra.mxu0 0.0
        %6672 = vmatprep.subr.mxu0 0.0
        %6673 = vmatpush1.msra.mxu0 0.0
        %6674 = vmatprep.subr.mxu0 0.0
        %6675 = vmatpush1.msra.mxu0 0.0
        %6676 = vmatprep.subr.mxu0 0.0
        %6677 = vmatpush1.msra.mxu0 0.0
        %6678 = vmatprep.subr.mxu0 0.0
        %6679 = vmatpush1.msra.mxu0 0.0
        %6680 = vmatprep.subr.mxu0 0.0
        %6681 = vmatpush1.msra.mxu0 0.0
        %6682 = vmatprep.subr.mxu0 0.0
        %6683 = vmatpush1.msra.mxu0 0.0
        %6684 = vmatprep.subr.mxu0 0.0
        %6685 = vmatpush1.msra.mxu0 0.0
        %6686 = vmatprep.subr.mxu0 0.0
        %6687 = vmatpush1.msra.mxu0 0.0
        %6688 = vmatprep.subr.mxu0 0.0
        %6689 = vmatpush1.msra.mxu0 0.0
        %6690 = vmatprep.subr.mxu0 0.0
        %6691 = vmatpush1.msra.mxu0 0.0
        %6692 = vmatprep.subr.mxu0 0.0
        %6693 = vmatpush1.msra.mxu0 0.0
        %6694 = vmatprep.subr.mxu0 0.0
        %6695 = vmatpush1.msra.mxu0 0.0
        %6696 = vmatprep.subr.mxu0 0.0
        %6697 = vmatpush1.msra.mxu0 0.0
        %6698 = vmatprep.subr.mxu0 0.0
        %6699 = vmatpush1.msra.mxu0 0.0
        %6700 = vmatprep.subr.mxu0 0.0
        %6701 = vmatpush1.msra.mxu0 0.0
        %6702 = vmatprep.subr.mxu0 0.0
        %6703 = vmatpush1.msra.mxu0 0.0
        %6704 = vmatprep.subr.mxu0 0.0
        %6705 = vmatpush1.msra.mxu0 0.0
        %6706 = vmatprep.subr.mxu0 0.0
        %6707 = vmatpush1.msra.mxu0 0.0
        %6708 = vmatprep.subr.mxu0 0.0
        %6709 = vmatpush1.msra.mxu0 0.0
        %6710 = vmatprep.mubr.f32.mxu0 0.0
        %6711 = vmatmul.mubr.f32.gmra.mrb[0].mxu0 %v6635
        %v6712 = vpop.f32.mrb[0].mxu0
        %v6713 = vadd.f32 %v6617, %v6712
        %v6714 = vpop.f32.mrb[0].mxu0
        %v6715 = vadd.f32 %v6617, %v6714
        %6716 = vmatprep.mubr.f32.mxu0 0.0
        %6717 = vmatmul.mubr.f32.gmra.mrb[0].mxu0 %v6638
        %v6718 = vpop.f32.mrb[0].mxu0
        %v6719 = vadd.f32 %v6622, %v6718
        %v6720 = vpop.f32.mrb[0].mxu0
        %v6721 = vadd.f32 %v6622, %v6720
        %6722 = vmatprep.mubr.f32.mxu0 0.0
        %6723 = vmatmul.mubr.f32.gmra.mrb[0].mxu0 %v6641
        %v6724 = vpop.f32.mrb[0].mxu0
        %v6725 = vadd.f32 %v6627, %v6724
        %v6726 = vpop.f32.mrb[0].mxu0
        %v6727 = vadd.f32 %v6627, %v6726
        %6728 = vmatprep.mubr.f32.mxu0 0.0
        %6729 = vmatmul.mubr.f32.gmra.mrb[0].mxu0 %v6644
        %v6730 = vpop.f32.mrb[0].mxu0
        %v6731 = vadd.f32 %v6632, %v6730
        %v6732 = vpop.f32.mrb[0].mxu0
        %v6733 = vadd.f32 %v6632, %v6732
        %6734 = vdwg.mxu0
        %6735 = vmatprep.subr.mxu0 %v6601
        %6736 = vmatpush1.msra.mxu0 %v6600
        %6737 = vmatprep.subr.mxu0 %v6605
        %6738 = vmatpush1.msra.mxu0 %v6604
        %6739 = vmatprep.subr.mxu0 0.0
        %6740 = vmatpush1.msra.mxu0 0.0
        %6741 = vmatprep.subr.mxu0 0.0
        %6742 = vmatpush1.msra.mxu0 0.0
        %6743 = vmatprep.subr.mxu0 0.0
        %6744 = vmatpush1.msra.mxu0 0.0
        %6745 = vmatprep.subr.mxu0 0.0
        %6746 = vmatpush1.msra.mxu0 0.0
        %6747 = vmatprep.subr.mxu0 0.0
        %6748 = vmatpush1.msra.mxu0 0.0
        %6749 = vmatprep.subr.mxu0 0.0
        %6750 = vmatpush1.msra.mxu0 0.0
        %6751 = vmatprep.subr.mxu0 0.0
        %6752 = vmatpush1.msra.mxu0 0.0
        %6753 = vmatprep.subr.mxu0 0.0
        %6754 = vmatpush1.msra.mxu0 0.0
        %6755 = vmatprep.subr.mxu0 0.0
        %6756 = vmatpush1.msra.mxu0 0.0
        %6757 = vmatprep.subr.mxu0 0.0
        %6758 = vmatpush1.msra.mxu0 0.0
        %6759 = vmatprep.subr.mxu0 0.0
        %6760 = vmatpush1.msra.mxu0 0.0
        %6761 = vmatprep.subr.mxu0 0.0
        %6762 = vmatpush1.msra.mxu0 0.0
        %6763 = vmatprep.subr.mxu0 0.0
        %6764 = vmatpush1.msra.mxu0 0.0
        %6765 = vmatprep.subr.mxu0 0.0
        %6766 = vmatpush1.msra.mxu0 0.0
        %6767 = vmatprep.subr.mxu0 0.0
        %6768 = vmatpush1.msra.mxu0 0.0
        %6769 = vmatprep.subr.mxu0 0.0
        %6770 = vmatpush1.msra.mxu0 0.0
        %6771 = vmatprep.subr.mxu0 0.0
        %6772 = vmatpush1.msra.mxu0 0.0
        %6773 = vmatprep.subr.mxu0 0.0
        %6774 = vmatpush1.msra.mxu0 0.0
        %6775 = vmatprep.subr.mxu0 0.0
        %6776 = vmatpush1.msra.mxu0 0.0
        %6777 = vmatprep.subr.mxu0 0.0
        %6778 = vmatpush1.msra.mxu0 0.0
        %6779 = vmatprep.subr.mxu0 0.0
        %6780 = vmatpush1.msra.mxu0 0.0
        %6781 = vmatprep.subr.mxu0 0.0
        %6782 = vmatpush1.msra.mxu0 0.0
        %6783 = vmatprep.subr.mxu0 0.0
        %6784 = vmatpush1.msra.mxu0 0.0
        %6785 = vmatprep.subr.mxu0 0.0
        %6786 = vmatpush1.msra.mxu0 0.0
        %6787 = vmatprep.subr.mxu0 0.0
        %6788 = vmatpush1.msra.mxu0 0.0
        %6789 = vmatprep.subr.mxu0 0.0
        %6790 = vmatpush1.msra.mxu0 0.0
        %6791 = vmatprep.subr.mxu0 0.0
        %6792 = vmatpush1.msra.mxu0 0.0
        %6793 = vmatprep.subr.mxu0 0.0
        %6794 = vmatpush1.msra.mxu0 0.0
        %6795 = vmatprep.subr.mxu0 0.0
        %6796 = vmatpush1.msra.mxu0 0.0
        %6797 = vmatprep.subr.mxu0 0.0
        %6798 = vmatpush1.msra.mxu0 0.0
        %6799 = vmatprep.mubr.f32.mxu0 0.0
        %6800 = vmatmul.mubr.f32.gmra.mrb[0].mxu0 %v6635
        %v6801 = vpop.f32.mrb[0].mxu0
        %v6802 = vadd.f32 %v6617, %v6801
        %v6803 = vpop.f32.mrb[0].mxu0
        %v6804 = vadd.f32 %v6617, %v6803
        %6805 = vmatprep.mubr.f32.mxu0 0.0
        %6806 = vmatmul.mubr.f32.gmra.mrb[0].mxu0 %v6638
        %v6807 = vpop.f32.mrb[0].mxu0
        %v6808 = vadd.f32 %v6622, %v6807
        %v6809 = vpop.f32.mrb[0].mxu0
        %v6810 = vadd.f32 %v6622, %v6809
        %6811 = vmatprep.mubr.f32.mxu0 0.0
        %6812 = vmatmul.mubr.f32.gmra.mrb[0].mxu0 %v6641
        %v6813 = vpop.f32.mrb[0].mxu0
        %v6814 = vadd.f32 %v6627, %v6813
        %v6815 = vpop.f32.mrb[0].mxu0
        %v6816 = vadd.f32 %v6627, %v6815
        %6817 = vmatprep.mubr.f32.mxu0 0.0
        %6818 = vmatmul.mubr.f32.gmra.mrb[0].mxu0 %v6644
        %v6819 = vpop.f32.mrb[0].mxu0
        %v6820 = vadd.f32 %v6632, %v6819
        %v6821 = vpop.f32.mrb[0].mxu0
        %v6822 = vadd.f32 %v6632, %v6821
        %6823 = vdwg.mxu0
        %v6824 = vadd.f32 %v6713, %v1157
        %v6825 = vadd.f32 %v6715, %v1158
        %v6826 = vadd.f32 %v6802, %v1159
        %v6827 = vadd.f32 %v6804, %v1160
        %v6828 = vadd.f32 %v6719, %v1161
        %v6829 = vadd.f32 %v6721, %v1162
        %v6830 = vadd.f32 %v6808, %v1163
        %v6831 = vadd.f32 %v6810, %v1164
        %v6832 = vadd.f32 %v6725, %v1165
        %v6833 = vadd.f32 %v6727, %v1166
        %v6834 = vadd.f32 %v6814, %v1167
        %v6835 = vadd.f32 %v6816, %v1168
        %v6836 = vadd.f32 %v6731, %v1169
        %v6837 = vadd.f32 %v6733, %v1170
        %v6838 = vadd.f32 %v6820, %v1171
        %v6839 = vadd.f32 %v6822, %v1172
        %6840 = vst [vmem:[%s227] sm:$0xff] %v6824
        %6841 = vst [vmem:[%s227 + $0x8] sm:$0xff] %v6825
        %6842 = vst [vmem:[%s227 + $0x10] sm:$0xff] %v6826
        %6843 = vst [vmem:[%s227 + $0x18] sm:$0xff] %v6827
        %6844 = vst [vmem:[%s227 + $0x20] sm:$0xff] %v6828
        %6845 = vst [vmem:[%s227 + $0x28] sm:$0xff] %v6829
        %6846 = vst [vmem:[%s227 + $0x30] sm:$0xff] %v6830
        %6847 = vst [vmem:[%s227 + $0x38] sm:$0xff] %v6831
        %6848 = vst [vmem:[%s227 + $0x40] sm:$0xff] %v6832
        %6849 = vst [vmem:[%s227 + $0x48] sm:$0xff] %v6833
        %6850 = vst [vmem:[%s227 + $0x50] sm:$0xff] %v6834
        %6851 = vst [vmem:[%s227 + $0x58] sm:$0xff] %v6835
        %6852 = vst [vmem:[%s227 + $0x60] sm:$0xff] %v6836
        %6853 = vst [vmem:[%s227 + $0x68] sm:$0xff] %v6837
        %6854 = vst [vmem:[%s227 + $0x70] sm:$0xff] %v6838
        %6855 = vst [vmem:[%s227 + $0x78] sm:$0xff] %v6839
        %s6856 = sand.u32 %s148, 1
        %s6857 = sand.u32 %s148, 1
        %s6858 = smul.addr %s6857, 128
        %s6859 = scalar_lea.vmem [#allocation5], %s6858
        // Predicated region
        $region45: #{temporal_nonlocal_forward.1} parent=39 // pred_check
          %p6860 = pneg %p158
        $region46: #{temporal_nonlocal_forward.1} parent=39 // pred_check_branch
          %6862 = sbr.rel (%p6860) target = $region48
        $region47: #{temporal_nonlocal_forward.1} parent=39 // pred_region
          %s6863 = smul.u32 4, %s21
          %s6864 = smul.addr %s20, 32
          %s6865 = sadd.s32 %s6863, %s6864
          %s6866 = smul.addr %s6865, 8
          %s6867 = scalar_lea.vmem %s5, %s6866
          // Predicated region
          $region49: #{temporal_nonlocal_forward.1} parent=47 // pred_check
            _
          $region50: #{temporal_nonlocal_forward.1} parent=47 // pred_check_branch
            %6869 = sbr.rel (0) target = $region52
          $region51: #{temporal_nonlocal_forward.1} parent=47 // pred_region
            // Predicated region
            $region53: #{temporal_nonlocal_forward.1} parent=51 // pred_check
              _
            $region54: #{temporal_nonlocal_forward.1} parent=51 // pred_check_branch
              %6871 = sbr.rel (0) target = $region56
            $region55: #{temporal_nonlocal_forward.1} parent=51 // pred_region
              loop: start=0, step=1, limit=1
              $region57: #{temporal_nonlocal_forward.1} parent=55 // loop_pre_header
                _
              $region58: #{temporal_nonlocal_forward.1} parent=55 // loop_header
                %s6873 = sphi 0, %s6877
                %p6874 = scmp.ge.s32.totalorder %s6873, 1
                %s6878 = sphi %s6859, %s6859
                %s6879 = sphi %s6867, %s6867
              $region59: #{temporal_nonlocal_forward.1} parent=55 // loop_header_branch
                %6876 = sbr.rel (%p6874) target = $region63
              $region60: #{temporal_nonlocal_forward.1} parent=55 // loop_body
                %v6880 = vld [vmem:[%s6878] sm:$0xff]
                %6881 = vst [vmem:[%s6879] sm:$0xff] %v6880
                %v6882 = vld [vmem:[%s6878 + $0x8] sm:$0xff]
                %6883 = vst [vmem:[%s6879 + $0x8] sm:$0xff] %v6882
                %v6884 = vld [vmem:[%s6878 + $0x10] sm:$0xff]
                %6885 = vst [vmem:[%s6879 + $0x10] sm:$0xff] %v6884
                %v6886 = vld [vmem:[%s6878 + $0x18] sm:$0xff]
                %6887 = vst [vmem:[%s6879 + $0x18] sm:$0xff] %v6886
                %v6888 = vld [vmem:[%s6878 + $0x20] sm:$0xff]
                %6889 = vst [vmem:[%s6879 + $0x40] sm:$0xff] %v6888
                %v6890 = vld [vmem:[%s6878 + $0x28] sm:$0xff]
                %6891 = vst [vmem:[%s6879 + $0x48] sm:$0xff] %v6890
                %v6892 = vld [vmem:[%s6878 + $0x30] sm:$0xff]
                %6893 = vst [vmem:[%s6879 + $0x50] sm:$0xff] %v6892
                %v6894 = vld [vmem:[%s6878 + $0x38] sm:$0xff]
                %6895 = vst [vmem:[%s6879 + $0x58] sm:$0xff] %v6894
                %v6896 = vld [vmem:[%s6878 + $0x40] sm:$0xff]
                %6897 = vst [vmem:[%s6879 + $0x80] sm:$0xff] %v6896
                %v6898 = vld [vmem:[%s6878 + $0x48] sm:$0xff]
                %6899 = vst [vmem:[%s6879 + $0x88] sm:$0xff] %v6898
                %v6900 = vld [vmem:[%s6878 + $0x50] sm:$0xff]
                %6901 = vst [vmem:[%s6879 + $0x90] sm:$0xff] %v6900
                %v6902 = vld [vmem:[%s6878 + $0x58] sm:$0xff]
                %6903 = vst [vmem:[%s6879 + $0x98] sm:$0xff] %v6902
                %v6904 = vld [vmem:[%s6878 + $0x60] sm:$0xff]
                %6905 = vst [vmem:[%s6879 + $0xc0] sm:$0xff] %v6904
                %v6906 = vld [vmem:[%s6878 + $0x68] sm:$0xff]
                %6907 = vst [vmem:[%s6879 + $0xc8] sm:$0xff] %v6906
                %v6908 = vld [vmem:[%s6878 + $0x70] sm:$0xff]
                %6909 = vst [vmem:[%s6879 + $0xd0] sm:$0xff] %v6908
                %v6910 = vld [vmem:[%s6878 + $0x78] sm:$0xff]
                %6911 = vst [vmem:[%s6879 + $0xd8] sm:$0xff] %v6910
              $region61: #{temporal_nonlocal_forward.1} parent=55 // loop_footer
                %s6877 = sadd.s32 1, %s6873
              $region62: #{temporal_nonlocal_forward.1} parent=55 // loop_footer_branch
                %6872 = sbr.rel target = $region58
              $region63: #{temporal_nonlocal_forward.1} parent=55 // loop_exit
                _
            $region56: #{temporal_nonlocal_forward.1} parent=51 // pred_fallthru
              _
            // Predicated region
            $region64: #{temporal_nonlocal_forward.1} parent=51 // pred_check
              _
            $region65: #{temporal_nonlocal_forward.1} parent=51 // pred_check_branch
              %6913 = sbr.rel target = $region67
            $region66: #{temporal_nonlocal_forward.1} parent=51 // pred_region
              _
            $region67: #{temporal_nonlocal_forward.1} parent=51 // pred_fallthru
              _
          $region52: #{temporal_nonlocal_forward.1} parent=47 // pred_fallthru
            _
          %6914 = vnop
        $region48: #{temporal_nonlocal_forward.1} parent=39 // pred_fallthru
          _
      $region40: #{temporal_nonlocal_forward.1} parent=5 // pred_fallthru
        _
      %p6915 = scmp.le.s32.totalorder 2, %s11
      // Predicated region
      $region68: #{temporal_nonlocal_forward.1} parent=5 // pred_check
        %p6916 = pneg %p6915
      $region69: #{temporal_nonlocal_forward.1} parent=5 // pred_check_branch
        %6918 = sbr.rel (%p6916) target = $region71
      $region70: #{temporal_nonlocal_forward.1} parent=5 // pred_region
        %s6919 = ssub.s32 %s11, 2
        // Predicated region
        $region72: #{temporal_nonlocal_forward.1} parent=70 // pred_check
          %p6920 = pneg %p164
        $region73: #{temporal_nonlocal_forward.1} parent=70 // pred_check_branch
          %6922 = sbr.rel (%p6920) target = $region75
        $region74: #{temporal_nonlocal_forward.1} parent=70 // pred_region
          %s6923 = sand.u32 %s149, 1
          %s6924 = sand.u32 %s149, 1
          %s6925 = smul.addr %s6924, 128
          %s6926 = scalar_lea.vmem [#allocation5], %s6925
        $region75: #{temporal_nonlocal_forward.1} parent=70 // pred_fallthru
          _
      $region71: #{temporal_nonlocal_forward.1} parent=5 // pred_fallthru
        _
    $region6: #{temporal_nonlocal_forward.1} parent=1 // loop_footer
      %s15 = sadd.s32 1, %s11
    $region7: #{temporal_nonlocal_forward.1} parent=1 // loop_footer_branch
      %10 = sbr.rel target = $region3
    $region8: #{temporal_nonlocal_forward.1} parent=1 // loop_exit
      _

</llo_original>
